<compile_context>
chip_gen: v6e
topology: v6e:2x2x1
jax: 0.10.0
libtpu: 0.0.40
codegen_flags: <defaults>
</compile_context>

<pallas_src>
import functools

import jax
import jax.numpy as jnp
import numpy as np
from jax.experimental import pallas as pl
from jax.experimental.pallas import tpu as pltpu

TM = 8                                # batch tile (sublane-aligned; batch is tiny)
PAD = 512                             # feature-dim padding granularity
TILE_GRAN = 256                       # tiles are divisors of the padded dim, multiples of this
_MAX_W_TILE_ELEMS = 6 * 1024 * 1024   # 12 MiB bf16 per weight tile -> <=24 MiB double-buffered
_VMEM_LIMIT_BYTES = 48 * 1024 * 1024  # fits v7x's 64 MiB physical VMEM with headroom; well under
                                      # v5e/v6e's 128 MiB (overrides their 16/32 MiB default
                                      # scoped budget, which the bigger tiles would exceed)

FULL_DIMS = [365 * 3 * 41, 6570, 1024, 256, 1024, 6570, 365 * 3 * 41]
ACTS = ["relu", "relu", "relu", "relu", "relu", "tanh"]


def _round_up(x, m):
    return ((x + m - 1) // m) * m


def _tile_candidates(dim_pad):
    """Divisors of dim_pad that are multiples of TILE_GRAN (6656 -> 256,512,3328,6656)."""
    return [d for d in range(TILE_GRAN, dim_pad + 1, TILE_GRAN) if dim_pad % d == 0]


def _pick_tiles(k_pad, n_pad):
    """Pick (TK, TN) for one layer.

    Priority: (1) at least two blocks along N so the leading "parallel" grid
    axis can be sharded across v7x's two TensorCores, (2) maximum tile area
    (fewest grid steps -> least fixed per-step overhead), (3) wider TN
    (lane-dense weight DMAs and output stores) -- all subject to the
    double-buffered weight-tile VMEM cap.
    """
    best_key, best = None, None
    for tn in _tile_candidates(n_pad):
        for tk in _tile_candidates(k_pad):
            if tk * tn > _MAX_W_TILE_ELEMS:
                continue
            key = (n_pad // tn >= 2, tk * tn, tn)
            if best_key is None or key > best_key:
                best_key, best = key, (tk, tn)
    assert best is not None, (k_pad, n_pad)
    return best


def _linear_kernel(x_ref, w_ref, b_ref, o_ref, acc_ref, *, activation):
    """Fused tiled matmul + bias + activation.

    grid = (N//TN, M//TM, K//TK), k last ("arbitrary").  The f32 VMEM scratch
    acc_ref is zeroed at k==0 and flushed (bias + activation, cast to the
    output dtype) at k==last.  This is only valid because for a fixed (j, i)
    the k steps run consecutively, i.e. the reduction axis must stay the
    trailing grid axis and the output index_map must be k-invariant.
    """
    k = pl.program_id(2)

    @pl.when(k == 0)
    def _():
        acc_ref[...] = jnp.zeros_like(acc_ref)

    acc_ref[...] += jnp.dot(x_ref[...], w_ref[...],
                            preferred_element_type=jnp.float32)

    @pl.when(k == pl.num_programs(2) - 1)
    def _():
        y = acc_ref[...] + b_ref[...]
        if activation == "relu":
            y = jnp.maximum(y, 0.0)
        else:  # tanh
            y = jnp.tanh(y)
        o_ref[...] = y.astype(o_ref.dtype)


def linear_pallas(x, w_blocked, b, activation, out_dtype):
    """x: (M_pad, K_pad) bf16, w_blocked: (N/TN, K/TK, TK, TN) bf16 tile-blocked,
    b: (1, N_pad) f32  ->  (M_pad, N_pad) out_dtype."""
    M, K = x.shape
    nb, kb, TK, TN = w_blocked.shape
    N = nb * TN
    assert K == kb * TK and M % TM == 0
    # Reduction axis (kb) must be the TRAILING grid axis; the accumulator pattern
    # in _linear_kernel depends on it.  Do not reorder.
    grid = (nb, M // TM, kb)
    kernel = functools.partial(_linear_kernel, activation=activation)
    return pl.pallas_call(
        kernel,
        out_shape=jax.ShapeDtypeStruct((M, N), out_dtype),
        grid_spec=pltpu.PrefetchScalarGridSpec(
            num_scalar_prefetch=0,
            grid=grid,   # wide N axis first -> megacore shards the weight stream on v7x
            in_specs=[
                pl.BlockSpec((TM, TK), lambda j, i, k: (i, k)),
                # tile-blocked weights: each (TK, TN) block is one contiguous DMA
                pl.BlockSpec((None, None, TK, TN), lambda j, i, k: (j, k, 0, 0)),
                pl.BlockSpec((1, TN), lambda j, i, k: (0, j)),
            ],
            out_specs=pl.BlockSpec((TM, TN), lambda j, i, k: (i, j)),
            scratch_shapes=[pltpu.VMEM((TM, TN), jnp.float32)],
        ),
        compiler_params=pltpu.CompilerParams(
            dimension_semantics=("parallel", "parallel", "arbitrary"),
            vmem_limit_bytes=_VMEM_LIMIT_BYTES),
    )(x, w_blocked, b)


# ---------------------------------------------------------------------------
# Parameter construction (deterministic, PyTorch-style U(-1/sqrt(fan_in), ...))
# ---------------------------------------------------------------------------
def init_params(key, dims):
    params = []
    for din, dout in zip(dims[:-1], dims[1:]):
        k_pad, n_pad = _round_up(din, PAD), _round_up(dout, PAD)
        tk, tn = _pick_tiles(k_pad, n_pad)
        key, k1, k2 = jax.random.split(key, 3)
        scale = 1.0 / float(din) ** 0.5
        w = jax.random.uniform(k1, (k_pad, n_pad), jnp.float32, -scale, scale)
        row_mask = (jnp.arange(k_pad) < din)[:, None]
        col_mask = (jnp.arange(n_pad) < dout)[None, :]
        w = jnp.where(row_mask & col_mask, w, 0.0)        # padding stays inert
        w = w.astype(jnp.bfloat16)                        # zeros stay exactly zero
        # tile-blocked HBM layout: (N/TN, K/TK, TK, TN)
        w_blocked = w.reshape(k_pad // tk, tk, n_pad // tn, tn).transpose(2, 0, 1, 3)
        b = jax.random.uniform(k2, (1, n_pad), jnp.float32, -scale, scale)
        b = jnp.where(col_mask, b, 0.0)
        params.append((w_blocked, b))
    return params


@jax.jit
def autoencoder_forward(x, params):
    """x: (batch, D) f32 -> (batch, D) f32, D = dims[0]."""
    M, D = x.shape
    k_pad0 = params[0][0].shape[1] * params[0][0].shape[2]     # kb * TK of layer 1
    m_pad = _round_up(M, TM)
    # Padded batch rows become relu(bias) after layer 1; inert because rows never
    # mix, and they are sliced off below.
    h = jnp.pad(x, ((0, m_pad - M), (0, k_pad0 - D))).astype(jnp.bfloat16)
    n_layers = len(params)
    for li, ((w, b), act) in enumerate(zip(params, ACTS)):
        out_dtype = jnp.float32 if li == n_layers - 1 else jnp.bfloat16
        h = linear_pallas(h, w, b, act, out_dtype)
    return h[:M, :D]


def reference_forward(x, params):
    """Pure-JAX reference with identical (bf16 weights/activations, f32 accumulate) math."""
    M, D = x.shape
    k_pad0 = params[0][0].shape[1] * params[0][0].shape[2]
    h = jnp.pad(x, ((0, 0), (0, k_pad0 - D))).astype(jnp.bfloat16)
    n_layers = len(params)
    for li, ((w_blocked, b), act) in enumerate(zip(params, ACTS)):
        nb, kb, tk, tn = w_blocked.shape
        w = w_blocked.transpose(1, 2, 0, 3).reshape(kb * tk, nb * tn)
        y = jnp.dot(h, w, preferred_element_type=jnp.float32) + b
        y = jnp.maximum(y, 0.0) if act == "relu" else jnp.tanh(y)
        h = y.astype(jnp.bfloat16) if li < n_layers - 1 else y
    return h[:, :D]


if __name__ == "__main__":
    key = jax.random.PRNGKey(0)
    kx, kparams = jax.random.split(key)

    # Small, architecture-consistent smoke-test dims (encoder narrows, decoder
    # widens, Tanh output). The real module uses FULL_DIMS; same code path, just
    # larger grids/tiles (layer 1 picks (TK,TN)=(11264,512), layer 6 (256,22528)).
    demo_dims = [1230, 656, 128, 64, 128, 656, 1230]
    batch = 2

    x = jax.random.normal(kx, (batch, demo_dims[0]), jnp.float32)
    params = init_params(kparams, demo_dims)

    y = jax.block_until_ready(autoencoder_forward(x, params))
    assert y.shape == (batch, demo_dims[0]), y.shape
    assert y.dtype == jnp.float32, y.dtype

    y_ref = jax.block_until_ready(reference_forward(x, params))
    np.testing.assert_allclose(np.asarray(y), np.asarray(y_ref), atol=2e-2, rtol=2e-2)
    assert bool(jnp.all(jnp.abs(y) <= 1.0))   # Tanh output range sanity check
    print("KERNEL_OK")
</pallas_src>

<mosaic_0001>
module attributes {stable_mosaic.version = 11 : i64} {
  func.func @_linear_kernel(%arg0: i32, %arg1: i32, %arg2: i32, %arg3: memref<8x1536xbf16, #tpu.memory_space<vmem>>, %arg4: memref<1x1x1536x512xbf16, #tpu.memory_space<vmem>>, %arg5: memref<1x512xf32, #tpu.memory_space<vmem>>, %arg6: memref<8x512xbf16, #tpu.memory_space<vmem>>, %arg7: memref<8x512xf32, #tpu.memory_space<vmem>>) attributes {dimension_semantics = [#tpu.dimension_semantics<parallel>, #tpu.dimension_semantics<parallel>, #tpu.dimension_semantics<arbitrary>], iteration_bounds = array<i64: 2, 1, 1>, scalar_prefetch = 0 : i64, scratch_operands = 1 : i64, tpu.core_type = #tpu.core_type<tc>, window_params = [{transform_indices = @transform_0, window_bounds = array<i64: 8, 1536>}, {transform_indices = @transform_1, window_bounds = array<i64: 1, 1, 1536, 512>}, {transform_indices = @transform_2, window_bounds = array<i64: 1, 512>}, {transform_indices = @transform_3, window_bounds = array<i64: 8, 512>}]} {
    %c0_i32 = arith.constant 0 : i32
    %0 = arith.cmpi eq, %arg2, %c0_i32 : i32
    %1 = arith.extui %0 : i1 to i32
    %c0_i32_0 = arith.constant 0 : i32
    %2 = arith.cmpi ne, %1, %c0_i32_0 : i32
    scf.if %2 {
      %cst_12 = arith.constant 0.000000e+00 : f32
      %13 = vector.broadcast %cst_12 : f32 to vector<8x512xf32>
      %c0_13 = arith.constant 0 : index
      %c0_14 = arith.constant 0 : index
      %14 = vector.load %arg7[%c0_13, %c0_14] : memref<8x512xf32, #tpu.memory_space<vmem>>, vector<8x512xf32>
      tpu.vector_store %arg7[%c0_13, %c0_14], %13 {strides = array<i32>} : memref<8x512xf32, #tpu.memory_space<vmem>>, vector<8x512xf32>,
    } else {
    }
    %c0 = arith.constant 0 : index
    %c0_1 = arith.constant 0 : index
    %3 = vector.load %arg7[%c0, %c0_1] : memref<8x512xf32, #tpu.memory_space<vmem>>, vector<8x512xf32>
    %c0_2 = arith.constant 0 : index
    %c0_3 = arith.constant 0 : index
    %4 = vector.load %arg3[%c0_2, %c0_3] : memref<8x1536xbf16, #tpu.memory_space<vmem>>, vector<8x1536xbf16>
    %c0_4 = arith.constant 0 : index
    %c0_5 = arith.constant 0 : index
    %c0_6 = arith.constant 0 : index
    %c0_7 = arith.constant 0 : index
    %5 = vector.load %arg4[%c0_4, %c0_5, %c0_6, %c0_7] : memref<1x1x1536x512xbf16, #tpu.memory_space<vmem>>, vector<1x1x1536x512xbf16>
    %6 = vector.shape_cast %5 : vector<1x1x1536x512xbf16> to vector<1536x512xbf16>
    %cst = arith.constant dense<0.000000e+00> : vector<8x512xf32>
    %7 = tpu.matmul %4, %6, %cst {dimension_numbers = #tpu.dot_dimension_numbers<[1], [0], [0], [1], [0, 0, 1, 1], [], []>} : vector<8x1536xbf16>, vector<1536x512xbf16>, vector<8x512xf32> -> vector<8x512xf32>
    %8 = arith.addf %3, %7 : vector<8x512xf32>
    %c0_8 = arith.constant 0 : index
    %c0_9 = arith.constant 0 : index
    %9 = vector.load %arg7[%c0_8, %c0_9] : memref<8x512xf32, #tpu.memory_space<vmem>>, vector<8x512xf32>
    tpu.vector_store %arg7[%c0_8, %c0_9], %8 {strides = array<i32>} : memref<8x512xf32, #tpu.memory_space<vmem>>, vector<8x512xf32>,
    %c0_i32_10 = arith.constant 0 : i32
    %10 = arith.cmpi eq, %arg2, %c0_i32_10 : i32
    %11 = arith.extui %10 : i1 to i32
    %c0_i32_11 = arith.constant 0 : i32
    %12 = arith.cmpi ne, %11, %c0_i32_11 : i32
    scf.if %12 {
      %c0_12 = arith.constant 0 : index
      %c0_13 = arith.constant 0 : index
      %13 = vector.load %arg7[%c0_12, %c0_13] : memref<8x512xf32, #tpu.memory_space<vmem>>, vector<8x512xf32>
      %c0_14 = arith.constant 0 : index
      %c0_15 = arith.constant 0 : index
      %14 = vector.load %arg5[%c0_14, %c0_15] : memref<1x512xf32, #tpu.memory_space<vmem>>, vector<1x512xf32>
      %15 = vector.broadcast %14 : vector<1x512xf32> to vector<8x512xf32>
      %16 = arith.addf %13, %15 : vector<8x512xf32>
      %cst_16 = arith.constant 0.000000e+00 : f32
      %17 = vector.broadcast %cst_16 : f32 to vector<8x512xf32>
      %18 = arith.maximumf %16, %17 : vector<8x512xf32>
      %19 = arith.truncf %18 : vector<8x512xf32> to vector<8x512xbf16>
      %c0_17 = arith.constant 0 : index
      %c0_18 = arith.constant 0 : index
      %20 = vector.load %arg6[%c0_17, %c0_18] : memref<8x512xbf16, #tpu.memory_space<vmem>>, vector<8x512xbf16>
      tpu.vector_store %arg6[%c0_17, %c0_18], %19 {strides = array<i32>} : memref<8x512xbf16, #tpu.memory_space<vmem>>, vector<8x512xbf16>,
    } else {
    }
    return
  }
  func.func @transform_0(%arg0: i32, %arg1: i32, %arg2: i32) -> (i32, i32) {
    %c0_i32 = arith.constant 0 : i32
    return %arg1, %arg2 : i32, i32
  }
  func.func @transform_1(%arg0: i32, %arg1: i32, %arg2: i32) -> (i32, i32, i32, i32) {
    %c0_i32 = arith.constant 0 : i32
    %c0_i32_0 = arith.constant 0 : i32
    %c0_i32_1 = arith.constant 0 : i32
    return %arg0, %arg2, %c0_i32, %c0_i32_0 : i32, i32, i32, i32
  }
  func.func @transform_2(%arg0: i32, %arg1: i32, %arg2: i32) -> (i32, i32) {
    %c0_i32 = arith.constant 0 : i32
    %c0_i32_0 = arith.constant 0 : i32
    return %c0_i32, %arg0 : i32, i32
  }
  func.func @transform_3(%arg0: i32, %arg1: i32, %arg2: i32) -> (i32, i32) {
    %c0_i32 = arith.constant 0 : i32
    return %arg1, %arg0 : i32, i32
  }
}

module attributes {stable_mosaic.version = 11 : i64} {
  func.func @_linear_kernel(%arg0: i32, %arg1: i32, %arg2: i32, %arg3: memref<8x1024xbf16, #tpu.memory_space<vmem>>, %arg4: memref<1x1x1024x256xbf16, #tpu.memory_space<vmem>>, %arg5: memref<1x256xf32, #tpu.memory_space<vmem>>, %arg6: memref<8x256xbf16, #tpu.memory_space<vmem>>, %arg7: memref<8x256xf32, #tpu.memory_space<vmem>>) attributes {dimension_semantics = [#tpu.dimension_semantics<parallel>, #tpu.dimension_semantics<parallel>, #tpu.dimension_semantics<arbitrary>], iteration_bounds = array<i64: 2, 1, 1>, scalar_prefetch = 0 : i64, scratch_operands = 1 : i64, tpu.core_type = #tpu.core_type<tc>, window_params = [{transform_indices = @transform_0, window_bounds = array<i64: 8, 1024>}, {transform_indices = @transform_1, window_bounds = array<i64: 1, 1, 1024, 256>}, {transform_indices = @transform_2, window_bounds = array<i64: 1, 256>}, {transform_indices = @transform_3, window_bounds = array<i64: 8, 256>}]} {
    %c0_i32 = arith.constant 0 : i32
    %0 = arith.cmpi eq, %arg2, %c0_i32 : i32
    %1 = arith.extui %0 : i1 to i32
    %c0_i32_0 = arith.constant 0 : i32
    %2 = arith.cmpi ne, %1, %c0_i32_0 : i32
    scf.if %2 {
      %cst_12 = arith.constant 0.000000e+00 : f32
      %13 = vector.broadcast %cst_12 : f32 to vector<8x256xf32>
      %c0_13 = arith.constant 0 : index
      %c0_14 = arith.constant 0 : index
      %14 = vector.load %arg7[%c0_13, %c0_14] : memref<8x256xf32, #tpu.memory_space<vmem>>, vector<8x256xf32>
      tpu.vector_store %arg7[%c0_13, %c0_14], %13 {strides = array<i32>} : memref<8x256xf32, #tpu.memory_space<vmem>>, vector<8x256xf32>,
    } else {
    }
    %c0 = arith.constant 0 : index
    %c0_1 = arith.constant 0 : index
    %3 = vector.load %arg7[%c0, %c0_1] : memref<8x256xf32, #tpu.memory_space<vmem>>, vector<8x256xf32>
    %c0_2 = arith.constant 0 : index
    %c0_3 = arith.constant 0 : index
    %4 = vector.load %arg3[%c0_2, %c0_3] : memref<8x1024xbf16, #tpu.memory_space<vmem>>, vector<8x1024xbf16>
    %c0_4 = arith.constant 0 : index
    %c0_5 = arith.constant 0 : index
    %c0_6 = arith.constant 0 : index
    %c0_7 = arith.constant 0 : index
    %5 = vector.load %arg4[%c0_4, %c0_5, %c0_6, %c0_7] : memref<1x1x1024x256xbf16, #tpu.memory_space<vmem>>, vector<1x1x1024x256xbf16>
    %6 = vector.shape_cast %5 : vector<1x1x1024x256xbf16> to vector<1024x256xbf16>
    %cst = arith.constant dense<0.000000e+00> : vector<8x256xf32>
    %7 = tpu.matmul %4, %6, %cst {dimension_numbers = #tpu.dot_dimension_numbers<[1], [0], [0], [1], [0, 0, 1, 1], [], []>} : vector<8x1024xbf16>, vector<1024x256xbf16>, vector<8x256xf32> -> vector<8x256xf32>
    %8 = arith.addf %3, %7 : vector<8x256xf32>
    %c0_8 = arith.constant 0 : index
    %c0_9 = arith.constant 0 : index
    %9 = vector.load %arg7[%c0_8, %c0_9] : memref<8x256xf32, #tpu.memory_space<vmem>>, vector<8x256xf32>
    tpu.vector_store %arg7[%c0_8, %c0_9], %8 {strides = array<i32>} : memref<8x256xf32, #tpu.memory_space<vmem>>, vector<8x256xf32>,
    %c0_i32_10 = arith.constant 0 : i32
    %10 = arith.cmpi eq, %arg2, %c0_i32_10 : i32
    %11 = arith.extui %10 : i1 to i32
    %c0_i32_11 = arith.constant 0 : i32
    %12 = arith.cmpi ne, %11, %c0_i32_11 : i32
    scf.if %12 {
      %c0_12 = arith.constant 0 : index
      %c0_13 = arith.constant 0 : index
      %13 = vector.load %arg7[%c0_12, %c0_13] : memref<8x256xf32, #tpu.memory_space<vmem>>, vector<8x256xf32>
      %c0_14 = arith.constant 0 : index
      %c0_15 = arith.constant 0 : index
      %14 = vector.load %arg5[%c0_14, %c0_15] : memref<1x256xf32, #tpu.memory_space<vmem>>, vector<1x256xf32>
      %15 = vector.broadcast %14 : vector<1x256xf32> to vector<8x256xf32>
      %16 = arith.addf %13, %15 : vector<8x256xf32>
      %cst_16 = arith.constant 0.000000e+00 : f32
      %17 = vector.broadcast %cst_16 : f32 to vector<8x256xf32>
      %18 = arith.maximumf %16, %17 : vector<8x256xf32>
      %19 = arith.truncf %18 : vector<8x256xf32> to vector<8x256xbf16>
      %c0_17 = arith.constant 0 : index
      %c0_18 = arith.constant 0 : index
      %20 = vector.load %arg6[%c0_17, %c0_18] : memref<8x256xbf16, #tpu.memory_space<vmem>>, vector<8x256xbf16>
      tpu.vector_store %arg6[%c0_17, %c0_18], %19 {strides = array<i32>} : memref<8x256xbf16, #tpu.memory_space<vmem>>, vector<8x256xbf16>,
    } else {
    }
    return
  }
  func.func @transform_0(%arg0: i32, %arg1: i32, %arg2: i32) -> (i32, i32) {
    %c0_i32 = arith.constant 0 : i32
    return %arg1, %arg2 : i32, i32
  }
  func.func @transform_1(%arg0: i32, %arg1: i32, %arg2: i32) -> (i32, i32, i32, i32) {
    %c0_i32 = arith.constant 0 : i32
    %c0_i32_0 = arith.constant 0 : i32
    %c0_i32_1 = arith.constant 0 : i32
    return %arg0, %arg2, %c0_i32, %c0_i32_0 : i32, i32, i32, i32
  }
  func.func @transform_2(%arg0: i32, %arg1: i32, %arg2: i32) -> (i32, i32) {
    %c0_i32 = arith.constant 0 : i32
    %c0_i32_0 = arith.constant 0 : i32
    return %c0_i32, %arg0 : i32, i32
  }
  func.func @transform_3(%arg0: i32, %arg1: i32, %arg2: i32) -> (i32, i32) {
    %c0_i32 = arith.constant 0 : i32
    return %arg1, %arg0 : i32, i32
  }
}

module attributes {stable_mosaic.version = 11 : i64} {
  func.func @_linear_kernel(%arg0: i32, %arg1: i32, %arg2: i32, %arg3: memref<8x512xbf16, #tpu.memory_space<vmem>>, %arg4: memref<1x1x512x512xbf16, #tpu.memory_space<vmem>>, %arg5: memref<1x512xf32, #tpu.memory_space<vmem>>, %arg6: memref<8x512xbf16, #tpu.memory_space<vmem>>, %arg7: memref<8x512xf32, #tpu.memory_space<vmem>>) attributes {dimension_semantics = [#tpu.dimension_semantics<parallel>, #tpu.dimension_semantics<parallel>, #tpu.dimension_semantics<arbitrary>], iteration_bounds = array<i64: 2, 1, 1>, scalar_prefetch = 0 : i64, scratch_operands = 1 : i64, tpu.core_type = #tpu.core_type<tc>, window_params = [{transform_indices = @transform_0, window_bounds = array<i64: 8, 512>}, {transform_indices = @transform_1, window_bounds = array<i64: 1, 1, 512, 512>}, {transform_indices = @transform_2, window_bounds = array<i64: 1, 512>}, {transform_indices = @transform_3, window_bounds = array<i64: 8, 512>}]} {
    %c0_i32 = arith.constant 0 : i32
    %0 = arith.cmpi eq, %arg2, %c0_i32 : i32
    %1 = arith.extui %0 : i1 to i32
    %c0_i32_0 = arith.constant 0 : i32
    %2 = arith.cmpi ne, %1, %c0_i32_0 : i32
    scf.if %2 {
      %cst_12 = arith.constant 0.000000e+00 : f32
      %13 = vector.broadcast %cst_12 : f32 to vector<8x512xf32>
      %c0_13 = arith.constant 0 : index
      %c0_14 = arith.constant 0 : index
      %14 = vector.load %arg7[%c0_13, %c0_14] : memref<8x512xf32, #tpu.memory_space<vmem>>, vector<8x512xf32>
      tpu.vector_store %arg7[%c0_13, %c0_14], %13 {strides = array<i32>} : memref<8x512xf32, #tpu.memory_space<vmem>>, vector<8x512xf32>,
    } else {
    }
    %c0 = arith.constant 0 : index
    %c0_1 = arith.constant 0 : index
    %3 = vector.load %arg7[%c0, %c0_1] : memref<8x512xf32, #tpu.memory_space<vmem>>, vector<8x512xf32>
    %c0_2 = arith.constant 0 : index
    %c0_3 = arith.constant 0 : index
    %4 = vector.load %arg3[%c0_2, %c0_3] : memref<8x512xbf16, #tpu.memory_space<vmem>>, vector<8x512xbf16>
    %c0_4 = arith.constant 0 : index
    %c0_5 = arith.constant 0 : index
    %c0_6 = arith.constant 0 : index
    %c0_7 = arith.constant 0 : index
    %5 = vector.load %arg4[%c0_4, %c0_5, %c0_6, %c0_7] : memref<1x1x512x512xbf16, #tpu.memory_space<vmem>>, vector<1x1x512x512xbf16>
    %6 = vector.shape_cast %5 : vector<1x1x512x512xbf16> to vector<512x512xbf16>
    %cst = arith.constant dense<0.000000e+00> : vector<8x512xf32>
    %7 = tpu.matmul %4, %6, %cst {dimension_numbers = #tpu.dot_dimension_numbers<[1], [0], [0], [1], [0, 0, 1, 1], [], []>} : vector<8x512xbf16>, vector<512x512xbf16>, vector<8x512xf32> -> vector<8x512xf32>
    %8 = arith.addf %3, %7 : vector<8x512xf32>
    %c0_8 = arith.constant 0 : index
    %c0_9 = arith.constant 0 : index
    %9 = vector.load %arg7[%c0_8, %c0_9] : memref<8x512xf32, #tpu.memory_space<vmem>>, vector<8x512xf32>
    tpu.vector_store %arg7[%c0_8, %c0_9], %8 {strides = array<i32>} : memref<8x512xf32, #tpu.memory_space<vmem>>, vector<8x512xf32>,
    %c0_i32_10 = arith.constant 0 : i32
    %10 = arith.cmpi eq, %arg2, %c0_i32_10 : i32
    %11 = arith.extui %10 : i1 to i32
    %c0_i32_11 = arith.constant 0 : i32
    %12 = arith.cmpi ne, %11, %c0_i32_11 : i32
    scf.if %12 {
      %c0_12 = arith.constant 0 : index
      %c0_13 = arith.constant 0 : index
      %13 = vector.load %arg7[%c0_12, %c0_13] : memref<8x512xf32, #tpu.memory_space<vmem>>, vector<8x512xf32>
      %c0_14 = arith.constant 0 : index
      %c0_15 = arith.constant 0 : index
      %14 = vector.load %arg5[%c0_14, %c0_15] : memref<1x512xf32, #tpu.memory_space<vmem>>, vector<1x512xf32>
      %15 = vector.broadcast %14 : vector<1x512xf32> to vector<8x512xf32>
      %16 = arith.addf %13, %15 : vector<8x512xf32>
      %cst_16 = arith.constant 0.000000e+00 : f32
      %17 = vector.broadcast %cst_16 : f32 to vector<8x512xf32>
      %18 = arith.maximumf %16, %17 : vector<8x512xf32>
      %19 = arith.truncf %18 : vector<8x512xf32> to vector<8x512xbf16>
      %c0_17 = arith.constant 0 : index
      %c0_18 = arith.constant 0 : index
      %20 = vector.load %arg6[%c0_17, %c0_18] : memref<8x512xbf16, #tpu.memory_space<vmem>>, vector<8x512xbf16>
      tpu.vector_store %arg6[%c0_17, %c0_18], %19 {strides = array<i32>} : memref<8x512xbf16, #tpu.memory_space<vmem>>, vector<8x512xbf16>,
    } else {
    }
    return
  }
  func.func @transform_0(%arg0: i32, %arg1: i32, %arg2: i32) -> (i32, i32) {
    %c0_i32 = arith.constant 0 : i32
    return %arg1, %arg2 : i32, i32
  }
  func.func @transform_1(%arg0: i32, %arg1: i32, %arg2: i32) -> (i32, i32, i32, i32) {
    %c0_i32 = arith.constant 0 : i32
    %c0_i32_0 = arith.constant 0 : i32
    %c0_i32_1 = arith.constant 0 : i32
    return %arg0, %arg2, %c0_i32, %c0_i32_0 : i32, i32, i32, i32
  }
  func.func @transform_2(%arg0: i32, %arg1: i32, %arg2: i32) -> (i32, i32) {
    %c0_i32 = arith.constant 0 : i32
    %c0_i32_0 = arith.constant 0 : i32
    return %c0_i32, %arg0 : i32, i32
  }
  func.func @transform_3(%arg0: i32, %arg1: i32, %arg2: i32) -> (i32, i32) {
    %c0_i32 = arith.constant 0 : i32
    return %arg1, %arg0 : i32, i32
  }
}

module attributes {stable_mosaic.version = 11 : i64} {
  func.func @_linear_kernel(%arg0: i32, %arg1: i32, %arg2: i32, %arg3: memref<8x512xbf16, #tpu.memory_space<vmem>>, %arg4: memref<1x1x512x256xbf16, #tpu.memory_space<vmem>>, %arg5: memref<1x256xf32, #tpu.memory_space<vmem>>, %arg6: memref<8x256xbf16, #tpu.memory_space<vmem>>, %arg7: memref<8x256xf32, #tpu.memory_space<vmem>>) attributes {dimension_semantics = [#tpu.dimension_semantics<parallel>, #tpu.dimension_semantics<parallel>, #tpu.dimension_semantics<arbitrary>], iteration_bounds = array<i64: 2, 1, 1>, scalar_prefetch = 0 : i64, scratch_operands = 1 : i64, tpu.core_type = #tpu.core_type<tc>, window_params = [{transform_indices = @transform_0, window_bounds = array<i64: 8, 512>}, {transform_indices = @transform_1, window_bounds = array<i64: 1, 1, 512, 256>}, {transform_indices = @transform_2, window_bounds = array<i64: 1, 256>}, {transform_indices = @transform_3, window_bounds = array<i64: 8, 256>}]} {
    %c0_i32 = arith.constant 0 : i32
    %0 = arith.cmpi eq, %arg2, %c0_i32 : i32
    %1 = arith.extui %0 : i1 to i32
    %c0_i32_0 = arith.constant 0 : i32
    %2 = arith.cmpi ne, %1, %c0_i32_0 : i32
    scf.if %2 {
      %cst_12 = arith.constant 0.000000e+00 : f32
      %13 = vector.broadcast %cst_12 : f32 to vector<8x256xf32>
      %c0_13 = arith.constant 0 : index
      %c0_14 = arith.constant 0 : index
      %14 = vector.load %arg7[%c0_13, %c0_14] : memref<8x256xf32, #tpu.memory_space<vmem>>, vector<8x256xf32>
      tpu.vector_store %arg7[%c0_13, %c0_14], %13 {strides = array<i32>} : memref<8x256xf32, #tpu.memory_space<vmem>>, vector<8x256xf32>,
    } else {
    }
    %c0 = arith.constant 0 : index
    %c0_1 = arith.constant 0 : index
    %3 = vector.load %arg7[%c0, %c0_1] : memref<8x256xf32, #tpu.memory_space<vmem>>, vector<8x256xf32>
    %c0_2 = arith.constant 0 : index
    %c0_3 = arith.constant 0 : index
    %4 = vector.load %arg3[%c0_2, %c0_3] : memref<8x512xbf16, #tpu.memory_space<vmem>>, vector<8x512xbf16>
    %c0_4 = arith.constant 0 : index
    %c0_5 = arith.constant 0 : index
    %c0_6 = arith.constant 0 : index
    %c0_7 = arith.constant 0 : index
    %5 = vector.load %arg4[%c0_4, %c0_5, %c0_6, %c0_7] : memref<1x1x512x256xbf16, #tpu.memory_space<vmem>>, vector<1x1x512x256xbf16>
    %6 = vector.shape_cast %5 : vector<1x1x512x256xbf16> to vector<512x256xbf16>
    %cst = arith.constant dense<0.000000e+00> : vector<8x256xf32>
    %7 = tpu.matmul %4, %6, %cst {dimension_numbers = #tpu.dot_dimension_numbers<[1], [0], [0], [1], [0, 0, 1, 1], [], []>} : vector<8x512xbf16>, vector<512x256xbf16>, vector<8x256xf32> -> vector<8x256xf32>
    %8 = arith.addf %3, %7 : vector<8x256xf32>
    %c0_8 = arith.constant 0 : index
    %c0_9 = arith.constant 0 : index
    %9 = vector.load %arg7[%c0_8, %c0_9] : memref<8x256xf32, #tpu.memory_space<vmem>>, vector<8x256xf32>
    tpu.vector_store %arg7[%c0_8, %c0_9], %8 {strides = array<i32>} : memref<8x256xf32, #tpu.memory_space<vmem>>, vector<8x256xf32>,
    %c0_i32_10 = arith.constant 0 : i32
    %10 = arith.cmpi eq, %arg2, %c0_i32_10 : i32
    %11 = arith.extui %10 : i1 to i32
    %c0_i32_11 = arith.constant 0 : i32
    %12 = arith.cmpi ne, %11, %c0_i32_11 : i32
    scf.if %12 {
      %c0_12 = arith.constant 0 : index
      %c0_13 = arith.constant 0 : index
      %13 = vector.load %arg7[%c0_12, %c0_13] : memref<8x256xf32, #tpu.memory_space<vmem>>, vector<8x256xf32>
      %c0_14 = arith.constant 0 : index
      %c0_15 = arith.constant 0 : index
      %14 = vector.load %arg5[%c0_14, %c0_15] : memref<1x256xf32, #tpu.memory_space<vmem>>, vector<1x256xf32>
      %15 = vector.broadcast %14 : vector<1x256xf32> to vector<8x256xf32>
      %16 = arith.addf %13, %15 : vector<8x256xf32>
      %cst_16 = arith.constant 0.000000e+00 : f32
      %17 = vector.broadcast %cst_16 : f32 to vector<8x256xf32>
      %18 = arith.maximumf %16, %17 : vector<8x256xf32>
      %19 = arith.truncf %18 : vector<8x256xf32> to vector<8x256xbf16>
      %c0_17 = arith.constant 0 : index
      %c0_18 = arith.constant 0 : index
      %20 = vector.load %arg6[%c0_17, %c0_18] : memref<8x256xbf16, #tpu.memory_space<vmem>>, vector<8x256xbf16>
      tpu.vector_store %arg6[%c0_17, %c0_18], %19 {strides = array<i32>} : memref<8x256xbf16, #tpu.memory_space<vmem>>, vector<8x256xbf16>,
    } else {
    }
    return
  }
  func.func @transform_0(%arg0: i32, %arg1: i32, %arg2: i32) -> (i32, i32) {
    %c0_i32 = arith.constant 0 : i32
    return %arg1, %arg2 : i32, i32
  }
  func.func @transform_1(%arg0: i32, %arg1: i32, %arg2: i32) -> (i32, i32, i32, i32) {
    %c0_i32 = arith.constant 0 : i32
    %c0_i32_0 = arith.constant 0 : i32
    %c0_i32_1 = arith.constant 0 : i32
    return %arg0, %arg2, %c0_i32, %c0_i32_0 : i32, i32, i32, i32
  }
  func.func @transform_2(%arg0: i32, %arg1: i32, %arg2: i32) -> (i32, i32) {
    %c0_i32 = arith.constant 0 : i32
    %c0_i32_0 = arith.constant 0 : i32
    return %c0_i32, %arg0 : i32, i32
  }
  func.func @transform_3(%arg0: i32, %arg1: i32, %arg2: i32) -> (i32, i32) {
    %c0_i32 = arith.constant 0 : i32
    return %arg1, %arg0 : i32, i32
  }
}

module attributes {stable_mosaic.version = 11 : i64} {
  func.func @_linear_kernel(%arg0: i32, %arg1: i32, %arg2: i32, %arg3: memref<8x1024xbf16, #tpu.memory_space<vmem>>, %arg4: memref<1x1x1024x768xbf16, #tpu.memory_space<vmem>>, %arg5: memref<1x768xf32, #tpu.memory_space<vmem>>, %arg6: memref<8x768xf32, #tpu.memory_space<vmem>>, %arg7: memref<8x768xf32, #tpu.memory_space<vmem>>) attributes {dimension_semantics = [#tpu.dimension_semantics<parallel>, #tpu.dimension_semantics<parallel>, #tpu.dimension_semantics<arbitrary>], iteration_bounds = array<i64: 2, 1, 1>, scalar_prefetch = 0 : i64, scratch_operands = 1 : i64, tpu.core_type = #tpu.core_type<tc>, window_params = [{transform_indices = @transform_0, window_bounds = array<i64: 8, 1024>}, {transform_indices = @transform_1, window_bounds = array<i64: 1, 1, 1024, 768>}, {transform_indices = @transform_2, window_bounds = array<i64: 1, 768>}, {transform_indices = @transform_3, window_bounds = array<i64: 8, 768>}]} {
    %c0_i32 = arith.constant 0 : i32
    %0 = arith.cmpi eq, %arg2, %c0_i32 : i32
    %1 = arith.extui %0 : i1 to i32
    %c0_i32_0 = arith.constant 0 : i32
    %2 = arith.cmpi ne, %1, %c0_i32_0 : i32
    scf.if %2 {
      %cst_12 = arith.constant 0.000000e+00 : f32
      %13 = vector.broadcast %cst_12 : f32 to vector<8x768xf32>
      %c0_13 = arith.constant 0 : index
      %c0_14 = arith.constant 0 : index
      %14 = vector.load %arg7[%c0_13, %c0_14] : memref<8x768xf32, #tpu.memory_space<vmem>>, vector<8x768xf32>
      tpu.vector_store %arg7[%c0_13, %c0_14], %13 {strides = array<i32>} : memref<8x768xf32, #tpu.memory_space<vmem>>, vector<8x768xf32>,
    } else {
    }
    %c0 = arith.constant 0 : index
    %c0_1 = arith.constant 0 : index
    %3 = vector.load %arg7[%c0, %c0_1] : memref<8x768xf32, #tpu.memory_space<vmem>>, vector<8x768xf32>
    %c0_2 = arith.constant 0 : index
    %c0_3 = arith.constant 0 : index
    %4 = vector.load %arg3[%c0_2, %c0_3] : memref<8x1024xbf16, #tpu.memory_space<vmem>>, vector<8x1024xbf16>
    %c0_4 = arith.constant 0 : index
    %c0_5 = arith.constant 0 : index
    %c0_6 = arith.constant 0 : index
    %c0_7 = arith.constant 0 : index
    %5 = vector.load %arg4[%c0_4, %c0_5, %c0_6, %c0_7] : memref<1x1x1024x768xbf16, #tpu.memory_space<vmem>>, vector<1x1x1024x768xbf16>
    %6 = vector.shape_cast %5 : vector<1x1x1024x768xbf16> to vector<1024x768xbf16>
    %cst = arith.constant dense<0.000000e+00> : vector<8x768xf32>
    %7 = tpu.matmul %4, %6, %cst {dimension_numbers = #tpu.dot_dimension_numbers<[1], [0], [0], [1], [0, 0, 1, 1], [], []>} : vector<8x1024xbf16>, vector<1024x768xbf16>, vector<8x768xf32> -> vector<8x768xf32>
    %8 = arith.addf %3, %7 : vector<8x768xf32>
    %c0_8 = arith.constant 0 : index
    %c0_9 = arith.constant 0 : index
    %9 = vector.load %arg7[%c0_8, %c0_9] : memref<8x768xf32, #tpu.memory_space<vmem>>, vector<8x768xf32>
    tpu.vector_store %arg7[%c0_8, %c0_9], %8 {strides = array<i32>} : memref<8x768xf32, #tpu.memory_space<vmem>>, vector<8x768xf32>,
    %c0_i32_10 = arith.constant 0 : i32
    %10 = arith.cmpi eq, %arg2, %c0_i32_10 : i32
    %11 = arith.extui %10 : i1 to i32
    %c0_i32_11 = arith.constant 0 : i32
    %12 = arith.cmpi ne, %11, %c0_i32_11 : i32
    scf.if %12 {
      %c0_12 = arith.constant 0 : index
      %c0_13 = arith.constant 0 : index
      %13 = vector.load %arg7[%c0_12, %c0_13] : memref<8x768xf32, #tpu.memory_space<vmem>>, vector<8x768xf32>
      %c0_14 = arith.constant 0 : index
      %c0_15 = arith.constant 0 : index
      %14 = vector.load %arg5[%c0_14, %c0_15] : memref<1x768xf32, #tpu.memory_space<vmem>>, vector<1x768xf32>
      %15 = vector.broadcast %14 : vector<1x768xf32> to vector<8x768xf32>
      %16 = arith.addf %13, %15 : vector<8x768xf32>
      %17 = math.tanh %16 : vector<8x768xf32>
      %c0_16 = arith.constant 0 : index
      %c0_17 = arith.constant 0 : index
      %18 = vector.load %arg6[%c0_16, %c0_17] : memref<8x768xf32, #tpu.memory_space<vmem>>, vector<8x768xf32>
      tpu.vector_store %arg6[%c0_16, %c0_17], %17 {strides = array<i32>} : memref<8x768xf32, #tpu.memory_space<vmem>>, vector<8x768xf32>,
    } else {
    }
    return
  }
  func.func @transform_0(%arg0: i32, %arg1: i32, %arg2: i32) -> (i32, i32) {
    %c0_i32 = arith.constant 0 : i32
    return %arg1, %arg2 : i32, i32
  }
  func.func @transform_1(%arg0: i32, %arg1: i32, %arg2: i32) -> (i32, i32, i32, i32) {
    %c0_i32 = arith.constant 0 : i32
    %c0_i32_0 = arith.constant 0 : i32
    %c0_i32_1 = arith.constant 0 : i32
    return %arg0, %arg2, %c0_i32, %c0_i32_0 : i32, i32, i32, i32
  }
  func.func @transform_2(%arg0: i32, %arg1: i32, %arg2: i32) -> (i32, i32) {
    %c0_i32 = arith.constant 0 : i32
    %c0_i32_0 = arith.constant 0 : i32
    return %c0_i32, %arg0 : i32, i32
  }
  func.func @transform_3(%arg0: i32, %arg1: i32, %arg2: i32) -> (i32, i32) {
    %c0_i32 = arith.constant 0 : i32
    return %arg1, %arg0 : i32, i32
  }
}

</mosaic_0001>

<llo_original>
// kernel: autoencoder_forward.8
$region0: #{autoencoder_forward.8}
  #allocation0 [shape = 'u32[]', space=smem, size = 0x4, offset = 0x4, fixed_abs, tag = 'smem constant byte address 0x4 - core index']
  #allocation1 [shape = 'u32[144,128]{1,0:T(1,128)}', space=vmem, size = 0x12000, scoped, tag = 'internal scratch']
  #allocation2 [shape = 'f32[8,256]{1,0:T(8,128)}', space=vmem, size = 0x2000, scoped, tag = 'scratch operand']
  %s0 = inlined_call_operand.vmem [shape: bf16[8,512], index: 0, kind: input, shape index: {}]
  %s1 = inlined_call_operand.vmem [shape: bf16[2,1,512,256], index: 1, kind: input, shape index: {}]
  %s2 = inlined_call_operand.vmem [shape: f32[1,512], index: 2, kind: input, shape index: {}]
  %s3 = inlined_call_operand.vmem [shape: bf16[8,512], index: 3, kind: output, shape index: {}]
  %s4 = sld [smem:[#allocation0]]
  $region53: #{autoencoder_forward.8} parent=0
    _
  %s6 = ssub.s32 1, %s4
  %s7 = scalar_select 0, %s6, %s4
  loop: start=0, step=1, limit=4
  $region2: #{autoencoder_forward.8} parent=0 // loop_pre_header
    _
  $region3: #{autoencoder_forward.8} parent=0 // loop_header
    %s9 = sphi 0, %s13
    %p10 = scmp.ge.s32.totalorder %s9, 4
    %s16 = sphi 0, %s35
    %s17 = sphi 0, %s31
    %s18 = sphi 0, %s27
    %s19 = sphi 0, %s16
    %s20 = sphi 0, %s17
    %s21 = sphi 0, %s18
    %s22 = sphi 0, %s19
    %s23 = sphi 0, %s20
    %s24 = sphi 0, %s21
    %s40 = sphi 0, %s42
    %s43 = sphi 0, %s40
    %s44 = sphi 0, %s43
    %s60 = sphi 0, %s44
    %s68 = sphi 0, %s70
    %s71 = sphi 0, %s68
    %s72 = sphi 0, %s71
    %s88 = sphi 0, %s72
    %s94 = sphi 0, %s96
    %s97 = sphi 0, %s94
    %s98 = sphi 0, %s97
    %s114 = sphi 0, %s98
    %s122 = sphi 0, %s124
    %s125 = sphi 0, %s122
    %s126 = sphi 0, %s125
    %s142 = sphi 0, %s126
  $region4: #{autoencoder_forward.8} parent=0 // loop_header_branch
    %12 = sbr.rel (%p10) target = $region8
  $region5: #{autoencoder_forward.8} parent=0 // loop_body
    %s14 = ssub.s32 %s9, 1
    %s15 = ssub.s32 %s9, 2
    %s25 = sadd.s32 1, %s18
    %p26 = scmp.ge.s32.totalorder %s25, 1
    %s27 = scalar_select %p26, 0, %s25
    %s28 = sadd.s32 1, %s17
    %s29 = scalar_select %p26, %s28, %s17
    %p30 = scmp.ge.s32.totalorder %s29, 1
    %s31 = scalar_select %p30, 0, %s29
    %s32 = sadd.s32 1, %s16
    %s33 = scalar_select %p30, %s32, %s16
    %p34 = scmp.ge.s32.totalorder %s33, 2
    %s35 = scalar_select %p34, 0, %s33
    %s36 = ssub.s32 %s17, %s31
    %s37 = ssub.s32 %s18, %s27
    %s38 = sor.u32 %s36, %s37
    %p39 = scmp.eq.s32.totalorder %s38, 0
    %s41 = sadd.s32 %s40, 1
    %s42 = scalar_select %p39, %s40, %s41
    %p45 = pneg %p39
    %p46 = scmp.eq.s32.totalorder %s9, 1
    %p47 = por %p45, %p46
    %p48 = scmp.ne.s32.totalorder %s40, %s43
    %p49 = scmp.eq.s32.totalorder %s9, 0
    %p50 = por %p48, %p49
    %p51 = scmp.ne.s32.totalorder %s40, %s43
    %p52 = scmp.eq.s32.totalorder %s14, 1
    %p53 = por %p51, %p52
    %p54 = scmp.ne.s32.totalorder %s43, %s44
    %p55 = scmp.eq.s32.totalorder %s14, 0
    %p56 = por %p54, %p55
    %p57 = scmp.ne.s32.totalorder %s43, %s44
    %p58 = scmp.eq.s32.totalorder %s15, 1
    %p59 = por %p57, %p58
    %p61 = scmp.ne.s32.totalorder %s44, %s60
    %p62 = scmp.eq.s32.totalorder %s15, 0
    %p63 = por %p61, %p62
    %s64 = ssub.s32 %s16, %s35
    %s65 = ssub.s32 %s18, %s27
    %s66 = sor.u32 %s64, %s65
    %p67 = scmp.eq.s32.totalorder %s66, 0
    %s69 = sadd.s32 %s68, 1
    %s70 = scalar_select %p67, %s68, %s69
    %p73 = pneg %p67
    %p74 = scmp.eq.s32.totalorder %s9, 1
    %p75 = por %p73, %p74
    %p76 = scmp.ne.s32.totalorder %s68, %s71
    %p77 = scmp.eq.s32.totalorder %s9, 0
    %p78 = por %p76, %p77
    %p79 = scmp.ne.s32.totalorder %s68, %s71
    %p80 = scmp.eq.s32.totalorder %s14, 1
    %p81 = por %p79, %p80
    %p82 = scmp.ne.s32.totalorder %s71, %s72
    %p83 = scmp.eq.s32.totalorder %s14, 0
    %p84 = por %p82, %p83
    %p85 = scmp.ne.s32.totalorder %s71, %s72
    %p86 = scmp.eq.s32.totalorder %s15, 1
    %p87 = por %p85, %p86
    %p89 = scmp.ne.s32.totalorder %s72, %s88
    %p90 = scmp.eq.s32.totalorder %s15, 0
    %p91 = por %p89, %p90
    %s92 = ssub.s32 %s16, %s35
    %p93 = scmp.eq.s32.totalorder %s92, 0
    %s95 = sadd.s32 %s94, 1
    %s96 = scalar_select %p93, %s94, %s95
    %p99 = pneg %p93
    %p100 = scmp.eq.s32.totalorder %s9, 1
    %p101 = por %p99, %p100
    %p102 = scmp.ne.s32.totalorder %s94, %s97
    %p103 = scmp.eq.s32.totalorder %s9, 0
    %p104 = por %p102, %p103
    %p105 = scmp.ne.s32.totalorder %s94, %s97
    %p106 = scmp.eq.s32.totalorder %s14, 1
    %p107 = por %p105, %p106
    %p108 = scmp.ne.s32.totalorder %s97, %s98
    %p109 = scmp.eq.s32.totalorder %s14, 0
    %p110 = por %p108, %p109
    %p111 = scmp.ne.s32.totalorder %s97, %s98
    %p112 = scmp.eq.s32.totalorder %s15, 1
    %p113 = por %p111, %p112
    %p115 = scmp.ne.s32.totalorder %s98, %s114
    %p116 = scmp.eq.s32.totalorder %s15, 0
    %p117 = por %p115, %p116
    %s118 = ssub.s32 %s17, %s31
    %s119 = ssub.s32 %s16, %s35
    %s120 = sor.u32 %s118, %s119
    %p121 = scmp.eq.s32.totalorder %s120, 0
    %s123 = sadd.s32 %s122, 1
    %s124 = scalar_select %p121, %s122, %s123
    %p127 = pneg %p121
    %p128 = scmp.eq.s32.totalorder %s9, 1
    %p129 = por %p127, %p128
    %p130 = scmp.ne.s32.totalorder %s122, %s125
    %p131 = scmp.eq.s32.totalorder %s9, 0
    %p132 = por %p130, %p131
    %p133 = scmp.ne.s32.totalorder %s122, %s125
    %p134 = scmp.eq.s32.totalorder %s14, 1
    %p135 = por %p133, %p134
    %p136 = scmp.ne.s32.totalorder %s125, %s126
    %p137 = scmp.eq.s32.totalorder %s14, 0
    %p138 = por %p136, %p137
    %p139 = scmp.ne.s32.totalorder %s125, %s126
    %p140 = scmp.eq.s32.totalorder %s15, 1
    %p141 = por %p139, %p140
    %p143 = scmp.ne.s32.totalorder %s126, %s142
    %p144 = scmp.eq.s32.totalorder %s15, 0
    %p145 = por %p143, %p144
    %p146 = scmp.le.s32.totalorder 1, %s9
    %p147 = scmp.lt.s32.totalorder %s9, 3
    %p148 = pnand %p146, %p147
    %p149 = pneg %p148
    // Predicated region
    $region9: #{autoencoder_forward.8} parent=5 // pred_check
      _
    $region10: #{autoencoder_forward.8} parent=5 // pred_check_branch
      %151 = sbr.rel (%p148) target = $region12
    $region11: #{autoencoder_forward.8} parent=5 // pred_region
      %s152 = ssub.s32 %s9, 1
      // Predicated region
      $region13: #{autoencoder_forward.8} parent=11 // pred_check
        %p153 = pneg %p56
      $region14: #{autoencoder_forward.8} parent=11 // pred_check_branch
        %155 = sbr.rel (%p153) target = $region16
      $region15: #{autoencoder_forward.8} parent=11 // pred_region
        %s156 = smul.u32 4, %s21
        %p157 = scmp.lt.s32.totalorder %s20, 0
        %s158 = scalar_select %p157, %s20, 0
        %p159 = scmp.lt.s32.totalorder %s156, 3
        %s160 = scalar_select %p159, %s156, 3
        %s161 = smul.addr %s158, 4
        %s162 = sadd.s32 %s160, %s161
        %s163 = smul.addr %s162, 4
        %s164 = scalar_lea.vmem %s0, %s163
        %s165 = smul.u32 4, %s21
      $region16: #{autoencoder_forward.8} parent=11 // pred_fallthru
        _
    $region12: #{autoencoder_forward.8} parent=5 // pred_fallthru
      _
    %p166 = scmp.lt.s32.totalorder %s9, 2
    // Predicated region
    $region17: #{autoencoder_forward.8} parent=5 // pred_check
      %p167 = pneg %p166
    $region18: #{autoencoder_forward.8} parent=5 // pred_check_branch
      %169 = sbr.rel (%p167) target = $region20
    $region19: #{autoencoder_forward.8} parent=5 // pred_region
      // Predicated region
      $region21: #{autoencoder_forward.8} parent=19 // pred_check
        %p170 = pneg %p78
      $region22: #{autoencoder_forward.8} parent=19 // pred_check_branch
        %172 = sbr.rel (%p170) target = $region24
      $region23: #{autoencoder_forward.8} parent=19 // pred_region
        %p173 = scmp.lt.s32.totalorder %s16, 1
        %s174 = scalar_select %p173, %s16, 1
        %p175 = scmp.lt.s32.totalorder %s18, 0
        %s176 = scalar_select %p175, %s18, 0
        %s177 = smul.addr %s176, 128
        %s178 = smul.addr %s174, 128
        %s179 = sadd.s32 %s177, %s178
        %s180 = smul.addr %s179, 4
        %s181 = scalar_lea.vmem %s1, %s180
      $region24: #{autoencoder_forward.8} parent=19 // pred_fallthru
        _
      // Predicated region
      $region25: #{autoencoder_forward.8} parent=19 // pred_check
        %p182 = pneg %p104
      $region26: #{autoencoder_forward.8} parent=19 // pred_check_branch
        %184 = sbr.rel (%p182) target = $region28
      $region27: #{autoencoder_forward.8} parent=19 // pred_region
        %s185 = smul.u32 2, %s16
        %p186 = scmp.lt.s32.totalorder %s185, 3
        %s187 = scalar_select %p186, %s185, 3
        %s188 = scalar_lea.vmem %s2, %s187
        %s189 = smul.u32 2, %s16
      $region28: #{autoencoder_forward.8} parent=19 // pred_fallthru
        _
    $region20: #{autoencoder_forward.8} parent=5 // pred_fallthru
      _
    %p190 = scmp.le.s32.totalorder 1, %s9
    %p191 = scmp.lt.s32.totalorder %s9, 3
    %p192 = pnand %p190, %p191
    %p193 = pneg %p192
    // Predicated region
    $region29: #{autoencoder_forward.8} parent=5 // pred_check
      _
    $region30: #{autoencoder_forward.8} parent=5 // pred_check_branch
      %195 = sbr.rel (%p192) target = $region32
    $region31: #{autoencoder_forward.8} parent=5 // pred_region
      %s196 = ssub.s32 %s9, 1
      %s197 = smul.u32 4, %s21
      %p198 = scmp.lt.s32.totalorder %s20, 0
      %s199 = scalar_select %p198, %s20, 0
      %p200 = scmp.lt.s32.totalorder %s197, 3
      %s201 = scalar_select %p200, %s197, 3
      %s202 = smul.addr %s199, 4
      %s203 = sadd.s32 %s201, %s202
      %s204 = smul.addr %s203, 4
      %s205 = scalar_lea.vmem %s0, %s204
      %p206 = pneg %p56
      %p207 = pneg %p53
      %p208 = scmp.lt.s32.totalorder %s19, 1
      %s209 = scalar_select %p208, %s19, 1
      %p210 = scmp.lt.s32.totalorder %s21, 0
      %s211 = scalar_select %p210, %s21, 0
      %s212 = smul.addr %s211, 128
      %s213 = smul.addr %s209, 128
      %s214 = sadd.s32 %s212, %s213
      %s215 = smul.addr %s214, 4
      %s216 = scalar_lea.vmem %s1, %s215
      %p217 = pneg %p84
      %p218 = pneg %p81
      %s219 = smul.u32 2, %s19
      %p220 = scmp.lt.s32.totalorder %s219, 3
      %s221 = scalar_select %p220, %s219, 3
      %s222 = scalar_lea.vmem %s2, %s221
      %p223 = pneg %p110
      %p224 = pneg %p107
      %p225 = pneg %p138
      %p226 = pneg %p135
      %s227 = smul.u32 2, %s19
      %p228 = scmp.lt.s32.totalorder %s20, 0
      %s229 = scalar_select %p228, %s20, 0
      %p230 = scmp.lt.s32.totalorder %s227, 3
      %s231 = scalar_select %p230, %s227, 3
      %s232 = smul.addr %s229, 4
      %s233 = sadd.s32 %s231, %s232
      %s234 = smul.addr %s233, 4
      %s235 = scalar_lea.vmem %s3, %s234
      %s236 = smul.u32 4, %s21
      %p237 = scmp.lt.s32.totalorder %s20, 0
      %s238 = scalar_select %p237, %s20, 0
      %p239 = scmp.lt.s32.totalorder %s236, 3
      %s240 = scalar_select %p239, %s236, 3
      %s241 = smul.addr %s238, 4
      %s242 = sadd.s32 %s240, %s241
      %s243 = smul.addr %s242, 4
      %s244 = scalar_lea.vmem %s0, %s243
      %s245 = smul.u32 4, %s21
      %p246 = scmp.lt.s32.totalorder %s19, 1
      %s247 = scalar_select %p246, %s19, 1
      %p248 = scmp.lt.s32.totalorder %s21, 0
      %s249 = scalar_select %p248, %s21, 0
      %s250 = smul.addr %s249, 128
      %s251 = smul.addr %s247, 128
      %s252 = sadd.s32 %s250, %s251
      %s253 = smul.addr %s252, 4
      %s254 = scalar_lea.vmem %s1, %s253
      %s255 = smul.u32 2, %s19
      %p256 = scmp.lt.s32.totalorder %s255, 3
      %s257 = scalar_select %p256, %s255, 3
      %s258 = scalar_lea.vmem %s2, %s257
      %s259 = smul.u32 2, %s19
      %s260 = smul.u32 2, %s19
      %p261 = scmp.lt.s32.totalorder %s20, 0
      %s262 = scalar_select %p261, %s20, 0
      %p263 = scmp.lt.s32.totalorder %s260, 3
      %s264 = scalar_select %p263, %s260, 3
      %s265 = smul.addr %s262, 4
      %s266 = sadd.s32 %s264, %s265
      %s267 = smul.addr %s266, 4
      %s268 = scalar_lea.vmem %s3, %s267
      %s269 = smul.u32 2, %s19
      %p270 = scmp.eq.s32.totalorder %s21, 0
      // Predicated region
      $region33: #{autoencoder_forward.8} parent=31 // pred_check
        %p271 = pneg %p270
      $region34: #{autoencoder_forward.8} parent=31 // pred_check_branch
        %273 = sbr.rel (%p271) target = $region36
      $region35: #{autoencoder_forward.8} parent=31 // pred_region
        %274 = vst [vmem:[#allocation2] sm:$0xff] 0.0
        %275 = vst [vmem:[#allocation2 + $0x8] sm:$0xff] 0.0
      $region36: #{autoencoder_forward.8} parent=31 // pred_fallthru
        _
      %v276 = vld [vmem:[#allocation2] sm:$0xff]
      %v277 = vld [vmem:[#allocation2 + $0x8] sm:$0xff]
      %v278 = vld [vmem:[%s244] sm:$0xff]
      %v279 = vld [vmem:[%s244 + $0x8] sm:$0xff]
      %v280 = vld [vmem:[%s254] sm:$0xff]
      %v281 = vld [vmem:[%s254 + $0x8] sm:$0xff]
      %v282 = vld [vmem:[%s254 + $0x10] sm:$0xff]
      %v283 = vld [vmem:[%s254 + $0x18] sm:$0xff]
      %v284 = vld [vmem:[%s254 + $0x20] sm:$0xff]
      %v285 = vld [vmem:[%s254 + $0x28] sm:$0xff]
      %v286 = vld [vmem:[%s254 + $0x30] sm:$0xff]
      %v287 = vld [vmem:[%s254 + $0x38] sm:$0xff]
      %v288 = vld [vmem:[%s254 + $0x40] sm:$0xff]
      %v289 = vld [vmem:[%s254 + $0x48] sm:$0xff]
      %v290 = vld [vmem:[%s254 + $0x50] sm:$0xff]
      %v291 = vld [vmem:[%s254 + $0x58] sm:$0xff]
      %v292 = vld [vmem:[%s254 + $0x60] sm:$0xff]
      %v293 = vld [vmem:[%s254 + $0x68] sm:$0xff]
      %v294 = vld [vmem:[%s254 + $0x70] sm:$0xff]
      %v295 = vld [vmem:[%s254 + $0x78] sm:$0xff]
      %v296 = vld [vmem:[%s254 + $0x80] sm:$0xff]
      %v297 = vld [vmem:[%s254 + $0x88] sm:$0xff]
      %v298 = vld [vmem:[%s254 + $0x90] sm:$0xff]
      %v299 = vld [vmem:[%s254 + $0x98] sm:$0xff]
      %v300 = vld [vmem:[%s254 + $0xa0] sm:$0xff]
      %v301 = vld [vmem:[%s254 + $0xa8] sm:$0xff]
      %v302 = vld [vmem:[%s254 + $0xb0] sm:$0xff]
      %v303 = vld [vmem:[%s254 + $0xb8] sm:$0xff]
      %v304 = vld [vmem:[%s254 + $0xc0] sm:$0xff]
      %v305 = vld [vmem:[%s254 + $0xc8] sm:$0xff]
      %v306 = vld [vmem:[%s254 + $0xd0] sm:$0xff]
      %v307 = vld [vmem:[%s254 + $0xd8] sm:$0xff]
      %v308 = vld [vmem:[%s254 + $0xe0] sm:$0xff]
      %v309 = vld [vmem:[%s254 + $0xe8] sm:$0xff]
      %v310 = vld [vmem:[%s254 + $0xf0] sm:$0xff]
      %v311 = vld [vmem:[%s254 + $0xf8] sm:$0xff]
      %v312 = vld [vmem:[%s254 + $0x100] sm:$0xff]
      %v313 = vld [vmem:[%s254 + $0x108] sm:$0xff]
      %v314 = vld [vmem:[%s254 + $0x110] sm:$0xff]
      %v315 = vld [vmem:[%s254 + $0x118] sm:$0xff]
      %v316 = vld [vmem:[%s254 + $0x120] sm:$0xff]
      %v317 = vld [vmem:[%s254 + $0x128] sm:$0xff]
      %v318 = vld [vmem:[%s254 + $0x130] sm:$0xff]
      %v319 = vld [vmem:[%s254 + $0x138] sm:$0xff]
      %v320 = vld [vmem:[%s254 + $0x140] sm:$0xff]
      %v321 = vld [vmem:[%s254 + $0x148] sm:$0xff]
      %v322 = vld [vmem:[%s254 + $0x150] sm:$0xff]
      %v323 = vld [vmem:[%s254 + $0x158] sm:$0xff]
      %v324 = vld [vmem:[%s254 + $0x160] sm:$0xff]
      %v325 = vld [vmem:[%s254 + $0x168] sm:$0xff]
      %v326 = vld [vmem:[%s254 + $0x170] sm:$0xff]
      %v327 = vld [vmem:[%s254 + $0x178] sm:$0xff]
      %v328 = vld [vmem:[%s254 + $0x180] sm:$0xff]
      %v329 = vld [vmem:[%s254 + $0x188] sm:$0xff]
      %v330 = vld [vmem:[%s254 + $0x190] sm:$0xff]
      %v331 = vld [vmem:[%s254 + $0x198] sm:$0xff]
      %v332 = vld [vmem:[%s254 + $0x1a0] sm:$0xff]
      %v333 = vld [vmem:[%s254 + $0x1a8] sm:$0xff]
      %v334 = vld [vmem:[%s254 + $0x1b0] sm:$0xff]
      %v335 = vld [vmem:[%s254 + $0x1b8] sm:$0xff]
      %v336 = vld [vmem:[%s254 + $0x1c0] sm:$0xff]
      %v337 = vld [vmem:[%s254 + $0x1c8] sm:$0xff]
      %v338 = vld [vmem:[%s254 + $0x1d0] sm:$0xff]
      %v339 = vld [vmem:[%s254 + $0x1d8] sm:$0xff]
      %v340 = vld [vmem:[%s254 + $0x1e0] sm:$0xff]
      %v341 = vld [vmem:[%s254 + $0x1e8] sm:$0xff]
      %v342 = vld [vmem:[%s254 + $0x1f0] sm:$0xff]
      %v343 = vld [vmem:[%s254 + $0x1f8] sm:$0xff]
      %v346 = vunpack.c.l.b16 %v278
      %v347 = vunpack.c.h.b16 %v278
      %v348 = vunpack.c.l.b16 %v279
      %v349 = vunpack.c.h.b16 %v279
      %v350 = vpack.c.b16 %v346, %v346
      %v351 = vpack.c.b16 %v347, %v347
      %v352 = vpack.c.b16 %v348, %v348
      %v353 = vpack.c.b16 %v349, %v349
      %v422 = vunpack.c.l.b16 %v280
      %v423 = vunpack.c.h.b16 %v280
      %v424 = vunpack.c.l.b16 %v281
      %v425 = vunpack.c.h.b16 %v281
      %v426 = vunpack.c.l.b16 %v282
      %v427 = vunpack.c.h.b16 %v282
      %v428 = vunpack.c.l.b16 %v283
      %v429 = vunpack.c.h.b16 %v283
      %v430 = vunpack.c.l.b16 %v284
      %v431 = vunpack.c.h.b16 %v284
      %v432 = vunpack.c.l.b16 %v285
      %v433 = vunpack.c.h.b16 %v285
      %v434 = vunpack.c.l.b16 %v286
      %v435 = vunpack.c.h.b16 %v286
      %v436 = vunpack.c.l.b16 %v287
      %v437 = vunpack.c.h.b16 %v287
      %v438 = vunpack.c.l.b16 %v288
      %v439 = vunpack.c.h.b16 %v288
      %v440 = vunpack.c.l.b16 %v289
      %v441 = vunpack.c.h.b16 %v289
      %v442 = vunpack.c.l.b16 %v290
      %v443 = vunpack.c.h.b16 %v290
      %v444 = vunpack.c.l.b16 %v291
      %v445 = vunpack.c.h.b16 %v291
      %v446 = vunpack.c.l.b16 %v292
      %v447 = vunpack.c.h.b16 %v292
      %v448 = vunpack.c.l.b16 %v293
      %v449 = vunpack.c.h.b16 %v293
      %v450 = vunpack.c.l.b16 %v294
      %v451 = vunpack.c.h.b16 %v294
      %v452 = vunpack.c.l.b16 %v295
      %v453 = vunpack.c.h.b16 %v295
      %v454 = vunpack.c.l.b16 %v296
      %v455 = vunpack.c.h.b16 %v296
      %v456 = vunpack.c.l.b16 %v297
      %v457 = vunpack.c.h.b16 %v297
      %v458 = vunpack.c.l.b16 %v298
      %v459 = vunpack.c.h.b16 %v298
      %v460 = vunpack.c.l.b16 %v299
      %v461 = vunpack.c.h.b16 %v299
      %v462 = vunpack.c.l.b16 %v300
      %v463 = vunpack.c.h.b16 %v300
      %v464 = vunpack.c.l.b16 %v301
      %v465 = vunpack.c.h.b16 %v301
      %v466 = vunpack.c.l.b16 %v302
      %v467 = vunpack.c.h.b16 %v302
      %v468 = vunpack.c.l.b16 %v303
      %v469 = vunpack.c.h.b16 %v303
      %v470 = vunpack.c.l.b16 %v304
      %v471 = vunpack.c.h.b16 %v304
      %v472 = vunpack.c.l.b16 %v305
      %v473 = vunpack.c.h.b16 %v305
      %v474 = vunpack.c.l.b16 %v306
      %v475 = vunpack.c.h.b16 %v306
      %v476 = vunpack.c.l.b16 %v307
      %v477 = vunpack.c.h.b16 %v307
      %v478 = vunpack.c.l.b16 %v308
      %v479 = vunpack.c.h.b16 %v308
      %v480 = vunpack.c.l.b16 %v309
      %v481 = vunpack.c.h.b16 %v309
      %v482 = vunpack.c.l.b16 %v310
      %v483 = vunpack.c.h.b16 %v310
      %v484 = vunpack.c.l.b16 %v311
      %v485 = vunpack.c.h.b16 %v311
      %v486 = vunpack.c.l.b16 %v312
      %v487 = vunpack.c.h.b16 %v312
      %v488 = vunpack.c.l.b16 %v313
      %v489 = vunpack.c.h.b16 %v313
      %v490 = vunpack.c.l.b16 %v314
      %v491 = vunpack.c.h.b16 %v314
      %v492 = vunpack.c.l.b16 %v315
      %v493 = vunpack.c.h.b16 %v315
      %v494 = vunpack.c.l.b16 %v316
      %v495 = vunpack.c.h.b16 %v316
      %v496 = vunpack.c.l.b16 %v317
      %v497 = vunpack.c.h.b16 %v317
      %v498 = vunpack.c.l.b16 %v318
      %v499 = vunpack.c.h.b16 %v318
      %v500 = vunpack.c.l.b16 %v319
      %v501 = vunpack.c.h.b16 %v319
      %v502 = vunpack.c.l.b16 %v320
      %v503 = vunpack.c.h.b16 %v320
      %v504 = vunpack.c.l.b16 %v321
      %v505 = vunpack.c.h.b16 %v321
      %v506 = vunpack.c.l.b16 %v322
      %v507 = vunpack.c.h.b16 %v322
      %v508 = vunpack.c.l.b16 %v323
      %v509 = vunpack.c.h.b16 %v323
      %v510 = vunpack.c.l.b16 %v324
      %v511 = vunpack.c.h.b16 %v324
      %v512 = vunpack.c.l.b16 %v325
      %v513 = vunpack.c.h.b16 %v325
      %v514 = vunpack.c.l.b16 %v326
      %v515 = vunpack.c.h.b16 %v326
      %v516 = vunpack.c.l.b16 %v327
      %v517 = vunpack.c.h.b16 %v327
      %v518 = vunpack.c.l.b16 %v328
      %v519 = vunpack.c.h.b16 %v328
      %v520 = vunpack.c.l.b16 %v329
      %v521 = vunpack.c.h.b16 %v329
      %v522 = vunpack.c.l.b16 %v330
      %v523 = vunpack.c.h.b16 %v330
      %v524 = vunpack.c.l.b16 %v331
      %v525 = vunpack.c.h.b16 %v331
      %v526 = vunpack.c.l.b16 %v332
      %v527 = vunpack.c.h.b16 %v332
      %v528 = vunpack.c.l.b16 %v333
      %v529 = vunpack.c.h.b16 %v333
      %v530 = vunpack.c.l.b16 %v334
      %v531 = vunpack.c.h.b16 %v334
      %v532 = vunpack.c.l.b16 %v335
      %v533 = vunpack.c.h.b16 %v335
      %v534 = vunpack.c.l.b16 %v336
      %v535 = vunpack.c.h.b16 %v336
      %v536 = vunpack.c.l.b16 %v337
      %v537 = vunpack.c.h.b16 %v337
      %v538 = vunpack.c.l.b16 %v338
      %v539 = vunpack.c.h.b16 %v338
      %v540 = vunpack.c.l.b16 %v339
      %v541 = vunpack.c.h.b16 %v339
      %v542 = vunpack.c.l.b16 %v340
      %v543 = vunpack.c.h.b16 %v340
      %v544 = vunpack.c.l.b16 %v341
      %v545 = vunpack.c.h.b16 %v341
      %v546 = vunpack.c.l.b16 %v342
      %v547 = vunpack.c.h.b16 %v342
      %v548 = vunpack.c.l.b16 %v343
      %v549 = vunpack.c.h.b16 %v343
      %v550 = vpack.c.b16 %v424, %v422
      %v551 = vpack.c.b16 %v425, %v423
      %v552 = vpack.c.b16 %v428, %v426
      %v553 = vpack.c.b16 %v429, %v427
      %v554 = vpack.c.b16 %v432, %v430
      %v555 = vpack.c.b16 %v433, %v431
      %v556 = vpack.c.b16 %v436, %v434
      %v557 = vpack.c.b16 %v437, %v435
      %v558 = vpack.c.b16 %v440, %v438
      %v559 = vpack.c.b16 %v441, %v439
      %v560 = vpack.c.b16 %v444, %v442
      %v561 = vpack.c.b16 %v445, %v443
      %v562 = vpack.c.b16 %v448, %v446
      %v563 = vpack.c.b16 %v449, %v447
      %v564 = vpack.c.b16 %v452, %v450
      %v565 = vpack.c.b16 %v453, %v451
      %v566 = vpack.c.b16 %v456, %v454
      %v567 = vpack.c.b16 %v457, %v455
      %v568 = vpack.c.b16 %v460, %v458
      %v569 = vpack.c.b16 %v461, %v459
      %v570 = vpack.c.b16 %v464, %v462
      %v571 = vpack.c.b16 %v465, %v463
      %v572 = vpack.c.b16 %v468, %v466
      %v573 = vpack.c.b16 %v469, %v467
      %v574 = vpack.c.b16 %v472, %v470
      %v575 = vpack.c.b16 %v473, %v471
      %v576 = vpack.c.b16 %v476, %v474
      %v577 = vpack.c.b16 %v477, %v475
      %v578 = vpack.c.b16 %v480, %v478
      %v579 = vpack.c.b16 %v481, %v479
      %v580 = vpack.c.b16 %v484, %v482
      %v581 = vpack.c.b16 %v485, %v483
      %v582 = vpack.c.b16 %v488, %v486
      %v583 = vpack.c.b16 %v489, %v487
      %v584 = vpack.c.b16 %v492, %v490
      %v585 = vpack.c.b16 %v493, %v491
      %v586 = vpack.c.b16 %v496, %v494
      %v587 = vpack.c.b16 %v497, %v495
      %v588 = vpack.c.b16 %v500, %v498
      %v589 = vpack.c.b16 %v501, %v499
      %v590 = vpack.c.b16 %v504, %v502
      %v591 = vpack.c.b16 %v505, %v503
      %v592 = vpack.c.b16 %v508, %v506
      %v593 = vpack.c.b16 %v509, %v507
      %v594 = vpack.c.b16 %v512, %v510
      %v595 = vpack.c.b16 %v513, %v511
      %v596 = vpack.c.b16 %v516, %v514
      %v597 = vpack.c.b16 %v517, %v515
      %v598 = vpack.c.b16 %v520, %v518
      %v599 = vpack.c.b16 %v521, %v519
      %v600 = vpack.c.b16 %v524, %v522
      %v601 = vpack.c.b16 %v525, %v523
      %v602 = vpack.c.b16 %v528, %v526
      %v603 = vpack.c.b16 %v529, %v527
      %v604 = vpack.c.b16 %v532, %v530
      %v605 = vpack.c.b16 %v533, %v531
      %v606 = vpack.c.b16 %v536, %v534
      %v607 = vpack.c.b16 %v537, %v535
      %v608 = vpack.c.b16 %v540, %v538
      %v609 = vpack.c.b16 %v541, %v539
      %v610 = vpack.c.b16 %v544, %v542
      %v611 = vpack.c.b16 %v545, %v543
      %v612 = vpack.c.b16 %v548, %v546
      %v613 = vpack.c.b16 %v549, %v547
      %678 = vmatprep.subr.bf16.mxu0 %v565
      %679 = vmatpush1.bf16.msra.mxu0 %v564
      %680 = vmatprep.subr.bf16.mxu0 %v563
      %681 = vmatpush1.bf16.msra.mxu0 %v562
      %682 = vmatprep.subr.bf16.mxu0 %v561
      %683 = vmatpush1.bf16.msra.mxu0 %v560
      %684 = vmatprep.subr.bf16.mxu0 %v559
      %685 = vmatpush1.bf16.msra.mxu0 %v558
      %686 = vmatprep.subr.bf16.mxu0 %v557
      %687 = vmatpush1.bf16.msra.mxu0 %v556
      %688 = vmatprep.subr.bf16.mxu0 %v555
      %689 = vmatpush1.bf16.msra.mxu0 %v554
      %690 = vmatprep.subr.bf16.mxu0 %v553
      %691 = vmatpush1.bf16.msra.mxu0 %v552
      %692 = vmatprep.subr.bf16.mxu0 %v551
      %693 = vmatpush1.bf16.msra.mxu0 %v550
      %694 = vmatprep.subr.bf16.mxu0 %v581
      %695 = vmatpush2.bf16.msra.mxu0 %v580
      %696 = vmatprep.subr.bf16.mxu0 %v579
      %697 = vmatpush2.bf16.msra.mxu0 %v578
      %698 = vmatprep.subr.bf16.mxu0 %v577
      %699 = vmatpush2.bf16.msra.mxu0 %v576
      %700 = vmatprep.subr.bf16.mxu0 %v575
      %701 = vmatpush2.bf16.msra.mxu0 %v574
      %702 = vmatprep.subr.bf16.mxu0 %v573
      %703 = vmatpush2.bf16.msra.mxu0 %v572
      %704 = vmatprep.subr.bf16.mxu0 %v571
      %705 = vmatpush2.bf16.msra.mxu0 %v570
      %706 = vmatprep.subr.bf16.mxu0 %v569
      %707 = vmatpush2.bf16.msra.mxu0 %v568
      %708 = vmatprep.subr.bf16.mxu0 %v567
      %709 = vmatpush2.bf16.msra.mxu0 %v566
      %710 = vmatprep.mubr.bf16.mxu0 %v351
      %711 = vmatmul.mubr.bf16.gmra.mxu0 %v350
      %v712 = vpop.f32.mrf.mxu0
      %v713 = vadd.f32 0.0, %v712
      %v714 = vpop.f32.mrf.mxu0
      %v715 = vadd.f32 0.0, %v714
      %v716 = vpop.f32.mrf.mxu0
      %v717 = vpop.f32.mrf.mxu0
      %718 = vdwg.mxu0
      %719 = vmatprep.subr.bf16.mxu0 %v597
      %720 = vmatpush1.bf16.msra.mxu0 %v596
      %721 = vmatprep.subr.bf16.mxu0 %v595
      %722 = vmatpush1.bf16.msra.mxu0 %v594
      %723 = vmatprep.subr.bf16.mxu0 %v593
      %724 = vmatpush1.bf16.msra.mxu0 %v592
      %725 = vmatprep.subr.bf16.mxu0 %v591
      %726 = vmatpush1.bf16.msra.mxu0 %v590
      %727 = vmatprep.subr.bf16.mxu0 %v589
      %728 = vmatpush1.bf16.msra.mxu0 %v588
      %729 = vmatprep.subr.bf16.mxu0 %v587
      %730 = vmatpush1.bf16.msra.mxu0 %v586
      %731 = vmatprep.subr.bf16.mxu0 %v585
      %732 = vmatpush1.bf16.msra.mxu0 %v584
      %733 = vmatprep.subr.bf16.mxu0 %v583
      %734 = vmatpush1.bf16.msra.mxu0 %v582
      %735 = vmatprep.subr.bf16.mxu0 %v613
      %736 = vmatpush2.bf16.msra.mxu0 %v612
      %737 = vmatprep.subr.bf16.mxu0 %v611
      %738 = vmatpush2.bf16.msra.mxu0 %v610
      %739 = vmatprep.subr.bf16.mxu0 %v609
      %740 = vmatpush2.bf16.msra.mxu0 %v608
      %741 = vmatprep.subr.bf16.mxu0 %v607
      %742 = vmatpush2.bf16.msra.mxu0 %v606
      %743 = vmatprep.subr.bf16.mxu0 %v605
      %744 = vmatpush2.bf16.msra.mxu0 %v604
      %745 = vmatprep.subr.bf16.mxu0 %v603
      %746 = vmatpush2.bf16.msra.mxu0 %v602
      %747 = vmatprep.subr.bf16.mxu0 %v601
      %748 = vmatpush2.bf16.msra.mxu0 %v600
      %749 = vmatprep.subr.bf16.mxu0 %v599
      %750 = vmatpush2.bf16.msra.mxu0 %v598
      %751 = vmatprep.mubr.bf16.mxu0 %v353
      %752 = vmatmul.mubr.bf16.gmra.mxu0 %v352
      %v753 = vpop.f32.mrf.mxu0
      %v754 = vadd.f32 %v713, %v753
      %v755 = vpop.f32.mrf.mxu0
      %v756 = vadd.f32 %v715, %v755
      %v757 = vpop.f32.mrf.mxu0
      %v758 = vpop.f32.mrf.mxu0
      %759 = vdwg.mxu0
      %v760 = vadd.f32 %v276, %v754
      %v761 = vadd.f32 %v277, %v756
      %762 = vst [vmem:[#allocation2] sm:$0xff] %v760
      %763 = vst [vmem:[#allocation2 + $0x8] sm:$0xff] %v761
      // Predicated region
      $region37: #{autoencoder_forward.8} parent=31 // pred_check
        %p764 = pneg %p270
      $region38: #{autoencoder_forward.8} parent=31 // pred_check_branch
        %766 = sbr.rel (%p764) target = $region40
      $region39: #{autoencoder_forward.8} parent=31 // pred_region
        %v767 = vld [vmem:[#allocation2] sm:$0xff]
        %v768 = vld [vmem:[#allocation2 + $0x8] sm:$0xff]
        %v769 = vld [vmem:[%s258] sm:$0x3]
        %v771 = vlaneseq
        %v772 = vshrl.u32 %v771, 7
        %v773 = vsub.s32 0, %v772
        %v774 = vrot.slane %v769, %v773
        %v775 = vlaneseq
        %v776 = vshrl.u32 %v775, 7
        %v777 = vsub.s32 1, %v776
        %v778 = vrot.slane %v769, %v777
        %v781 = vadd.f32 %v767, %v774
        %v782 = vadd.f32 %v768, %v778
        %v783 = vmax.f32 %v781, 0.0
        %v784 = vmax.f32 %v782, 0.0
        %v785 = vpack.c.bf16 %v783, %v783
        %v786 = vpack.c.bf16 %v784, %v784
        %v789 = vunpack.c.l.b16 %v785
        %v790 = vunpack.c.l.b16 %v786
        %v791 = vpack.c.b16 %v790, %v789
        %793 = vst [vmem:[%s268] sm:$0xff] %v791
      $region40: #{autoencoder_forward.8} parent=31 // pred_fallthru
        _
      %s794 = smul.u32 2, %s19
      %p795 = scmp.lt.s32.totalorder %s20, 0
      %s796 = scalar_select %p795, %s20, 0
      %p797 = scmp.lt.s32.totalorder %s794, 3
      %s798 = scalar_select %p797, %s794, 3
      %s799 = smul.addr %s796, 4
      %s800 = sadd.s32 %s798, %s799
      %s801 = smul.addr %s800, 4
      %s802 = scalar_lea.vmem %s3, %s801
      // Predicated region
      $region41: #{autoencoder_forward.8} parent=31 // pred_check
        %p803 = pneg %p135
      $region42: #{autoencoder_forward.8} parent=31 // pred_check_branch
        %805 = sbr.rel (%p803) target = $region44
      $region43: #{autoencoder_forward.8} parent=31 // pred_region
        %s806 = smul.u32 2, %s19
      $region44: #{autoencoder_forward.8} parent=31 // pred_fallthru
        _
    $region32: #{autoencoder_forward.8} parent=5 // pred_fallthru
      _
    %p807 = scmp.le.s32.totalorder 2, %s9
    // Predicated region
    $region45: #{autoencoder_forward.8} parent=5 // pred_check
      %p808 = pneg %p807
    $region46: #{autoencoder_forward.8} parent=5 // pred_check_branch
      %810 = sbr.rel (%p808) target = $region48
    $region47: #{autoencoder_forward.8} parent=5 // pred_region
      %s811 = ssub.s32 %s9, 2
      // Predicated region
      $region49: #{autoencoder_forward.8} parent=47 // pred_check
        %p812 = pneg %p141
      $region50: #{autoencoder_forward.8} parent=47 // pred_check_branch
        %814 = sbr.rel (%p812) target = $region52
      $region51: #{autoencoder_forward.8} parent=47 // pred_region
        %s815 = smul.u32 2, %s22
        %p816 = scmp.lt.s32.totalorder %s23, 0
        %s817 = scalar_select %p816, %s23, 0
        %p818 = scmp.lt.s32.totalorder %s815, 3
        %s819 = scalar_select %p818, %s815, 3
        %s820 = smul.addr %s817, 4
        %s821 = sadd.s32 %s819, %s820
        %s822 = smul.addr %s821, 4
        %s823 = scalar_lea.vmem %s3, %s822
      $region52: #{autoencoder_forward.8} parent=47 // pred_fallthru
        _
    $region48: #{autoencoder_forward.8} parent=5 // pred_fallthru
      _
  $region6: #{autoencoder_forward.8} parent=0 // loop_footer
    %s13 = sadd.s32 1, %s9
  $region7: #{autoencoder_forward.8} parent=0 // loop_footer_branch
    %8 = sbr.rel target = $region3
  $region8: #{autoencoder_forward.8} parent=0 // loop_exit
    _

// kernel: autoencoder_forward.7
$region0: #{autoencoder_forward.7}
  #allocation0 [shape = 'u32[]', space=smem, size = 0x4, offset = 0x4, fixed_abs, tag = 'smem constant byte address 0x4 - core index']
  #allocation1 [shape = 'u32[144,128]{1,0:T(1,128)}', space=vmem, size = 0x12000, scoped, tag = 'internal scratch']
  #allocation2 [shape = 'f32[8,256]{1,0:T(8,128)}', space=vmem, size = 0x2000, scoped, tag = 'scratch operand']
  %s0 = inlined_call_operand.vmem [shape: bf16[8,1024], index: 0, kind: input, shape index: {}]
  %s1 = inlined_call_operand.vmem [shape: bf16[2,1,1024,256], index: 1, kind: input, shape index: {}]
  %s2 = inlined_call_operand.vmem [shape: f32[1,512], index: 2, kind: input, shape index: {}]
  %s3 = inlined_call_operand.vmem [shape: bf16[8,512], index: 3, kind: output, shape index: {}]
  %s4 = sld [smem:[#allocation0]]
  $region53: #{autoencoder_forward.7} parent=0
    _
  %s6 = ssub.s32 1, %s4
  %s7 = scalar_select 0, %s6, %s4
  loop: start=0, step=1, limit=4
  $region2: #{autoencoder_forward.7} parent=0 // loop_pre_header
    _
  $region3: #{autoencoder_forward.7} parent=0 // loop_header
    %s9 = sphi 0, %s13
    %p10 = scmp.ge.s32.totalorder %s9, 4
    %s16 = sphi 0, %s35
    %s17 = sphi 0, %s31
    %s18 = sphi 0, %s27
    %s19 = sphi 0, %s16
    %s20 = sphi 0, %s17
    %s21 = sphi 0, %s18
    %s22 = sphi 0, %s19
    %s23 = sphi 0, %s20
    %s24 = sphi 0, %s21
    %s40 = sphi 0, %s42
    %s43 = sphi 0, %s40
    %s44 = sphi 0, %s43
    %s60 = sphi 0, %s44
    %s68 = sphi 0, %s70
    %s71 = sphi 0, %s68
    %s72 = sphi 0, %s71
    %s88 = sphi 0, %s72
    %s94 = sphi 0, %s96
    %s97 = sphi 0, %s94
    %s98 = sphi 0, %s97
    %s114 = sphi 0, %s98
    %s122 = sphi 0, %s124
    %s125 = sphi 0, %s122
    %s126 = sphi 0, %s125
    %s142 = sphi 0, %s126
  $region4: #{autoencoder_forward.7} parent=0 // loop_header_branch
    %12 = sbr.rel (%p10) target = $region8
  $region5: #{autoencoder_forward.7} parent=0 // loop_body
    %s14 = ssub.s32 %s9, 1
    %s15 = ssub.s32 %s9, 2
    %s25 = sadd.s32 1, %s18
    %p26 = scmp.ge.s32.totalorder %s25, 1
    %s27 = scalar_select %p26, 0, %s25
    %s28 = sadd.s32 1, %s17
    %s29 = scalar_select %p26, %s28, %s17
    %p30 = scmp.ge.s32.totalorder %s29, 1
    %s31 = scalar_select %p30, 0, %s29
    %s32 = sadd.s32 1, %s16
    %s33 = scalar_select %p30, %s32, %s16
    %p34 = scmp.ge.s32.totalorder %s33, 2
    %s35 = scalar_select %p34, 0, %s33
    %s36 = ssub.s32 %s17, %s31
    %s37 = ssub.s32 %s18, %s27
    %s38 = sor.u32 %s36, %s37
    %p39 = scmp.eq.s32.totalorder %s38, 0
    %s41 = sadd.s32 %s40, 1
    %s42 = scalar_select %p39, %s40, %s41
    %p45 = pneg %p39
    %p46 = scmp.eq.s32.totalorder %s9, 1
    %p47 = por %p45, %p46
    %p48 = scmp.ne.s32.totalorder %s40, %s43
    %p49 = scmp.eq.s32.totalorder %s9, 0
    %p50 = por %p48, %p49
    %p51 = scmp.ne.s32.totalorder %s40, %s43
    %p52 = scmp.eq.s32.totalorder %s14, 1
    %p53 = por %p51, %p52
    %p54 = scmp.ne.s32.totalorder %s43, %s44
    %p55 = scmp.eq.s32.totalorder %s14, 0
    %p56 = por %p54, %p55
    %p57 = scmp.ne.s32.totalorder %s43, %s44
    %p58 = scmp.eq.s32.totalorder %s15, 1
    %p59 = por %p57, %p58
    %p61 = scmp.ne.s32.totalorder %s44, %s60
    %p62 = scmp.eq.s32.totalorder %s15, 0
    %p63 = por %p61, %p62
    %s64 = ssub.s32 %s16, %s35
    %s65 = ssub.s32 %s18, %s27
    %s66 = sor.u32 %s64, %s65
    %p67 = scmp.eq.s32.totalorder %s66, 0
    %s69 = sadd.s32 %s68, 1
    %s70 = scalar_select %p67, %s68, %s69
    %p73 = pneg %p67
    %p74 = scmp.eq.s32.totalorder %s9, 1
    %p75 = por %p73, %p74
    %p76 = scmp.ne.s32.totalorder %s68, %s71
    %p77 = scmp.eq.s32.totalorder %s9, 0
    %p78 = por %p76, %p77
    %p79 = scmp.ne.s32.totalorder %s68, %s71
    %p80 = scmp.eq.s32.totalorder %s14, 1
    %p81 = por %p79, %p80
    %p82 = scmp.ne.s32.totalorder %s71, %s72
    %p83 = scmp.eq.s32.totalorder %s14, 0
    %p84 = por %p82, %p83
    %p85 = scmp.ne.s32.totalorder %s71, %s72
    %p86 = scmp.eq.s32.totalorder %s15, 1
    %p87 = por %p85, %p86
    %p89 = scmp.ne.s32.totalorder %s72, %s88
    %p90 = scmp.eq.s32.totalorder %s15, 0
    %p91 = por %p89, %p90
    %s92 = ssub.s32 %s16, %s35
    %p93 = scmp.eq.s32.totalorder %s92, 0
    %s95 = sadd.s32 %s94, 1
    %s96 = scalar_select %p93, %s94, %s95
    %p99 = pneg %p93
    %p100 = scmp.eq.s32.totalorder %s9, 1
    %p101 = por %p99, %p100
    %p102 = scmp.ne.s32.totalorder %s94, %s97
    %p103 = scmp.eq.s32.totalorder %s9, 0
    %p104 = por %p102, %p103
    %p105 = scmp.ne.s32.totalorder %s94, %s97
    %p106 = scmp.eq.s32.totalorder %s14, 1
    %p107 = por %p105, %p106
    %p108 = scmp.ne.s32.totalorder %s97, %s98
    %p109 = scmp.eq.s32.totalorder %s14, 0
    %p110 = por %p108, %p109
    %p111 = scmp.ne.s32.totalorder %s97, %s98
    %p112 = scmp.eq.s32.totalorder %s15, 1
    %p113 = por %p111, %p112
    %p115 = scmp.ne.s32.totalorder %s98, %s114
    %p116 = scmp.eq.s32.totalorder %s15, 0
    %p117 = por %p115, %p116
    %s118 = ssub.s32 %s17, %s31
    %s119 = ssub.s32 %s16, %s35
    %s120 = sor.u32 %s118, %s119
    %p121 = scmp.eq.s32.totalorder %s120, 0
    %s123 = sadd.s32 %s122, 1
    %s124 = scalar_select %p121, %s122, %s123
    %p127 = pneg %p121
    %p128 = scmp.eq.s32.totalorder %s9, 1
    %p129 = por %p127, %p128
    %p130 = scmp.ne.s32.totalorder %s122, %s125
    %p131 = scmp.eq.s32.totalorder %s9, 0
    %p132 = por %p130, %p131
    %p133 = scmp.ne.s32.totalorder %s122, %s125
    %p134 = scmp.eq.s32.totalorder %s14, 1
    %p135 = por %p133, %p134
    %p136 = scmp.ne.s32.totalorder %s125, %s126
    %p137 = scmp.eq.s32.totalorder %s14, 0
    %p138 = por %p136, %p137
    %p139 = scmp.ne.s32.totalorder %s125, %s126
    %p140 = scmp.eq.s32.totalorder %s15, 1
    %p141 = por %p139, %p140
    %p143 = scmp.ne.s32.totalorder %s126, %s142
    %p144 = scmp.eq.s32.totalorder %s15, 0
    %p145 = por %p143, %p144
    %p146 = scmp.le.s32.totalorder 1, %s9
    %p147 = scmp.lt.s32.totalorder %s9, 3
    %p148 = pnand %p146, %p147
    %p149 = pneg %p148
    // Predicated region
    $region9: #{autoencoder_forward.7} parent=5 // pred_check
      _
    $region10: #{autoencoder_forward.7} parent=5 // pred_check_branch
      %151 = sbr.rel (%p148) target = $region12
    $region11: #{autoencoder_forward.7} parent=5 // pred_region
      %s152 = ssub.s32 %s9, 1
      // Predicated region
      $region13: #{autoencoder_forward.7} parent=11 // pred_check
        %p153 = pneg %p56
      $region14: #{autoencoder_forward.7} parent=11 // pred_check_branch
        %155 = sbr.rel (%p153) target = $region16
      $region15: #{autoencoder_forward.7} parent=11 // pred_region
        %s156 = smul.u32 8, %s21
        %p157 = scmp.lt.s32.totalorder %s20, 0
        %s158 = scalar_select %p157, %s20, 0
        %p159 = scmp.lt.s32.totalorder %s156, 7
        %s160 = scalar_select %p159, %s156, 7
        %s161 = smul.addr %s158, 8
        %s162 = sadd.s32 %s160, %s161
        %s163 = smul.addr %s162, 4
        %s164 = scalar_lea.vmem %s0, %s163
        %s165 = smul.u32 8, %s21
      $region16: #{autoencoder_forward.7} parent=11 // pred_fallthru
        _
    $region12: #{autoencoder_forward.7} parent=5 // pred_fallthru
      _
    %p166 = scmp.lt.s32.totalorder %s9, 2
    // Predicated region
    $region17: #{autoencoder_forward.7} parent=5 // pred_check
      %p167 = pneg %p166
    $region18: #{autoencoder_forward.7} parent=5 // pred_check_branch
      %169 = sbr.rel (%p167) target = $region20
    $region19: #{autoencoder_forward.7} parent=5 // pred_region
      // Predicated region
      $region21: #{autoencoder_forward.7} parent=19 // pred_check
        %p170 = pneg %p78
      $region22: #{autoencoder_forward.7} parent=19 // pred_check_branch
        %172 = sbr.rel (%p170) target = $region24
      $region23: #{autoencoder_forward.7} parent=19 // pred_region
        %p173 = scmp.lt.s32.totalorder %s16, 1
        %s174 = scalar_select %p173, %s16, 1
        %p175 = scmp.lt.s32.totalorder %s18, 0
        %s176 = scalar_select %p175, %s18, 0
        %s177 = smul.addr %s176, 256
        %s178 = smul.addr %s174, 256
        %s179 = sadd.s32 %s177, %s178
        %s180 = smul.addr %s179, 4
        %s181 = scalar_lea.vmem %s1, %s180
      $region24: #{autoencoder_forward.7} parent=19 // pred_fallthru
        _
      // Predicated region
      $region25: #{autoencoder_forward.7} parent=19 // pred_check
        %p182 = pneg %p104
      $region26: #{autoencoder_forward.7} parent=19 // pred_check_branch
        %184 = sbr.rel (%p182) target = $region28
      $region27: #{autoencoder_forward.7} parent=19 // pred_region
        %s185 = smul.u32 2, %s16
        %p186 = scmp.lt.s32.totalorder %s185, 3
        %s187 = scalar_select %p186, %s185, 3
        %s188 = scalar_lea.vmem %s2, %s187
        %s189 = smul.u32 2, %s16
      $region28: #{autoencoder_forward.7} parent=19 // pred_fallthru
        _
    $region20: #{autoencoder_forward.7} parent=5 // pred_fallthru
      _
    %p190 = scmp.le.s32.totalorder 1, %s9
    %p191 = scmp.lt.s32.totalorder %s9, 3
    %p192 = pnand %p190, %p191
    %p193 = pneg %p192
    // Predicated region
    $region29: #{autoencoder_forward.7} parent=5 // pred_check
      _
    $region30: #{autoencoder_forward.7} parent=5 // pred_check_branch
      %195 = sbr.rel (%p192) target = $region32
    $region31: #{autoencoder_forward.7} parent=5 // pred_region
      %s196 = ssub.s32 %s9, 1
      %s197 = smul.u32 8, %s21
      %p198 = scmp.lt.s32.totalorder %s20, 0
      %s199 = scalar_select %p198, %s20, 0
      %p200 = scmp.lt.s32.totalorder %s197, 7
      %s201 = scalar_select %p200, %s197, 7
      %s202 = smul.addr %s199, 8
      %s203 = sadd.s32 %s201, %s202
      %s204 = smul.addr %s203, 4
      %s205 = scalar_lea.vmem %s0, %s204
      %p206 = pneg %p56
      %p207 = pneg %p53
      %p208 = scmp.lt.s32.totalorder %s19, 1
      %s209 = scalar_select %p208, %s19, 1
      %p210 = scmp.lt.s32.totalorder %s21, 0
      %s211 = scalar_select %p210, %s21, 0
      %s212 = smul.addr %s211, 256
      %s213 = smul.addr %s209, 256
      %s214 = sadd.s32 %s212, %s213
      %s215 = smul.addr %s214, 4
      %s216 = scalar_lea.vmem %s1, %s215
      %p217 = pneg %p84
      %p218 = pneg %p81
      %s219 = smul.u32 2, %s19
      %p220 = scmp.lt.s32.totalorder %s219, 3
      %s221 = scalar_select %p220, %s219, 3
      %s222 = scalar_lea.vmem %s2, %s221
      %p223 = pneg %p110
      %p224 = pneg %p107
      %p225 = pneg %p138
      %p226 = pneg %p135
      %s227 = smul.u32 2, %s19
      %p228 = scmp.lt.s32.totalorder %s20, 0
      %s229 = scalar_select %p228, %s20, 0
      %p230 = scmp.lt.s32.totalorder %s227, 3
      %s231 = scalar_select %p230, %s227, 3
      %s232 = smul.addr %s229, 4
      %s233 = sadd.s32 %s231, %s232
      %s234 = smul.addr %s233, 4
      %s235 = scalar_lea.vmem %s3, %s234
      %s236 = smul.u32 8, %s21
      %p237 = scmp.lt.s32.totalorder %s20, 0
      %s238 = scalar_select %p237, %s20, 0
      %p239 = scmp.lt.s32.totalorder %s236, 7
      %s240 = scalar_select %p239, %s236, 7
      %s241 = smul.addr %s238, 8
      %s242 = sadd.s32 %s240, %s241
      %s243 = smul.addr %s242, 4
      %s244 = scalar_lea.vmem %s0, %s243
      %s245 = smul.u32 8, %s21
      %p246 = scmp.lt.s32.totalorder %s19, 1
      %s247 = scalar_select %p246, %s19, 1
      %p248 = scmp.lt.s32.totalorder %s21, 0
      %s249 = scalar_select %p248, %s21, 0
      %s250 = smul.addr %s249, 256
      %s251 = smul.addr %s247, 256
      %s252 = sadd.s32 %s250, %s251
      %s253 = smul.addr %s252, 4
      %s254 = scalar_lea.vmem %s1, %s253
      %s255 = smul.u32 2, %s19
      %p256 = scmp.lt.s32.totalorder %s255, 3
      %s257 = scalar_select %p256, %s255, 3
      %s258 = scalar_lea.vmem %s2, %s257
      %s259 = smul.u32 2, %s19
      %s260 = smul.u32 2, %s19
      %p261 = scmp.lt.s32.totalorder %s20, 0
      %s262 = scalar_select %p261, %s20, 0
      %p263 = scmp.lt.s32.totalorder %s260, 3
      %s264 = scalar_select %p263, %s260, 3
      %s265 = smul.addr %s262, 4
      %s266 = sadd.s32 %s264, %s265
      %s267 = smul.addr %s266, 4
      %s268 = scalar_lea.vmem %s3, %s267
      %s269 = smul.u32 2, %s19
      %p270 = scmp.eq.s32.totalorder %s21, 0
      // Predicated region
      $region33: #{autoencoder_forward.7} parent=31 // pred_check
        %p271 = pneg %p270
      $region34: #{autoencoder_forward.7} parent=31 // pred_check_branch
        %273 = sbr.rel (%p271) target = $region36
      $region35: #{autoencoder_forward.7} parent=31 // pred_region
        %274 = vst [vmem:[#allocation2] sm:$0xff] 0.0
        %275 = vst [vmem:[#allocation2 + $0x8] sm:$0xff] 0.0
      $region36: #{autoencoder_forward.7} parent=31 // pred_fallthru
        _
      %v276 = vld [vmem:[#allocation2] sm:$0xff]
      %v277 = vld [vmem:[#allocation2 + $0x8] sm:$0xff]
      %v278 = vld [vmem:[%s244] sm:$0xff]
      %v279 = vld [vmem:[%s244 + $0x8] sm:$0xff]
      %v280 = vld [vmem:[%s244 + $0x10] sm:$0xff]
      %v281 = vld [vmem:[%s244 + $0x18] sm:$0xff]
      %v282 = vld [vmem:[%s254] sm:$0xff]
      %v283 = vld [vmem:[%s254 + $0x8] sm:$0xff]
      %v284 = vld [vmem:[%s254 + $0x10] sm:$0xff]
      %v285 = vld [vmem:[%s254 + $0x18] sm:$0xff]
      %v286 = vld [vmem:[%s254 + $0x20] sm:$0xff]
      %v287 = vld [vmem:[%s254 + $0x28] sm:$0xff]
      %v288 = vld [vmem:[%s254 + $0x30] sm:$0xff]
      %v289 = vld [vmem:[%s254 + $0x38] sm:$0xff]
      %v290 = vld [vmem:[%s254 + $0x40] sm:$0xff]
      %v291 = vld [vmem:[%s254 + $0x48] sm:$0xff]
      %v292 = vld [vmem:[%s254 + $0x50] sm:$0xff]
      %v293 = vld [vmem:[%s254 + $0x58] sm:$0xff]
      %v294 = vld [vmem:[%s254 + $0x60] sm:$0xff]
      %v295 = vld [vmem:[%s254 + $0x68] sm:$0xff]
      %v296 = vld [vmem:[%s254 + $0x70] sm:$0xff]
      %v297 = vld [vmem:[%s254 + $0x78] sm:$0xff]
      %v298 = vld [vmem:[%s254 + $0x80] sm:$0xff]
      %v299 = vld [vmem:[%s254 + $0x88] sm:$0xff]
      %v300 = vld [vmem:[%s254 + $0x90] sm:$0xff]
      %v301 = vld [vmem:[%s254 + $0x98] sm:$0xff]
      %v302 = vld [vmem:[%s254 + $0xa0] sm:$0xff]
      %v303 = vld [vmem:[%s254 + $0xa8] sm:$0xff]
      %v304 = vld [vmem:[%s254 + $0xb0] sm:$0xff]
      %v305 = vld [vmem:[%s254 + $0xb8] sm:$0xff]
      %v306 = vld [vmem:[%s254 + $0xc0] sm:$0xff]
      %v307 = vld [vmem:[%s254 + $0xc8] sm:$0xff]
      %v308 = vld [vmem:[%s254 + $0xd0] sm:$0xff]
      %v309 = vld [vmem:[%s254 + $0xd8] sm:$0xff]
      %v310 = vld [vmem:[%s254 + $0xe0] sm:$0xff]
      %v311 = vld [vmem:[%s254 + $0xe8] sm:$0xff]
      %v312 = vld [vmem:[%s254 + $0xf0] sm:$0xff]
      %v313 = vld [vmem:[%s254 + $0xf8] sm:$0xff]
      %v314 = vld [vmem:[%s254 + $0x100] sm:$0xff]
      %v315 = vld [vmem:[%s254 + $0x108] sm:$0xff]
      %v316 = vld [vmem:[%s254 + $0x110] sm:$0xff]
      %v317 = vld [vmem:[%s254 + $0x118] sm:$0xff]
      %v318 = vld [vmem:[%s254 + $0x120] sm:$0xff]
      %v319 = vld [vmem:[%s254 + $0x128] sm:$0xff]
      %v320 = vld [vmem:[%s254 + $0x130] sm:$0xff]
      %v321 = vld [vmem:[%s254 + $0x138] sm:$0xff]
      %v322 = vld [vmem:[%s254 + $0x140] sm:$0xff]
      %v323 = vld [vmem:[%s254 + $0x148] sm:$0xff]
      %v324 = vld [vmem:[%s254 + $0x150] sm:$0xff]
      %v325 = vld [vmem:[%s254 + $0x158] sm:$0xff]
      %v326 = vld [vmem:[%s254 + $0x160] sm:$0xff]
      %v327 = vld [vmem:[%s254 + $0x168] sm:$0xff]
      %v328 = vld [vmem:[%s254 + $0x170] sm:$0xff]
      %v329 = vld [vmem:[%s254 + $0x178] sm:$0xff]
      %v330 = vld [vmem:[%s254 + $0x180] sm:$0xff]
      %v331 = vld [vmem:[%s254 + $0x188] sm:$0xff]
      %v332 = vld [vmem:[%s254 + $0x190] sm:$0xff]
      %v333 = vld [vmem:[%s254 + $0x198] sm:$0xff]
      %v334 = vld [vmem:[%s254 + $0x1a0] sm:$0xff]
      %v335 = vld [vmem:[%s254 + $0x1a8] sm:$0xff]
      %v336 = vld [vmem:[%s254 + $0x1b0] sm:$0xff]
      %v337 = vld [vmem:[%s254 + $0x1b8] sm:$0xff]
      %v338 = vld [vmem:[%s254 + $0x1c0] sm:$0xff]
      %v339 = vld [vmem:[%s254 + $0x1c8] sm:$0xff]
      %v340 = vld [vmem:[%s254 + $0x1d0] sm:$0xff]
      %v341 = vld [vmem:[%s254 + $0x1d8] sm:$0xff]
      %v342 = vld [vmem:[%s254 + $0x1e0] sm:$0xff]
      %v343 = vld [vmem:[%s254 + $0x1e8] sm:$0xff]
      %v344 = vld [vmem:[%s254 + $0x1f0] sm:$0xff]
      %v345 = vld [vmem:[%s254 + $0x1f8] sm:$0xff]
      %v346 = vld [vmem:[%s254 + $0x200] sm:$0xff]
      %v347 = vld [vmem:[%s254 + $0x208] sm:$0xff]
      %v348 = vld [vmem:[%s254 + $0x210] sm:$0xff]
      %v349 = vld [vmem:[%s254 + $0x218] sm:$0xff]
      %v350 = vld [vmem:[%s254 + $0x220] sm:$0xff]
      %v351 = vld [vmem:[%s254 + $0x228] sm:$0xff]
      %v352 = vld [vmem:[%s254 + $0x230] sm:$0xff]
      %v353 = vld [vmem:[%s254 + $0x238] sm:$0xff]
      %v354 = vld [vmem:[%s254 + $0x240] sm:$0xff]
      %v355 = vld [vmem:[%s254 + $0x248] sm:$0xff]
      %v356 = vld [vmem:[%s254 + $0x250] sm:$0xff]
      %v357 = vld [vmem:[%s254 + $0x258] sm:$0xff]
      %v358 = vld [vmem:[%s254 + $0x260] sm:$0xff]
      %v359 = vld [vmem:[%s254 + $0x268] sm:$0xff]
      %v360 = vld [vmem:[%s254 + $0x270] sm:$0xff]
      %v361 = vld [vmem:[%s254 + $0x278] sm:$0xff]
      %v362 = vld [vmem:[%s254 + $0x280] sm:$0xff]
      %v363 = vld [vmem:[%s254 + $0x288] sm:$0xff]
      %v364 = vld [vmem:[%s254 + $0x290] sm:$0xff]
      %v365 = vld [vmem:[%s254 + $0x298] sm:$0xff]
      %v366 = vld [vmem:[%s254 + $0x2a0] sm:$0xff]
      %v367 = vld [vmem:[%s254 + $0x2a8] sm:$0xff]
      %v368 = vld [vmem:[%s254 + $0x2b0] sm:$0xff]
      %v369 = vld [vmem:[%s254 + $0x2b8] sm:$0xff]
      %v370 = vld [vmem:[%s254 + $0x2c0] sm:$0xff]
      %v371 = vld [vmem:[%s254 + $0x2c8] sm:$0xff]
      %v372 = vld [vmem:[%s254 + $0x2d0] sm:$0xff]
      %v373 = vld [vmem:[%s254 + $0x2d8] sm:$0xff]
      %v374 = vld [vmem:[%s254 + $0x2e0] sm:$0xff]
      %v375 = vld [vmem:[%s254 + $0x2e8] sm:$0xff]
      %v376 = vld [vmem:[%s254 + $0x2f0] sm:$0xff]
      %v377 = vld [vmem:[%s254 + $0x2f8] sm:$0xff]
      %v378 = vld [vmem:[%s254 + $0x300] sm:$0xff]
      %v379 = vld [vmem:[%s254 + $0x308] sm:$0xff]
      %v380 = vld [vmem:[%s254 + $0x310] sm:$0xff]
      %v381 = vld [vmem:[%s254 + $0x318] sm:$0xff]
      %v382 = vld [vmem:[%s254 + $0x320] sm:$0xff]
      %v383 = vld [vmem:[%s254 + $0x328] sm:$0xff]
      %v384 = vld [vmem:[%s254 + $0x330] sm:$0xff]
      %v385 = vld [vmem:[%s254 + $0x338] sm:$0xff]
      %v386 = vld [vmem:[%s254 + $0x340] sm:$0xff]
      %v387 = vld [vmem:[%s254 + $0x348] sm:$0xff]
      %v388 = vld [vmem:[%s254 + $0x350] sm:$0xff]
      %v389 = vld [vmem:[%s254 + $0x358] sm:$0xff]
      %v390 = vld [vmem:[%s254 + $0x360] sm:$0xff]
      %v391 = vld [vmem:[%s254 + $0x368] sm:$0xff]
      %v392 = vld [vmem:[%s254 + $0x370] sm:$0xff]
      %v393 = vld [vmem:[%s254 + $0x378] sm:$0xff]
      %v394 = vld [vmem:[%s254 + $0x380] sm:$0xff]
      %v395 = vld [vmem:[%s254 + $0x388] sm:$0xff]
      %v396 = vld [vmem:[%s254 + $0x390] sm:$0xff]
      %v397 = vld [vmem:[%s254 + $0x398] sm:$0xff]
      %v398 = vld [vmem:[%s254 + $0x3a0] sm:$0xff]
      %v399 = vld [vmem:[%s254 + $0x3a8] sm:$0xff]
      %v400 = vld [vmem:[%s254 + $0x3b0] sm:$0xff]
      %v401 = vld [vmem:[%s254 + $0x3b8] sm:$0xff]
      %v402 = vld [vmem:[%s254 + $0x3c0] sm:$0xff]
      %v403 = vld [vmem:[%s254 + $0x3c8] sm:$0xff]
      %v404 = vld [vmem:[%s254 + $0x3d0] sm:$0xff]
      %v405 = vld [vmem:[%s254 + $0x3d8] sm:$0xff]
      %v406 = vld [vmem:[%s254 + $0x3e0] sm:$0xff]
      %v407 = vld [vmem:[%s254 + $0x3e8] sm:$0xff]
      %v408 = vld [vmem:[%s254 + $0x3f0] sm:$0xff]
      %v409 = vld [vmem:[%s254 + $0x3f8] sm:$0xff]
      %v414 = vunpack.c.l.b16 %v278
      %v415 = vunpack.c.h.b16 %v278
      %v416 = vunpack.c.l.b16 %v279
      %v417 = vunpack.c.h.b16 %v279
      %v418 = vunpack.c.l.b16 %v280
      %v419 = vunpack.c.h.b16 %v280
      %v420 = vunpack.c.l.b16 %v281
      %v421 = vunpack.c.h.b16 %v281
      %v422 = vpack.c.b16 %v414, %v414
      %v423 = vpack.c.b16 %v415, %v415
      %v424 = vpack.c.b16 %v416, %v416
      %v425 = vpack.c.b16 %v417, %v417
      %v426 = vpack.c.b16 %v418, %v418
      %v427 = vpack.c.b16 %v419, %v419
      %v428 = vpack.c.b16 %v420, %v420
      %v429 = vpack.c.b16 %v421, %v421
      %v566 = vunpack.c.l.b16 %v282
      %v567 = vunpack.c.h.b16 %v282
      %v568 = vunpack.c.l.b16 %v283
      %v569 = vunpack.c.h.b16 %v283
      %v570 = vunpack.c.l.b16 %v284
      %v571 = vunpack.c.h.b16 %v284
      %v572 = vunpack.c.l.b16 %v285
      %v573 = vunpack.c.h.b16 %v285
      %v574 = vunpack.c.l.b16 %v286
      %v575 = vunpack.c.h.b16 %v286
      %v576 = vunpack.c.l.b16 %v287
      %v577 = vunpack.c.h.b16 %v287
      %v578 = vunpack.c.l.b16 %v288
      %v579 = vunpack.c.h.b16 %v288
      %v580 = vunpack.c.l.b16 %v289
      %v581 = vunpack.c.h.b16 %v289
      %v582 = vunpack.c.l.b16 %v290
      %v583 = vunpack.c.h.b16 %v290
      %v584 = vunpack.c.l.b16 %v291
      %v585 = vunpack.c.h.b16 %v291
      %v586 = vunpack.c.l.b16 %v292
      %v587 = vunpack.c.h.b16 %v292
      %v588 = vunpack.c.l.b16 %v293
      %v589 = vunpack.c.h.b16 %v293
      %v590 = vunpack.c.l.b16 %v294
      %v591 = vunpack.c.h.b16 %v294
      %v592 = vunpack.c.l.b16 %v295
      %v593 = vunpack.c.h.b16 %v295
      %v594 = vunpack.c.l.b16 %v296
      %v595 = vunpack.c.h.b16 %v296
      %v596 = vunpack.c.l.b16 %v297
      %v597 = vunpack.c.h.b16 %v297
      %v598 = vunpack.c.l.b16 %v298
      %v599 = vunpack.c.h.b16 %v298
      %v600 = vunpack.c.l.b16 %v299
      %v601 = vunpack.c.h.b16 %v299
      %v602 = vunpack.c.l.b16 %v300
      %v603 = vunpack.c.h.b16 %v300
      %v604 = vunpack.c.l.b16 %v301
      %v605 = vunpack.c.h.b16 %v301
      %v606 = vunpack.c.l.b16 %v302
      %v607 = vunpack.c.h.b16 %v302
      %v608 = vunpack.c.l.b16 %v303
      %v609 = vunpack.c.h.b16 %v303
      %v610 = vunpack.c.l.b16 %v304
      %v611 = vunpack.c.h.b16 %v304
      %v612 = vunpack.c.l.b16 %v305
      %v613 = vunpack.c.h.b16 %v305
      %v614 = vunpack.c.l.b16 %v306
      %v615 = vunpack.c.h.b16 %v306
      %v616 = vunpack.c.l.b16 %v307
      %v617 = vunpack.c.h.b16 %v307
      %v618 = vunpack.c.l.b16 %v308
      %v619 = vunpack.c.h.b16 %v308
      %v620 = vunpack.c.l.b16 %v309
      %v621 = vunpack.c.h.b16 %v309
      %v622 = vunpack.c.l.b16 %v310
      %v623 = vunpack.c.h.b16 %v310
      %v624 = vunpack.c.l.b16 %v311
      %v625 = vunpack.c.h.b16 %v311
      %v626 = vunpack.c.l.b16 %v312
      %v627 = vunpack.c.h.b16 %v312
      %v628 = vunpack.c.l.b16 %v313
      %v629 = vunpack.c.h.b16 %v313
      %v630 = vunpack.c.l.b16 %v314
      %v631 = vunpack.c.h.b16 %v314
      %v632 = vunpack.c.l.b16 %v315
      %v633 = vunpack.c.h.b16 %v315
      %v634 = vunpack.c.l.b16 %v316
      %v635 = vunpack.c.h.b16 %v316
      %v636 = vunpack.c.l.b16 %v317
      %v637 = vunpack.c.h.b16 %v317
      %v638 = vunpack.c.l.b16 %v318
      %v639 = vunpack.c.h.b16 %v318
      %v640 = vunpack.c.l.b16 %v319
      %v641 = vunpack.c.h.b16 %v319
      %v642 = vunpack.c.l.b16 %v320
      %v643 = vunpack.c.h.b16 %v320
      %v644 = vunpack.c.l.b16 %v321
      %v645 = vunpack.c.h.b16 %v321
      %v646 = vunpack.c.l.b16 %v322
      %v647 = vunpack.c.h.b16 %v322
      %v648 = vunpack.c.l.b16 %v323
      %v649 = vunpack.c.h.b16 %v323
      %v650 = vunpack.c.l.b16 %v324
      %v651 = vunpack.c.h.b16 %v324
      %v652 = vunpack.c.l.b16 %v325
      %v653 = vunpack.c.h.b16 %v325
      %v654 = vunpack.c.l.b16 %v326
      %v655 = vunpack.c.h.b16 %v326
      %v656 = vunpack.c.l.b16 %v327
      %v657 = vunpack.c.h.b16 %v327
      %v658 = vunpack.c.l.b16 %v328
      %v659 = vunpack.c.h.b16 %v328
      %v660 = vunpack.c.l.b16 %v329
      %v661 = vunpack.c.h.b16 %v329
      %v662 = vunpack.c.l.b16 %v330
      %v663 = vunpack.c.h.b16 %v330
      %v664 = vunpack.c.l.b16 %v331
      %v665 = vunpack.c.h.b16 %v331
      %v666 = vunpack.c.l.b16 %v332
      %v667 = vunpack.c.h.b16 %v332
      %v668 = vunpack.c.l.b16 %v333
      %v669 = vunpack.c.h.b16 %v333
      %v670 = vunpack.c.l.b16 %v334
      %v671 = vunpack.c.h.b16 %v334
      %v672 = vunpack.c.l.b16 %v335
      %v673 = vunpack.c.h.b16 %v335
      %v674 = vunpack.c.l.b16 %v336
      %v675 = vunpack.c.h.b16 %v336
      %v676 = vunpack.c.l.b16 %v337
      %v677 = vunpack.c.h.b16 %v337
      %v678 = vunpack.c.l.b16 %v338
      %v679 = vunpack.c.h.b16 %v338
      %v680 = vunpack.c.l.b16 %v339
      %v681 = vunpack.c.h.b16 %v339
      %v682 = vunpack.c.l.b16 %v340
      %v683 = vunpack.c.h.b16 %v340
      %v684 = vunpack.c.l.b16 %v341
      %v685 = vunpack.c.h.b16 %v341
      %v686 = vunpack.c.l.b16 %v342
      %v687 = vunpack.c.h.b16 %v342
      %v688 = vunpack.c.l.b16 %v343
      %v689 = vunpack.c.h.b16 %v343
      %v690 = vunpack.c.l.b16 %v344
      %v691 = vunpack.c.h.b16 %v344
      %v692 = vunpack.c.l.b16 %v345
      %v693 = vunpack.c.h.b16 %v345
      %v694 = vunpack.c.l.b16 %v346
      %v695 = vunpack.c.h.b16 %v346
      %v696 = vunpack.c.l.b16 %v347
      %v697 = vunpack.c.h.b16 %v347
      %v698 = vunpack.c.l.b16 %v348
      %v699 = vunpack.c.h.b16 %v348
      %v700 = vunpack.c.l.b16 %v349
      %v701 = vunpack.c.h.b16 %v349
      %v702 = vunpack.c.l.b16 %v350
      %v703 = vunpack.c.h.b16 %v350
      %v704 = vunpack.c.l.b16 %v351
      %v705 = vunpack.c.h.b16 %v351
      %v706 = vunpack.c.l.b16 %v352
      %v707 = vunpack.c.h.b16 %v352
      %v708 = vunpack.c.l.b16 %v353
      %v709 = vunpack.c.h.b16 %v353
      %v710 = vunpack.c.l.b16 %v354
      %v711 = vunpack.c.h.b16 %v354
      %v712 = vunpack.c.l.b16 %v355
      %v713 = vunpack.c.h.b16 %v355
      %v714 = vunpack.c.l.b16 %v356
      %v715 = vunpack.c.h.b16 %v356
      %v716 = vunpack.c.l.b16 %v357
      %v717 = vunpack.c.h.b16 %v357
      %v718 = vunpack.c.l.b16 %v358
      %v719 = vunpack.c.h.b16 %v358
      %v720 = vunpack.c.l.b16 %v359
      %v721 = vunpack.c.h.b16 %v359
      %v722 = vunpack.c.l.b16 %v360
      %v723 = vunpack.c.h.b16 %v360
      %v724 = vunpack.c.l.b16 %v361
      %v725 = vunpack.c.h.b16 %v361
      %v726 = vunpack.c.l.b16 %v362
      %v727 = vunpack.c.h.b16 %v362
      %v728 = vunpack.c.l.b16 %v363
      %v729 = vunpack.c.h.b16 %v363
      %v730 = vunpack.c.l.b16 %v364
      %v731 = vunpack.c.h.b16 %v364
      %v732 = vunpack.c.l.b16 %v365
      %v733 = vunpack.c.h.b16 %v365
      %v734 = vunpack.c.l.b16 %v366
      %v735 = vunpack.c.h.b16 %v366
      %v736 = vunpack.c.l.b16 %v367
      %v737 = vunpack.c.h.b16 %v367
      %v738 = vunpack.c.l.b16 %v368
      %v739 = vunpack.c.h.b16 %v368
      %v740 = vunpack.c.l.b16 %v369
      %v741 = vunpack.c.h.b16 %v369
      %v742 = vunpack.c.l.b16 %v370
      %v743 = vunpack.c.h.b16 %v370
      %v744 = vunpack.c.l.b16 %v371
      %v745 = vunpack.c.h.b16 %v371
      %v746 = vunpack.c.l.b16 %v372
      %v747 = vunpack.c.h.b16 %v372
      %v748 = vunpack.c.l.b16 %v373
      %v749 = vunpack.c.h.b16 %v373
      %v750 = vunpack.c.l.b16 %v374
      %v751 = vunpack.c.h.b16 %v374
      %v752 = vunpack.c.l.b16 %v375
      %v753 = vunpack.c.h.b16 %v375
      %v754 = vunpack.c.l.b16 %v376
      %v755 = vunpack.c.h.b16 %v376
      %v756 = vunpack.c.l.b16 %v377
      %v757 = vunpack.c.h.b16 %v377
      %v758 = vunpack.c.l.b16 %v378
      %v759 = vunpack.c.h.b16 %v378
      %v760 = vunpack.c.l.b16 %v379
      %v761 = vunpack.c.h.b16 %v379
      %v762 = vunpack.c.l.b16 %v380
      %v763 = vunpack.c.h.b16 %v380
      %v764 = vunpack.c.l.b16 %v381
      %v765 = vunpack.c.h.b16 %v381
      %v766 = vunpack.c.l.b16 %v382
      %v767 = vunpack.c.h.b16 %v382
      %v768 = vunpack.c.l.b16 %v383
      %v769 = vunpack.c.h.b16 %v383
      %v770 = vunpack.c.l.b16 %v384
      %v771 = vunpack.c.h.b16 %v384
      %v772 = vunpack.c.l.b16 %v385
      %v773 = vunpack.c.h.b16 %v385
      %v774 = vunpack.c.l.b16 %v386
      %v775 = vunpack.c.h.b16 %v386
      %v776 = vunpack.c.l.b16 %v387
      %v777 = vunpack.c.h.b16 %v387
      %v778 = vunpack.c.l.b16 %v388
      %v779 = vunpack.c.h.b16 %v388
      %v780 = vunpack.c.l.b16 %v389
      %v781 = vunpack.c.h.b16 %v389
      %v782 = vunpack.c.l.b16 %v390
      %v783 = vunpack.c.h.b16 %v390
      %v784 = vunpack.c.l.b16 %v391
      %v785 = vunpack.c.h.b16 %v391
      %v786 = vunpack.c.l.b16 %v392
      %v787 = vunpack.c.h.b16 %v392
      %v788 = vunpack.c.l.b16 %v393
      %v789 = vunpack.c.h.b16 %v393
      %v790 = vunpack.c.l.b16 %v394
      %v791 = vunpack.c.h.b16 %v394
      %v792 = vunpack.c.l.b16 %v395
      %v793 = vunpack.c.h.b16 %v395
      %v794 = vunpack.c.l.b16 %v396
      %v795 = vunpack.c.h.b16 %v396
      %v796 = vunpack.c.l.b16 %v397
      %v797 = vunpack.c.h.b16 %v397
      %v798 = vunpack.c.l.b16 %v398
      %v799 = vunpack.c.h.b16 %v398
      %v800 = vunpack.c.l.b16 %v399
      %v801 = vunpack.c.h.b16 %v399
      %v802 = vunpack.c.l.b16 %v400
      %v803 = vunpack.c.h.b16 %v400
      %v804 = vunpack.c.l.b16 %v401
      %v805 = vunpack.c.h.b16 %v401
      %v806 = vunpack.c.l.b16 %v402
      %v807 = vunpack.c.h.b16 %v402
      %v808 = vunpack.c.l.b16 %v403
      %v809 = vunpack.c.h.b16 %v403
      %v810 = vunpack.c.l.b16 %v404
      %v811 = vunpack.c.h.b16 %v404
      %v812 = vunpack.c.l.b16 %v405
      %v813 = vunpack.c.h.b16 %v405
      %v814 = vunpack.c.l.b16 %v406
      %v815 = vunpack.c.h.b16 %v406
      %v816 = vunpack.c.l.b16 %v407
      %v817 = vunpack.c.h.b16 %v407
      %v818 = vunpack.c.l.b16 %v408
      %v819 = vunpack.c.h.b16 %v408
      %v820 = vunpack.c.l.b16 %v409
      %v821 = vunpack.c.h.b16 %v409
      %v822 = vpack.c.b16 %v568, %v566
      %v823 = vpack.c.b16 %v569, %v567
      %v824 = vpack.c.b16 %v572, %v570
      %v825 = vpack.c.b16 %v573, %v571
      %v826 = vpack.c.b16 %v576, %v574
      %v827 = vpack.c.b16 %v577, %v575
      %v828 = vpack.c.b16 %v580, %v578
      %v829 = vpack.c.b16 %v581, %v579
      %v830 = vpack.c.b16 %v584, %v582
      %v831 = vpack.c.b16 %v585, %v583
      %v832 = vpack.c.b16 %v588, %v586
      %v833 = vpack.c.b16 %v589, %v587
      %v834 = vpack.c.b16 %v592, %v590
      %v835 = vpack.c.b16 %v593, %v591
      %v836 = vpack.c.b16 %v596, %v594
      %v837 = vpack.c.b16 %v597, %v595
      %v838 = vpack.c.b16 %v600, %v598
      %v839 = vpack.c.b16 %v601, %v599
      %v840 = vpack.c.b16 %v604, %v602
      %v841 = vpack.c.b16 %v605, %v603
      %v842 = vpack.c.b16 %v608, %v606
      %v843 = vpack.c.b16 %v609, %v607
      %v844 = vpack.c.b16 %v612, %v610
      %v845 = vpack.c.b16 %v613, %v611
      %v846 = vpack.c.b16 %v616, %v614
      %v847 = vpack.c.b16 %v617, %v615
      %v848 = vpack.c.b16 %v620, %v618
      %v849 = vpack.c.b16 %v621, %v619
      %v850 = vpack.c.b16 %v624, %v622
      %v851 = vpack.c.b16 %v625, %v623
      %v852 = vpack.c.b16 %v628, %v626
      %v853 = vpack.c.b16 %v629, %v627
      %v854 = vpack.c.b16 %v632, %v630
      %v855 = vpack.c.b16 %v633, %v631
      %v856 = vpack.c.b16 %v636, %v634
      %v857 = vpack.c.b16 %v637, %v635
      %v858 = vpack.c.b16 %v640, %v638
      %v859 = vpack.c.b16 %v641, %v639
      %v860 = vpack.c.b16 %v644, %v642
      %v861 = vpack.c.b16 %v645, %v643
      %v862 = vpack.c.b16 %v648, %v646
      %v863 = vpack.c.b16 %v649, %v647
      %v864 = vpack.c.b16 %v652, %v650
      %v865 = vpack.c.b16 %v653, %v651
      %v866 = vpack.c.b16 %v656, %v654
      %v867 = vpack.c.b16 %v657, %v655
      %v868 = vpack.c.b16 %v660, %v658
      %v869 = vpack.c.b16 %v661, %v659
      %v870 = vpack.c.b16 %v664, %v662
      %v871 = vpack.c.b16 %v665, %v663
      %v872 = vpack.c.b16 %v668, %v666
      %v873 = vpack.c.b16 %v669, %v667
      %v874 = vpack.c.b16 %v672, %v670
      %v875 = vpack.c.b16 %v673, %v671
      %v876 = vpack.c.b16 %v676, %v674
      %v877 = vpack.c.b16 %v677, %v675
      %v878 = vpack.c.b16 %v680, %v678
      %v879 = vpack.c.b16 %v681, %v679
      %v880 = vpack.c.b16 %v684, %v682
      %v881 = vpack.c.b16 %v685, %v683
      %v882 = vpack.c.b16 %v688, %v686
      %v883 = vpack.c.b16 %v689, %v687
      %v884 = vpack.c.b16 %v692, %v690
      %v885 = vpack.c.b16 %v693, %v691
      %v886 = vpack.c.b16 %v696, %v694
      %v887 = vpack.c.b16 %v697, %v695
      %v888 = vpack.c.b16 %v700, %v698
      %v889 = vpack.c.b16 %v701, %v699
      %v890 = vpack.c.b16 %v704, %v702
      %v891 = vpack.c.b16 %v705, %v703
      %v892 = vpack.c.b16 %v708, %v706
      %v893 = vpack.c.b16 %v709, %v707
      %v894 = vpack.c.b16 %v712, %v710
      %v895 = vpack.c.b16 %v713, %v711
      %v896 = vpack.c.b16 %v716, %v714
      %v897 = vpack.c.b16 %v717, %v715
      %v898 = vpack.c.b16 %v720, %v718
      %v899 = vpack.c.b16 %v721, %v719
      %v900 = vpack.c.b16 %v724, %v722
      %v901 = vpack.c.b16 %v725, %v723
      %v902 = vpack.c.b16 %v728, %v726
      %v903 = vpack.c.b16 %v729, %v727
      %v904 = vpack.c.b16 %v732, %v730
      %v905 = vpack.c.b16 %v733, %v731
      %v906 = vpack.c.b16 %v736, %v734
      %v907 = vpack.c.b16 %v737, %v735
      %v908 = vpack.c.b16 %v740, %v738
      %v909 = vpack.c.b16 %v741, %v739
      %v910 = vpack.c.b16 %v744, %v742
      %v911 = vpack.c.b16 %v745, %v743
      %v912 = vpack.c.b16 %v748, %v746
      %v913 = vpack.c.b16 %v749, %v747
      %v914 = vpack.c.b16 %v752, %v750
      %v915 = vpack.c.b16 %v753, %v751
      %v916 = vpack.c.b16 %v756, %v754
      %v917 = vpack.c.b16 %v757, %v755
      %v918 = vpack.c.b16 %v760, %v758
      %v919 = vpack.c.b16 %v761, %v759
      %v920 = vpack.c.b16 %v764, %v762
      %v921 = vpack.c.b16 %v765, %v763
      %v922 = vpack.c.b16 %v768, %v766
      %v923 = vpack.c.b16 %v769, %v767
      %v924 = vpack.c.b16 %v772, %v770
      %v925 = vpack.c.b16 %v773, %v771
      %v926 = vpack.c.b16 %v776, %v774
      %v927 = vpack.c.b16 %v777, %v775
      %v928 = vpack.c.b16 %v780, %v778
      %v929 = vpack.c.b16 %v781, %v779
      %v930 = vpack.c.b16 %v784, %v782
      %v931 = vpack.c.b16 %v785, %v783
      %v932 = vpack.c.b16 %v788, %v786
      %v933 = vpack.c.b16 %v789, %v787
      %v934 = vpack.c.b16 %v792, %v790
      %v935 = vpack.c.b16 %v793, %v791
      %v936 = vpack.c.b16 %v796, %v794
      %v937 = vpack.c.b16 %v797, %v795
      %v938 = vpack.c.b16 %v800, %v798
      %v939 = vpack.c.b16 %v801, %v799
      %v940 = vpack.c.b16 %v804, %v802
      %v941 = vpack.c.b16 %v805, %v803
      %v942 = vpack.c.b16 %v808, %v806
      %v943 = vpack.c.b16 %v809, %v807
      %v944 = vpack.c.b16 %v812, %v810
      %v945 = vpack.c.b16 %v813, %v811
      %v946 = vpack.c.b16 %v816, %v814
      %v947 = vpack.c.b16 %v817, %v815
      %v948 = vpack.c.b16 %v820, %v818
      %v949 = vpack.c.b16 %v821, %v819
      %1078 = vmatprep.subr.bf16.mxu0 %v837
      %1079 = vmatpush1.bf16.msra.mxu0 %v836
      %1080 = vmatprep.subr.bf16.mxu0 %v835
      %1081 = vmatpush1.bf16.msra.mxu0 %v834
      %1082 = vmatprep.subr.bf16.mxu0 %v833
      %1083 = vmatpush1.bf16.msra.mxu0 %v832
      %1084 = vmatprep.subr.bf16.mxu0 %v831
      %1085 = vmatpush1.bf16.msra.mxu0 %v830
      %1086 = vmatprep.subr.bf16.mxu0 %v829
      %1087 = vmatpush1.bf16.msra.mxu0 %v828
      %1088 = vmatprep.subr.bf16.mxu0 %v827
      %1089 = vmatpush1.bf16.msra.mxu0 %v826
      %1090 = vmatprep.subr.bf16.mxu0 %v825
      %1091 = vmatpush1.bf16.msra.mxu0 %v824
      %1092 = vmatprep.subr.bf16.mxu0 %v823
      %1093 = vmatpush1.bf16.msra.mxu0 %v822
      %1094 = vmatprep.subr.bf16.mxu0 %v853
      %1095 = vmatpush2.bf16.msra.mxu0 %v852
      %1096 = vmatprep.subr.bf16.mxu0 %v851
      %1097 = vmatpush2.bf16.msra.mxu0 %v850
      %1098 = vmatprep.subr.bf16.mxu0 %v849
      %1099 = vmatpush2.bf16.msra.mxu0 %v848
      %1100 = vmatprep.subr.bf16.mxu0 %v847
      %1101 = vmatpush2.bf16.msra.mxu0 %v846
      %1102 = vmatprep.subr.bf16.mxu0 %v845
      %1103 = vmatpush2.bf16.msra.mxu0 %v844
      %1104 = vmatprep.subr.bf16.mxu0 %v843
      %1105 = vmatpush2.bf16.msra.mxu0 %v842
      %1106 = vmatprep.subr.bf16.mxu0 %v841
      %1107 = vmatpush2.bf16.msra.mxu0 %v840
      %1108 = vmatprep.subr.bf16.mxu0 %v839
      %1109 = vmatpush2.bf16.msra.mxu0 %v838
      %1110 = vmatprep.mubr.bf16.mxu0 %v423
      %1111 = vmatmul.mubr.bf16.gmra.mxu0 %v422
      %v1112 = vpop.f32.mrf.mxu0
      %v1113 = vadd.f32 0.0, %v1112
      %v1114 = vpop.f32.mrf.mxu0
      %v1115 = vadd.f32 0.0, %v1114
      %v1116 = vpop.f32.mrf.mxu0
      %v1117 = vpop.f32.mrf.mxu0
      %1118 = vdwg.mxu0
      %1119 = vmatprep.subr.bf16.mxu0 %v869
      %1120 = vmatpush1.bf16.msra.mxu0 %v868
      %1121 = vmatprep.subr.bf16.mxu0 %v867
      %1122 = vmatpush1.bf16.msra.mxu0 %v866
      %1123 = vmatprep.subr.bf16.mxu0 %v865
      %1124 = vmatpush1.bf16.msra.mxu0 %v864
      %1125 = vmatprep.subr.bf16.mxu0 %v863
      %1126 = vmatpush1.bf16.msra.mxu0 %v862
      %1127 = vmatprep.subr.bf16.mxu0 %v861
      %1128 = vmatpush1.bf16.msra.mxu0 %v860
      %1129 = vmatprep.subr.bf16.mxu0 %v859
      %1130 = vmatpush1.bf16.msra.mxu0 %v858
      %1131 = vmatprep.subr.bf16.mxu0 %v857
      %1132 = vmatpush1.bf16.msra.mxu0 %v856
      %1133 = vmatprep.subr.bf16.mxu0 %v855
      %1134 = vmatpush1.bf16.msra.mxu0 %v854
      %1135 = vmatprep.subr.bf16.mxu0 %v885
      %1136 = vmatpush2.bf16.msra.mxu0 %v884
      %1137 = vmatprep.subr.bf16.mxu0 %v883
      %1138 = vmatpush2.bf16.msra.mxu0 %v882
      %1139 = vmatprep.subr.bf16.mxu0 %v881
      %1140 = vmatpush2.bf16.msra.mxu0 %v880
      %1141 = vmatprep.subr.bf16.mxu0 %v879
      %1142 = vmatpush2.bf16.msra.mxu0 %v878
      %1143 = vmatprep.subr.bf16.mxu0 %v877
      %1144 = vmatpush2.bf16.msra.mxu0 %v876
      %1145 = vmatprep.subr.bf16.mxu0 %v875
      %1146 = vmatpush2.bf16.msra.mxu0 %v874
      %1147 = vmatprep.subr.bf16.mxu0 %v873
      %1148 = vmatpush2.bf16.msra.mxu0 %v872
      %1149 = vmatprep.subr.bf16.mxu0 %v871
      %1150 = vmatpush2.bf16.msra.mxu0 %v870
      %1151 = vmatprep.mubr.bf16.mxu0 %v425
      %1152 = vmatmul.mubr.bf16.gmra.mxu0 %v424
      %v1153 = vpop.f32.mrf.mxu0
      %v1154 = vadd.f32 %v1113, %v1153
      %v1155 = vpop.f32.mrf.mxu0
      %v1156 = vadd.f32 %v1115, %v1155
      %v1157 = vpop.f32.mrf.mxu0
      %v1158 = vpop.f32.mrf.mxu0
      %1159 = vdwg.mxu0
      %1160 = vmatprep.subr.bf16.mxu0 %v901
      %1161 = vmatpush1.bf16.msra.mxu0 %v900
      %1162 = vmatprep.subr.bf16.mxu0 %v899
      %1163 = vmatpush1.bf16.msra.mxu0 %v898
      %1164 = vmatprep.subr.bf16.mxu0 %v897
      %1165 = vmatpush1.bf16.msra.mxu0 %v896
      %1166 = vmatprep.subr.bf16.mxu0 %v895
      %1167 = vmatpush1.bf16.msra.mxu0 %v894
      %1168 = vmatprep.subr.bf16.mxu0 %v893
      %1169 = vmatpush1.bf16.msra.mxu0 %v892
      %1170 = vmatprep.subr.bf16.mxu0 %v891
      %1171 = vmatpush1.bf16.msra.mxu0 %v890
      %1172 = vmatprep.subr.bf16.mxu0 %v889
      %1173 = vmatpush1.bf16.msra.mxu0 %v888
      %1174 = vmatprep.subr.bf16.mxu0 %v887
      %1175 = vmatpush1.bf16.msra.mxu0 %v886
      %1176 = vmatprep.subr.bf16.mxu0 %v917
      %1177 = vmatpush2.bf16.msra.mxu0 %v916
      %1178 = vmatprep.subr.bf16.mxu0 %v915
      %1179 = vmatpush2.bf16.msra.mxu0 %v914
      %1180 = vmatprep.subr.bf16.mxu0 %v913
      %1181 = vmatpush2.bf16.msra.mxu0 %v912
      %1182 = vmatprep.subr.bf16.mxu0 %v911
      %1183 = vmatpush2.bf16.msra.mxu0 %v910
      %1184 = vmatprep.subr.bf16.mxu0 %v909
      %1185 = vmatpush2.bf16.msra.mxu0 %v908
      %1186 = vmatprep.subr.bf16.mxu0 %v907
      %1187 = vmatpush2.bf16.msra.mxu0 %v906
      %1188 = vmatprep.subr.bf16.mxu0 %v905
      %1189 = vmatpush2.bf16.msra.mxu0 %v904
      %1190 = vmatprep.subr.bf16.mxu0 %v903
      %1191 = vmatpush2.bf16.msra.mxu0 %v902
      %1192 = vmatprep.mubr.bf16.mxu0 %v427
      %1193 = vmatmul.mubr.bf16.gmra.mxu0 %v426
      %v1194 = vpop.f32.mrf.mxu0
      %v1195 = vadd.f32 %v1154, %v1194
      %v1196 = vpop.f32.mrf.mxu0
      %v1197 = vadd.f32 %v1156, %v1196
      %v1198 = vpop.f32.mrf.mxu0
      %v1199 = vpop.f32.mrf.mxu0
      %1200 = vdwg.mxu0
      %1201 = vmatprep.subr.bf16.mxu0 %v933
      %1202 = vmatpush1.bf16.msra.mxu0 %v932
      %1203 = vmatprep.subr.bf16.mxu0 %v931
      %1204 = vmatpush1.bf16.msra.mxu0 %v930
      %1205 = vmatprep.subr.bf16.mxu0 %v929
      %1206 = vmatpush1.bf16.msra.mxu0 %v928
      %1207 = vmatprep.subr.bf16.mxu0 %v927
      %1208 = vmatpush1.bf16.msra.mxu0 %v926
      %1209 = vmatprep.subr.bf16.mxu0 %v925
      %1210 = vmatpush1.bf16.msra.mxu0 %v924
      %1211 = vmatprep.subr.bf16.mxu0 %v923
      %1212 = vmatpush1.bf16.msra.mxu0 %v922
      %1213 = vmatprep.subr.bf16.mxu0 %v921
      %1214 = vmatpush1.bf16.msra.mxu0 %v920
      %1215 = vmatprep.subr.bf16.mxu0 %v919
      %1216 = vmatpush1.bf16.msra.mxu0 %v918
      %1217 = vmatprep.subr.bf16.mxu0 %v949
      %1218 = vmatpush2.bf16.msra.mxu0 %v948
      %1219 = vmatprep.subr.bf16.mxu0 %v947
      %1220 = vmatpush2.bf16.msra.mxu0 %v946
      %1221 = vmatprep.subr.bf16.mxu0 %v945
      %1222 = vmatpush2.bf16.msra.mxu0 %v944
      %1223 = vmatprep.subr.bf16.mxu0 %v943
      %1224 = vmatpush2.bf16.msra.mxu0 %v942
      %1225 = vmatprep.subr.bf16.mxu0 %v941
      %1226 = vmatpush2.bf16.msra.mxu0 %v940
      %1227 = vmatprep.subr.bf16.mxu0 %v939
      %1228 = vmatpush2.bf16.msra.mxu0 %v938
      %1229 = vmatprep.subr.bf16.mxu0 %v937
      %1230 = vmatpush2.bf16.msra.mxu0 %v936
      %1231 = vmatprep.subr.bf16.mxu0 %v935
      %1232 = vmatpush2.bf16.msra.mxu0 %v934
      %1233 = vmatprep.mubr.bf16.mxu0 %v429
      %1234 = vmatmul.mubr.bf16.gmra.mxu0 %v428
      %v1235 = vpop.f32.mrf.mxu0
      %v1236 = vadd.f32 %v1195, %v1235
      %v1237 = vpop.f32.mrf.mxu0
      %v1238 = vadd.f32 %v1197, %v1237
      %v1239 = vpop.f32.mrf.mxu0
      %v1240 = vpop.f32.mrf.mxu0
      %1241 = vdwg.mxu0
      %v1242 = vadd.f32 %v276, %v1236
      %v1243 = vadd.f32 %v277, %v1238
      %1244 = vst [vmem:[#allocation2] sm:$0xff] %v1242
      %1245 = vst [vmem:[#allocation2 + $0x8] sm:$0xff] %v1243
      // Predicated region
      $region37: #{autoencoder_forward.7} parent=31 // pred_check
        %p1246 = pneg %p270
      $region38: #{autoencoder_forward.7} parent=31 // pred_check_branch
        %1248 = sbr.rel (%p1246) target = $region40
      $region39: #{autoencoder_forward.7} parent=31 // pred_region
        %v1249 = vld [vmem:[#allocation2] sm:$0xff]
        %v1250 = vld [vmem:[#allocation2 + $0x8] sm:$0xff]
        %v1251 = vld [vmem:[%s258] sm:$0x3]
        %v1253 = vlaneseq
        %v1254 = vshrl.u32 %v1253, 7
        %v1255 = vsub.s32 0, %v1254
        %v1256 = vrot.slane %v1251, %v1255
        %v1257 = vlaneseq
        %v1258 = vshrl.u32 %v1257, 7
        %v1259 = vsub.s32 1, %v1258
        %v1260 = vrot.slane %v1251, %v1259
        %v1263 = vadd.f32 %v1249, %v1256
        %v1264 = vadd.f32 %v1250, %v1260
        %v1265 = vmax.f32 %v1263, 0.0
        %v1266 = vmax.f32 %v1264, 0.0
        %v1267 = vpack.c.bf16 %v1265, %v1265
        %v1268 = vpack.c.bf16 %v1266, %v1266
        %v1271 = vunpack.c.l.b16 %v1267
        %v1272 = vunpack.c.l.b16 %v1268
        %v1273 = vpack.c.b16 %v1272, %v1271
        %1275 = vst [vmem:[%s268] sm:$0xff] %v1273
      $region40: #{autoencoder_forward.7} parent=31 // pred_fallthru
        _
      %s1276 = smul.u32 2, %s19
      %p1277 = scmp.lt.s32.totalorder %s20, 0
      %s1278 = scalar_select %p1277, %s20, 0
      %p1279 = scmp.lt.s32.totalorder %s1276, 3
      %s1280 = scalar_select %p1279, %s1276, 3
      %s1281 = smul.addr %s1278, 4
      %s1282 = sadd.s32 %s1280, %s1281
      %s1283 = smul.addr %s1282, 4
      %s1284 = scalar_lea.vmem %s3, %s1283
      // Predicated region
      $region41: #{autoencoder_forward.7} parent=31 // pred_check
        %p1285 = pneg %p135
      $region42: #{autoencoder_forward.7} parent=31 // pred_check_branch
        %1287 = sbr.rel (%p1285) target = $region44
      $region43: #{autoencoder_forward.7} parent=31 // pred_region
        %s1288 = smul.u32 2, %s19
      $region44: #{autoencoder_forward.7} parent=31 // pred_fallthru
        _
    $region32: #{autoencoder_forward.7} parent=5 // pred_fallthru
      _
    %p1289 = scmp.le.s32.totalorder 2, %s9
    // Predicated region
    $region45: #{autoencoder_forward.7} parent=5 // pred_check
      %p1290 = pneg %p1289
    $region46: #{autoencoder_forward.7} parent=5 // pred_check_branch
      %1292 = sbr.rel (%p1290) target = $region48
    $region47: #{autoencoder_forward.7} parent=5 // pred_region
      %s1293 = ssub.s32 %s9, 2
      // Predicated region
      $region49: #{autoencoder_forward.7} parent=47 // pred_check
        %p1294 = pneg %p141
      $region50: #{autoencoder_forward.7} parent=47 // pred_check_branch
        %1296 = sbr.rel (%p1294) target = $region52
      $region51: #{autoencoder_forward.7} parent=47 // pred_region
        %s1297 = smul.u32 2, %s22
        %p1298 = scmp.lt.s32.totalorder %s23, 0
        %s1299 = scalar_select %p1298, %s23, 0
        %p1300 = scmp.lt.s32.totalorder %s1297, 3
        %s1301 = scalar_select %p1300, %s1297, 3
        %s1302 = smul.addr %s1299, 4
        %s1303 = sadd.s32 %s1301, %s1302
        %s1304 = smul.addr %s1303, 4
        %s1305 = scalar_lea.vmem %s3, %s1304
      $region52: #{autoencoder_forward.7} parent=47 // pred_fallthru
        _
    $region48: #{autoencoder_forward.7} parent=5 // pred_fallthru
      _
  $region6: #{autoencoder_forward.7} parent=0 // loop_footer
    %s13 = sadd.s32 1, %s9
  $region7: #{autoencoder_forward.7} parent=0 // loop_footer_branch
    %8 = sbr.rel target = $region3
  $region8: #{autoencoder_forward.7} parent=0 // loop_exit
    _

// kernel: autoencoder_forward.10
$region0: #{autoencoder_forward.10}
  #allocation0 [shape = 'u32[]', space=smem, size = 0x4, offset = 0x4, fixed_abs, tag = 'smem constant byte address 0x4 - core index']
  #allocation1 [shape = 'u32[144,128]{1,0:T(1,128)}', space=vmem, size = 0x12000, scoped, tag = 'internal scratch']
  #allocation2 [shape = 'f32[8,512]{1,0:T(8,128)}', space=vmem, size = 0x4000, scoped, tag = 'scratch operand']
  %s0 = inlined_call_operand.vmem [shape: bf16[8,512], index: 0, kind: input, shape index: {}]
  %s1 = inlined_call_operand.vmem [shape: bf16[2,1,512,512], index: 1, kind: input, shape index: {}]
  %s2 = inlined_call_operand.vmem [shape: f32[1,1024], index: 2, kind: input, shape index: {}]
  %s3 = inlined_call_operand.vmem [shape: bf16[8,1024], index: 3, kind: output, shape index: {}]
  %s4 = sld [smem:[#allocation0]]
  $region53: #{autoencoder_forward.10} parent=0
    _
  %s6 = ssub.s32 1, %s4
  %s7 = scalar_select 0, %s6, %s4
  loop: start=0, step=1, limit=4
  $region2: #{autoencoder_forward.10} parent=0 // loop_pre_header
    _
  $region3: #{autoencoder_forward.10} parent=0 // loop_header
    %s9 = sphi 0, %s13
    %p10 = scmp.ge.s32.totalorder %s9, 4
    %s16 = sphi 0, %s35
    %s17 = sphi 0, %s31
    %s18 = sphi 0, %s27
    %s19 = sphi 0, %s16
    %s20 = sphi 0, %s17
    %s21 = sphi 0, %s18
    %s22 = sphi 0, %s19
    %s23 = sphi 0, %s20
    %s24 = sphi 0, %s21
    %s40 = sphi 0, %s42
    %s43 = sphi 0, %s40
    %s44 = sphi 0, %s43
    %s60 = sphi 0, %s44
    %s68 = sphi 0, %s70
    %s71 = sphi 0, %s68
    %s72 = sphi 0, %s71
    %s88 = sphi 0, %s72
    %s94 = sphi 0, %s96
    %s97 = sphi 0, %s94
    %s98 = sphi 0, %s97
    %s114 = sphi 0, %s98
    %s122 = sphi 0, %s124
    %s125 = sphi 0, %s122
    %s126 = sphi 0, %s125
    %s142 = sphi 0, %s126
  $region4: #{autoencoder_forward.10} parent=0 // loop_header_branch
    %12 = sbr.rel (%p10) target = $region8
  $region5: #{autoencoder_forward.10} parent=0 // loop_body
    %s14 = ssub.s32 %s9, 1
    %s15 = ssub.s32 %s9, 2
    %s25 = sadd.s32 1, %s18
    %p26 = scmp.ge.s32.totalorder %s25, 1
    %s27 = scalar_select %p26, 0, %s25
    %s28 = sadd.s32 1, %s17
    %s29 = scalar_select %p26, %s28, %s17
    %p30 = scmp.ge.s32.totalorder %s29, 1
    %s31 = scalar_select %p30, 0, %s29
    %s32 = sadd.s32 1, %s16
    %s33 = scalar_select %p30, %s32, %s16
    %p34 = scmp.ge.s32.totalorder %s33, 2
    %s35 = scalar_select %p34, 0, %s33
    %s36 = ssub.s32 %s17, %s31
    %s37 = ssub.s32 %s18, %s27
    %s38 = sor.u32 %s36, %s37
    %p39 = scmp.eq.s32.totalorder %s38, 0
    %s41 = sadd.s32 %s40, 1
    %s42 = scalar_select %p39, %s40, %s41
    %p45 = pneg %p39
    %p46 = scmp.eq.s32.totalorder %s9, 1
    %p47 = por %p45, %p46
    %p48 = scmp.ne.s32.totalorder %s40, %s43
    %p49 = scmp.eq.s32.totalorder %s9, 0
    %p50 = por %p48, %p49
    %p51 = scmp.ne.s32.totalorder %s40, %s43
    %p52 = scmp.eq.s32.totalorder %s14, 1
    %p53 = por %p51, %p52
    %p54 = scmp.ne.s32.totalorder %s43, %s44
    %p55 = scmp.eq.s32.totalorder %s14, 0
    %p56 = por %p54, %p55
    %p57 = scmp.ne.s32.totalorder %s43, %s44
    %p58 = scmp.eq.s32.totalorder %s15, 1
    %p59 = por %p57, %p58
    %p61 = scmp.ne.s32.totalorder %s44, %s60
    %p62 = scmp.eq.s32.totalorder %s15, 0
    %p63 = por %p61, %p62
    %s64 = ssub.s32 %s16, %s35
    %s65 = ssub.s32 %s18, %s27
    %s66 = sor.u32 %s64, %s65
    %p67 = scmp.eq.s32.totalorder %s66, 0
    %s69 = sadd.s32 %s68, 1
    %s70 = scalar_select %p67, %s68, %s69
    %p73 = pneg %p67
    %p74 = scmp.eq.s32.totalorder %s9, 1
    %p75 = por %p73, %p74
    %p76 = scmp.ne.s32.totalorder %s68, %s71
    %p77 = scmp.eq.s32.totalorder %s9, 0
    %p78 = por %p76, %p77
    %p79 = scmp.ne.s32.totalorder %s68, %s71
    %p80 = scmp.eq.s32.totalorder %s14, 1
    %p81 = por %p79, %p80
    %p82 = scmp.ne.s32.totalorder %s71, %s72
    %p83 = scmp.eq.s32.totalorder %s14, 0
    %p84 = por %p82, %p83
    %p85 = scmp.ne.s32.totalorder %s71, %s72
    %p86 = scmp.eq.s32.totalorder %s15, 1
    %p87 = por %p85, %p86
    %p89 = scmp.ne.s32.totalorder %s72, %s88
    %p90 = scmp.eq.s32.totalorder %s15, 0
    %p91 = por %p89, %p90
    %s92 = ssub.s32 %s16, %s35
    %p93 = scmp.eq.s32.totalorder %s92, 0
    %s95 = sadd.s32 %s94, 1
    %s96 = scalar_select %p93, %s94, %s95
    %p99 = pneg %p93
    %p100 = scmp.eq.s32.totalorder %s9, 1
    %p101 = por %p99, %p100
    %p102 = scmp.ne.s32.totalorder %s94, %s97
    %p103 = scmp.eq.s32.totalorder %s9, 0
    %p104 = por %p102, %p103
    %p105 = scmp.ne.s32.totalorder %s94, %s97
    %p106 = scmp.eq.s32.totalorder %s14, 1
    %p107 = por %p105, %p106
    %p108 = scmp.ne.s32.totalorder %s97, %s98
    %p109 = scmp.eq.s32.totalorder %s14, 0
    %p110 = por %p108, %p109
    %p111 = scmp.ne.s32.totalorder %s97, %s98
    %p112 = scmp.eq.s32.totalorder %s15, 1
    %p113 = por %p111, %p112
    %p115 = scmp.ne.s32.totalorder %s98, %s114
    %p116 = scmp.eq.s32.totalorder %s15, 0
    %p117 = por %p115, %p116
    %s118 = ssub.s32 %s17, %s31
    %s119 = ssub.s32 %s16, %s35
    %s120 = sor.u32 %s118, %s119
    %p121 = scmp.eq.s32.totalorder %s120, 0
    %s123 = sadd.s32 %s122, 1
    %s124 = scalar_select %p121, %s122, %s123
    %p127 = pneg %p121
    %p128 = scmp.eq.s32.totalorder %s9, 1
    %p129 = por %p127, %p128
    %p130 = scmp.ne.s32.totalorder %s122, %s125
    %p131 = scmp.eq.s32.totalorder %s9, 0
    %p132 = por %p130, %p131
    %p133 = scmp.ne.s32.totalorder %s122, %s125
    %p134 = scmp.eq.s32.totalorder %s14, 1
    %p135 = por %p133, %p134
    %p136 = scmp.ne.s32.totalorder %s125, %s126
    %p137 = scmp.eq.s32.totalorder %s14, 0
    %p138 = por %p136, %p137
    %p139 = scmp.ne.s32.totalorder %s125, %s126
    %p140 = scmp.eq.s32.totalorder %s15, 1
    %p141 = por %p139, %p140
    %p143 = scmp.ne.s32.totalorder %s126, %s142
    %p144 = scmp.eq.s32.totalorder %s15, 0
    %p145 = por %p143, %p144
    %p146 = scmp.le.s32.totalorder 1, %s9
    %p147 = scmp.lt.s32.totalorder %s9, 3
    %p148 = pnand %p146, %p147
    %p149 = pneg %p148
    // Predicated region
    $region9: #{autoencoder_forward.10} parent=5 // pred_check
      _
    $region10: #{autoencoder_forward.10} parent=5 // pred_check_branch
      %151 = sbr.rel (%p148) target = $region12
    $region11: #{autoencoder_forward.10} parent=5 // pred_region
      %s152 = ssub.s32 %s9, 1
      // Predicated region
      $region13: #{autoencoder_forward.10} parent=11 // pred_check
        %p153 = pneg %p56
      $region14: #{autoencoder_forward.10} parent=11 // pred_check_branch
        %155 = sbr.rel (%p153) target = $region16
      $region15: #{autoencoder_forward.10} parent=11 // pred_region
        %s156 = smul.u32 4, %s21
        %p157 = scmp.lt.s32.totalorder %s20, 0
        %s158 = scalar_select %p157, %s20, 0
        %p159 = scmp.lt.s32.totalorder %s156, 3
        %s160 = scalar_select %p159, %s156, 3
        %s161 = smul.addr %s158, 4
        %s162 = sadd.s32 %s160, %s161
        %s163 = smul.addr %s162, 4
        %s164 = scalar_lea.vmem %s0, %s163
        %s165 = smul.u32 4, %s21
      $region16: #{autoencoder_forward.10} parent=11 // pred_fallthru
        _
    $region12: #{autoencoder_forward.10} parent=5 // pred_fallthru
      _
    %p166 = scmp.lt.s32.totalorder %s9, 2
    // Predicated region
    $region17: #{autoencoder_forward.10} parent=5 // pred_check
      %p167 = pneg %p166
    $region18: #{autoencoder_forward.10} parent=5 // pred_check_branch
      %169 = sbr.rel (%p167) target = $region20
    $region19: #{autoencoder_forward.10} parent=5 // pred_region
      // Predicated region
      $region21: #{autoencoder_forward.10} parent=19 // pred_check
        %p170 = pneg %p78
      $region22: #{autoencoder_forward.10} parent=19 // pred_check_branch
        %172 = sbr.rel (%p170) target = $region24
      $region23: #{autoencoder_forward.10} parent=19 // pred_region
        %p173 = scmp.lt.s32.totalorder %s16, 1
        %s174 = scalar_select %p173, %s16, 1
        %p175 = scmp.lt.s32.totalorder %s18, 0
        %s176 = scalar_select %p175, %s18, 0
        %s177 = smul.addr %s176, 256
        %s178 = smul.addr %s174, 256
        %s179 = sadd.s32 %s177, %s178
        %s180 = smul.addr %s179, 4
        %s181 = scalar_lea.vmem %s1, %s180
      $region24: #{autoencoder_forward.10} parent=19 // pred_fallthru
        _
      // Predicated region
      $region25: #{autoencoder_forward.10} parent=19 // pred_check
        %p182 = pneg %p104
      $region26: #{autoencoder_forward.10} parent=19 // pred_check_branch
        %184 = sbr.rel (%p182) target = $region28
      $region27: #{autoencoder_forward.10} parent=19 // pred_region
        %s185 = smul.u32 4, %s16
        %p186 = scmp.lt.s32.totalorder %s185, 7
        %s187 = scalar_select %p186, %s185, 7
        %s188 = scalar_lea.vmem %s2, %s187
        %s189 = smul.u32 4, %s16
      $region28: #{autoencoder_forward.10} parent=19 // pred_fallthru
        _
    $region20: #{autoencoder_forward.10} parent=5 // pred_fallthru
      _
    %p190 = scmp.le.s32.totalorder 1, %s9
    %p191 = scmp.lt.s32.totalorder %s9, 3
    %p192 = pnand %p190, %p191
    %p193 = pneg %p192
    // Predicated region
    $region29: #{autoencoder_forward.10} parent=5 // pred_check
      _
    $region30: #{autoencoder_forward.10} parent=5 // pred_check_branch
      %195 = sbr.rel (%p192) target = $region32
    $region31: #{autoencoder_forward.10} parent=5 // pred_region
      %s196 = ssub.s32 %s9, 1
      %s197 = smul.u32 4, %s21
      %p198 = scmp.lt.s32.totalorder %s20, 0
      %s199 = scalar_select %p198, %s20, 0
      %p200 = scmp.lt.s32.totalorder %s197, 3
      %s201 = scalar_select %p200, %s197, 3
      %s202 = smul.addr %s199, 4
      %s203 = sadd.s32 %s201, %s202
      %s204 = smul.addr %s203, 4
      %s205 = scalar_lea.vmem %s0, %s204
      %p206 = pneg %p56
      %p207 = pneg %p53
      %p208 = scmp.lt.s32.totalorder %s19, 1
      %s209 = scalar_select %p208, %s19, 1
      %p210 = scmp.lt.s32.totalorder %s21, 0
      %s211 = scalar_select %p210, %s21, 0
      %s212 = smul.addr %s211, 256
      %s213 = smul.addr %s209, 256
      %s214 = sadd.s32 %s212, %s213
      %s215 = smul.addr %s214, 4
      %s216 = scalar_lea.vmem %s1, %s215
      %p217 = pneg %p84
      %p218 = pneg %p81
      %s219 = smul.u32 4, %s19
      %p220 = scmp.lt.s32.totalorder %s219, 7
      %s221 = scalar_select %p220, %s219, 7
      %s222 = scalar_lea.vmem %s2, %s221
      %p223 = pneg %p110
      %p224 = pneg %p107
      %p225 = pneg %p138
      %p226 = pneg %p135
      %s227 = smul.u32 4, %s19
      %p228 = scmp.lt.s32.totalorder %s20, 0
      %s229 = scalar_select %p228, %s20, 0
      %p230 = scmp.lt.s32.totalorder %s227, 7
      %s231 = scalar_select %p230, %s227, 7
      %s232 = smul.addr %s229, 8
      %s233 = sadd.s32 %s231, %s232
      %s234 = smul.addr %s233, 4
      %s235 = scalar_lea.vmem %s3, %s234
      %s236 = smul.u32 4, %s21
      %p237 = scmp.lt.s32.totalorder %s20, 0
      %s238 = scalar_select %p237, %s20, 0
      %p239 = scmp.lt.s32.totalorder %s236, 3
      %s240 = scalar_select %p239, %s236, 3
      %s241 = smul.addr %s238, 4
      %s242 = sadd.s32 %s240, %s241
      %s243 = smul.addr %s242, 4
      %s244 = scalar_lea.vmem %s0, %s243
      %s245 = smul.u32 4, %s21
      %p246 = scmp.lt.s32.totalorder %s19, 1
      %s247 = scalar_select %p246, %s19, 1
      %p248 = scmp.lt.s32.totalorder %s21, 0
      %s249 = scalar_select %p248, %s21, 0
      %s250 = smul.addr %s249, 256
      %s251 = smul.addr %s247, 256
      %s252 = sadd.s32 %s250, %s251
      %s253 = smul.addr %s252, 4
      %s254 = scalar_lea.vmem %s1, %s253
      %s255 = smul.u32 4, %s19
      %p256 = scmp.lt.s32.totalorder %s255, 7
      %s257 = scalar_select %p256, %s255, 7
      %s258 = scalar_lea.vmem %s2, %s257
      %s259 = smul.u32 4, %s19
      %s260 = smul.u32 4, %s19
      %p261 = scmp.lt.s32.totalorder %s20, 0
      %s262 = scalar_select %p261, %s20, 0
      %p263 = scmp.lt.s32.totalorder %s260, 7
      %s264 = scalar_select %p263, %s260, 7
      %s265 = smul.addr %s262, 8
      %s266 = sadd.s32 %s264, %s265
      %s267 = smul.addr %s266, 4
      %s268 = scalar_lea.vmem %s3, %s267
      %s269 = smul.u32 4, %s19
      %p270 = scmp.eq.s32.totalorder %s21, 0
      // Predicated region
      $region33: #{autoencoder_forward.10} parent=31 // pred_check
        %p271 = pneg %p270
      $region34: #{autoencoder_forward.10} parent=31 // pred_check_branch
        %273 = sbr.rel (%p271) target = $region36
      $region35: #{autoencoder_forward.10} parent=31 // pred_region
        %274 = vst [vmem:[#allocation2] sm:$0xff] 0.0
        %275 = vst [vmem:[#allocation2 + $0x8] sm:$0xff] 0.0
        %276 = vst [vmem:[#allocation2 + $0x10] sm:$0xff] 0.0
        %277 = vst [vmem:[#allocation2 + $0x18] sm:$0xff] 0.0
      $region36: #{autoencoder_forward.10} parent=31 // pred_fallthru
        _
      %v278 = vld [vmem:[#allocation2] sm:$0xff]
      %v279 = vld [vmem:[#allocation2 + $0x8] sm:$0xff]
      %v280 = vld [vmem:[#allocation2 + $0x10] sm:$0xff]
      %v281 = vld [vmem:[#allocation2 + $0x18] sm:$0xff]
      %v282 = vld [vmem:[%s244] sm:$0xff]
      %v283 = vld [vmem:[%s244 + $0x8] sm:$0xff]
      %v284 = vld [vmem:[%s254] sm:$0xff]
      %v285 = vld [vmem:[%s254 + $0x8] sm:$0xff]
      %v286 = vld [vmem:[%s254 + $0x10] sm:$0xff]
      %v287 = vld [vmem:[%s254 + $0x18] sm:$0xff]
      %v288 = vld [vmem:[%s254 + $0x20] sm:$0xff]
      %v289 = vld [vmem:[%s254 + $0x28] sm:$0xff]
      %v290 = vld [vmem:[%s254 + $0x30] sm:$0xff]
      %v291 = vld [vmem:[%s254 + $0x38] sm:$0xff]
      %v292 = vld [vmem:[%s254 + $0x40] sm:$0xff]
      %v293 = vld [vmem:[%s254 + $0x48] sm:$0xff]
      %v294 = vld [vmem:[%s254 + $0x50] sm:$0xff]
      %v295 = vld [vmem:[%s254 + $0x58] sm:$0xff]
      %v296 = vld [vmem:[%s254 + $0x60] sm:$0xff]
      %v297 = vld [vmem:[%s254 + $0x68] sm:$0xff]
      %v298 = vld [vmem:[%s254 + $0x70] sm:$0xff]
      %v299 = vld [vmem:[%s254 + $0x78] sm:$0xff]
      %v300 = vld [vmem:[%s254 + $0x80] sm:$0xff]
      %v301 = vld [vmem:[%s254 + $0x88] sm:$0xff]
      %v302 = vld [vmem:[%s254 + $0x90] sm:$0xff]
      %v303 = vld [vmem:[%s254 + $0x98] sm:$0xff]
      %v304 = vld [vmem:[%s254 + $0xa0] sm:$0xff]
      %v305 = vld [vmem:[%s254 + $0xa8] sm:$0xff]
      %v306 = vld [vmem:[%s254 + $0xb0] sm:$0xff]
      %v307 = vld [vmem:[%s254 + $0xb8] sm:$0xff]
      %v308 = vld [vmem:[%s254 + $0xc0] sm:$0xff]
      %v309 = vld [vmem:[%s254 + $0xc8] sm:$0xff]
      %v310 = vld [vmem:[%s254 + $0xd0] sm:$0xff]
      %v311 = vld [vmem:[%s254 + $0xd8] sm:$0xff]
      %v312 = vld [vmem:[%s254 + $0xe0] sm:$0xff]
      %v313 = vld [vmem:[%s254 + $0xe8] sm:$0xff]
      %v314 = vld [vmem:[%s254 + $0xf0] sm:$0xff]
      %v315 = vld [vmem:[%s254 + $0xf8] sm:$0xff]
      %v316 = vld [vmem:[%s254 + $0x100] sm:$0xff]
      %v317 = vld [vmem:[%s254 + $0x108] sm:$0xff]
      %v318 = vld [vmem:[%s254 + $0x110] sm:$0xff]
      %v319 = vld [vmem:[%s254 + $0x118] sm:$0xff]
      %v320 = vld [vmem:[%s254 + $0x120] sm:$0xff]
      %v321 = vld [vmem:[%s254 + $0x128] sm:$0xff]
      %v322 = vld [vmem:[%s254 + $0x130] sm:$0xff]
      %v323 = vld [vmem:[%s254 + $0x138] sm:$0xff]
      %v324 = vld [vmem:[%s254 + $0x140] sm:$0xff]
      %v325 = vld [vmem:[%s254 + $0x148] sm:$0xff]
      %v326 = vld [vmem:[%s254 + $0x150] sm:$0xff]
      %v327 = vld [vmem:[%s254 + $0x158] sm:$0xff]
      %v328 = vld [vmem:[%s254 + $0x160] sm:$0xff]
      %v329 = vld [vmem:[%s254 + $0x168] sm:$0xff]
      %v330 = vld [vmem:[%s254 + $0x170] sm:$0xff]
      %v331 = vld [vmem:[%s254 + $0x178] sm:$0xff]
      %v332 = vld [vmem:[%s254 + $0x180] sm:$0xff]
      %v333 = vld [vmem:[%s254 + $0x188] sm:$0xff]
      %v334 = vld [vmem:[%s254 + $0x190] sm:$0xff]
      %v335 = vld [vmem:[%s254 + $0x198] sm:$0xff]
      %v336 = vld [vmem:[%s254 + $0x1a0] sm:$0xff]
      %v337 = vld [vmem:[%s254 + $0x1a8] sm:$0xff]
      %v338 = vld [vmem:[%s254 + $0x1b0] sm:$0xff]
      %v339 = vld [vmem:[%s254 + $0x1b8] sm:$0xff]
      %v340 = vld [vmem:[%s254 + $0x1c0] sm:$0xff]
      %v341 = vld [vmem:[%s254 + $0x1c8] sm:$0xff]
      %v342 = vld [vmem:[%s254 + $0x1d0] sm:$0xff]
      %v343 = vld [vmem:[%s254 + $0x1d8] sm:$0xff]
      %v344 = vld [vmem:[%s254 + $0x1e0] sm:$0xff]
      %v345 = vld [vmem:[%s254 + $0x1e8] sm:$0xff]
      %v346 = vld [vmem:[%s254 + $0x1f0] sm:$0xff]
      %v347 = vld [vmem:[%s254 + $0x1f8] sm:$0xff]
      %v348 = vld [vmem:[%s254 + $0x200] sm:$0xff]
      %v349 = vld [vmem:[%s254 + $0x208] sm:$0xff]
      %v350 = vld [vmem:[%s254 + $0x210] sm:$0xff]
      %v351 = vld [vmem:[%s254 + $0x218] sm:$0xff]
      %v352 = vld [vmem:[%s254 + $0x220] sm:$0xff]
      %v353 = vld [vmem:[%s254 + $0x228] sm:$0xff]
      %v354 = vld [vmem:[%s254 + $0x230] sm:$0xff]
      %v355 = vld [vmem:[%s254 + $0x238] sm:$0xff]
      %v356 = vld [vmem:[%s254 + $0x240] sm:$0xff]
      %v357 = vld [vmem:[%s254 + $0x248] sm:$0xff]
      %v358 = vld [vmem:[%s254 + $0x250] sm:$0xff]
      %v359 = vld [vmem:[%s254 + $0x258] sm:$0xff]
      %v360 = vld [vmem:[%s254 + $0x260] sm:$0xff]
      %v361 = vld [vmem:[%s254 + $0x268] sm:$0xff]
      %v362 = vld [vmem:[%s254 + $0x270] sm:$0xff]
      %v363 = vld [vmem:[%s254 + $0x278] sm:$0xff]
      %v364 = vld [vmem:[%s254 + $0x280] sm:$0xff]
      %v365 = vld [vmem:[%s254 + $0x288] sm:$0xff]
      %v366 = vld [vmem:[%s254 + $0x290] sm:$0xff]
      %v367 = vld [vmem:[%s254 + $0x298] sm:$0xff]
      %v368 = vld [vmem:[%s254 + $0x2a0] sm:$0xff]
      %v369 = vld [vmem:[%s254 + $0x2a8] sm:$0xff]
      %v370 = vld [vmem:[%s254 + $0x2b0] sm:$0xff]
      %v371 = vld [vmem:[%s254 + $0x2b8] sm:$0xff]
      %v372 = vld [vmem:[%s254 + $0x2c0] sm:$0xff]
      %v373 = vld [vmem:[%s254 + $0x2c8] sm:$0xff]
      %v374 = vld [vmem:[%s254 + $0x2d0] sm:$0xff]
      %v375 = vld [vmem:[%s254 + $0x2d8] sm:$0xff]
      %v376 = vld [vmem:[%s254 + $0x2e0] sm:$0xff]
      %v377 = vld [vmem:[%s254 + $0x2e8] sm:$0xff]
      %v378 = vld [vmem:[%s254 + $0x2f0] sm:$0xff]
      %v379 = vld [vmem:[%s254 + $0x2f8] sm:$0xff]
      %v380 = vld [vmem:[%s254 + $0x300] sm:$0xff]
      %v381 = vld [vmem:[%s254 + $0x308] sm:$0xff]
      %v382 = vld [vmem:[%s254 + $0x310] sm:$0xff]
      %v383 = vld [vmem:[%s254 + $0x318] sm:$0xff]
      %v384 = vld [vmem:[%s254 + $0x320] sm:$0xff]
      %v385 = vld [vmem:[%s254 + $0x328] sm:$0xff]
      %v386 = vld [vmem:[%s254 + $0x330] sm:$0xff]
      %v387 = vld [vmem:[%s254 + $0x338] sm:$0xff]
      %v388 = vld [vmem:[%s254 + $0x340] sm:$0xff]
      %v389 = vld [vmem:[%s254 + $0x348] sm:$0xff]
      %v390 = vld [vmem:[%s254 + $0x350] sm:$0xff]
      %v391 = vld [vmem:[%s254 + $0x358] sm:$0xff]
      %v392 = vld [vmem:[%s254 + $0x360] sm:$0xff]
      %v393 = vld [vmem:[%s254 + $0x368] sm:$0xff]
      %v394 = vld [vmem:[%s254 + $0x370] sm:$0xff]
      %v395 = vld [vmem:[%s254 + $0x378] sm:$0xff]
      %v396 = vld [vmem:[%s254 + $0x380] sm:$0xff]
      %v397 = vld [vmem:[%s254 + $0x388] sm:$0xff]
      %v398 = vld [vmem:[%s254 + $0x390] sm:$0xff]
      %v399 = vld [vmem:[%s254 + $0x398] sm:$0xff]
      %v400 = vld [vmem:[%s254 + $0x3a0] sm:$0xff]
      %v401 = vld [vmem:[%s254 + $0x3a8] sm:$0xff]
      %v402 = vld [vmem:[%s254 + $0x3b0] sm:$0xff]
      %v403 = vld [vmem:[%s254 + $0x3b8] sm:$0xff]
      %v404 = vld [vmem:[%s254 + $0x3c0] sm:$0xff]
      %v405 = vld [vmem:[%s254 + $0x3c8] sm:$0xff]
      %v406 = vld [vmem:[%s254 + $0x3d0] sm:$0xff]
      %v407 = vld [vmem:[%s254 + $0x3d8] sm:$0xff]
      %v408 = vld [vmem:[%s254 + $0x3e0] sm:$0xff]
      %v409 = vld [vmem:[%s254 + $0x3e8] sm:$0xff]
      %v410 = vld [vmem:[%s254 + $0x3f0] sm:$0xff]
      %v411 = vld [vmem:[%s254 + $0x3f8] sm:$0xff]
      %v414 = vunpack.c.l.b16 %v282
      %v415 = vunpack.c.h.b16 %v282
      %v416 = vunpack.c.l.b16 %v283
      %v417 = vunpack.c.h.b16 %v283
      %v418 = vpack.c.b16 %v414, %v414
      %v419 = vpack.c.b16 %v415, %v415
      %v420 = vpack.c.b16 %v416, %v416
      %v421 = vpack.c.b16 %v417, %v417
      %v554 = vunpack.c.l.b16 %v284
      %v555 = vunpack.c.h.b16 %v284
      %v556 = vunpack.c.l.b16 %v285
      %v557 = vunpack.c.h.b16 %v285
      %v558 = vunpack.c.l.b16 %v286
      %v559 = vunpack.c.h.b16 %v286
      %v560 = vunpack.c.l.b16 %v287
      %v561 = vunpack.c.h.b16 %v287
      %v562 = vunpack.c.l.b16 %v288
      %v563 = vunpack.c.h.b16 %v288
      %v564 = vunpack.c.l.b16 %v289
      %v565 = vunpack.c.h.b16 %v289
      %v566 = vunpack.c.l.b16 %v290
      %v567 = vunpack.c.h.b16 %v290
      %v568 = vunpack.c.l.b16 %v291
      %v569 = vunpack.c.h.b16 %v291
      %v570 = vunpack.c.l.b16 %v292
      %v571 = vunpack.c.h.b16 %v292
      %v572 = vunpack.c.l.b16 %v293
      %v573 = vunpack.c.h.b16 %v293
      %v574 = vunpack.c.l.b16 %v294
      %v575 = vunpack.c.h.b16 %v294
      %v576 = vunpack.c.l.b16 %v295
      %v577 = vunpack.c.h.b16 %v295
      %v578 = vunpack.c.l.b16 %v296
      %v579 = vunpack.c.h.b16 %v296
      %v580 = vunpack.c.l.b16 %v297
      %v581 = vunpack.c.h.b16 %v297
      %v582 = vunpack.c.l.b16 %v298
      %v583 = vunpack.c.h.b16 %v298
      %v584 = vunpack.c.l.b16 %v299
      %v585 = vunpack.c.h.b16 %v299
      %v586 = vunpack.c.l.b16 %v300
      %v587 = vunpack.c.h.b16 %v300
      %v588 = vunpack.c.l.b16 %v301
      %v589 = vunpack.c.h.b16 %v301
      %v590 = vunpack.c.l.b16 %v302
      %v591 = vunpack.c.h.b16 %v302
      %v592 = vunpack.c.l.b16 %v303
      %v593 = vunpack.c.h.b16 %v303
      %v594 = vunpack.c.l.b16 %v304
      %v595 = vunpack.c.h.b16 %v304
      %v596 = vunpack.c.l.b16 %v305
      %v597 = vunpack.c.h.b16 %v305
      %v598 = vunpack.c.l.b16 %v306
      %v599 = vunpack.c.h.b16 %v306
      %v600 = vunpack.c.l.b16 %v307
      %v601 = vunpack.c.h.b16 %v307
      %v602 = vunpack.c.l.b16 %v308
      %v603 = vunpack.c.h.b16 %v308
      %v604 = vunpack.c.l.b16 %v309
      %v605 = vunpack.c.h.b16 %v309
      %v606 = vunpack.c.l.b16 %v310
      %v607 = vunpack.c.h.b16 %v310
      %v608 = vunpack.c.l.b16 %v311
      %v609 = vunpack.c.h.b16 %v311
      %v610 = vunpack.c.l.b16 %v312
      %v611 = vunpack.c.h.b16 %v312
      %v612 = vunpack.c.l.b16 %v313
      %v613 = vunpack.c.h.b16 %v313
      %v614 = vunpack.c.l.b16 %v314
      %v615 = vunpack.c.h.b16 %v314
      %v616 = vunpack.c.l.b16 %v315
      %v617 = vunpack.c.h.b16 %v315
      %v618 = vunpack.c.l.b16 %v316
      %v619 = vunpack.c.h.b16 %v316
      %v620 = vunpack.c.l.b16 %v317
      %v621 = vunpack.c.h.b16 %v317
      %v622 = vunpack.c.l.b16 %v318
      %v623 = vunpack.c.h.b16 %v318
      %v624 = vunpack.c.l.b16 %v319
      %v625 = vunpack.c.h.b16 %v319
      %v626 = vunpack.c.l.b16 %v320
      %v627 = vunpack.c.h.b16 %v320
      %v628 = vunpack.c.l.b16 %v321
      %v629 = vunpack.c.h.b16 %v321
      %v630 = vunpack.c.l.b16 %v322
      %v631 = vunpack.c.h.b16 %v322
      %v632 = vunpack.c.l.b16 %v323
      %v633 = vunpack.c.h.b16 %v323
      %v634 = vunpack.c.l.b16 %v324
      %v635 = vunpack.c.h.b16 %v324
      %v636 = vunpack.c.l.b16 %v325
      %v637 = vunpack.c.h.b16 %v325
      %v638 = vunpack.c.l.b16 %v326
      %v639 = vunpack.c.h.b16 %v326
      %v640 = vunpack.c.l.b16 %v327
      %v641 = vunpack.c.h.b16 %v327
      %v642 = vunpack.c.l.b16 %v328
      %v643 = vunpack.c.h.b16 %v328
      %v644 = vunpack.c.l.b16 %v329
      %v645 = vunpack.c.h.b16 %v329
      %v646 = vunpack.c.l.b16 %v330
      %v647 = vunpack.c.h.b16 %v330
      %v648 = vunpack.c.l.b16 %v331
      %v649 = vunpack.c.h.b16 %v331
      %v650 = vunpack.c.l.b16 %v332
      %v651 = vunpack.c.h.b16 %v332
      %v652 = vunpack.c.l.b16 %v333
      %v653 = vunpack.c.h.b16 %v333
      %v654 = vunpack.c.l.b16 %v334
      %v655 = vunpack.c.h.b16 %v334
      %v656 = vunpack.c.l.b16 %v335
      %v657 = vunpack.c.h.b16 %v335
      %v658 = vunpack.c.l.b16 %v336
      %v659 = vunpack.c.h.b16 %v336
      %v660 = vunpack.c.l.b16 %v337
      %v661 = vunpack.c.h.b16 %v337
      %v662 = vunpack.c.l.b16 %v338
      %v663 = vunpack.c.h.b16 %v338
      %v664 = vunpack.c.l.b16 %v339
      %v665 = vunpack.c.h.b16 %v339
      %v666 = vunpack.c.l.b16 %v340
      %v667 = vunpack.c.h.b16 %v340
      %v668 = vunpack.c.l.b16 %v341
      %v669 = vunpack.c.h.b16 %v341
      %v670 = vunpack.c.l.b16 %v342
      %v671 = vunpack.c.h.b16 %v342
      %v672 = vunpack.c.l.b16 %v343
      %v673 = vunpack.c.h.b16 %v343
      %v674 = vunpack.c.l.b16 %v344
      %v675 = vunpack.c.h.b16 %v344
      %v676 = vunpack.c.l.b16 %v345
      %v677 = vunpack.c.h.b16 %v345
      %v678 = vunpack.c.l.b16 %v346
      %v679 = vunpack.c.h.b16 %v346
      %v680 = vunpack.c.l.b16 %v347
      %v681 = vunpack.c.h.b16 %v347
      %v682 = vunpack.c.l.b16 %v348
      %v683 = vunpack.c.h.b16 %v348
      %v684 = vunpack.c.l.b16 %v349
      %v685 = vunpack.c.h.b16 %v349
      %v686 = vunpack.c.l.b16 %v350
      %v687 = vunpack.c.h.b16 %v350
      %v688 = vunpack.c.l.b16 %v351
      %v689 = vunpack.c.h.b16 %v351
      %v690 = vunpack.c.l.b16 %v352
      %v691 = vunpack.c.h.b16 %v352
      %v692 = vunpack.c.l.b16 %v353
      %v693 = vunpack.c.h.b16 %v353
      %v694 = vunpack.c.l.b16 %v354
      %v695 = vunpack.c.h.b16 %v354
      %v696 = vunpack.c.l.b16 %v355
      %v697 = vunpack.c.h.b16 %v355
      %v698 = vunpack.c.l.b16 %v356
      %v699 = vunpack.c.h.b16 %v356
      %v700 = vunpack.c.l.b16 %v357
      %v701 = vunpack.c.h.b16 %v357
      %v702 = vunpack.c.l.b16 %v358
      %v703 = vunpack.c.h.b16 %v358
      %v704 = vunpack.c.l.b16 %v359
      %v705 = vunpack.c.h.b16 %v359
      %v706 = vunpack.c.l.b16 %v360
      %v707 = vunpack.c.h.b16 %v360
      %v708 = vunpack.c.l.b16 %v361
      %v709 = vunpack.c.h.b16 %v361
      %v710 = vunpack.c.l.b16 %v362
      %v711 = vunpack.c.h.b16 %v362
      %v712 = vunpack.c.l.b16 %v363
      %v713 = vunpack.c.h.b16 %v363
      %v714 = vunpack.c.l.b16 %v364
      %v715 = vunpack.c.h.b16 %v364
      %v716 = vunpack.c.l.b16 %v365
      %v717 = vunpack.c.h.b16 %v365
      %v718 = vunpack.c.l.b16 %v366
      %v719 = vunpack.c.h.b16 %v366
      %v720 = vunpack.c.l.b16 %v367
      %v721 = vunpack.c.h.b16 %v367
      %v722 = vunpack.c.l.b16 %v368
      %v723 = vunpack.c.h.b16 %v368
      %v724 = vunpack.c.l.b16 %v369
      %v725 = vunpack.c.h.b16 %v369
      %v726 = vunpack.c.l.b16 %v370
      %v727 = vunpack.c.h.b16 %v370
      %v728 = vunpack.c.l.b16 %v371
      %v729 = vunpack.c.h.b16 %v371
      %v730 = vunpack.c.l.b16 %v372
      %v731 = vunpack.c.h.b16 %v372
      %v732 = vunpack.c.l.b16 %v373
      %v733 = vunpack.c.h.b16 %v373
      %v734 = vunpack.c.l.b16 %v374
      %v735 = vunpack.c.h.b16 %v374
      %v736 = vunpack.c.l.b16 %v375
      %v737 = vunpack.c.h.b16 %v375
      %v738 = vunpack.c.l.b16 %v376
      %v739 = vunpack.c.h.b16 %v376
      %v740 = vunpack.c.l.b16 %v377
      %v741 = vunpack.c.h.b16 %v377
      %v742 = vunpack.c.l.b16 %v378
      %v743 = vunpack.c.h.b16 %v378
      %v744 = vunpack.c.l.b16 %v379
      %v745 = vunpack.c.h.b16 %v379
      %v746 = vunpack.c.l.b16 %v380
      %v747 = vunpack.c.h.b16 %v380
      %v748 = vunpack.c.l.b16 %v381
      %v749 = vunpack.c.h.b16 %v381
      %v750 = vunpack.c.l.b16 %v382
      %v751 = vunpack.c.h.b16 %v382
      %v752 = vunpack.c.l.b16 %v383
      %v753 = vunpack.c.h.b16 %v383
      %v754 = vunpack.c.l.b16 %v384
      %v755 = vunpack.c.h.b16 %v384
      %v756 = vunpack.c.l.b16 %v385
      %v757 = vunpack.c.h.b16 %v385
      %v758 = vunpack.c.l.b16 %v386
      %v759 = vunpack.c.h.b16 %v386
      %v760 = vunpack.c.l.b16 %v387
      %v761 = vunpack.c.h.b16 %v387
      %v762 = vunpack.c.l.b16 %v388
      %v763 = vunpack.c.h.b16 %v388
      %v764 = vunpack.c.l.b16 %v389
      %v765 = vunpack.c.h.b16 %v389
      %v766 = vunpack.c.l.b16 %v390
      %v767 = vunpack.c.h.b16 %v390
      %v768 = vunpack.c.l.b16 %v391
      %v769 = vunpack.c.h.b16 %v391
      %v770 = vunpack.c.l.b16 %v392
      %v771 = vunpack.c.h.b16 %v392
      %v772 = vunpack.c.l.b16 %v393
      %v773 = vunpack.c.h.b16 %v393
      %v774 = vunpack.c.l.b16 %v394
      %v775 = vunpack.c.h.b16 %v394
      %v776 = vunpack.c.l.b16 %v395
      %v777 = vunpack.c.h.b16 %v395
      %v778 = vunpack.c.l.b16 %v396
      %v779 = vunpack.c.h.b16 %v396
      %v780 = vunpack.c.l.b16 %v397
      %v781 = vunpack.c.h.b16 %v397
      %v782 = vunpack.c.l.b16 %v398
      %v783 = vunpack.c.h.b16 %v398
      %v784 = vunpack.c.l.b16 %v399
      %v785 = vunpack.c.h.b16 %v399
      %v786 = vunpack.c.l.b16 %v400
      %v787 = vunpack.c.h.b16 %v400
      %v788 = vunpack.c.l.b16 %v401
      %v789 = vunpack.c.h.b16 %v401
      %v790 = vunpack.c.l.b16 %v402
      %v791 = vunpack.c.h.b16 %v402
      %v792 = vunpack.c.l.b16 %v403
      %v793 = vunpack.c.h.b16 %v403
      %v794 = vunpack.c.l.b16 %v404
      %v795 = vunpack.c.h.b16 %v404
      %v796 = vunpack.c.l.b16 %v405
      %v797 = vunpack.c.h.b16 %v405
      %v798 = vunpack.c.l.b16 %v406
      %v799 = vunpack.c.h.b16 %v406
      %v800 = vunpack.c.l.b16 %v407
      %v801 = vunpack.c.h.b16 %v407
      %v802 = vunpack.c.l.b16 %v408
      %v803 = vunpack.c.h.b16 %v408
      %v804 = vunpack.c.l.b16 %v409
      %v805 = vunpack.c.h.b16 %v409
      %v806 = vunpack.c.l.b16 %v410
      %v807 = vunpack.c.h.b16 %v410
      %v808 = vunpack.c.l.b16 %v411
      %v809 = vunpack.c.h.b16 %v411
      %v810 = vpack.c.b16 %v558, %v554
      %v811 = vpack.c.b16 %v559, %v555
      %v812 = vpack.c.b16 %v560, %v556
      %v813 = vpack.c.b16 %v561, %v557
      %v814 = vpack.c.b16 %v566, %v562
      %v815 = vpack.c.b16 %v567, %v563
      %v816 = vpack.c.b16 %v568, %v564
      %v817 = vpack.c.b16 %v569, %v565
      %v818 = vpack.c.b16 %v574, %v570
      %v819 = vpack.c.b16 %v575, %v571
      %v820 = vpack.c.b16 %v576, %v572
      %v821 = vpack.c.b16 %v577, %v573
      %v822 = vpack.c.b16 %v582, %v578
      %v823 = vpack.c.b16 %v583, %v579
      %v824 = vpack.c.b16 %v584, %v580
      %v825 = vpack.c.b16 %v585, %v581
      %v826 = vpack.c.b16 %v590, %v586
      %v827 = vpack.c.b16 %v591, %v587
      %v828 = vpack.c.b16 %v592, %v588
      %v829 = vpack.c.b16 %v593, %v589
      %v830 = vpack.c.b16 %v598, %v594
      %v831 = vpack.c.b16 %v599, %v595
      %v832 = vpack.c.b16 %v600, %v596
      %v833 = vpack.c.b16 %v601, %v597
      %v834 = vpack.c.b16 %v606, %v602
      %v835 = vpack.c.b16 %v607, %v603
      %v836 = vpack.c.b16 %v608, %v604
      %v837 = vpack.c.b16 %v609, %v605
      %v838 = vpack.c.b16 %v614, %v610
      %v839 = vpack.c.b16 %v615, %v611
      %v840 = vpack.c.b16 %v616, %v612
      %v841 = vpack.c.b16 %v617, %v613
      %v842 = vpack.c.b16 %v622, %v618
      %v843 = vpack.c.b16 %v623, %v619
      %v844 = vpack.c.b16 %v624, %v620
      %v845 = vpack.c.b16 %v625, %v621
      %v846 = vpack.c.b16 %v630, %v626
      %v847 = vpack.c.b16 %v631, %v627
      %v848 = vpack.c.b16 %v632, %v628
      %v849 = vpack.c.b16 %v633, %v629
      %v850 = vpack.c.b16 %v638, %v634
      %v851 = vpack.c.b16 %v639, %v635
      %v852 = vpack.c.b16 %v640, %v636
      %v853 = vpack.c.b16 %v641, %v637
      %v854 = vpack.c.b16 %v646, %v642
      %v855 = vpack.c.b16 %v647, %v643
      %v856 = vpack.c.b16 %v648, %v644
      %v857 = vpack.c.b16 %v649, %v645
      %v858 = vpack.c.b16 %v654, %v650
      %v859 = vpack.c.b16 %v655, %v651
      %v860 = vpack.c.b16 %v656, %v652
      %v861 = vpack.c.b16 %v657, %v653
      %v862 = vpack.c.b16 %v662, %v658
      %v863 = vpack.c.b16 %v663, %v659
      %v864 = vpack.c.b16 %v664, %v660
      %v865 = vpack.c.b16 %v665, %v661
      %v866 = vpack.c.b16 %v670, %v666
      %v867 = vpack.c.b16 %v671, %v667
      %v868 = vpack.c.b16 %v672, %v668
      %v869 = vpack.c.b16 %v673, %v669
      %v870 = vpack.c.b16 %v678, %v674
      %v871 = vpack.c.b16 %v679, %v675
      %v872 = vpack.c.b16 %v680, %v676
      %v873 = vpack.c.b16 %v681, %v677
      %v874 = vpack.c.b16 %v686, %v682
      %v875 = vpack.c.b16 %v687, %v683
      %v876 = vpack.c.b16 %v688, %v684
      %v877 = vpack.c.b16 %v689, %v685
      %v878 = vpack.c.b16 %v694, %v690
      %v879 = vpack.c.b16 %v695, %v691
      %v880 = vpack.c.b16 %v696, %v692
      %v881 = vpack.c.b16 %v697, %v693
      %v882 = vpack.c.b16 %v702, %v698
      %v883 = vpack.c.b16 %v703, %v699
      %v884 = vpack.c.b16 %v704, %v700
      %v885 = vpack.c.b16 %v705, %v701
      %v886 = vpack.c.b16 %v710, %v706
      %v887 = vpack.c.b16 %v711, %v707
      %v888 = vpack.c.b16 %v712, %v708
      %v889 = vpack.c.b16 %v713, %v709
      %v890 = vpack.c.b16 %v718, %v714
      %v891 = vpack.c.b16 %v719, %v715
      %v892 = vpack.c.b16 %v720, %v716
      %v893 = vpack.c.b16 %v721, %v717
      %v894 = vpack.c.b16 %v726, %v722
      %v895 = vpack.c.b16 %v727, %v723
      %v896 = vpack.c.b16 %v728, %v724
      %v897 = vpack.c.b16 %v729, %v725
      %v898 = vpack.c.b16 %v734, %v730
      %v899 = vpack.c.b16 %v735, %v731
      %v900 = vpack.c.b16 %v736, %v732
      %v901 = vpack.c.b16 %v737, %v733
      %v902 = vpack.c.b16 %v742, %v738
      %v903 = vpack.c.b16 %v743, %v739
      %v904 = vpack.c.b16 %v744, %v740
      %v905 = vpack.c.b16 %v745, %v741
      %v906 = vpack.c.b16 %v750, %v746
      %v907 = vpack.c.b16 %v751, %v747
      %v908 = vpack.c.b16 %v752, %v748
      %v909 = vpack.c.b16 %v753, %v749
      %v910 = vpack.c.b16 %v758, %v754
      %v911 = vpack.c.b16 %v759, %v755
      %v912 = vpack.c.b16 %v760, %v756
      %v913 = vpack.c.b16 %v761, %v757
      %v914 = vpack.c.b16 %v766, %v762
      %v915 = vpack.c.b16 %v767, %v763
      %v916 = vpack.c.b16 %v768, %v764
      %v917 = vpack.c.b16 %v769, %v765
      %v918 = vpack.c.b16 %v774, %v770
      %v919 = vpack.c.b16 %v775, %v771
      %v920 = vpack.c.b16 %v776, %v772
      %v921 = vpack.c.b16 %v777, %v773
      %v922 = vpack.c.b16 %v782, %v778
      %v923 = vpack.c.b16 %v783, %v779
      %v924 = vpack.c.b16 %v784, %v780
      %v925 = vpack.c.b16 %v785, %v781
      %v926 = vpack.c.b16 %v790, %v786
      %v927 = vpack.c.b16 %v791, %v787
      %v928 = vpack.c.b16 %v792, %v788
      %v929 = vpack.c.b16 %v793, %v789
      %v930 = vpack.c.b16 %v798, %v794
      %v931 = vpack.c.b16 %v799, %v795
      %v932 = vpack.c.b16 %v800, %v796
      %v933 = vpack.c.b16 %v801, %v797
      %v934 = vpack.c.b16 %v806, %v802
      %v935 = vpack.c.b16 %v807, %v803
      %v936 = vpack.c.b16 %v808, %v804
      %v937 = vpack.c.b16 %v809, %v805
      %1066 = vmatprep.subr.bf16.mxu0 %v839
      %1067 = vmatpush1.bf16.msra.mxu0 %v838
      %1068 = vmatprep.subr.bf16.mxu0 %v835
      %1069 = vmatpush1.bf16.msra.mxu0 %v834
      %1070 = vmatprep.subr.bf16.mxu0 %v831
      %1071 = vmatpush1.bf16.msra.mxu0 %v830
      %1072 = vmatprep.subr.bf16.mxu0 %v827
      %1073 = vmatpush1.bf16.msra.mxu0 %v826
      %1074 = vmatprep.subr.bf16.mxu0 %v823
      %1075 = vmatpush1.bf16.msra.mxu0 %v822
      %1076 = vmatprep.subr.bf16.mxu0 %v819
      %1077 = vmatpush1.bf16.msra.mxu0 %v818
      %1078 = vmatprep.subr.bf16.mxu0 %v815
      %1079 = vmatpush1.bf16.msra.mxu0 %v814
      %1080 = vmatprep.subr.bf16.mxu0 %v811
      %1081 = vmatpush1.bf16.msra.mxu0 %v810
      %1082 = vmatprep.subr.bf16.mxu0 %v871
      %1083 = vmatpush2.bf16.msra.mxu0 %v870
      %1084 = vmatprep.subr.bf16.mxu0 %v867
      %1085 = vmatpush2.bf16.msra.mxu0 %v866
      %1086 = vmatprep.subr.bf16.mxu0 %v863
      %1087 = vmatpush2.bf16.msra.mxu0 %v862
      %1088 = vmatprep.subr.bf16.mxu0 %v859
      %1089 = vmatpush2.bf16.msra.mxu0 %v858
      %1090 = vmatprep.subr.bf16.mxu0 %v855
      %1091 = vmatpush2.bf16.msra.mxu0 %v854
      %1092 = vmatprep.subr.bf16.mxu0 %v851
      %1093 = vmatpush2.bf16.msra.mxu0 %v850
      %1094 = vmatprep.subr.bf16.mxu0 %v847
      %1095 = vmatpush2.bf16.msra.mxu0 %v846
      %1096 = vmatprep.subr.bf16.mxu0 %v843
      %1097 = vmatpush2.bf16.msra.mxu0 %v842
      %1098 = vmatprep.mubr.bf16.mxu0 %v419
      %1099 = vmatmul.mubr.bf16.gmra.mxu0 %v418
      %v1100 = vpop.f32.mrf.mxu0
      %v1101 = vadd.f32 0.0, %v1100
      %v1102 = vpop.f32.mrf.mxu0
      %v1103 = vadd.f32 0.0, %v1102
      %v1104 = vpop.f32.mrf.mxu0
      %v1105 = vpop.f32.mrf.mxu0
      %1106 = vdwg.mxu0
      %1107 = vmatprep.subr.bf16.mxu0 %v903
      %1108 = vmatpush1.bf16.msra.mxu0 %v902
      %1109 = vmatprep.subr.bf16.mxu0 %v899
      %1110 = vmatpush1.bf16.msra.mxu0 %v898
      %1111 = vmatprep.subr.bf16.mxu0 %v895
      %1112 = vmatpush1.bf16.msra.mxu0 %v894
      %1113 = vmatprep.subr.bf16.mxu0 %v891
      %1114 = vmatpush1.bf16.msra.mxu0 %v890
      %1115 = vmatprep.subr.bf16.mxu0 %v887
      %1116 = vmatpush1.bf16.msra.mxu0 %v886
      %1117 = vmatprep.subr.bf16.mxu0 %v883
      %1118 = vmatpush1.bf16.msra.mxu0 %v882
      %1119 = vmatprep.subr.bf16.mxu0 %v879
      %1120 = vmatpush1.bf16.msra.mxu0 %v878
      %1121 = vmatprep.subr.bf16.mxu0 %v875
      %1122 = vmatpush1.bf16.msra.mxu0 %v874
      %1123 = vmatprep.subr.bf16.mxu0 %v935
      %1124 = vmatpush2.bf16.msra.mxu0 %v934
      %1125 = vmatprep.subr.bf16.mxu0 %v931
      %1126 = vmatpush2.bf16.msra.mxu0 %v930
      %1127 = vmatprep.subr.bf16.mxu0 %v927
      %1128 = vmatpush2.bf16.msra.mxu0 %v926
      %1129 = vmatprep.subr.bf16.mxu0 %v923
      %1130 = vmatpush2.bf16.msra.mxu0 %v922
      %1131 = vmatprep.subr.bf16.mxu0 %v919
      %1132 = vmatpush2.bf16.msra.mxu0 %v918
      %1133 = vmatprep.subr.bf16.mxu0 %v915
      %1134 = vmatpush2.bf16.msra.mxu0 %v914
      %1135 = vmatprep.subr.bf16.mxu0 %v911
      %1136 = vmatpush2.bf16.msra.mxu0 %v910
      %1137 = vmatprep.subr.bf16.mxu0 %v907
      %1138 = vmatpush2.bf16.msra.mxu0 %v906
      %1139 = vmatprep.mubr.bf16.mxu0 %v421
      %1140 = vmatmul.mubr.bf16.gmra.mxu0 %v420
      %v1141 = vpop.f32.mrf.mxu0
      %v1142 = vadd.f32 %v1101, %v1141
      %v1143 = vpop.f32.mrf.mxu0
      %v1144 = vadd.f32 %v1103, %v1143
      %v1145 = vpop.f32.mrf.mxu0
      %v1146 = vpop.f32.mrf.mxu0
      %1147 = vdwg.mxu0
      %1148 = vmatprep.subr.bf16.mxu0 %v841
      %1149 = vmatpush1.bf16.msra.mxu0 %v840
      %1150 = vmatprep.subr.bf16.mxu0 %v837
      %1151 = vmatpush1.bf16.msra.mxu0 %v836
      %1152 = vmatprep.subr.bf16.mxu0 %v833
      %1153 = vmatpush1.bf16.msra.mxu0 %v832
      %1154 = vmatprep.subr.bf16.mxu0 %v829
      %1155 = vmatpush1.bf16.msra.mxu0 %v828
      %1156 = vmatprep.subr.bf16.mxu0 %v825
      %1157 = vmatpush1.bf16.msra.mxu0 %v824
      %1158 = vmatprep.subr.bf16.mxu0 %v821
      %1159 = vmatpush1.bf16.msra.mxu0 %v820
      %1160 = vmatprep.subr.bf16.mxu0 %v817
      %1161 = vmatpush1.bf16.msra.mxu0 %v816
      %1162 = vmatprep.subr.bf16.mxu0 %v813
      %1163 = vmatpush1.bf16.msra.mxu0 %v812
      %1164 = vmatprep.subr.bf16.mxu0 %v873
      %1165 = vmatpush2.bf16.msra.mxu0 %v872
      %1166 = vmatprep.subr.bf16.mxu0 %v869
      %1167 = vmatpush2.bf16.msra.mxu0 %v868
      %1168 = vmatprep.subr.bf16.mxu0 %v865
      %1169 = vmatpush2.bf16.msra.mxu0 %v864
      %1170 = vmatprep.subr.bf16.mxu0 %v861
      %1171 = vmatpush2.bf16.msra.mxu0 %v860
      %1172 = vmatprep.subr.bf16.mxu0 %v857
      %1173 = vmatpush2.bf16.msra.mxu0 %v856
      %1174 = vmatprep.subr.bf16.mxu0 %v853
      %1175 = vmatpush2.bf16.msra.mxu0 %v852
      %1176 = vmatprep.subr.bf16.mxu0 %v849
      %1177 = vmatpush2.bf16.msra.mxu0 %v848
      %1178 = vmatprep.subr.bf16.mxu0 %v845
      %1179 = vmatpush2.bf16.msra.mxu0 %v844
      %1180 = vmatprep.mubr.bf16.mxu0 %v419
      %1181 = vmatmul.mubr.bf16.gmra.mxu0 %v418
      %v1182 = vpop.f32.mrf.mxu0
      %v1183 = vadd.f32 0.0, %v1182
      %v1184 = vpop.f32.mrf.mxu0
      %v1185 = vadd.f32 0.0, %v1184
      %v1186 = vpop.f32.mrf.mxu0
      %v1187 = vpop.f32.mrf.mxu0
      %1188 = vdwg.mxu0
      %1189 = vmatprep.subr.bf16.mxu0 %v905
      %1190 = vmatpush1.bf16.msra.mxu0 %v904
      %1191 = vmatprep.subr.bf16.mxu0 %v901
      %1192 = vmatpush1.bf16.msra.mxu0 %v900
      %1193 = vmatprep.subr.bf16.mxu0 %v897
      %1194 = vmatpush1.bf16.msra.mxu0 %v896
      %1195 = vmatprep.subr.bf16.mxu0 %v893
      %1196 = vmatpush1.bf16.msra.mxu0 %v892
      %1197 = vmatprep.subr.bf16.mxu0 %v889
      %1198 = vmatpush1.bf16.msra.mxu0 %v888
      %1199 = vmatprep.subr.bf16.mxu0 %v885
      %1200 = vmatpush1.bf16.msra.mxu0 %v884
      %1201 = vmatprep.subr.bf16.mxu0 %v881
      %1202 = vmatpush1.bf16.msra.mxu0 %v880
      %1203 = vmatprep.subr.bf16.mxu0 %v877
      %1204 = vmatpush1.bf16.msra.mxu0 %v876
      %1205 = vmatprep.subr.bf16.mxu0 %v937
      %1206 = vmatpush2.bf16.msra.mxu0 %v936
      %1207 = vmatprep.subr.bf16.mxu0 %v933
      %1208 = vmatpush2.bf16.msra.mxu0 %v932
      %1209 = vmatprep.subr.bf16.mxu0 %v929
      %1210 = vmatpush2.bf16.msra.mxu0 %v928
      %1211 = vmatprep.subr.bf16.mxu0 %v925
      %1212 = vmatpush2.bf16.msra.mxu0 %v924
      %1213 = vmatprep.subr.bf16.mxu0 %v921
      %1214 = vmatpush2.bf16.msra.mxu0 %v920
      %1215 = vmatprep.subr.bf16.mxu0 %v917
      %1216 = vmatpush2.bf16.msra.mxu0 %v916
      %1217 = vmatprep.subr.bf16.mxu0 %v913
      %1218 = vmatpush2.bf16.msra.mxu0 %v912
      %1219 = vmatprep.subr.bf16.mxu0 %v909
      %1220 = vmatpush2.bf16.msra.mxu0 %v908
      %1221 = vmatprep.mubr.bf16.mxu0 %v421
      %1222 = vmatmul.mubr.bf16.gmra.mxu0 %v420
      %v1223 = vpop.f32.mrf.mxu0
      %v1224 = vadd.f32 %v1183, %v1223
      %v1225 = vpop.f32.mrf.mxu0
      %v1226 = vadd.f32 %v1185, %v1225
      %v1227 = vpop.f32.mrf.mxu0
      %v1228 = vpop.f32.mrf.mxu0
      %1229 = vdwg.mxu0
      %v1230 = vadd.f32 %v278, %v1142
      %v1231 = vadd.f32 %v279, %v1144
      %v1232 = vadd.f32 %v280, %v1224
      %v1233 = vadd.f32 %v281, %v1226
      %1234 = vst [vmem:[#allocation2] sm:$0xff] %v1230
      %1235 = vst [vmem:[#allocation2 + $0x8] sm:$0xff] %v1231
      %1236 = vst [vmem:[#allocation2 + $0x10] sm:$0xff] %v1232
      %1237 = vst [vmem:[#allocation2 + $0x18] sm:$0xff] %v1233
      // Predicated region
      $region37: #{autoencoder_forward.10} parent=31 // pred_check
        %p1238 = pneg %p270
      $region38: #{autoencoder_forward.10} parent=31 // pred_check_branch
        %1240 = sbr.rel (%p1238) target = $region40
      $region39: #{autoencoder_forward.10} parent=31 // pred_region
        %v1241 = vld [vmem:[#allocation2] sm:$0xff]
        %v1242 = vld [vmem:[#allocation2 + $0x8] sm:$0xff]
        %v1243 = vld [vmem:[#allocation2 + $0x10] sm:$0xff]
        %v1244 = vld [vmem:[#allocation2 + $0x18] sm:$0xff]
        %v1245 = vld [vmem:[%s258] sm:$0xf]
        %v1247 = vlaneseq
        %v1248 = vshrl.u32 %v1247, 7
        %v1249 = vsub.s32 0, %v1248
        %v1250 = vrot.slane %v1245, %v1249
        %v1251 = vlaneseq
        %v1252 = vshrl.u32 %v1251, 7
        %v1253 = vsub.s32 1, %v1252
        %v1254 = vrot.slane %v1245, %v1253
        %v1255 = vlaneseq
        %v1256 = vshrl.u32 %v1255, 7
        %v1257 = vsub.s32 2, %v1256
        %v1258 = vrot.slane %v1245, %v1257
        %v1259 = vlaneseq
        %v1260 = vshrl.u32 %v1259, 7
        %v1261 = vsub.s32 3, %v1260
        %v1262 = vrot.slane %v1245, %v1261
        %v1267 = vadd.f32 %v1241, %v1250
        %v1268 = vadd.f32 %v1242, %v1254
        %v1269 = vadd.f32 %v1243, %v1258
        %v1270 = vadd.f32 %v1244, %v1262
        %v1271 = vmax.f32 %v1267, 0.0
        %v1272 = vmax.f32 %v1268, 0.0
        %v1273 = vmax.f32 %v1269, 0.0
        %v1274 = vmax.f32 %v1270, 0.0
        %v1275 = vpack.c.bf16 %v1271, %v1271
        %v1276 = vpack.c.bf16 %v1272, %v1272
        %v1277 = vpack.c.bf16 %v1273, %v1273
        %v1278 = vpack.c.bf16 %v1274, %v1274
        %v1283 = vunpack.c.l.b16 %v1275
        %v1284 = vunpack.c.l.b16 %v1276
        %v1285 = vunpack.c.l.b16 %v1277
        %v1286 = vunpack.c.l.b16 %v1278
        %v1287 = vpack.c.b16 %v1284, %v1283
        %v1288 = vpack.c.b16 %v1286, %v1285
        %1291 = vst [vmem:[%s268] sm:$0xff] %v1287
        %1292 = vst [vmem:[%s268 + $0x8] sm:$0xff] %v1288
      $region40: #{autoencoder_forward.10} parent=31 // pred_fallthru
        _
      %s1293 = smul.u32 4, %s19
      %p1294 = scmp.lt.s32.totalorder %s20, 0
      %s1295 = scalar_select %p1294, %s20, 0
      %p1296 = scmp.lt.s32.totalorder %s1293, 7
      %s1297 = scalar_select %p1296, %s1293, 7
      %s1298 = smul.addr %s1295, 8
      %s1299 = sadd.s32 %s1297, %s1298
      %s1300 = smul.addr %s1299, 4
      %s1301 = scalar_lea.vmem %s3, %s1300
      // Predicated region
      $region41: #{autoencoder_forward.10} parent=31 // pred_check
        %p1302 = pneg %p135
      $region42: #{autoencoder_forward.10} parent=31 // pred_check_branch
        %1304 = sbr.rel (%p1302) target = $region44
      $region43: #{autoencoder_forward.10} parent=31 // pred_region
        %s1305 = smul.u32 4, %s19
      $region44: #{autoencoder_forward.10} parent=31 // pred_fallthru
        _
    $region32: #{autoencoder_forward.10} parent=5 // pred_fallthru
      _
    %p1306 = scmp.le.s32.totalorder 2, %s9
    // Predicated region
    $region45: #{autoencoder_forward.10} parent=5 // pred_check
      %p1307 = pneg %p1306
    $region46: #{autoencoder_forward.10} parent=5 // pred_check_branch
      %1309 = sbr.rel (%p1307) target = $region48
    $region47: #{autoencoder_forward.10} parent=5 // pred_region
      %s1310 = ssub.s32 %s9, 2
      // Predicated region
      $region49: #{autoencoder_forward.10} parent=47 // pred_check
        %p1311 = pneg %p141
      $region50: #{autoencoder_forward.10} parent=47 // pred_check_branch
        %1313 = sbr.rel (%p1311) target = $region52
      $region51: #{autoencoder_forward.10} parent=47 // pred_region
        %s1314 = smul.u32 4, %s22
        %p1315 = scmp.lt.s32.totalorder %s23, 0
        %s1316 = scalar_select %p1315, %s23, 0
        %p1317 = scmp.lt.s32.totalorder %s1314, 7
        %s1318 = scalar_select %p1317, %s1314, 7
        %s1319 = smul.addr %s1316, 8
        %s1320 = sadd.s32 %s1318, %s1319
        %s1321 = smul.addr %s1320, 4
        %s1322 = scalar_lea.vmem %s3, %s1321
      $region52: #{autoencoder_forward.10} parent=47 // pred_fallthru
        _
    $region48: #{autoencoder_forward.10} parent=5 // pred_fallthru
      _
  $region6: #{autoencoder_forward.10} parent=0 // loop_footer
    %s13 = sadd.s32 1, %s9
  $region7: #{autoencoder_forward.10} parent=0 // loop_footer_branch
    %8 = sbr.rel target = $region3
  $region8: #{autoencoder_forward.10} parent=0 // loop_exit
    _

// kernel: autoencoder_forward.6
$region0: #{autoencoder_forward.6}
  #allocation0 [shape = 'u32[]', space=smem, size = 0x4, offset = 0x4, fixed_abs, tag = 'smem constant byte address 0x4 - core index']
  #allocation1 [shape = 'u32[144,128]{1,0:T(1,128)}', space=vmem, size = 0x12000, scoped, tag = 'internal scratch']
  #allocation2 [shape = 'f32[8,512]{1,0:T(8,128)}', space=vmem, size = 0x4000, scoped, tag = 'scratch operand']
  %s0 = inlined_call_operand.vmem [shape: bf16[8,1536], index: 0, kind: input, shape index: {}]
  %s1 = inlined_call_operand.hbm [shape: bf16[2,1,1536,512], index: 1, kind: input, shape index: {}]
  %s2 = inlined_call_operand.hbm [shape: f32[1,1024], index: 2, kind: input, shape index: {}]
  %s3 = inlined_call_operand.vmem [shape: bf16[8,1024], index: 3, kind: output, shape index: {}]
  %s4 = sld [smem:[#allocation0]]
  $region61: #{autoencoder_forward.6} parent=0
    _
  %s6 = ssub.s32 1, %s4
  %s7 = scalar_select 0, %s6, %s4
  $region1: #{autoencoder_forward.6} parent=0
    #allocation3 [shape = 'u8[3145728]{0}', space=vmem, size = 0x300000, scoped, tag = 'input window, operand 1']
    #allocation4 [shape = 's32[2]{0}', space=sflag, size = 0x8, scoped, tag = 'scoped memory for autoencoder_forward.6']
    #allocation5 [shape = 'u8[4096]{0}', space=vmem, size = 0x1000, scoped, tag = 'input window, operand 2']
    #allocation6 [shape = 's32[2]{0}', space=sflag, size = 0x8, scoped, tag = 'scoped memory for autoencoder_forward.6']
    %8 = vsyncpa [#allocation4], 0
    %s9 = scalar_lea.sflag [#allocation4], 1
    %10 = vsyncpa %s9, 0
    %11 = vsyncpa [#allocation6], 0
    %s12 = scalar_lea.sflag [#allocation6], 1
    %13 = vsyncpa %s12, 0
    loop: start=0, step=1, limit=4
    $region2: #{autoencoder_forward.6} parent=1 // loop_pre_header
      _
    $region3: #{autoencoder_forward.6} parent=1 // loop_header
      %s15 = sphi 0, %s19
      %p16 = scmp.ge.s32.totalorder %s15, 4
      %s22 = sphi 0, %s41
      %s23 = sphi 0, %s37
      %s24 = sphi 0, %s33
      %s25 = sphi 0, %s22
      %s26 = sphi 0, %s23
      %s27 = sphi 0, %s24
      %s28 = sphi 0, %s25
      %s29 = sphi 0, %s26
      %s30 = sphi 0, %s27
      %s46 = sphi 0, %s48
      %s49 = sphi 0, %s46
      %s50 = sphi 0, %s49
      %s66 = sphi 0, %s50
      %s74 = sphi 0, %s76
      %s77 = sphi 0, %s74
      %s78 = sphi 0, %s77
      %s94 = sphi 0, %s78
      %s100 = sphi 0, %s102
      %s103 = sphi 0, %s100
      %s104 = sphi 0, %s103
      %s120 = sphi 0, %s104
      %s128 = sphi 0, %s130
      %s131 = sphi 0, %s128
      %s132 = sphi 0, %s131
      %s148 = sphi 0, %s132
    $region4: #{autoencoder_forward.6} parent=1 // loop_header_branch
      %18 = sbr.rel (%p16) target = $region8
    $region5: #{autoencoder_forward.6} parent=1 // loop_body
      %s20 = ssub.s32 %s15, 1
      %s21 = ssub.s32 %s15, 2
      %s31 = sadd.s32 1, %s24
      %p32 = scmp.ge.s32.totalorder %s31, 1
      %s33 = scalar_select %p32, 0, %s31
      %s34 = sadd.s32 1, %s23
      %s35 = scalar_select %p32, %s34, %s23
      %p36 = scmp.ge.s32.totalorder %s35, 1
      %s37 = scalar_select %p36, 0, %s35
      %s38 = sadd.s32 1, %s22
      %s39 = scalar_select %p36, %s38, %s22
      %p40 = scmp.ge.s32.totalorder %s39, 2
      %s41 = scalar_select %p40, 0, %s39
      %s42 = ssub.s32 %s23, %s37
      %s43 = ssub.s32 %s24, %s33
      %s44 = sor.u32 %s42, %s43
      %p45 = scmp.eq.s32.totalorder %s44, 0
      %s47 = sadd.s32 %s46, 1
      %s48 = scalar_select %p45, %s46, %s47
      %p51 = pneg %p45
      %p52 = scmp.eq.s32.totalorder %s15, 1
      %p53 = por %p51, %p52
      %p54 = scmp.ne.s32.totalorder %s46, %s49
      %p55 = scmp.eq.s32.totalorder %s15, 0
      %p56 = por %p54, %p55
      %p57 = scmp.ne.s32.totalorder %s46, %s49
      %p58 = scmp.eq.s32.totalorder %s20, 1
      %p59 = por %p57, %p58
      %p60 = scmp.ne.s32.totalorder %s49, %s50
      %p61 = scmp.eq.s32.totalorder %s20, 0
      %p62 = por %p60, %p61
      %p63 = scmp.ne.s32.totalorder %s49, %s50
      %p64 = scmp.eq.s32.totalorder %s21, 1
      %p65 = por %p63, %p64
      %p67 = scmp.ne.s32.totalorder %s50, %s66
      %p68 = scmp.eq.s32.totalorder %s21, 0
      %p69 = por %p67, %p68
      %s70 = ssub.s32 %s22, %s41
      %s71 = ssub.s32 %s24, %s33
      %s72 = sor.u32 %s70, %s71
      %p73 = scmp.eq.s32.totalorder %s72, 0
      %s75 = sadd.s32 %s74, 1
      %s76 = scalar_select %p73, %s74, %s75
      %p79 = pneg %p73
      %p80 = scmp.eq.s32.totalorder %s15, 1
      %p81 = por %p79, %p80
      %p82 = scmp.ne.s32.totalorder %s74, %s77
      %p83 = scmp.eq.s32.totalorder %s15, 0
      %p84 = por %p82, %p83
      %p85 = scmp.ne.s32.totalorder %s74, %s77
      %p86 = scmp.eq.s32.totalorder %s20, 1
      %p87 = por %p85, %p86
      %p88 = scmp.ne.s32.totalorder %s77, %s78
      %p89 = scmp.eq.s32.totalorder %s20, 0
      %p90 = por %p88, %p89
      %p91 = scmp.ne.s32.totalorder %s77, %s78
      %p92 = scmp.eq.s32.totalorder %s21, 1
      %p93 = por %p91, %p92
      %p95 = scmp.ne.s32.totalorder %s78, %s94
      %p96 = scmp.eq.s32.totalorder %s21, 0
      %p97 = por %p95, %p96
      %s98 = ssub.s32 %s22, %s41
      %p99 = scmp.eq.s32.totalorder %s98, 0
      %s101 = sadd.s32 %s100, 1
      %s102 = scalar_select %p99, %s100, %s101
      %p105 = pneg %p99
      %p106 = scmp.eq.s32.totalorder %s15, 1
      %p107 = por %p105, %p106
      %p108 = scmp.ne.s32.totalorder %s100, %s103
      %p109 = scmp.eq.s32.totalorder %s15, 0
      %p110 = por %p108, %p109
      %p111 = scmp.ne.s32.totalorder %s100, %s103
      %p112 = scmp.eq.s32.totalorder %s20, 1
      %p113 = por %p111, %p112
      %p114 = scmp.ne.s32.totalorder %s103, %s104
      %p115 = scmp.eq.s32.totalorder %s20, 0
      %p116 = por %p114, %p115
      %p117 = scmp.ne.s32.totalorder %s103, %s104
      %p118 = scmp.eq.s32.totalorder %s21, 1
      %p119 = por %p117, %p118
      %p121 = scmp.ne.s32.totalorder %s104, %s120
      %p122 = scmp.eq.s32.totalorder %s21, 0
      %p123 = por %p121, %p122
      %s124 = ssub.s32 %s23, %s37
      %s125 = ssub.s32 %s22, %s41
      %s126 = sor.u32 %s124, %s125
      %p127 = scmp.eq.s32.totalorder %s126, 0
      %s129 = sadd.s32 %s128, 1
      %s130 = scalar_select %p127, %s128, %s129
      %p133 = pneg %p127
      %p134 = scmp.eq.s32.totalorder %s15, 1
      %p135 = por %p133, %p134
      %p136 = scmp.ne.s32.totalorder %s128, %s131
      %p137 = scmp.eq.s32.totalorder %s15, 0
      %p138 = por %p136, %p137
      %p139 = scmp.ne.s32.totalorder %s128, %s131
      %p140 = scmp.eq.s32.totalorder %s20, 1
      %p141 = por %p139, %p140
      %p142 = scmp.ne.s32.totalorder %s131, %s132
      %p143 = scmp.eq.s32.totalorder %s20, 0
      %p144 = por %p142, %p143
      %p145 = scmp.ne.s32.totalorder %s131, %s132
      %p146 = scmp.eq.s32.totalorder %s21, 1
      %p147 = por %p145, %p146
      %p149 = scmp.ne.s32.totalorder %s132, %s148
      %p150 = scmp.eq.s32.totalorder %s21, 0
      %p151 = por %p149, %p150
      %p152 = scmp.le.s32.totalorder 1, %s15
      %p153 = scmp.lt.s32.totalorder %s15, 3
      %p154 = pnand %p152, %p153
      %p155 = pneg %p154
      // Predicated region
      $region9: #{autoencoder_forward.6} parent=5 // pred_check
        _
      $region10: #{autoencoder_forward.6} parent=5 // pred_check_branch
        %157 = sbr.rel (%p154) target = $region12
      $region11: #{autoencoder_forward.6} parent=5 // pred_region
        %s158 = ssub.s32 %s15, 1
        // Predicated region
        $region13: #{autoencoder_forward.6} parent=11 // pred_check
          %p159 = pneg %p62
        $region14: #{autoencoder_forward.6} parent=11 // pred_check_branch
          %161 = sbr.rel (%p159) target = $region16
        $region15: #{autoencoder_forward.6} parent=11 // pred_region
          %s162 = smul.u32 12, %s27
          %p163 = scmp.lt.s32.totalorder %s26, 0
          %s164 = scalar_select %p163, %s26, 0
          %p165 = scmp.lt.s32.totalorder %s162, 11
          %s166 = scalar_select %p165, %s162, 11
          %s167 = smul.addr %s164, 12
          %s168 = sadd.s32 %s166, %s167
          %s169 = smul.addr %s168, 4
          %s170 = scalar_lea.vmem %s0, %s169
          %s171 = smul.u32 12, %s27
        $region16: #{autoencoder_forward.6} parent=11 // pred_fallthru
          _
      $region12: #{autoencoder_forward.6} parent=5 // pred_fallthru
        _
      %p172 = scmp.lt.s32.totalorder %s15, 2
      // Predicated region
      $region17: #{autoencoder_forward.6} parent=5 // pred_check
        %p173 = pneg %p172
      $region18: #{autoencoder_forward.6} parent=5 // pred_check_branch
        %175 = sbr.rel (%p173) target = $region20
      $region19: #{autoencoder_forward.6} parent=5 // pred_region
        // Predicated region
        $region21: #{autoencoder_forward.6} parent=19 // pred_check
          %p176 = pneg %p84
        $region22: #{autoencoder_forward.6} parent=19 // pred_check_branch
          %178 = sbr.rel (%p176) target = $region24
        $region23: #{autoencoder_forward.6} parent=19 // pred_region
          %s179 = sand.u32 %s74, 1
          %s180 = scalar_lea.sflag [#allocation4], %s179
          %s181 = sand.u32 %s74, 1
          %s182 = smul.addr %s181, 3072
          %s183 = scalar_lea.vmem [#allocation3], %s182
          %s185 = ssub.s32 49152, 49152
          %186 = vsyncadd %s180, %s185
          %s187 = smul.addr %s24, 768
          %s188 = smul.addr %s22, 768
          %s189 = sadd.s32 %s187, %s188
          %s190 = smul.addr %s189, 64
          %s191 = scalar_lea.hbm %s1, %s190
          %s192 = sshll.u32 %s183, 4
          %s193 = int_to_ptr.vmem [resolvable:$true] %s192
          %198 = dma.hbm_to_vmem [thread:$0]  %s191, 49152, %s193, %s180, 256, 256, 16
        $region24: #{autoencoder_forward.6} parent=19 // pred_fallthru
          _
        // Predicated region
        $region25: #{autoencoder_forward.6} parent=19 // pred_check
          %p199 = pneg %p110
        $region26: #{autoencoder_forward.6} parent=19 // pred_check_branch
          %201 = sbr.rel (%p199) target = $region28
        $region27: #{autoencoder_forward.6} parent=19 // pred_region
          %s202 = sand.u32 %s100, 1
          %s203 = scalar_lea.sflag [#allocation6], %s202
          %s204 = sand.u32 %s100, 1
          %s205 = smul.addr %s204, 4
          %s206 = scalar_lea.vmem [#allocation5], %s205
          %s207 = smul.u32 4, %s22
          %s209 = ssub.s32 64, 64
          %210 = vsyncadd %s203, %s209
          %s211 = smul.addr %s207, 16
          %s212 = scalar_lea.hbm %s2, %s211
          %s214 = sshll.u32 %s206, 4
          %s215 = int_to_ptr.vmem [resolvable:$true] %s214
          %217 = dma.hbm_to_vmem [thread:$0]  %s212, 64, %s215, %s203
        $region28: #{autoencoder_forward.6} parent=19 // pred_fallthru
          _
      $region20: #{autoencoder_forward.6} parent=5 // pred_fallthru
        _
      %p218 = scmp.le.s32.totalorder 1, %s15
      %p219 = scmp.lt.s32.totalorder %s15, 3
      %p220 = pnand %p218, %p219
      %p221 = pneg %p220
      // Predicated region
      $region29: #{autoencoder_forward.6} parent=5 // pred_check
        _
      $region30: #{autoencoder_forward.6} parent=5 // pred_check_branch
        %223 = sbr.rel (%p220) target = $region32
      $region31: #{autoencoder_forward.6} parent=5 // pred_region
        %s224 = ssub.s32 %s15, 1
        %s225 = sand.u32 %s77, 1
        %s226 = scalar_lea.sflag [#allocation4], %s225
        %s227 = sand.u32 %s77, 1
        %s228 = smul.addr %s227, 3072
        %s229 = scalar_lea.vmem [#allocation3], %s228
        // Predicated region
        $region33: #{autoencoder_forward.6} parent=31 // pred_check
          %p230 = pneg %p90
        $region34: #{autoencoder_forward.6} parent=31 // pred_check_branch
          %232 = sbr.rel (%p230) target = $region36
        $region35: #{autoencoder_forward.6} parent=31 // pred_region
          %233 = dma.done %s226, 49152
        $region36: #{autoencoder_forward.6} parent=31 // pred_fallthru
          _
        %s234 = sand.u32 %s103, 1
        %s235 = scalar_lea.sflag [#allocation6], %s234
        %s236 = sand.u32 %s103, 1
        %s237 = smul.addr %s236, 4
        %s238 = scalar_lea.vmem [#allocation5], %s237
        // Predicated region
        $region37: #{autoencoder_forward.6} parent=31 // pred_check
          %p239 = pneg %p116
        $region38: #{autoencoder_forward.6} parent=31 // pred_check_branch
          %241 = sbr.rel (%p239) target = $region40
        $region39: #{autoencoder_forward.6} parent=31 // pred_region
          %242 = dma.done %s235, 64
        $region40: #{autoencoder_forward.6} parent=31 // pred_fallthru
          _
        %s243 = smul.u32 12, %s27
        %p244 = scmp.lt.s32.totalorder %s26, 0
        %s245 = scalar_select %p244, %s26, 0
        %p246 = scmp.lt.s32.totalorder %s243, 11
        %s247 = scalar_select %p246, %s243, 11
        %s248 = smul.addr %s245, 12
        %s249 = sadd.s32 %s247, %s248
        %s250 = smul.addr %s249, 4
        %s251 = scalar_lea.vmem %s0, %s250
        %p252 = pneg %p62
        %p253 = pneg %p59
        %s254 = sand.u32 %s77, 1
        %s255 = scalar_lea.sflag [#allocation4], %s254
        %s256 = sand.u32 %s77, 1
        %s257 = smul.addr %s256, 3072
        %s258 = scalar_lea.vmem [#allocation3], %s257
        %p259 = pneg %p90
        %p260 = pneg %p87
        %s261 = sand.u32 %s103, 1
        %s262 = scalar_lea.sflag [#allocation6], %s261
        %s263 = sand.u32 %s103, 1
        %s264 = smul.addr %s263, 4
        %s265 = scalar_lea.vmem [#allocation5], %s264
        %p266 = pneg %p116
        %p267 = pneg %p113
        %p268 = pneg %p144
        %p269 = pneg %p141
        %s270 = smul.u32 4, %s25
        %p271 = scmp.lt.s32.totalorder %s26, 0
        %s272 = scalar_select %p271, %s26, 0
        %p273 = scmp.lt.s32.totalorder %s270, 7
        %s274 = scalar_select %p273, %s270, 7
        %s275 = smul.addr %s272, 8
        %s276 = sadd.s32 %s274, %s275
        %s277 = smul.addr %s276, 4
        %s278 = scalar_lea.vmem %s3, %s277
        %s279 = smul.u32 12, %s27
        %p280 = scmp.lt.s32.totalorder %s26, 0
        %s281 = scalar_select %p280, %s26, 0
        %p282 = scmp.lt.s32.totalorder %s279, 11
        %s283 = scalar_select %p282, %s279, 11
        %s284 = smul.addr %s281, 12
        %s285 = sadd.s32 %s283, %s284
        %s286 = smul.addr %s285, 4
        %s287 = scalar_lea.vmem %s0, %s286
        %s288 = smul.u32 12, %s27
        %s289 = smul.u32 4, %s25
        %s290 = smul.u32 4, %s25
        %p291 = scmp.lt.s32.totalorder %s26, 0
        %s292 = scalar_select %p291, %s26, 0
        %p293 = scmp.lt.s32.totalorder %s290, 7
        %s294 = scalar_select %p293, %s290, 7
        %s295 = smul.addr %s292, 8
        %s296 = sadd.s32 %s294, %s295
        %s297 = smul.addr %s296, 4
        %s298 = scalar_lea.vmem %s3, %s297
        %s299 = smul.u32 4, %s25
        %p300 = scmp.eq.s32.totalorder %s27, 0
        // Predicated region
        $region41: #{autoencoder_forward.6} parent=31 // pred_check
          %p301 = pneg %p300
        $region42: #{autoencoder_forward.6} parent=31 // pred_check_branch
          %303 = sbr.rel (%p301) target = $region44
        $region43: #{autoencoder_forward.6} parent=31 // pred_region
          %304 = vst [vmem:[#allocation2] sm:$0xff] 0.0
          %305 = vst [vmem:[#allocation2 + $0x8] sm:$0xff] 0.0
          %306 = vst [vmem:[#allocation2 + $0x10] sm:$0xff] 0.0
          %307 = vst [vmem:[#allocation2 + $0x18] sm:$0xff] 0.0
        $region44: #{autoencoder_forward.6} parent=31 // pred_fallthru
          _
        %v308 = vld [vmem:[#allocation2] sm:$0xff]
        %v309 = vld [vmem:[#allocation2 + $0x8] sm:$0xff]
        %v310 = vld [vmem:[#allocation2 + $0x10] sm:$0xff]
        %v311 = vld [vmem:[#allocation2 + $0x18] sm:$0xff]
        %v312 = vld [vmem:[%s287] sm:$0xff]
        %v313 = vld [vmem:[%s287 + $0x8] sm:$0xff]
        %v314 = vld [vmem:[%s287 + $0x10] sm:$0xff]
        %v315 = vld [vmem:[%s287 + $0x18] sm:$0xff]
        %v316 = vld [vmem:[%s287 + $0x20] sm:$0xff]
        %v317 = vld [vmem:[%s287 + $0x28] sm:$0xff]
        %v318 = vld [vmem:[%s229] sm:$0xff]
        %v319 = vld [vmem:[%s229 + $0x8] sm:$0xff]
        %v320 = vld [vmem:[%s229 + $0x10] sm:$0xff]
        %v321 = vld [vmem:[%s229 + $0x18] sm:$0xff]
        %v322 = vld [vmem:[%s229 + $0x20] sm:$0xff]
        %v323 = vld [vmem:[%s229 + $0x28] sm:$0xff]
        %v324 = vld [vmem:[%s229 + $0x30] sm:$0xff]
        %v325 = vld [vmem:[%s229 + $0x38] sm:$0xff]
        %v326 = vld [vmem:[%s229 + $0x40] sm:$0xff]
        %v327 = vld [vmem:[%s229 + $0x48] sm:$0xff]
        %v328 = vld [vmem:[%s229 + $0x50] sm:$0xff]
        %v329 = vld [vmem:[%s229 + $0x58] sm:$0xff]
        %v330 = vld [vmem:[%s229 + $0x60] sm:$0xff]
        %v331 = vld [vmem:[%s229 + $0x68] sm:$0xff]
        %v332 = vld [vmem:[%s229 + $0x70] sm:$0xff]
        %v333 = vld [vmem:[%s229 + $0x78] sm:$0xff]
        %v334 = vld [vmem:[%s229 + $0x80] sm:$0xff]
        %v335 = vld [vmem:[%s229 + $0x88] sm:$0xff]
        %v336 = vld [vmem:[%s229 + $0x90] sm:$0xff]
        %v337 = vld [vmem:[%s229 + $0x98] sm:$0xff]
        %v338 = vld [vmem:[%s229 + $0xa0] sm:$0xff]
        %v339 = vld [vmem:[%s229 + $0xa8] sm:$0xff]
        %v340 = vld [vmem:[%s229 + $0xb0] sm:$0xff]
        %v341 = vld [vmem:[%s229 + $0xb8] sm:$0xff]
        %v342 = vld [vmem:[%s229 + $0xc0] sm:$0xff]
        %v343 = vld [vmem:[%s229 + $0xc8] sm:$0xff]
        %v344 = vld [vmem:[%s229 + $0xd0] sm:$0xff]
        %v345 = vld [vmem:[%s229 + $0xd8] sm:$0xff]
        %v346 = vld [vmem:[%s229 + $0xe0] sm:$0xff]
        %v347 = vld [vmem:[%s229 + $0xe8] sm:$0xff]
        %v348 = vld [vmem:[%s229 + $0xf0] sm:$0xff]
        %v349 = vld [vmem:[%s229 + $0xf8] sm:$0xff]
        %v350 = vld [vmem:[%s229 + $0x100] sm:$0xff]
        %v351 = vld [vmem:[%s229 + $0x108] sm:$0xff]
        %v352 = vld [vmem:[%s229 + $0x110] sm:$0xff]
        %v353 = vld [vmem:[%s229 + $0x118] sm:$0xff]
        %v354 = vld [vmem:[%s229 + $0x120] sm:$0xff]
        %v355 = vld [vmem:[%s229 + $0x128] sm:$0xff]
        %v356 = vld [vmem:[%s229 + $0x130] sm:$0xff]
        %v357 = vld [vmem:[%s229 + $0x138] sm:$0xff]
        %v358 = vld [vmem:[%s229 + $0x140] sm:$0xff]
        %v359 = vld [vmem:[%s229 + $0x148] sm:$0xff]
        %v360 = vld [vmem:[%s229 + $0x150] sm:$0xff]
        %v361 = vld [vmem:[%s229 + $0x158] sm:$0xff]
        %v362 = vld [vmem:[%s229 + $0x160] sm:$0xff]
        %v363 = vld [vmem:[%s229 + $0x168] sm:$0xff]
        %v364 = vld [vmem:[%s229 + $0x170] sm:$0xff]
        %v365 = vld [vmem:[%s229 + $0x178] sm:$0xff]
        %v366 = vld [vmem:[%s229 + $0x180] sm:$0xff]
        %v367 = vld [vmem:[%s229 + $0x188] sm:$0xff]
        %v368 = vld [vmem:[%s229 + $0x190] sm:$0xff]
        %v369 = vld [vmem:[%s229 + $0x198] sm:$0xff]
        %v370 = vld [vmem:[%s229 + $0x1a0] sm:$0xff]
        %v371 = vld [vmem:[%s229 + $0x1a8] sm:$0xff]
        %v372 = vld [vmem:[%s229 + $0x1b0] sm:$0xff]
        %v373 = vld [vmem:[%s229 + $0x1b8] sm:$0xff]
        %v374 = vld [vmem:[%s229 + $0x1c0] sm:$0xff]
        %v375 = vld [vmem:[%s229 + $0x1c8] sm:$0xff]
        %v376 = vld [vmem:[%s229 + $0x1d0] sm:$0xff]
        %v377 = vld [vmem:[%s229 + $0x1d8] sm:$0xff]
        %v378 = vld [vmem:[%s229 + $0x1e0] sm:$0xff]
        %v379 = vld [vmem:[%s229 + $0x1e8] sm:$0xff]
        %v380 = vld [vmem:[%s229 + $0x1f0] sm:$0xff]
        %v381 = vld [vmem:[%s229 + $0x1f8] sm:$0xff]
        %v382 = vld [vmem:[%s229 + $0x200] sm:$0xff]
        %v383 = vld [vmem:[%s229 + $0x208] sm:$0xff]
        %v384 = vld [vmem:[%s229 + $0x210] sm:$0xff]
        %v385 = vld [vmem:[%s229 + $0x218] sm:$0xff]
        %v386 = vld [vmem:[%s229 + $0x220] sm:$0xff]
        %v387 = vld [vmem:[%s229 + $0x228] sm:$0xff]
        %v388 = vld [vmem:[%s229 + $0x230] sm:$0xff]
        %v389 = vld [vmem:[%s229 + $0x238] sm:$0xff]
        %v390 = vld [vmem:[%s229 + $0x240] sm:$0xff]
        %v391 = vld [vmem:[%s229 + $0x248] sm:$0xff]
        %v392 = vld [vmem:[%s229 + $0x250] sm:$0xff]
        %v393 = vld [vmem:[%s229 + $0x258] sm:$0xff]
        %v394 = vld [vmem:[%s229 + $0x260] sm:$0xff]
        %v395 = vld [vmem:[%s229 + $0x268] sm:$0xff]
        %v396 = vld [vmem:[%s229 + $0x270] sm:$0xff]
        %v397 = vld [vmem:[%s229 + $0x278] sm:$0xff]
        %v398 = vld [vmem:[%s229 + $0x280] sm:$0xff]
        %v399 = vld [vmem:[%s229 + $0x288] sm:$0xff]
        %v400 = vld [vmem:[%s229 + $0x290] sm:$0xff]
        %v401 = vld [vmem:[%s229 + $0x298] sm:$0xff]
        %v402 = vld [vmem:[%s229 + $0x2a0] sm:$0xff]
        %v403 = vld [vmem:[%s229 + $0x2a8] sm:$0xff]
        %v404 = vld [vmem:[%s229 + $0x2b0] sm:$0xff]
        %v405 = vld [vmem:[%s229 + $0x2b8] sm:$0xff]
        %v406 = vld [vmem:[%s229 + $0x2c0] sm:$0xff]
        %v407 = vld [vmem:[%s229 + $0x2c8] sm:$0xff]
        %v408 = vld [vmem:[%s229 + $0x2d0] sm:$0xff]
        %v409 = vld [vmem:[%s229 + $0x2d8] sm:$0xff]
        %v410 = vld [vmem:[%s229 + $0x2e0] sm:$0xff]
        %v411 = vld [vmem:[%s229 + $0x2e8] sm:$0xff]
        %v412 = vld [vmem:[%s229 + $0x2f0] sm:$0xff]
        %v413 = vld [vmem:[%s229 + $0x2f8] sm:$0xff]
        %v414 = vld [vmem:[%s229 + $0x300] sm:$0xff]
        %v415 = vld [vmem:[%s229 + $0x308] sm:$0xff]
        %v416 = vld [vmem:[%s229 + $0x310] sm:$0xff]
        %v417 = vld [vmem:[%s229 + $0x318] sm:$0xff]
        %v418 = vld [vmem:[%s229 + $0x320] sm:$0xff]
        %v419 = vld [vmem:[%s229 + $0x328] sm:$0xff]
        %v420 = vld [vmem:[%s229 + $0x330] sm:$0xff]
        %v421 = vld [vmem:[%s229 + $0x338] sm:$0xff]
        %v422 = vld [vmem:[%s229 + $0x340] sm:$0xff]
        %v423 = vld [vmem:[%s229 + $0x348] sm:$0xff]
        %v424 = vld [vmem:[%s229 + $0x350] sm:$0xff]
        %v425 = vld [vmem:[%s229 + $0x358] sm:$0xff]
        %v426 = vld [vmem:[%s229 + $0x360] sm:$0xff]
        %v427 = vld [vmem:[%s229 + $0x368] sm:$0xff]
        %v428 = vld [vmem:[%s229 + $0x370] sm:$0xff]
        %v429 = vld [vmem:[%s229 + $0x378] sm:$0xff]
        %v430 = vld [vmem:[%s229 + $0x380] sm:$0xff]
        %v431 = vld [vmem:[%s229 + $0x388] sm:$0xff]
        %v432 = vld [vmem:[%s229 + $0x390] sm:$0xff]
        %v433 = vld [vmem:[%s229 + $0x398] sm:$0xff]
        %v434 = vld [vmem:[%s229 + $0x3a0] sm:$0xff]
        %v435 = vld [vmem:[%s229 + $0x3a8] sm:$0xff]
        %v436 = vld [vmem:[%s229 + $0x3b0] sm:$0xff]
        %v437 = vld [vmem:[%s229 + $0x3b8] sm:$0xff]
        %v438 = vld [vmem:[%s229 + $0x3c0] sm:$0xff]
        %v439 = vld [vmem:[%s229 + $0x3c8] sm:$0xff]
        %v440 = vld [vmem:[%s229 + $0x3d0] sm:$0xff]
        %v441 = vld [vmem:[%s229 + $0x3d8] sm:$0xff]
        %v442 = vld [vmem:[%s229 + $0x3e0] sm:$0xff]
        %v443 = vld [vmem:[%s229 + $0x3e8] sm:$0xff]
        %v444 = vld [vmem:[%s229 + $0x3f0] sm:$0xff]
        %v445 = vld [vmem:[%s229 + $0x3f8] sm:$0xff]
        %v446 = vld [vmem:[%s229 + $0x400] sm:$0xff]
        %v447 = vld [vmem:[%s229 + $0x408] sm:$0xff]
        %v448 = vld [vmem:[%s229 + $0x410] sm:$0xff]
        %v449 = vld [vmem:[%s229 + $0x418] sm:$0xff]
        %v450 = vld [vmem:[%s229 + $0x420] sm:$0xff]
        %v451 = vld [vmem:[%s229 + $0x428] sm:$0xff]
        %v452 = vld [vmem:[%s229 + $0x430] sm:$0xff]
        %v453 = vld [vmem:[%s229 + $0x438] sm:$0xff]
        %v454 = vld [vmem:[%s229 + $0x440] sm:$0xff]
        %v455 = vld [vmem:[%s229 + $0x448] sm:$0xff]
        %v456 = vld [vmem:[%s229 + $0x450] sm:$0xff]
        %v457 = vld [vmem:[%s229 + $0x458] sm:$0xff]
        %v458 = vld [vmem:[%s229 + $0x460] sm:$0xff]
        %v459 = vld [vmem:[%s229 + $0x468] sm:$0xff]
        %v460 = vld [vmem:[%s229 + $0x470] sm:$0xff]
        %v461 = vld [vmem:[%s229 + $0x478] sm:$0xff]
        %v462 = vld [vmem:[%s229 + $0x480] sm:$0xff]
        %v463 = vld [vmem:[%s229 + $0x488] sm:$0xff]
        %v464 = vld [vmem:[%s229 + $0x490] sm:$0xff]
        %v465 = vld [vmem:[%s229 + $0x498] sm:$0xff]
        %v466 = vld [vmem:[%s229 + $0x4a0] sm:$0xff]
        %v467 = vld [vmem:[%s229 + $0x4a8] sm:$0xff]
        %v468 = vld [vmem:[%s229 + $0x4b0] sm:$0xff]
        %v469 = vld [vmem:[%s229 + $0x4b8] sm:$0xff]
        %v470 = vld [vmem:[%s229 + $0x4c0] sm:$0xff]
        %v471 = vld [vmem:[%s229 + $0x4c8] sm:$0xff]
        %v472 = vld [vmem:[%s229 + $0x4d0] sm:$0xff]
        %v473 = vld [vmem:[%s229 + $0x4d8] sm:$0xff]
        %v474 = vld [vmem:[%s229 + $0x4e0] sm:$0xff]
        %v475 = vld [vmem:[%s229 + $0x4e8] sm:$0xff]
        %v476 = vld [vmem:[%s229 + $0x4f0] sm:$0xff]
        %v477 = vld [vmem:[%s229 + $0x4f8] sm:$0xff]
        %v478 = vld [vmem:[%s229 + $0x500] sm:$0xff]
        %v479 = vld [vmem:[%s229 + $0x508] sm:$0xff]
        %v480 = vld [vmem:[%s229 + $0x510] sm:$0xff]
        %v481 = vld [vmem:[%s229 + $0x518] sm:$0xff]
        %v482 = vld [vmem:[%s229 + $0x520] sm:$0xff]
        %v483 = vld [vmem:[%s229 + $0x528] sm:$0xff]
        %v484 = vld [vmem:[%s229 + $0x530] sm:$0xff]
        %v485 = vld [vmem:[%s229 + $0x538] sm:$0xff]
        %v486 = vld [vmem:[%s229 + $0x540] sm:$0xff]
        %v487 = vld [vmem:[%s229 + $0x548] sm:$0xff]
        %v488 = vld [vmem:[%s229 + $0x550] sm:$0xff]
        %v489 = vld [vmem:[%s229 + $0x558] sm:$0xff]
        %v490 = vld [vmem:[%s229 + $0x560] sm:$0xff]
        %v491 = vld [vmem:[%s229 + $0x568] sm:$0xff]
        %v492 = vld [vmem:[%s229 + $0x570] sm:$0xff]
        %v493 = vld [vmem:[%s229 + $0x578] sm:$0xff]
        %v494 = vld [vmem:[%s229 + $0x580] sm:$0xff]
        %v495 = vld [vmem:[%s229 + $0x588] sm:$0xff]
        %v496 = vld [vmem:[%s229 + $0x590] sm:$0xff]
        %v497 = vld [vmem:[%s229 + $0x598] sm:$0xff]
        %v498 = vld [vmem:[%s229 + $0x5a0] sm:$0xff]
        %v499 = vld [vmem:[%s229 + $0x5a8] sm:$0xff]
        %v500 = vld [vmem:[%s229 + $0x5b0] sm:$0xff]
        %v501 = vld [vmem:[%s229 + $0x5b8] sm:$0xff]
        %v502 = vld [vmem:[%s229 + $0x5c0] sm:$0xff]
        %v503 = vld [vmem:[%s229 + $0x5c8] sm:$0xff]
        %v504 = vld [vmem:[%s229 + $0x5d0] sm:$0xff]
        %v505 = vld [vmem:[%s229 + $0x5d8] sm:$0xff]
        %v506 = vld [vmem:[%s229 + $0x5e0] sm:$0xff]
        %v507 = vld [vmem:[%s229 + $0x5e8] sm:$0xff]
        %v508 = vld [vmem:[%s229 + $0x5f0] sm:$0xff]
        %v509 = vld [vmem:[%s229 + $0x5f8] sm:$0xff]
        %v510 = vld [vmem:[%s229 + $0x600] sm:$0xff]
        %v511 = vld [vmem:[%s229 + $0x608] sm:$0xff]
        %v512 = vld [vmem:[%s229 + $0x610] sm:$0xff]
        %v513 = vld [vmem:[%s229 + $0x618] sm:$0xff]
        %v514 = vld [vmem:[%s229 + $0x620] sm:$0xff]
        %v515 = vld [vmem:[%s229 + $0x628] sm:$0xff]
        %v516 = vld [vmem:[%s229 + $0x630] sm:$0xff]
        %v517 = vld [vmem:[%s229 + $0x638] sm:$0xff]
        %v518 = vld [vmem:[%s229 + $0x640] sm:$0xff]
        %v519 = vld [vmem:[%s229 + $0x648] sm:$0xff]
        %v520 = vld [vmem:[%s229 + $0x650] sm:$0xff]
        %v521 = vld [vmem:[%s229 + $0x658] sm:$0xff]
        %v522 = vld [vmem:[%s229 + $0x660] sm:$0xff]
        %v523 = vld [vmem:[%s229 + $0x668] sm:$0xff]
        %v524 = vld [vmem:[%s229 + $0x670] sm:$0xff]
        %v525 = vld [vmem:[%s229 + $0x678] sm:$0xff]
        %v526 = vld [vmem:[%s229 + $0x680] sm:$0xff]
        %v527 = vld [vmem:[%s229 + $0x688] sm:$0xff]
        %v528 = vld [vmem:[%s229 + $0x690] sm:$0xff]
        %v529 = vld [vmem:[%s229 + $0x698] sm:$0xff]
        %v530 = vld [vmem:[%s229 + $0x6a0] sm:$0xff]
        %v531 = vld [vmem:[%s229 + $0x6a8] sm:$0xff]
        %v532 = vld [vmem:[%s229 + $0x6b0] sm:$0xff]
        %v533 = vld [vmem:[%s229 + $0x6b8] sm:$0xff]
        %v534 = vld [vmem:[%s229 + $0x6c0] sm:$0xff]
        %v535 = vld [vmem:[%s229 + $0x6c8] sm:$0xff]
        %v536 = vld [vmem:[%s229 + $0x6d0] sm:$0xff]
        %v537 = vld [vmem:[%s229 + $0x6d8] sm:$0xff]
        %v538 = vld [vmem:[%s229 + $0x6e0] sm:$0xff]
        %v539 = vld [vmem:[%s229 + $0x6e8] sm:$0xff]
        %v540 = vld [vmem:[%s229 + $0x6f0] sm:$0xff]
        %v541 = vld [vmem:[%s229 + $0x6f8] sm:$0xff]
        %v542 = vld [vmem:[%s229 + $0x700] sm:$0xff]
        %v543 = vld [vmem:[%s229 + $0x708] sm:$0xff]
        %v544 = vld [vmem:[%s229 + $0x710] sm:$0xff]
        %v545 = vld [vmem:[%s229 + $0x718] sm:$0xff]
        %v546 = vld [vmem:[%s229 + $0x720] sm:$0xff]
        %v547 = vld [vmem:[%s229 + $0x728] sm:$0xff]
        %v548 = vld [vmem:[%s229 + $0x730] sm:$0xff]
        %v549 = vld [vmem:[%s229 + $0x738] sm:$0xff]
        %v550 = vld [vmem:[%s229 + $0x740] sm:$0xff]
        %v551 = vld [vmem:[%s229 + $0x748] sm:$0xff]
        %v552 = vld [vmem:[%s229 + $0x750] sm:$0xff]
        %v553 = vld [vmem:[%s229 + $0x758] sm:$0xff]
        %v554 = vld [vmem:[%s229 + $0x760] sm:$0xff]
        %v555 = vld [vmem:[%s229 + $0x768] sm:$0xff]
        %v556 = vld [vmem:[%s229 + $0x770] sm:$0xff]
        %v557 = vld [vmem:[%s229 + $0x778] sm:$0xff]
        %v558 = vld [vmem:[%s229 + $0x780] sm:$0xff]
        %v559 = vld [vmem:[%s229 + $0x788] sm:$0xff]
        %v560 = vld [vmem:[%s229 + $0x790] sm:$0xff]
        %v561 = vld [vmem:[%s229 + $0x798] sm:$0xff]
        %v562 = vld [vmem:[%s229 + $0x7a0] sm:$0xff]
        %v563 = vld [vmem:[%s229 + $0x7a8] sm:$0xff]
        %v564 = vld [vmem:[%s229 + $0x7b0] sm:$0xff]
        %v565 = vld [vmem:[%s229 + $0x7b8] sm:$0xff]
        %v566 = vld [vmem:[%s229 + $0x7c0] sm:$0xff]
        %v567 = vld [vmem:[%s229 + $0x7c8] sm:$0xff]
        %v568 = vld [vmem:[%s229 + $0x7d0] sm:$0xff]
        %v569 = vld [vmem:[%s229 + $0x7d8] sm:$0xff]
        %v570 = vld [vmem:[%s229 + $0x7e0] sm:$0xff]
        %v571 = vld [vmem:[%s229 + $0x7e8] sm:$0xff]
        %v572 = vld [vmem:[%s229 + $0x7f0] sm:$0xff]
        %v573 = vld [vmem:[%s229 + $0x7f8] sm:$0xff]
        %v574 = vld [vmem:[%s229 + $0x800] sm:$0xff]
        %v575 = vld [vmem:[%s229 + $0x808] sm:$0xff]
        %v576 = vld [vmem:[%s229 + $0x810] sm:$0xff]
        %v577 = vld [vmem:[%s229 + $0x818] sm:$0xff]
        %v578 = vld [vmem:[%s229 + $0x820] sm:$0xff]
        %v579 = vld [vmem:[%s229 + $0x828] sm:$0xff]
        %v580 = vld [vmem:[%s229 + $0x830] sm:$0xff]
        %v581 = vld [vmem:[%s229 + $0x838] sm:$0xff]
        %v582 = vld [vmem:[%s229 + $0x840] sm:$0xff]
        %v583 = vld [vmem:[%s229 + $0x848] sm:$0xff]
        %v584 = vld [vmem:[%s229 + $0x850] sm:$0xff]
        %v585 = vld [vmem:[%s229 + $0x858] sm:$0xff]
        %v586 = vld [vmem:[%s229 + $0x860] sm:$0xff]
        %v587 = vld [vmem:[%s229 + $0x868] sm:$0xff]
        %v588 = vld [vmem:[%s229 + $0x870] sm:$0xff]
        %v589 = vld [vmem:[%s229 + $0x878] sm:$0xff]
        %v590 = vld [vmem:[%s229 + $0x880] sm:$0xff]
        %v591 = vld [vmem:[%s229 + $0x888] sm:$0xff]
        %v592 = vld [vmem:[%s229 + $0x890] sm:$0xff]
        %v593 = vld [vmem:[%s229 + $0x898] sm:$0xff]
        %v594 = vld [vmem:[%s229 + $0x8a0] sm:$0xff]
        %v595 = vld [vmem:[%s229 + $0x8a8] sm:$0xff]
        %v596 = vld [vmem:[%s229 + $0x8b0] sm:$0xff]
        %v597 = vld [vmem:[%s229 + $0x8b8] sm:$0xff]
        %v598 = vld [vmem:[%s229 + $0x8c0] sm:$0xff]
        %v599 = vld [vmem:[%s229 + $0x8c8] sm:$0xff]
        %v600 = vld [vmem:[%s229 + $0x8d0] sm:$0xff]
        %v601 = vld [vmem:[%s229 + $0x8d8] sm:$0xff]
        %v602 = vld [vmem:[%s229 + $0x8e0] sm:$0xff]
        %v603 = vld [vmem:[%s229 + $0x8e8] sm:$0xff]
        %v604 = vld [vmem:[%s229 + $0x8f0] sm:$0xff]
        %v605 = vld [vmem:[%s229 + $0x8f8] sm:$0xff]
        %v606 = vld [vmem:[%s229 + $0x900] sm:$0xff]
        %v607 = vld [vmem:[%s229 + $0x908] sm:$0xff]
        %v608 = vld [vmem:[%s229 + $0x910] sm:$0xff]
        %v609 = vld [vmem:[%s229 + $0x918] sm:$0xff]
        %v610 = vld [vmem:[%s229 + $0x920] sm:$0xff]
        %v611 = vld [vmem:[%s229 + $0x928] sm:$0xff]
        %v612 = vld [vmem:[%s229 + $0x930] sm:$0xff]
        %v613 = vld [vmem:[%s229 + $0x938] sm:$0xff]
        %v614 = vld [vmem:[%s229 + $0x940] sm:$0xff]
        %v615 = vld [vmem:[%s229 + $0x948] sm:$0xff]
        %v616 = vld [vmem:[%s229 + $0x950] sm:$0xff]
        %v617 = vld [vmem:[%s229 + $0x958] sm:$0xff]
        %v618 = vld [vmem:[%s229 + $0x960] sm:$0xff]
        %v619 = vld [vmem:[%s229 + $0x968] sm:$0xff]
        %v620 = vld [vmem:[%s229 + $0x970] sm:$0xff]
        %v621 = vld [vmem:[%s229 + $0x978] sm:$0xff]
        %v622 = vld [vmem:[%s229 + $0x980] sm:$0xff]
        %v623 = vld [vmem:[%s229 + $0x988] sm:$0xff]
        %v624 = vld [vmem:[%s229 + $0x990] sm:$0xff]
        %v625 = vld [vmem:[%s229 + $0x998] sm:$0xff]
        %v626 = vld [vmem:[%s229 + $0x9a0] sm:$0xff]
        %v627 = vld [vmem:[%s229 + $0x9a8] sm:$0xff]
        %v628 = vld [vmem:[%s229 + $0x9b0] sm:$0xff]
        %v629 = vld [vmem:[%s229 + $0x9b8] sm:$0xff]
        %v630 = vld [vmem:[%s229 + $0x9c0] sm:$0xff]
        %v631 = vld [vmem:[%s229 + $0x9c8] sm:$0xff]
        %v632 = vld [vmem:[%s229 + $0x9d0] sm:$0xff]
        %v633 = vld [vmem:[%s229 + $0x9d8] sm:$0xff]
        %v634 = vld [vmem:[%s229 + $0x9e0] sm:$0xff]
        %v635 = vld [vmem:[%s229 + $0x9e8] sm:$0xff]
        %v636 = vld [vmem:[%s229 + $0x9f0] sm:$0xff]
        %v637 = vld [vmem:[%s229 + $0x9f8] sm:$0xff]
        %v638 = vld [vmem:[%s229 + $0xa00] sm:$0xff]
        %v639 = vld [vmem:[%s229 + $0xa08] sm:$0xff]
        %v640 = vld [vmem:[%s229 + $0xa10] sm:$0xff]
        %v641 = vld [vmem:[%s229 + $0xa18] sm:$0xff]
        %v642 = vld [vmem:[%s229 + $0xa20] sm:$0xff]
        %v643 = vld [vmem:[%s229 + $0xa28] sm:$0xff]
        %v644 = vld [vmem:[%s229 + $0xa30] sm:$0xff]
        %v645 = vld [vmem:[%s229 + $0xa38] sm:$0xff]
        %v646 = vld [vmem:[%s229 + $0xa40] sm:$0xff]
        %v647 = vld [vmem:[%s229 + $0xa48] sm:$0xff]
        %v648 = vld [vmem:[%s229 + $0xa50] sm:$0xff]
        %v649 = vld [vmem:[%s229 + $0xa58] sm:$0xff]
        %v650 = vld [vmem:[%s229 + $0xa60] sm:$0xff]
        %v651 = vld [vmem:[%s229 + $0xa68] sm:$0xff]
        %v652 = vld [vmem:[%s229 + $0xa70] sm:$0xff]
        %v653 = vld [vmem:[%s229 + $0xa78] sm:$0xff]
        %v654 = vld [vmem:[%s229 + $0xa80] sm:$0xff]
        %v655 = vld [vmem:[%s229 + $0xa88] sm:$0xff]
        %v656 = vld [vmem:[%s229 + $0xa90] sm:$0xff]
        %v657 = vld [vmem:[%s229 + $0xa98] sm:$0xff]
        %v658 = vld [vmem:[%s229 + $0xaa0] sm:$0xff]
        %v659 = vld [vmem:[%s229 + $0xaa8] sm:$0xff]
        %v660 = vld [vmem:[%s229 + $0xab0] sm:$0xff]
        %v661 = vld [vmem:[%s229 + $0xab8] sm:$0xff]
        %v662 = vld [vmem:[%s229 + $0xac0] sm:$0xff]
        %v663 = vld [vmem:[%s229 + $0xac8] sm:$0xff]
        %v664 = vld [vmem:[%s229 + $0xad0] sm:$0xff]
        %v665 = vld [vmem:[%s229 + $0xad8] sm:$0xff]
        %v666 = vld [vmem:[%s229 + $0xae0] sm:$0xff]
        %v667 = vld [vmem:[%s229 + $0xae8] sm:$0xff]
        %v668 = vld [vmem:[%s229 + $0xaf0] sm:$0xff]
        %v669 = vld [vmem:[%s229 + $0xaf8] sm:$0xff]
        %v670 = vld [vmem:[%s229 + $0xb00] sm:$0xff]
        %v671 = vld [vmem:[%s229 + $0xb08] sm:$0xff]
        %v672 = vld [vmem:[%s229 + $0xb10] sm:$0xff]
        %v673 = vld [vmem:[%s229 + $0xb18] sm:$0xff]
        %v674 = vld [vmem:[%s229 + $0xb20] sm:$0xff]
        %v675 = vld [vmem:[%s229 + $0xb28] sm:$0xff]
        %v676 = vld [vmem:[%s229 + $0xb30] sm:$0xff]
        %v677 = vld [vmem:[%s229 + $0xb38] sm:$0xff]
        %v678 = vld [vmem:[%s229 + $0xb40] sm:$0xff]
        %v679 = vld [vmem:[%s229 + $0xb48] sm:$0xff]
        %v680 = vld [vmem:[%s229 + $0xb50] sm:$0xff]
        %v681 = vld [vmem:[%s229 + $0xb58] sm:$0xff]
        %v682 = vld [vmem:[%s229 + $0xb60] sm:$0xff]
        %v683 = vld [vmem:[%s229 + $0xb68] sm:$0xff]
        %v684 = vld [vmem:[%s229 + $0xb70] sm:$0xff]
        %v685 = vld [vmem:[%s229 + $0xb78] sm:$0xff]
        %v686 = vld [vmem:[%s229 + $0xb80] sm:$0xff]
        %v687 = vld [vmem:[%s229 + $0xb88] sm:$0xff]
        %v688 = vld [vmem:[%s229 + $0xb90] sm:$0xff]
        %v689 = vld [vmem:[%s229 + $0xb98] sm:$0xff]
        %v690 = vld [vmem:[%s229 + $0xba0] sm:$0xff]
        %v691 = vld [vmem:[%s229 + $0xba8] sm:$0xff]
        %v692 = vld [vmem:[%s229 + $0xbb0] sm:$0xff]
        %v693 = vld [vmem:[%s229 + $0xbb8] sm:$0xff]
        %v694 = vld [vmem:[%s229 + $0xbc0] sm:$0xff]
        %v695 = vld [vmem:[%s229 + $0xbc8] sm:$0xff]
        %v696 = vld [vmem:[%s229 + $0xbd0] sm:$0xff]
        %v697 = vld [vmem:[%s229 + $0xbd8] sm:$0xff]
        %v698 = vld [vmem:[%s229 + $0xbe0] sm:$0xff]
        %v699 = vld [vmem:[%s229 + $0xbe8] sm:$0xff]
        %v700 = vld [vmem:[%s229 + $0xbf0] sm:$0xff]
        %v701 = vld [vmem:[%s229 + $0xbf8] sm:$0xff]
        %v708 = vunpack.c.l.b16 %v312
        %v709 = vunpack.c.h.b16 %v312
        %v710 = vunpack.c.l.b16 %v313
        %v711 = vunpack.c.h.b16 %v313
        %v712 = vunpack.c.l.b16 %v314
        %v713 = vunpack.c.h.b16 %v314
        %v714 = vunpack.c.l.b16 %v315
        %v715 = vunpack.c.h.b16 %v315
        %v716 = vunpack.c.l.b16 %v316
        %v717 = vunpack.c.h.b16 %v316
        %v718 = vunpack.c.l.b16 %v317
        %v719 = vunpack.c.h.b16 %v317
        %v720 = vpack.c.b16 %v708, %v708
        %v721 = vpack.c.b16 %v709, %v709
        %v722 = vpack.c.b16 %v710, %v710
        %v723 = vpack.c.b16 %v711, %v711
        %v724 = vpack.c.b16 %v712, %v712
        %v725 = vpack.c.b16 %v713, %v713
        %v726 = vpack.c.b16 %v714, %v714
        %v727 = vpack.c.b16 %v715, %v715
        %v728 = vpack.c.b16 %v716, %v716
        %v729 = vpack.c.b16 %v717, %v717
        %v730 = vpack.c.b16 %v718, %v718
        %v731 = vpack.c.b16 %v719, %v719
        %v1128 = vunpack.c.l.b16 %v318
        %v1129 = vunpack.c.h.b16 %v318
        %v1130 = vunpack.c.l.b16 %v319
        %v1131 = vunpack.c.h.b16 %v319
        %v1132 = vunpack.c.l.b16 %v320
        %v1133 = vunpack.c.h.b16 %v320
        %v1134 = vunpack.c.l.b16 %v321
        %v1135 = vunpack.c.h.b16 %v321
        %v1136 = vunpack.c.l.b16 %v322
        %v1137 = vunpack.c.h.b16 %v322
        %v1138 = vunpack.c.l.b16 %v323
        %v1139 = vunpack.c.h.b16 %v323
        %v1140 = vunpack.c.l.b16 %v324
        %v1141 = vunpack.c.h.b16 %v324
        %v1142 = vunpack.c.l.b16 %v325
        %v1143 = vunpack.c.h.b16 %v325
        %v1144 = vunpack.c.l.b16 %v326
        %v1145 = vunpack.c.h.b16 %v326
        %v1146 = vunpack.c.l.b16 %v327
        %v1147 = vunpack.c.h.b16 %v327
        %v1148 = vunpack.c.l.b16 %v328
        %v1149 = vunpack.c.h.b16 %v328
        %v1150 = vunpack.c.l.b16 %v329
        %v1151 = vunpack.c.h.b16 %v329
        %v1152 = vunpack.c.l.b16 %v330
        %v1153 = vunpack.c.h.b16 %v330
        %v1154 = vunpack.c.l.b16 %v331
        %v1155 = vunpack.c.h.b16 %v331
        %v1156 = vunpack.c.l.b16 %v332
        %v1157 = vunpack.c.h.b16 %v332
        %v1158 = vunpack.c.l.b16 %v333
        %v1159 = vunpack.c.h.b16 %v333
        %v1160 = vunpack.c.l.b16 %v334
        %v1161 = vunpack.c.h.b16 %v334
        %v1162 = vunpack.c.l.b16 %v335
        %v1163 = vunpack.c.h.b16 %v335
        %v1164 = vunpack.c.l.b16 %v336
        %v1165 = vunpack.c.h.b16 %v336
        %v1166 = vunpack.c.l.b16 %v337
        %v1167 = vunpack.c.h.b16 %v337
        %v1168 = vunpack.c.l.b16 %v338
        %v1169 = vunpack.c.h.b16 %v338
        %v1170 = vunpack.c.l.b16 %v339
        %v1171 = vunpack.c.h.b16 %v339
        %v1172 = vunpack.c.l.b16 %v340
        %v1173 = vunpack.c.h.b16 %v340
        %v1174 = vunpack.c.l.b16 %v341
        %v1175 = vunpack.c.h.b16 %v341
        %v1176 = vunpack.c.l.b16 %v342
        %v1177 = vunpack.c.h.b16 %v342
        %v1178 = vunpack.c.l.b16 %v343
        %v1179 = vunpack.c.h.b16 %v343
        %v1180 = vunpack.c.l.b16 %v344
        %v1181 = vunpack.c.h.b16 %v344
        %v1182 = vunpack.c.l.b16 %v345
        %v1183 = vunpack.c.h.b16 %v345
        %v1184 = vunpack.c.l.b16 %v346
        %v1185 = vunpack.c.h.b16 %v346
        %v1186 = vunpack.c.l.b16 %v347
        %v1187 = vunpack.c.h.b16 %v347
        %v1188 = vunpack.c.l.b16 %v348
        %v1189 = vunpack.c.h.b16 %v348
        %v1190 = vunpack.c.l.b16 %v349
        %v1191 = vunpack.c.h.b16 %v349
        %v1192 = vunpack.c.l.b16 %v350
        %v1193 = vunpack.c.h.b16 %v350
        %v1194 = vunpack.c.l.b16 %v351
        %v1195 = vunpack.c.h.b16 %v351
        %v1196 = vunpack.c.l.b16 %v352
        %v1197 = vunpack.c.h.b16 %v352
        %v1198 = vunpack.c.l.b16 %v353
        %v1199 = vunpack.c.h.b16 %v353
        %v1200 = vunpack.c.l.b16 %v354
        %v1201 = vunpack.c.h.b16 %v354
        %v1202 = vunpack.c.l.b16 %v355
        %v1203 = vunpack.c.h.b16 %v355
        %v1204 = vunpack.c.l.b16 %v356
        %v1205 = vunpack.c.h.b16 %v356
        %v1206 = vunpack.c.l.b16 %v357
        %v1207 = vunpack.c.h.b16 %v357
        %v1208 = vunpack.c.l.b16 %v358
        %v1209 = vunpack.c.h.b16 %v358
        %v1210 = vunpack.c.l.b16 %v359
        %v1211 = vunpack.c.h.b16 %v359
        %v1212 = vunpack.c.l.b16 %v360
        %v1213 = vunpack.c.h.b16 %v360
        %v1214 = vunpack.c.l.b16 %v361
        %v1215 = vunpack.c.h.b16 %v361
        %v1216 = vunpack.c.l.b16 %v362
        %v1217 = vunpack.c.h.b16 %v362
        %v1218 = vunpack.c.l.b16 %v363
        %v1219 = vunpack.c.h.b16 %v363
        %v1220 = vunpack.c.l.b16 %v364
        %v1221 = vunpack.c.h.b16 %v364
        %v1222 = vunpack.c.l.b16 %v365
        %v1223 = vunpack.c.h.b16 %v365
        %v1224 = vunpack.c.l.b16 %v366
        %v1225 = vunpack.c.h.b16 %v366
        %v1226 = vunpack.c.l.b16 %v367
        %v1227 = vunpack.c.h.b16 %v367
        %v1228 = vunpack.c.l.b16 %v368
        %v1229 = vunpack.c.h.b16 %v368
        %v1230 = vunpack.c.l.b16 %v369
        %v1231 = vunpack.c.h.b16 %v369
        %v1232 = vunpack.c.l.b16 %v370
        %v1233 = vunpack.c.h.b16 %v370
        %v1234 = vunpack.c.l.b16 %v371
        %v1235 = vunpack.c.h.b16 %v371
        %v1236 = vunpack.c.l.b16 %v372
        %v1237 = vunpack.c.h.b16 %v372
        %v1238 = vunpack.c.l.b16 %v373
        %v1239 = vunpack.c.h.b16 %v373
        %v1240 = vunpack.c.l.b16 %v374
        %v1241 = vunpack.c.h.b16 %v374
        %v1242 = vunpack.c.l.b16 %v375
        %v1243 = vunpack.c.h.b16 %v375
        %v1244 = vunpack.c.l.b16 %v376
        %v1245 = vunpack.c.h.b16 %v376
        %v1246 = vunpack.c.l.b16 %v377
        %v1247 = vunpack.c.h.b16 %v377
        %v1248 = vunpack.c.l.b16 %v378
        %v1249 = vunpack.c.h.b16 %v378
        %v1250 = vunpack.c.l.b16 %v379
        %v1251 = vunpack.c.h.b16 %v379
        %v1252 = vunpack.c.l.b16 %v380
        %v1253 = vunpack.c.h.b16 %v380
        %v1254 = vunpack.c.l.b16 %v381
        %v1255 = vunpack.c.h.b16 %v381
        %v1256 = vunpack.c.l.b16 %v382
        %v1257 = vunpack.c.h.b16 %v382
        %v1258 = vunpack.c.l.b16 %v383
        %v1259 = vunpack.c.h.b16 %v383
        %v1260 = vunpack.c.l.b16 %v384
        %v1261 = vunpack.c.h.b16 %v384
        %v1262 = vunpack.c.l.b16 %v385
        %v1263 = vunpack.c.h.b16 %v385
        %v1264 = vunpack.c.l.b16 %v386
        %v1265 = vunpack.c.h.b16 %v386
        %v1266 = vunpack.c.l.b16 %v387
        %v1267 = vunpack.c.h.b16 %v387
        %v1268 = vunpack.c.l.b16 %v388
        %v1269 = vunpack.c.h.b16 %v388
        %v1270 = vunpack.c.l.b16 %v389
        %v1271 = vunpack.c.h.b16 %v389
        %v1272 = vunpack.c.l.b16 %v390
        %v1273 = vunpack.c.h.b16 %v390
        %v1274 = vunpack.c.l.b16 %v391
        %v1275 = vunpack.c.h.b16 %v391
        %v1276 = vunpack.c.l.b16 %v392
        %v1277 = vunpack.c.h.b16 %v392
        %v1278 = vunpack.c.l.b16 %v393
        %v1279 = vunpack.c.h.b16 %v393
        %v1280 = vunpack.c.l.b16 %v394
        %v1281 = vunpack.c.h.b16 %v394
        %v1282 = vunpack.c.l.b16 %v395
        %v1283 = vunpack.c.h.b16 %v395
        %v1284 = vunpack.c.l.b16 %v396
        %v1285 = vunpack.c.h.b16 %v396
        %v1286 = vunpack.c.l.b16 %v397
        %v1287 = vunpack.c.h.b16 %v397
        %v1288 = vunpack.c.l.b16 %v398
        %v1289 = vunpack.c.h.b16 %v398
        %v1290 = vunpack.c.l.b16 %v399
        %v1291 = vunpack.c.h.b16 %v399
        %v1292 = vunpack.c.l.b16 %v400
        %v1293 = vunpack.c.h.b16 %v400
        %v1294 = vunpack.c.l.b16 %v401
        %v1295 = vunpack.c.h.b16 %v401
        %v1296 = vunpack.c.l.b16 %v402
        %v1297 = vunpack.c.h.b16 %v402
        %v1298 = vunpack.c.l.b16 %v403
        %v1299 = vunpack.c.h.b16 %v403
        %v1300 = vunpack.c.l.b16 %v404
        %v1301 = vunpack.c.h.b16 %v404
        %v1302 = vunpack.c.l.b16 %v405
        %v1303 = vunpack.c.h.b16 %v405
        %v1304 = vunpack.c.l.b16 %v406
        %v1305 = vunpack.c.h.b16 %v406
        %v1306 = vunpack.c.l.b16 %v407
        %v1307 = vunpack.c.h.b16 %v407
        %v1308 = vunpack.c.l.b16 %v408
        %v1309 = vunpack.c.h.b16 %v408
        %v1310 = vunpack.c.l.b16 %v409
        %v1311 = vunpack.c.h.b16 %v409
        %v1312 = vunpack.c.l.b16 %v410
        %v1313 = vunpack.c.h.b16 %v410
        %v1314 = vunpack.c.l.b16 %v411
        %v1315 = vunpack.c.h.b16 %v411
        %v1316 = vunpack.c.l.b16 %v412
        %v1317 = vunpack.c.h.b16 %v412
        %v1318 = vunpack.c.l.b16 %v413
        %v1319 = vunpack.c.h.b16 %v413
        %v1320 = vunpack.c.l.b16 %v414
        %v1321 = vunpack.c.h.b16 %v414
        %v1322 = vunpack.c.l.b16 %v415
        %v1323 = vunpack.c.h.b16 %v415
        %v1324 = vunpack.c.l.b16 %v416
        %v1325 = vunpack.c.h.b16 %v416
        %v1326 = vunpack.c.l.b16 %v417
        %v1327 = vunpack.c.h.b16 %v417
        %v1328 = vunpack.c.l.b16 %v418
        %v1329 = vunpack.c.h.b16 %v418
        %v1330 = vunpack.c.l.b16 %v419
        %v1331 = vunpack.c.h.b16 %v419
        %v1332 = vunpack.c.l.b16 %v420
        %v1333 = vunpack.c.h.b16 %v420
        %v1334 = vunpack.c.l.b16 %v421
        %v1335 = vunpack.c.h.b16 %v421
        %v1336 = vunpack.c.l.b16 %v422
        %v1337 = vunpack.c.h.b16 %v422
        %v1338 = vunpack.c.l.b16 %v423
        %v1339 = vunpack.c.h.b16 %v423
        %v1340 = vunpack.c.l.b16 %v424
        %v1341 = vunpack.c.h.b16 %v424
        %v1342 = vunpack.c.l.b16 %v425
        %v1343 = vunpack.c.h.b16 %v425
        %v1344 = vunpack.c.l.b16 %v426
        %v1345 = vunpack.c.h.b16 %v426
        %v1346 = vunpack.c.l.b16 %v427
        %v1347 = vunpack.c.h.b16 %v427
        %v1348 = vunpack.c.l.b16 %v428
        %v1349 = vunpack.c.h.b16 %v428
        %v1350 = vunpack.c.l.b16 %v429
        %v1351 = vunpack.c.h.b16 %v429
        %v1352 = vunpack.c.l.b16 %v430
        %v1353 = vunpack.c.h.b16 %v430
        %v1354 = vunpack.c.l.b16 %v431
        %v1355 = vunpack.c.h.b16 %v431
        %v1356 = vunpack.c.l.b16 %v432
        %v1357 = vunpack.c.h.b16 %v432
        %v1358 = vunpack.c.l.b16 %v433
        %v1359 = vunpack.c.h.b16 %v433
        %v1360 = vunpack.c.l.b16 %v434
        %v1361 = vunpack.c.h.b16 %v434
        %v1362 = vunpack.c.l.b16 %v435
        %v1363 = vunpack.c.h.b16 %v435
        %v1364 = vunpack.c.l.b16 %v436
        %v1365 = vunpack.c.h.b16 %v436
        %v1366 = vunpack.c.l.b16 %v437
        %v1367 = vunpack.c.h.b16 %v437
        %v1368 = vunpack.c.l.b16 %v438
        %v1369 = vunpack.c.h.b16 %v438
        %v1370 = vunpack.c.l.b16 %v439
        %v1371 = vunpack.c.h.b16 %v439
        %v1372 = vunpack.c.l.b16 %v440
        %v1373 = vunpack.c.h.b16 %v440
        %v1374 = vunpack.c.l.b16 %v441
        %v1375 = vunpack.c.h.b16 %v441
        %v1376 = vunpack.c.l.b16 %v442
        %v1377 = vunpack.c.h.b16 %v442
        %v1378 = vunpack.c.l.b16 %v443
        %v1379 = vunpack.c.h.b16 %v443
        %v1380 = vunpack.c.l.b16 %v444
        %v1381 = vunpack.c.h.b16 %v444
        %v1382 = vunpack.c.l.b16 %v445
        %v1383 = vunpack.c.h.b16 %v445
        %v1384 = vunpack.c.l.b16 %v446
        %v1385 = vunpack.c.h.b16 %v446
        %v1386 = vunpack.c.l.b16 %v447
        %v1387 = vunpack.c.h.b16 %v447
        %v1388 = vunpack.c.l.b16 %v448
        %v1389 = vunpack.c.h.b16 %v448
        %v1390 = vunpack.c.l.b16 %v449
        %v1391 = vunpack.c.h.b16 %v449
        %v1392 = vunpack.c.l.b16 %v450
        %v1393 = vunpack.c.h.b16 %v450
        %v1394 = vunpack.c.l.b16 %v451
        %v1395 = vunpack.c.h.b16 %v451
        %v1396 = vunpack.c.l.b16 %v452
        %v1397 = vunpack.c.h.b16 %v452
        %v1398 = vunpack.c.l.b16 %v453
        %v1399 = vunpack.c.h.b16 %v453
        %v1400 = vunpack.c.l.b16 %v454
        %v1401 = vunpack.c.h.b16 %v454
        %v1402 = vunpack.c.l.b16 %v455
        %v1403 = vunpack.c.h.b16 %v455
        %v1404 = vunpack.c.l.b16 %v456
        %v1405 = vunpack.c.h.b16 %v456
        %v1406 = vunpack.c.l.b16 %v457
        %v1407 = vunpack.c.h.b16 %v457
        %v1408 = vunpack.c.l.b16 %v458
        %v1409 = vunpack.c.h.b16 %v458
        %v1410 = vunpack.c.l.b16 %v459
        %v1411 = vunpack.c.h.b16 %v459
        %v1412 = vunpack.c.l.b16 %v460
        %v1413 = vunpack.c.h.b16 %v460
        %v1414 = vunpack.c.l.b16 %v461
        %v1415 = vunpack.c.h.b16 %v461
        %v1416 = vunpack.c.l.b16 %v462
        %v1417 = vunpack.c.h.b16 %v462
        %v1418 = vunpack.c.l.b16 %v463
        %v1419 = vunpack.c.h.b16 %v463
        %v1420 = vunpack.c.l.b16 %v464
        %v1421 = vunpack.c.h.b16 %v464
        %v1422 = vunpack.c.l.b16 %v465
        %v1423 = vunpack.c.h.b16 %v465
        %v1424 = vunpack.c.l.b16 %v466
        %v1425 = vunpack.c.h.b16 %v466
        %v1426 = vunpack.c.l.b16 %v467
        %v1427 = vunpack.c.h.b16 %v467
        %v1428 = vunpack.c.l.b16 %v468
        %v1429 = vunpack.c.h.b16 %v468
        %v1430 = vunpack.c.l.b16 %v469
        %v1431 = vunpack.c.h.b16 %v469
        %v1432 = vunpack.c.l.b16 %v470
        %v1433 = vunpack.c.h.b16 %v470
        %v1434 = vunpack.c.l.b16 %v471
        %v1435 = vunpack.c.h.b16 %v471
        %v1436 = vunpack.c.l.b16 %v472
        %v1437 = vunpack.c.h.b16 %v472
        %v1438 = vunpack.c.l.b16 %v473
        %v1439 = vunpack.c.h.b16 %v473
        %v1440 = vunpack.c.l.b16 %v474
        %v1441 = vunpack.c.h.b16 %v474
        %v1442 = vunpack.c.l.b16 %v475
        %v1443 = vunpack.c.h.b16 %v475
        %v1444 = vunpack.c.l.b16 %v476
        %v1445 = vunpack.c.h.b16 %v476
        %v1446 = vunpack.c.l.b16 %v477
        %v1447 = vunpack.c.h.b16 %v477
        %v1448 = vunpack.c.l.b16 %v478
        %v1449 = vunpack.c.h.b16 %v478
        %v1450 = vunpack.c.l.b16 %v479
        %v1451 = vunpack.c.h.b16 %v479
        %v1452 = vunpack.c.l.b16 %v480
        %v1453 = vunpack.c.h.b16 %v480
        %v1454 = vunpack.c.l.b16 %v481
        %v1455 = vunpack.c.h.b16 %v481
        %v1456 = vunpack.c.l.b16 %v482
        %v1457 = vunpack.c.h.b16 %v482
        %v1458 = vunpack.c.l.b16 %v483
        %v1459 = vunpack.c.h.b16 %v483
        %v1460 = vunpack.c.l.b16 %v484
        %v1461 = vunpack.c.h.b16 %v484
        %v1462 = vunpack.c.l.b16 %v485
        %v1463 = vunpack.c.h.b16 %v485
        %v1464 = vunpack.c.l.b16 %v486
        %v1465 = vunpack.c.h.b16 %v486
        %v1466 = vunpack.c.l.b16 %v487
        %v1467 = vunpack.c.h.b16 %v487
        %v1468 = vunpack.c.l.b16 %v488
        %v1469 = vunpack.c.h.b16 %v488
        %v1470 = vunpack.c.l.b16 %v489
        %v1471 = vunpack.c.h.b16 %v489
        %v1472 = vunpack.c.l.b16 %v490
        %v1473 = vunpack.c.h.b16 %v490
        %v1474 = vunpack.c.l.b16 %v491
        %v1475 = vunpack.c.h.b16 %v491
        %v1476 = vunpack.c.l.b16 %v492
        %v1477 = vunpack.c.h.b16 %v492
        %v1478 = vunpack.c.l.b16 %v493
        %v1479 = vunpack.c.h.b16 %v493
        %v1480 = vunpack.c.l.b16 %v494
        %v1481 = vunpack.c.h.b16 %v494
        %v1482 = vunpack.c.l.b16 %v495
        %v1483 = vunpack.c.h.b16 %v495
        %v1484 = vunpack.c.l.b16 %v496
        %v1485 = vunpack.c.h.b16 %v496
        %v1486 = vunpack.c.l.b16 %v497
        %v1487 = vunpack.c.h.b16 %v497
        %v1488 = vunpack.c.l.b16 %v498
        %v1489 = vunpack.c.h.b16 %v498
        %v1490 = vunpack.c.l.b16 %v499
        %v1491 = vunpack.c.h.b16 %v499
        %v1492 = vunpack.c.l.b16 %v500
        %v1493 = vunpack.c.h.b16 %v500
        %v1494 = vunpack.c.l.b16 %v501
        %v1495 = vunpack.c.h.b16 %v501
        %v1496 = vunpack.c.l.b16 %v502
        %v1497 = vunpack.c.h.b16 %v502
        %v1498 = vunpack.c.l.b16 %v503
        %v1499 = vunpack.c.h.b16 %v503
        %v1500 = vunpack.c.l.b16 %v504
        %v1501 = vunpack.c.h.b16 %v504
        %v1502 = vunpack.c.l.b16 %v505
        %v1503 = vunpack.c.h.b16 %v505
        %v1504 = vunpack.c.l.b16 %v506
        %v1505 = vunpack.c.h.b16 %v506
        %v1506 = vunpack.c.l.b16 %v507
        %v1507 = vunpack.c.h.b16 %v507
        %v1508 = vunpack.c.l.b16 %v508
        %v1509 = vunpack.c.h.b16 %v508
        %v1510 = vunpack.c.l.b16 %v509
        %v1511 = vunpack.c.h.b16 %v509
        %v1512 = vunpack.c.l.b16 %v510
        %v1513 = vunpack.c.h.b16 %v510
        %v1514 = vunpack.c.l.b16 %v511
        %v1515 = vunpack.c.h.b16 %v511
        %v1516 = vunpack.c.l.b16 %v512
        %v1517 = vunpack.c.h.b16 %v512
        %v1518 = vunpack.c.l.b16 %v513
        %v1519 = vunpack.c.h.b16 %v513
        %v1520 = vunpack.c.l.b16 %v514
        %v1521 = vunpack.c.h.b16 %v514
        %v1522 = vunpack.c.l.b16 %v515
        %v1523 = vunpack.c.h.b16 %v515
        %v1524 = vunpack.c.l.b16 %v516
        %v1525 = vunpack.c.h.b16 %v516
        %v1526 = vunpack.c.l.b16 %v517
        %v1527 = vunpack.c.h.b16 %v517
        %v1528 = vunpack.c.l.b16 %v518
        %v1529 = vunpack.c.h.b16 %v518
        %v1530 = vunpack.c.l.b16 %v519
        %v1531 = vunpack.c.h.b16 %v519
        %v1532 = vunpack.c.l.b16 %v520
        %v1533 = vunpack.c.h.b16 %v520
        %v1534 = vunpack.c.l.b16 %v521
        %v1535 = vunpack.c.h.b16 %v521
        %v1536 = vunpack.c.l.b16 %v522
        %v1537 = vunpack.c.h.b16 %v522
        %v1538 = vunpack.c.l.b16 %v523
        %v1539 = vunpack.c.h.b16 %v523
        %v1540 = vunpack.c.l.b16 %v524
        %v1541 = vunpack.c.h.b16 %v524
        %v1542 = vunpack.c.l.b16 %v525
        %v1543 = vunpack.c.h.b16 %v525
        %v1544 = vunpack.c.l.b16 %v526
        %v1545 = vunpack.c.h.b16 %v526
        %v1546 = vunpack.c.l.b16 %v527
        %v1547 = vunpack.c.h.b16 %v527
        %v1548 = vunpack.c.l.b16 %v528
        %v1549 = vunpack.c.h.b16 %v528
        %v1550 = vunpack.c.l.b16 %v529
        %v1551 = vunpack.c.h.b16 %v529
        %v1552 = vunpack.c.l.b16 %v530
        %v1553 = vunpack.c.h.b16 %v530
        %v1554 = vunpack.c.l.b16 %v531
        %v1555 = vunpack.c.h.b16 %v531
        %v1556 = vunpack.c.l.b16 %v532
        %v1557 = vunpack.c.h.b16 %v532
        %v1558 = vunpack.c.l.b16 %v533
        %v1559 = vunpack.c.h.b16 %v533
        %v1560 = vunpack.c.l.b16 %v534
        %v1561 = vunpack.c.h.b16 %v534
        %v1562 = vunpack.c.l.b16 %v535
        %v1563 = vunpack.c.h.b16 %v535
        %v1564 = vunpack.c.l.b16 %v536
        %v1565 = vunpack.c.h.b16 %v536
        %v1566 = vunpack.c.l.b16 %v537
        %v1567 = vunpack.c.h.b16 %v537
        %v1568 = vunpack.c.l.b16 %v538
        %v1569 = vunpack.c.h.b16 %v538
        %v1570 = vunpack.c.l.b16 %v539
        %v1571 = vunpack.c.h.b16 %v539
        %v1572 = vunpack.c.l.b16 %v540
        %v1573 = vunpack.c.h.b16 %v540
        %v1574 = vunpack.c.l.b16 %v541
        %v1575 = vunpack.c.h.b16 %v541
        %v1576 = vunpack.c.l.b16 %v542
        %v1577 = vunpack.c.h.b16 %v542
        %v1578 = vunpack.c.l.b16 %v543
        %v1579 = vunpack.c.h.b16 %v543
        %v1580 = vunpack.c.l.b16 %v544
        %v1581 = vunpack.c.h.b16 %v544
        %v1582 = vunpack.c.l.b16 %v545
        %v1583 = vunpack.c.h.b16 %v545
        %v1584 = vunpack.c.l.b16 %v546
        %v1585 = vunpack.c.h.b16 %v546
        %v1586 = vunpack.c.l.b16 %v547
        %v1587 = vunpack.c.h.b16 %v547
        %v1588 = vunpack.c.l.b16 %v548
        %v1589 = vunpack.c.h.b16 %v548
        %v1590 = vunpack.c.l.b16 %v549
        %v1591 = vunpack.c.h.b16 %v549
        %v1592 = vunpack.c.l.b16 %v550
        %v1593 = vunpack.c.h.b16 %v550
        %v1594 = vunpack.c.l.b16 %v551
        %v1595 = vunpack.c.h.b16 %v551
        %v1596 = vunpack.c.l.b16 %v552
        %v1597 = vunpack.c.h.b16 %v552
        %v1598 = vunpack.c.l.b16 %v553
        %v1599 = vunpack.c.h.b16 %v553
        %v1600 = vunpack.c.l.b16 %v554
        %v1601 = vunpack.c.h.b16 %v554
        %v1602 = vunpack.c.l.b16 %v555
        %v1603 = vunpack.c.h.b16 %v555
        %v1604 = vunpack.c.l.b16 %v556
        %v1605 = vunpack.c.h.b16 %v556
        %v1606 = vunpack.c.l.b16 %v557
        %v1607 = vunpack.c.h.b16 %v557
        %v1608 = vunpack.c.l.b16 %v558
        %v1609 = vunpack.c.h.b16 %v558
        %v1610 = vunpack.c.l.b16 %v559
        %v1611 = vunpack.c.h.b16 %v559
        %v1612 = vunpack.c.l.b16 %v560
        %v1613 = vunpack.c.h.b16 %v560
        %v1614 = vunpack.c.l.b16 %v561
        %v1615 = vunpack.c.h.b16 %v561
        %v1616 = vunpack.c.l.b16 %v562
        %v1617 = vunpack.c.h.b16 %v562
        %v1618 = vunpack.c.l.b16 %v563
        %v1619 = vunpack.c.h.b16 %v563
        %v1620 = vunpack.c.l.b16 %v564
        %v1621 = vunpack.c.h.b16 %v564
        %v1622 = vunpack.c.l.b16 %v565
        %v1623 = vunpack.c.h.b16 %v565
        %v1624 = vunpack.c.l.b16 %v566
        %v1625 = vunpack.c.h.b16 %v566
        %v1626 = vunpack.c.l.b16 %v567
        %v1627 = vunpack.c.h.b16 %v567
        %v1628 = vunpack.c.l.b16 %v568
        %v1629 = vunpack.c.h.b16 %v568
        %v1630 = vunpack.c.l.b16 %v569
        %v1631 = vunpack.c.h.b16 %v569
        %v1632 = vunpack.c.l.b16 %v570
        %v1633 = vunpack.c.h.b16 %v570
        %v1634 = vunpack.c.l.b16 %v571
        %v1635 = vunpack.c.h.b16 %v571
        %v1636 = vunpack.c.l.b16 %v572
        %v1637 = vunpack.c.h.b16 %v572
        %v1638 = vunpack.c.l.b16 %v573
        %v1639 = vunpack.c.h.b16 %v573
        %v1640 = vunpack.c.l.b16 %v574
        %v1641 = vunpack.c.h.b16 %v574
        %v1642 = vunpack.c.l.b16 %v575
        %v1643 = vunpack.c.h.b16 %v575
        %v1644 = vunpack.c.l.b16 %v576
        %v1645 = vunpack.c.h.b16 %v576
        %v1646 = vunpack.c.l.b16 %v577
        %v1647 = vunpack.c.h.b16 %v577
        %v1648 = vunpack.c.l.b16 %v578
        %v1649 = vunpack.c.h.b16 %v578
        %v1650 = vunpack.c.l.b16 %v579
        %v1651 = vunpack.c.h.b16 %v579
        %v1652 = vunpack.c.l.b16 %v580
        %v1653 = vunpack.c.h.b16 %v580
        %v1654 = vunpack.c.l.b16 %v581
        %v1655 = vunpack.c.h.b16 %v581
        %v1656 = vunpack.c.l.b16 %v582
        %v1657 = vunpack.c.h.b16 %v582
        %v1658 = vunpack.c.l.b16 %v583
        %v1659 = vunpack.c.h.b16 %v583
        %v1660 = vunpack.c.l.b16 %v584
        %v1661 = vunpack.c.h.b16 %v584
        %v1662 = vunpack.c.l.b16 %v585
        %v1663 = vunpack.c.h.b16 %v585
        %v1664 = vunpack.c.l.b16 %v586
        %v1665 = vunpack.c.h.b16 %v586
        %v1666 = vunpack.c.l.b16 %v587
        %v1667 = vunpack.c.h.b16 %v587
        %v1668 = vunpack.c.l.b16 %v588
        %v1669 = vunpack.c.h.b16 %v588
        %v1670 = vunpack.c.l.b16 %v589
        %v1671 = vunpack.c.h.b16 %v589
        %v1672 = vunpack.c.l.b16 %v590
        %v1673 = vunpack.c.h.b16 %v590
        %v1674 = vunpack.c.l.b16 %v591
        %v1675 = vunpack.c.h.b16 %v591
        %v1676 = vunpack.c.l.b16 %v592
        %v1677 = vunpack.c.h.b16 %v592
        %v1678 = vunpack.c.l.b16 %v593
        %v1679 = vunpack.c.h.b16 %v593
        %v1680 = vunpack.c.l.b16 %v594
        %v1681 = vunpack.c.h.b16 %v594
        %v1682 = vunpack.c.l.b16 %v595
        %v1683 = vunpack.c.h.b16 %v595
        %v1684 = vunpack.c.l.b16 %v596
        %v1685 = vunpack.c.h.b16 %v596
        %v1686 = vunpack.c.l.b16 %v597
        %v1687 = vunpack.c.h.b16 %v597
        %v1688 = vunpack.c.l.b16 %v598
        %v1689 = vunpack.c.h.b16 %v598
        %v1690 = vunpack.c.l.b16 %v599
        %v1691 = vunpack.c.h.b16 %v599
        %v1692 = vunpack.c.l.b16 %v600
        %v1693 = vunpack.c.h.b16 %v600
        %v1694 = vunpack.c.l.b16 %v601
        %v1695 = vunpack.c.h.b16 %v601
        %v1696 = vunpack.c.l.b16 %v602
        %v1697 = vunpack.c.h.b16 %v602
        %v1698 = vunpack.c.l.b16 %v603
        %v1699 = vunpack.c.h.b16 %v603
        %v1700 = vunpack.c.l.b16 %v604
        %v1701 = vunpack.c.h.b16 %v604
        %v1702 = vunpack.c.l.b16 %v605
        %v1703 = vunpack.c.h.b16 %v605
        %v1704 = vunpack.c.l.b16 %v606
        %v1705 = vunpack.c.h.b16 %v606
        %v1706 = vunpack.c.l.b16 %v607
        %v1707 = vunpack.c.h.b16 %v607
        %v1708 = vunpack.c.l.b16 %v608
        %v1709 = vunpack.c.h.b16 %v608
        %v1710 = vunpack.c.l.b16 %v609
        %v1711 = vunpack.c.h.b16 %v609
        %v1712 = vunpack.c.l.b16 %v610
        %v1713 = vunpack.c.h.b16 %v610
        %v1714 = vunpack.c.l.b16 %v611
        %v1715 = vunpack.c.h.b16 %v611
        %v1716 = vunpack.c.l.b16 %v612
        %v1717 = vunpack.c.h.b16 %v612
        %v1718 = vunpack.c.l.b16 %v613
        %v1719 = vunpack.c.h.b16 %v613
        %v1720 = vunpack.c.l.b16 %v614
        %v1721 = vunpack.c.h.b16 %v614
        %v1722 = vunpack.c.l.b16 %v615
        %v1723 = vunpack.c.h.b16 %v615
        %v1724 = vunpack.c.l.b16 %v616
        %v1725 = vunpack.c.h.b16 %v616
        %v1726 = vunpack.c.l.b16 %v617
        %v1727 = vunpack.c.h.b16 %v617
        %v1728 = vunpack.c.l.b16 %v618
        %v1729 = vunpack.c.h.b16 %v618
        %v1730 = vunpack.c.l.b16 %v619
        %v1731 = vunpack.c.h.b16 %v619
        %v1732 = vunpack.c.l.b16 %v620
        %v1733 = vunpack.c.h.b16 %v620
        %v1734 = vunpack.c.l.b16 %v621
        %v1735 = vunpack.c.h.b16 %v621
        %v1736 = vunpack.c.l.b16 %v622
        %v1737 = vunpack.c.h.b16 %v622
        %v1738 = vunpack.c.l.b16 %v623
        %v1739 = vunpack.c.h.b16 %v623
        %v1740 = vunpack.c.l.b16 %v624
        %v1741 = vunpack.c.h.b16 %v624
        %v1742 = vunpack.c.l.b16 %v625
        %v1743 = vunpack.c.h.b16 %v625
        %v1744 = vunpack.c.l.b16 %v626
        %v1745 = vunpack.c.h.b16 %v626
        %v1746 = vunpack.c.l.b16 %v627
        %v1747 = vunpack.c.h.b16 %v627
        %v1748 = vunpack.c.l.b16 %v628
        %v1749 = vunpack.c.h.b16 %v628
        %v1750 = vunpack.c.l.b16 %v629
        %v1751 = vunpack.c.h.b16 %v629
        %v1752 = vunpack.c.l.b16 %v630
        %v1753 = vunpack.c.h.b16 %v630
        %v1754 = vunpack.c.l.b16 %v631
        %v1755 = vunpack.c.h.b16 %v631
        %v1756 = vunpack.c.l.b16 %v632
        %v1757 = vunpack.c.h.b16 %v632
        %v1758 = vunpack.c.l.b16 %v633
        %v1759 = vunpack.c.h.b16 %v633
        %v1760 = vunpack.c.l.b16 %v634
        %v1761 = vunpack.c.h.b16 %v634
        %v1762 = vunpack.c.l.b16 %v635
        %v1763 = vunpack.c.h.b16 %v635
        %v1764 = vunpack.c.l.b16 %v636
        %v1765 = vunpack.c.h.b16 %v636
        %v1766 = vunpack.c.l.b16 %v637
        %v1767 = vunpack.c.h.b16 %v637
        %v1768 = vunpack.c.l.b16 %v638
        %v1769 = vunpack.c.h.b16 %v638
        %v1770 = vunpack.c.l.b16 %v639
        %v1771 = vunpack.c.h.b16 %v639
        %v1772 = vunpack.c.l.b16 %v640
        %v1773 = vunpack.c.h.b16 %v640
        %v1774 = vunpack.c.l.b16 %v641
        %v1775 = vunpack.c.h.b16 %v641
        %v1776 = vunpack.c.l.b16 %v642
        %v1777 = vunpack.c.h.b16 %v642
        %v1778 = vunpack.c.l.b16 %v643
        %v1779 = vunpack.c.h.b16 %v643
        %v1780 = vunpack.c.l.b16 %v644
        %v1781 = vunpack.c.h.b16 %v644
        %v1782 = vunpack.c.l.b16 %v645
        %v1783 = vunpack.c.h.b16 %v645
        %v1784 = vunpack.c.l.b16 %v646
        %v1785 = vunpack.c.h.b16 %v646
        %v1786 = vunpack.c.l.b16 %v647
        %v1787 = vunpack.c.h.b16 %v647
        %v1788 = vunpack.c.l.b16 %v648
        %v1789 = vunpack.c.h.b16 %v648
        %v1790 = vunpack.c.l.b16 %v649
        %v1791 = vunpack.c.h.b16 %v649
        %v1792 = vunpack.c.l.b16 %v650
        %v1793 = vunpack.c.h.b16 %v650
        %v1794 = vunpack.c.l.b16 %v651
        %v1795 = vunpack.c.h.b16 %v651
        %v1796 = vunpack.c.l.b16 %v652
        %v1797 = vunpack.c.h.b16 %v652
        %v1798 = vunpack.c.l.b16 %v653
        %v1799 = vunpack.c.h.b16 %v653
        %v1800 = vunpack.c.l.b16 %v654
        %v1801 = vunpack.c.h.b16 %v654
        %v1802 = vunpack.c.l.b16 %v655
        %v1803 = vunpack.c.h.b16 %v655
        %v1804 = vunpack.c.l.b16 %v656
        %v1805 = vunpack.c.h.b16 %v656
        %v1806 = vunpack.c.l.b16 %v657
        %v1807 = vunpack.c.h.b16 %v657
        %v1808 = vunpack.c.l.b16 %v658
        %v1809 = vunpack.c.h.b16 %v658
        %v1810 = vunpack.c.l.b16 %v659
        %v1811 = vunpack.c.h.b16 %v659
        %v1812 = vunpack.c.l.b16 %v660
        %v1813 = vunpack.c.h.b16 %v660
        %v1814 = vunpack.c.l.b16 %v661
        %v1815 = vunpack.c.h.b16 %v661
        %v1816 = vunpack.c.l.b16 %v662
        %v1817 = vunpack.c.h.b16 %v662
        %v1818 = vunpack.c.l.b16 %v663
        %v1819 = vunpack.c.h.b16 %v663
        %v1820 = vunpack.c.l.b16 %v664
        %v1821 = vunpack.c.h.b16 %v664
        %v1822 = vunpack.c.l.b16 %v665
        %v1823 = vunpack.c.h.b16 %v665
        %v1824 = vunpack.c.l.b16 %v666
        %v1825 = vunpack.c.h.b16 %v666
        %v1826 = vunpack.c.l.b16 %v667
        %v1827 = vunpack.c.h.b16 %v667
        %v1828 = vunpack.c.l.b16 %v668
        %v1829 = vunpack.c.h.b16 %v668
        %v1830 = vunpack.c.l.b16 %v669
        %v1831 = vunpack.c.h.b16 %v669
        %v1832 = vunpack.c.l.b16 %v670
        %v1833 = vunpack.c.h.b16 %v670
        %v1834 = vunpack.c.l.b16 %v671
        %v1835 = vunpack.c.h.b16 %v671
        %v1836 = vunpack.c.l.b16 %v672
        %v1837 = vunpack.c.h.b16 %v672
        %v1838 = vunpack.c.l.b16 %v673
        %v1839 = vunpack.c.h.b16 %v673
        %v1840 = vunpack.c.l.b16 %v674
        %v1841 = vunpack.c.h.b16 %v674
        %v1842 = vunpack.c.l.b16 %v675
        %v1843 = vunpack.c.h.b16 %v675
        %v1844 = vunpack.c.l.b16 %v676
        %v1845 = vunpack.c.h.b16 %v676
        %v1846 = vunpack.c.l.b16 %v677
        %v1847 = vunpack.c.h.b16 %v677
        %v1848 = vunpack.c.l.b16 %v678
        %v1849 = vunpack.c.h.b16 %v678
        %v1850 = vunpack.c.l.b16 %v679
        %v1851 = vunpack.c.h.b16 %v679
        %v1852 = vunpack.c.l.b16 %v680
        %v1853 = vunpack.c.h.b16 %v680
        %v1854 = vunpack.c.l.b16 %v681
        %v1855 = vunpack.c.h.b16 %v681
        %v1856 = vunpack.c.l.b16 %v682
        %v1857 = vunpack.c.h.b16 %v682
        %v1858 = vunpack.c.l.b16 %v683
        %v1859 = vunpack.c.h.b16 %v683
        %v1860 = vunpack.c.l.b16 %v684
        %v1861 = vunpack.c.h.b16 %v684
        %v1862 = vunpack.c.l.b16 %v685
        %v1863 = vunpack.c.h.b16 %v685
        %v1864 = vunpack.c.l.b16 %v686
        %v1865 = vunpack.c.h.b16 %v686
        %v1866 = vunpack.c.l.b16 %v687
        %v1867 = vunpack.c.h.b16 %v687
        %v1868 = vunpack.c.l.b16 %v688
        %v1869 = vunpack.c.h.b16 %v688
        %v1870 = vunpack.c.l.b16 %v689
        %v1871 = vunpack.c.h.b16 %v689
        %v1872 = vunpack.c.l.b16 %v690
        %v1873 = vunpack.c.h.b16 %v690
        %v1874 = vunpack.c.l.b16 %v691
        %v1875 = vunpack.c.h.b16 %v691
        %v1876 = vunpack.c.l.b16 %v692
        %v1877 = vunpack.c.h.b16 %v692
        %v1878 = vunpack.c.l.b16 %v693
        %v1879 = vunpack.c.h.b16 %v693
        %v1880 = vunpack.c.l.b16 %v694
        %v1881 = vunpack.c.h.b16 %v694
        %v1882 = vunpack.c.l.b16 %v695
        %v1883 = vunpack.c.h.b16 %v695
        %v1884 = vunpack.c.l.b16 %v696
        %v1885 = vunpack.c.h.b16 %v696
        %v1886 = vunpack.c.l.b16 %v697
        %v1887 = vunpack.c.h.b16 %v697
        %v1888 = vunpack.c.l.b16 %v698
        %v1889 = vunpack.c.h.b16 %v698
        %v1890 = vunpack.c.l.b16 %v699
        %v1891 = vunpack.c.h.b16 %v699
        %v1892 = vunpack.c.l.b16 %v700
        %v1893 = vunpack.c.h.b16 %v700
        %v1894 = vunpack.c.l.b16 %v701
        %v1895 = vunpack.c.h.b16 %v701
        %v1896 = vpack.c.b16 %v1132, %v1128
        %v1897 = vpack.c.b16 %v1133, %v1129
        %v1898 = vpack.c.b16 %v1134, %v1130
        %v1899 = vpack.c.b16 %v1135, %v1131
        %v1900 = vpack.c.b16 %v1140, %v1136
        %v1901 = vpack.c.b16 %v1141, %v1137
        %v1902 = vpack.c.b16 %v1142, %v1138
        %v1903 = vpack.c.b16 %v1143, %v1139
        %v1904 = vpack.c.b16 %v1148, %v1144
        %v1905 = vpack.c.b16 %v1149, %v1145
        %v1906 = vpack.c.b16 %v1150, %v1146
        %v1907 = vpack.c.b16 %v1151, %v1147
        %v1908 = vpack.c.b16 %v1156, %v1152
        %v1909 = vpack.c.b16 %v1157, %v1153
        %v1910 = vpack.c.b16 %v1158, %v1154
        %v1911 = vpack.c.b16 %v1159, %v1155
        %v1912 = vpack.c.b16 %v1164, %v1160
        %v1913 = vpack.c.b16 %v1165, %v1161
        %v1914 = vpack.c.b16 %v1166, %v1162
        %v1915 = vpack.c.b16 %v1167, %v1163
        %v1916 = vpack.c.b16 %v1172, %v1168
        %v1917 = vpack.c.b16 %v1173, %v1169
        %v1918 = vpack.c.b16 %v1174, %v1170
        %v1919 = vpack.c.b16 %v1175, %v1171
        %v1920 = vpack.c.b16 %v1180, %v1176
        %v1921 = vpack.c.b16 %v1181, %v1177
        %v1922 = vpack.c.b16 %v1182, %v1178
        %v1923 = vpack.c.b16 %v1183, %v1179
        %v1924 = vpack.c.b16 %v1188, %v1184
        %v1925 = vpack.c.b16 %v1189, %v1185
        %v1926 = vpack.c.b16 %v1190, %v1186
        %v1927 = vpack.c.b16 %v1191, %v1187
        %v1928 = vpack.c.b16 %v1196, %v1192
        %v1929 = vpack.c.b16 %v1197, %v1193
        %v1930 = vpack.c.b16 %v1198, %v1194
        %v1931 = vpack.c.b16 %v1199, %v1195
        %v1932 = vpack.c.b16 %v1204, %v1200
        %v1933 = vpack.c.b16 %v1205, %v1201
        %v1934 = vpack.c.b16 %v1206, %v1202
        %v1935 = vpack.c.b16 %v1207, %v1203
        %v1936 = vpack.c.b16 %v1212, %v1208
        %v1937 = vpack.c.b16 %v1213, %v1209
        %v1938 = vpack.c.b16 %v1214, %v1210
        %v1939 = vpack.c.b16 %v1215, %v1211
        %v1940 = vpack.c.b16 %v1220, %v1216
        %v1941 = vpack.c.b16 %v1221, %v1217
        %v1942 = vpack.c.b16 %v1222, %v1218
        %v1943 = vpack.c.b16 %v1223, %v1219
        %v1944 = vpack.c.b16 %v1228, %v1224
        %v1945 = vpack.c.b16 %v1229, %v1225
        %v1946 = vpack.c.b16 %v1230, %v1226
        %v1947 = vpack.c.b16 %v1231, %v1227
        %v1948 = vpack.c.b16 %v1236, %v1232
        %v1949 = vpack.c.b16 %v1237, %v1233
        %v1950 = vpack.c.b16 %v1238, %v1234
        %v1951 = vpack.c.b16 %v1239, %v1235
        %v1952 = vpack.c.b16 %v1244, %v1240
        %v1953 = vpack.c.b16 %v1245, %v1241
        %v1954 = vpack.c.b16 %v1246, %v1242
        %v1955 = vpack.c.b16 %v1247, %v1243
        %v1956 = vpack.c.b16 %v1252, %v1248
        %v1957 = vpack.c.b16 %v1253, %v1249
        %v1958 = vpack.c.b16 %v1254, %v1250
        %v1959 = vpack.c.b16 %v1255, %v1251
        %v1960 = vpack.c.b16 %v1260, %v1256
        %v1961 = vpack.c.b16 %v1261, %v1257
        %v1962 = vpack.c.b16 %v1262, %v1258
        %v1963 = vpack.c.b16 %v1263, %v1259
        %v1964 = vpack.c.b16 %v1268, %v1264
        %v1965 = vpack.c.b16 %v1269, %v1265
        %v1966 = vpack.c.b16 %v1270, %v1266
        %v1967 = vpack.c.b16 %v1271, %v1267
        %v1968 = vpack.c.b16 %v1276, %v1272
        %v1969 = vpack.c.b16 %v1277, %v1273
        %v1970 = vpack.c.b16 %v1278, %v1274
        %v1971 = vpack.c.b16 %v1279, %v1275
        %v1972 = vpack.c.b16 %v1284, %v1280
        %v1973 = vpack.c.b16 %v1285, %v1281
        %v1974 = vpack.c.b16 %v1286, %v1282
        %v1975 = vpack.c.b16 %v1287, %v1283
        %v1976 = vpack.c.b16 %v1292, %v1288
        %v1977 = vpack.c.b16 %v1293, %v1289
        %v1978 = vpack.c.b16 %v1294, %v1290
        %v1979 = vpack.c.b16 %v1295, %v1291
        %v1980 = vpack.c.b16 %v1300, %v1296
        %v1981 = vpack.c.b16 %v1301, %v1297
        %v1982 = vpack.c.b16 %v1302, %v1298
        %v1983 = vpack.c.b16 %v1303, %v1299
        %v1984 = vpack.c.b16 %v1308, %v1304
        %v1985 = vpack.c.b16 %v1309, %v1305
        %v1986 = vpack.c.b16 %v1310, %v1306
        %v1987 = vpack.c.b16 %v1311, %v1307
        %v1988 = vpack.c.b16 %v1316, %v1312
        %v1989 = vpack.c.b16 %v1317, %v1313
        %v1990 = vpack.c.b16 %v1318, %v1314
        %v1991 = vpack.c.b16 %v1319, %v1315
        %v1992 = vpack.c.b16 %v1324, %v1320
        %v1993 = vpack.c.b16 %v1325, %v1321
        %v1994 = vpack.c.b16 %v1326, %v1322
        %v1995 = vpack.c.b16 %v1327, %v1323
        %v1996 = vpack.c.b16 %v1332, %v1328
        %v1997 = vpack.c.b16 %v1333, %v1329
        %v1998 = vpack.c.b16 %v1334, %v1330
        %v1999 = vpack.c.b16 %v1335, %v1331
        %v2000 = vpack.c.b16 %v1340, %v1336
        %v2001 = vpack.c.b16 %v1341, %v1337
        %v2002 = vpack.c.b16 %v1342, %v1338
        %v2003 = vpack.c.b16 %v1343, %v1339
        %v2004 = vpack.c.b16 %v1348, %v1344
        %v2005 = vpack.c.b16 %v1349, %v1345
        %v2006 = vpack.c.b16 %v1350, %v1346
        %v2007 = vpack.c.b16 %v1351, %v1347
        %v2008 = vpack.c.b16 %v1356, %v1352
        %v2009 = vpack.c.b16 %v1357, %v1353
        %v2010 = vpack.c.b16 %v1358, %v1354
        %v2011 = vpack.c.b16 %v1359, %v1355
        %v2012 = vpack.c.b16 %v1364, %v1360
        %v2013 = vpack.c.b16 %v1365, %v1361
        %v2014 = vpack.c.b16 %v1366, %v1362
        %v2015 = vpack.c.b16 %v1367, %v1363
        %v2016 = vpack.c.b16 %v1372, %v1368
        %v2017 = vpack.c.b16 %v1373, %v1369
        %v2018 = vpack.c.b16 %v1374, %v1370
        %v2019 = vpack.c.b16 %v1375, %v1371
        %v2020 = vpack.c.b16 %v1380, %v1376
        %v2021 = vpack.c.b16 %v1381, %v1377
        %v2022 = vpack.c.b16 %v1382, %v1378
        %v2023 = vpack.c.b16 %v1383, %v1379
        %v2024 = vpack.c.b16 %v1388, %v1384
        %v2025 = vpack.c.b16 %v1389, %v1385
        %v2026 = vpack.c.b16 %v1390, %v1386
        %v2027 = vpack.c.b16 %v1391, %v1387
        %v2028 = vpack.c.b16 %v1396, %v1392
        %v2029 = vpack.c.b16 %v1397, %v1393
        %v2030 = vpack.c.b16 %v1398, %v1394
        %v2031 = vpack.c.b16 %v1399, %v1395
        %v2032 = vpack.c.b16 %v1404, %v1400
        %v2033 = vpack.c.b16 %v1405, %v1401
        %v2034 = vpack.c.b16 %v1406, %v1402
        %v2035 = vpack.c.b16 %v1407, %v1403
        %v2036 = vpack.c.b16 %v1412, %v1408
        %v2037 = vpack.c.b16 %v1413, %v1409
        %v2038 = vpack.c.b16 %v1414, %v1410
        %v2039 = vpack.c.b16 %v1415, %v1411
        %v2040 = vpack.c.b16 %v1420, %v1416
        %v2041 = vpack.c.b16 %v1421, %v1417
        %v2042 = vpack.c.b16 %v1422, %v1418
        %v2043 = vpack.c.b16 %v1423, %v1419
        %v2044 = vpack.c.b16 %v1428, %v1424
        %v2045 = vpack.c.b16 %v1429, %v1425
        %v2046 = vpack.c.b16 %v1430, %v1426
        %v2047 = vpack.c.b16 %v1431, %v1427
        %v2048 = vpack.c.b16 %v1436, %v1432
        %v2049 = vpack.c.b16 %v1437, %v1433
        %v2050 = vpack.c.b16 %v1438, %v1434
        %v2051 = vpack.c.b16 %v1439, %v1435
        %v2052 = vpack.c.b16 %v1444, %v1440
        %v2053 = vpack.c.b16 %v1445, %v1441
        %v2054 = vpack.c.b16 %v1446, %v1442
        %v2055 = vpack.c.b16 %v1447, %v1443
        %v2056 = vpack.c.b16 %v1452, %v1448
        %v2057 = vpack.c.b16 %v1453, %v1449
        %v2058 = vpack.c.b16 %v1454, %v1450
        %v2059 = vpack.c.b16 %v1455, %v1451
        %v2060 = vpack.c.b16 %v1460, %v1456
        %v2061 = vpack.c.b16 %v1461, %v1457
        %v2062 = vpack.c.b16 %v1462, %v1458
        %v2063 = vpack.c.b16 %v1463, %v1459
        %v2064 = vpack.c.b16 %v1468, %v1464
        %v2065 = vpack.c.b16 %v1469, %v1465
        %v2066 = vpack.c.b16 %v1470, %v1466
        %v2067 = vpack.c.b16 %v1471, %v1467
        %v2068 = vpack.c.b16 %v1476, %v1472
        %v2069 = vpack.c.b16 %v1477, %v1473
        %v2070 = vpack.c.b16 %v1478, %v1474
        %v2071 = vpack.c.b16 %v1479, %v1475
        %v2072 = vpack.c.b16 %v1484, %v1480
        %v2073 = vpack.c.b16 %v1485, %v1481
        %v2074 = vpack.c.b16 %v1486, %v1482
        %v2075 = vpack.c.b16 %v1487, %v1483
        %v2076 = vpack.c.b16 %v1492, %v1488
        %v2077 = vpack.c.b16 %v1493, %v1489
        %v2078 = vpack.c.b16 %v1494, %v1490
        %v2079 = vpack.c.b16 %v1495, %v1491
        %v2080 = vpack.c.b16 %v1500, %v1496
        %v2081 = vpack.c.b16 %v1501, %v1497
        %v2082 = vpack.c.b16 %v1502, %v1498
        %v2083 = vpack.c.b16 %v1503, %v1499
        %v2084 = vpack.c.b16 %v1508, %v1504
        %v2085 = vpack.c.b16 %v1509, %v1505
        %v2086 = vpack.c.b16 %v1510, %v1506
        %v2087 = vpack.c.b16 %v1511, %v1507
        %v2088 = vpack.c.b16 %v1516, %v1512
        %v2089 = vpack.c.b16 %v1517, %v1513
        %v2090 = vpack.c.b16 %v1518, %v1514
        %v2091 = vpack.c.b16 %v1519, %v1515
        %v2092 = vpack.c.b16 %v1524, %v1520
        %v2093 = vpack.c.b16 %v1525, %v1521
        %v2094 = vpack.c.b16 %v1526, %v1522
        %v2095 = vpack.c.b16 %v1527, %v1523
        %v2096 = vpack.c.b16 %v1532, %v1528
        %v2097 = vpack.c.b16 %v1533, %v1529
        %v2098 = vpack.c.b16 %v1534, %v1530
        %v2099 = vpack.c.b16 %v1535, %v1531
        %v2100 = vpack.c.b16 %v1540, %v1536
        %v2101 = vpack.c.b16 %v1541, %v1537
        %v2102 = vpack.c.b16 %v1542, %v1538
        %v2103 = vpack.c.b16 %v1543, %v1539
        %v2104 = vpack.c.b16 %v1548, %v1544
        %v2105 = vpack.c.b16 %v1549, %v1545
        %v2106 = vpack.c.b16 %v1550, %v1546
        %v2107 = vpack.c.b16 %v1551, %v1547
        %v2108 = vpack.c.b16 %v1556, %v1552
        %v2109 = vpack.c.b16 %v1557, %v1553
        %v2110 = vpack.c.b16 %v1558, %v1554
        %v2111 = vpack.c.b16 %v1559, %v1555
        %v2112 = vpack.c.b16 %v1564, %v1560
        %v2113 = vpack.c.b16 %v1565, %v1561
        %v2114 = vpack.c.b16 %v1566, %v1562
        %v2115 = vpack.c.b16 %v1567, %v1563
        %v2116 = vpack.c.b16 %v1572, %v1568
        %v2117 = vpack.c.b16 %v1573, %v1569
        %v2118 = vpack.c.b16 %v1574, %v1570
        %v2119 = vpack.c.b16 %v1575, %v1571
        %v2120 = vpack.c.b16 %v1580, %v1576
        %v2121 = vpack.c.b16 %v1581, %v1577
        %v2122 = vpack.c.b16 %v1582, %v1578
        %v2123 = vpack.c.b16 %v1583, %v1579
        %v2124 = vpack.c.b16 %v1588, %v1584
        %v2125 = vpack.c.b16 %v1589, %v1585
        %v2126 = vpack.c.b16 %v1590, %v1586
        %v2127 = vpack.c.b16 %v1591, %v1587
        %v2128 = vpack.c.b16 %v1596, %v1592
        %v2129 = vpack.c.b16 %v1597, %v1593
        %v2130 = vpack.c.b16 %v1598, %v1594
        %v2131 = vpack.c.b16 %v1599, %v1595
        %v2132 = vpack.c.b16 %v1604, %v1600
        %v2133 = vpack.c.b16 %v1605, %v1601
        %v2134 = vpack.c.b16 %v1606, %v1602
        %v2135 = vpack.c.b16 %v1607, %v1603
        %v2136 = vpack.c.b16 %v1612, %v1608
        %v2137 = vpack.c.b16 %v1613, %v1609
        %v2138 = vpack.c.b16 %v1614, %v1610
        %v2139 = vpack.c.b16 %v1615, %v1611
        %v2140 = vpack.c.b16 %v1620, %v1616
        %v2141 = vpack.c.b16 %v1621, %v1617
        %v2142 = vpack.c.b16 %v1622, %v1618
        %v2143 = vpack.c.b16 %v1623, %v1619
        %v2144 = vpack.c.b16 %v1628, %v1624
        %v2145 = vpack.c.b16 %v1629, %v1625
        %v2146 = vpack.c.b16 %v1630, %v1626
        %v2147 = vpack.c.b16 %v1631, %v1627
        %v2148 = vpack.c.b16 %v1636, %v1632
        %v2149 = vpack.c.b16 %v1637, %v1633
        %v2150 = vpack.c.b16 %v1638, %v1634
        %v2151 = vpack.c.b16 %v1639, %v1635
        %v2152 = vpack.c.b16 %v1644, %v1640
        %v2153 = vpack.c.b16 %v1645, %v1641
        %v2154 = vpack.c.b16 %v1646, %v1642
        %v2155 = vpack.c.b16 %v1647, %v1643
        %v2156 = vpack.c.b16 %v1652, %v1648
        %v2157 = vpack.c.b16 %v1653, %v1649
        %v2158 = vpack.c.b16 %v1654, %v1650
        %v2159 = vpack.c.b16 %v1655, %v1651
        %v2160 = vpack.c.b16 %v1660, %v1656
        %v2161 = vpack.c.b16 %v1661, %v1657
        %v2162 = vpack.c.b16 %v1662, %v1658
        %v2163 = vpack.c.b16 %v1663, %v1659
        %v2164 = vpack.c.b16 %v1668, %v1664
        %v2165 = vpack.c.b16 %v1669, %v1665
        %v2166 = vpack.c.b16 %v1670, %v1666
        %v2167 = vpack.c.b16 %v1671, %v1667
        %v2168 = vpack.c.b16 %v1676, %v1672
        %v2169 = vpack.c.b16 %v1677, %v1673
        %v2170 = vpack.c.b16 %v1678, %v1674
        %v2171 = vpack.c.b16 %v1679, %v1675
        %v2172 = vpack.c.b16 %v1684, %v1680
        %v2173 = vpack.c.b16 %v1685, %v1681
        %v2174 = vpack.c.b16 %v1686, %v1682
        %v2175 = vpack.c.b16 %v1687, %v1683
        %v2176 = vpack.c.b16 %v1692, %v1688
        %v2177 = vpack.c.b16 %v1693, %v1689
        %v2178 = vpack.c.b16 %v1694, %v1690
        %v2179 = vpack.c.b16 %v1695, %v1691
        %v2180 = vpack.c.b16 %v1700, %v1696
        %v2181 = vpack.c.b16 %v1701, %v1697
        %v2182 = vpack.c.b16 %v1702, %v1698
        %v2183 = vpack.c.b16 %v1703, %v1699
        %v2184 = vpack.c.b16 %v1708, %v1704
        %v2185 = vpack.c.b16 %v1709, %v1705
        %v2186 = vpack.c.b16 %v1710, %v1706
        %v2187 = vpack.c.b16 %v1711, %v1707
        %v2188 = vpack.c.b16 %v1716, %v1712
        %v2189 = vpack.c.b16 %v1717, %v1713
        %v2190 = vpack.c.b16 %v1718, %v1714
        %v2191 = vpack.c.b16 %v1719, %v1715
        %v2192 = vpack.c.b16 %v1724, %v1720
        %v2193 = vpack.c.b16 %v1725, %v1721
        %v2194 = vpack.c.b16 %v1726, %v1722
        %v2195 = vpack.c.b16 %v1727, %v1723
        %v2196 = vpack.c.b16 %v1732, %v1728
        %v2197 = vpack.c.b16 %v1733, %v1729
        %v2198 = vpack.c.b16 %v1734, %v1730
        %v2199 = vpack.c.b16 %v1735, %v1731
        %v2200 = vpack.c.b16 %v1740, %v1736
        %v2201 = vpack.c.b16 %v1741, %v1737
        %v2202 = vpack.c.b16 %v1742, %v1738
        %v2203 = vpack.c.b16 %v1743, %v1739
        %v2204 = vpack.c.b16 %v1748, %v1744
        %v2205 = vpack.c.b16 %v1749, %v1745
        %v2206 = vpack.c.b16 %v1750, %v1746
        %v2207 = vpack.c.b16 %v1751, %v1747
        %v2208 = vpack.c.b16 %v1756, %v1752
        %v2209 = vpack.c.b16 %v1757, %v1753
        %v2210 = vpack.c.b16 %v1758, %v1754
        %v2211 = vpack.c.b16 %v1759, %v1755
        %v2212 = vpack.c.b16 %v1764, %v1760
        %v2213 = vpack.c.b16 %v1765, %v1761
        %v2214 = vpack.c.b16 %v1766, %v1762
        %v2215 = vpack.c.b16 %v1767, %v1763
        %v2216 = vpack.c.b16 %v1772, %v1768
        %v2217 = vpack.c.b16 %v1773, %v1769
        %v2218 = vpack.c.b16 %v1774, %v1770
        %v2219 = vpack.c.b16 %v1775, %v1771
        %v2220 = vpack.c.b16 %v1780, %v1776
        %v2221 = vpack.c.b16 %v1781, %v1777
        %v2222 = vpack.c.b16 %v1782, %v1778
        %v2223 = vpack.c.b16 %v1783, %v1779
        %v2224 = vpack.c.b16 %v1788, %v1784
        %v2225 = vpack.c.b16 %v1789, %v1785
        %v2226 = vpack.c.b16 %v1790, %v1786
        %v2227 = vpack.c.b16 %v1791, %v1787
        %v2228 = vpack.c.b16 %v1796, %v1792
        %v2229 = vpack.c.b16 %v1797, %v1793
        %v2230 = vpack.c.b16 %v1798, %v1794
        %v2231 = vpack.c.b16 %v1799, %v1795
        %v2232 = vpack.c.b16 %v1804, %v1800
        %v2233 = vpack.c.b16 %v1805, %v1801
        %v2234 = vpack.c.b16 %v1806, %v1802
        %v2235 = vpack.c.b16 %v1807, %v1803
        %v2236 = vpack.c.b16 %v1812, %v1808
        %v2237 = vpack.c.b16 %v1813, %v1809
        %v2238 = vpack.c.b16 %v1814, %v1810
        %v2239 = vpack.c.b16 %v1815, %v1811
        %v2240 = vpack.c.b16 %v1820, %v1816
        %v2241 = vpack.c.b16 %v1821, %v1817
        %v2242 = vpack.c.b16 %v1822, %v1818
        %v2243 = vpack.c.b16 %v1823, %v1819
        %v2244 = vpack.c.b16 %v1828, %v1824
        %v2245 = vpack.c.b16 %v1829, %v1825
        %v2246 = vpack.c.b16 %v1830, %v1826
        %v2247 = vpack.c.b16 %v1831, %v1827
        %v2248 = vpack.c.b16 %v1836, %v1832
        %v2249 = vpack.c.b16 %v1837, %v1833
        %v2250 = vpack.c.b16 %v1838, %v1834
        %v2251 = vpack.c.b16 %v1839, %v1835
        %v2252 = vpack.c.b16 %v1844, %v1840
        %v2253 = vpack.c.b16 %v1845, %v1841
        %v2254 = vpack.c.b16 %v1846, %v1842
        %v2255 = vpack.c.b16 %v1847, %v1843
        %v2256 = vpack.c.b16 %v1852, %v1848
        %v2257 = vpack.c.b16 %v1853, %v1849
        %v2258 = vpack.c.b16 %v1854, %v1850
        %v2259 = vpack.c.b16 %v1855, %v1851
        %v2260 = vpack.c.b16 %v1860, %v1856
        %v2261 = vpack.c.b16 %v1861, %v1857
        %v2262 = vpack.c.b16 %v1862, %v1858
        %v2263 = vpack.c.b16 %v1863, %v1859
        %v2264 = vpack.c.b16 %v1868, %v1864
        %v2265 = vpack.c.b16 %v1869, %v1865
        %v2266 = vpack.c.b16 %v1870, %v1866
        %v2267 = vpack.c.b16 %v1871, %v1867
        %v2268 = vpack.c.b16 %v1876, %v1872
        %v2269 = vpack.c.b16 %v1877, %v1873
        %v2270 = vpack.c.b16 %v1878, %v1874
        %v2271 = vpack.c.b16 %v1879, %v1875
        %v2272 = vpack.c.b16 %v1884, %v1880
        %v2273 = vpack.c.b16 %v1885, %v1881
        %v2274 = vpack.c.b16 %v1886, %v1882
        %v2275 = vpack.c.b16 %v1887, %v1883
        %v2276 = vpack.c.b16 %v1892, %v1888
        %v2277 = vpack.c.b16 %v1893, %v1889
        %v2278 = vpack.c.b16 %v1894, %v1890
        %v2279 = vpack.c.b16 %v1895, %v1891
        %2664 = vmatprep.subr.bf16.mxu0 %v1925
        %2665 = vmatpush1.bf16.msra.mxu0 %v1924
        %2666 = vmatprep.subr.bf16.mxu0 %v1921
        %2667 = vmatpush1.bf16.msra.mxu0 %v1920
        %2668 = vmatprep.subr.bf16.mxu0 %v1917
        %2669 = vmatpush1.bf16.msra.mxu0 %v1916
        %2670 = vmatprep.subr.bf16.mxu0 %v1913
        %2671 = vmatpush1.bf16.msra.mxu0 %v1912
        %2672 = vmatprep.subr.bf16.mxu0 %v1909
        %2673 = vmatpush1.bf16.msra.mxu0 %v1908
        %2674 = vmatprep.subr.bf16.mxu0 %v1905
        %2675 = vmatpush1.bf16.msra.mxu0 %v1904
        %2676 = vmatprep.subr.bf16.mxu0 %v1901
        %2677 = vmatpush1.bf16.msra.mxu0 %v1900
        %2678 = vmatprep.subr.bf16.mxu0 %v1897
        %2679 = vmatpush1.bf16.msra.mxu0 %v1896
        %2680 = vmatprep.subr.bf16.mxu0 %v1957
        %2681 = vmatpush2.bf16.msra.mxu0 %v1956
        %2682 = vmatprep.subr.bf16.mxu0 %v1953
        %2683 = vmatpush2.bf16.msra.mxu0 %v1952
        %2684 = vmatprep.subr.bf16.mxu0 %v1949
        %2685 = vmatpush2.bf16.msra.mxu0 %v1948
        %2686 = vmatprep.subr.bf16.mxu0 %v1945
        %2687 = vmatpush2.bf16.msra.mxu0 %v1944
        %2688 = vmatprep.subr.bf16.mxu0 %v1941
        %2689 = vmatpush2.bf16.msra.mxu0 %v1940
        %2690 = vmatprep.subr.bf16.mxu0 %v1937
        %2691 = vmatpush2.bf16.msra.mxu0 %v1936
        %2692 = vmatprep.subr.bf16.mxu0 %v1933
        %2693 = vmatpush2.bf16.msra.mxu0 %v1932
        %2694 = vmatprep.subr.bf16.mxu0 %v1929
        %2695 = vmatpush2.bf16.msra.mxu0 %v1928
        %2696 = vmatprep.mubr.bf16.mxu0 %v721
        %2697 = vmatmul.mubr.bf16.gmra.mxu0 %v720
        %v2698 = vpop.f32.mrf.mxu0
        %v2699 = vadd.f32 0.0, %v2698
        %v2700 = vpop.f32.mrf.mxu0
        %v2701 = vadd.f32 0.0, %v2700
        %v2702 = vpop.f32.mrf.mxu0
        %v2703 = vpop.f32.mrf.mxu0
        %2704 = vdwg.mxu0
        %2705 = vmatprep.subr.bf16.mxu0 %v1989
        %2706 = vmatpush1.bf16.msra.mxu0 %v1988
        %2707 = vmatprep.subr.bf16.mxu0 %v1985
        %2708 = vmatpush1.bf16.msra.mxu0 %v1984
        %2709 = vmatprep.subr.bf16.mxu0 %v1981
        %2710 = vmatpush1.bf16.msra.mxu0 %v1980
        %2711 = vmatprep.subr.bf16.mxu0 %v1977
        %2712 = vmatpush1.bf16.msra.mxu0 %v1976
        %2713 = vmatprep.subr.bf16.mxu0 %v1973
        %2714 = vmatpush1.bf16.msra.mxu0 %v1972
        %2715 = vmatprep.subr.bf16.mxu0 %v1969
        %2716 = vmatpush1.bf16.msra.mxu0 %v1968
        %2717 = vmatprep.subr.bf16.mxu0 %v1965
        %2718 = vmatpush1.bf16.msra.mxu0 %v1964
        %2719 = vmatprep.subr.bf16.mxu0 %v1961
        %2720 = vmatpush1.bf16.msra.mxu0 %v1960
        %2721 = vmatprep.subr.bf16.mxu0 %v2021
        %2722 = vmatpush2.bf16.msra.mxu0 %v2020
        %2723 = vmatprep.subr.bf16.mxu0 %v2017
        %2724 = vmatpush2.bf16.msra.mxu0 %v2016
        %2725 = vmatprep.subr.bf16.mxu0 %v2013
        %2726 = vmatpush2.bf16.msra.mxu0 %v2012
        %2727 = vmatprep.subr.bf16.mxu0 %v2009
        %2728 = vmatpush2.bf16.msra.mxu0 %v2008
        %2729 = vmatprep.subr.bf16.mxu0 %v2005
        %2730 = vmatpush2.bf16.msra.mxu0 %v2004
        %2731 = vmatprep.subr.bf16.mxu0 %v2001
        %2732 = vmatpush2.bf16.msra.mxu0 %v2000
        %2733 = vmatprep.subr.bf16.mxu0 %v1997
        %2734 = vmatpush2.bf16.msra.mxu0 %v1996
        %2735 = vmatprep.subr.bf16.mxu0 %v1993
        %2736 = vmatpush2.bf16.msra.mxu0 %v1992
        %2737 = vmatprep.mubr.bf16.mxu0 %v723
        %2738 = vmatmul.mubr.bf16.gmra.mxu0 %v722
        %v2739 = vpop.f32.mrf.mxu0
        %v2740 = vadd.f32 %v2699, %v2739
        %v2741 = vpop.f32.mrf.mxu0
        %v2742 = vadd.f32 %v2701, %v2741
        %v2743 = vpop.f32.mrf.mxu0
        %v2744 = vpop.f32.mrf.mxu0
        %2745 = vdwg.mxu0
        %2746 = vmatprep.subr.bf16.mxu0 %v2053
        %2747 = vmatpush1.bf16.msra.mxu0 %v2052
        %2748 = vmatprep.subr.bf16.mxu0 %v2049
        %2749 = vmatpush1.bf16.msra.mxu0 %v2048
        %2750 = vmatprep.subr.bf16.mxu0 %v2045
        %2751 = vmatpush1.bf16.msra.mxu0 %v2044
        %2752 = vmatprep.subr.bf16.mxu0 %v2041
        %2753 = vmatpush1.bf16.msra.mxu0 %v2040
        %2754 = vmatprep.subr.bf16.mxu0 %v2037
        %2755 = vmatpush1.bf16.msra.mxu0 %v2036
        %2756 = vmatprep.subr.bf16.mxu0 %v2033
        %2757 = vmatpush1.bf16.msra.mxu0 %v2032
        %2758 = vmatprep.subr.bf16.mxu0 %v2029
        %2759 = vmatpush1.bf16.msra.mxu0 %v2028
        %2760 = vmatprep.subr.bf16.mxu0 %v2025
        %2761 = vmatpush1.bf16.msra.mxu0 %v2024
        %2762 = vmatprep.subr.bf16.mxu0 %v2085
        %2763 = vmatpush2.bf16.msra.mxu0 %v2084
        %2764 = vmatprep.subr.bf16.mxu0 %v2081
        %2765 = vmatpush2.bf16.msra.mxu0 %v2080
        %2766 = vmatprep.subr.bf16.mxu0 %v2077
        %2767 = vmatpush2.bf16.msra.mxu0 %v2076
        %2768 = vmatprep.subr.bf16.mxu0 %v2073
        %2769 = vmatpush2.bf16.msra.mxu0 %v2072
        %2770 = vmatprep.subr.bf16.mxu0 %v2069
        %2771 = vmatpush2.bf16.msra.mxu0 %v2068
        %2772 = vmatprep.subr.bf16.mxu0 %v2065
        %2773 = vmatpush2.bf16.msra.mxu0 %v2064
        %2774 = vmatprep.subr.bf16.mxu0 %v2061
        %2775 = vmatpush2.bf16.msra.mxu0 %v2060
        %2776 = vmatprep.subr.bf16.mxu0 %v2057
        %2777 = vmatpush2.bf16.msra.mxu0 %v2056
        %2778 = vmatprep.mubr.bf16.mxu0 %v725
        %2779 = vmatmul.mubr.bf16.gmra.mxu0 %v724
        %v2780 = vpop.f32.mrf.mxu0
        %v2781 = vadd.f32 %v2740, %v2780
        %v2782 = vpop.f32.mrf.mxu0
        %v2783 = vadd.f32 %v2742, %v2782
        %v2784 = vpop.f32.mrf.mxu0
        %v2785 = vpop.f32.mrf.mxu0
        %2786 = vdwg.mxu0
        %2787 = vmatprep.subr.bf16.mxu0 %v2117
        %2788 = vmatpush1.bf16.msra.mxu0 %v2116
        %2789 = vmatprep.subr.bf16.mxu0 %v2113
        %2790 = vmatpush1.bf16.msra.mxu0 %v2112
        %2791 = vmatprep.subr.bf16.mxu0 %v2109
        %2792 = vmatpush1.bf16.msra.mxu0 %v2108
        %2793 = vmatprep.subr.bf16.mxu0 %v2105
        %2794 = vmatpush1.bf16.msra.mxu0 %v2104
        %2795 = vmatprep.subr.bf16.mxu0 %v2101
        %2796 = vmatpush1.bf16.msra.mxu0 %v2100
        %2797 = vmatprep.subr.bf16.mxu0 %v2097
        %2798 = vmatpush1.bf16.msra.mxu0 %v2096
        %2799 = vmatprep.subr.bf16.mxu0 %v2093
        %2800 = vmatpush1.bf16.msra.mxu0 %v2092
        %2801 = vmatprep.subr.bf16.mxu0 %v2089
        %2802 = vmatpush1.bf16.msra.mxu0 %v2088
        %2803 = vmatprep.subr.bf16.mxu0 %v2149
        %2804 = vmatpush2.bf16.msra.mxu0 %v2148
        %2805 = vmatprep.subr.bf16.mxu0 %v2145
        %2806 = vmatpush2.bf16.msra.mxu0 %v2144
        %2807 = vmatprep.subr.bf16.mxu0 %v2141
        %2808 = vmatpush2.bf16.msra.mxu0 %v2140
        %2809 = vmatprep.subr.bf16.mxu0 %v2137
        %2810 = vmatpush2.bf16.msra.mxu0 %v2136
        %2811 = vmatprep.subr.bf16.mxu0 %v2133
        %2812 = vmatpush2.bf16.msra.mxu0 %v2132
        %2813 = vmatprep.subr.bf16.mxu0 %v2129
        %2814 = vmatpush2.bf16.msra.mxu0 %v2128
        %2815 = vmatprep.subr.bf16.mxu0 %v2125
        %2816 = vmatpush2.bf16.msra.mxu0 %v2124
        %2817 = vmatprep.subr.bf16.mxu0 %v2121
        %2818 = vmatpush2.bf16.msra.mxu0 %v2120
        %2819 = vmatprep.mubr.bf16.mxu0 %v727
        %2820 = vmatmul.mubr.bf16.gmra.mxu0 %v726
        %v2821 = vpop.f32.mrf.mxu0
        %v2822 = vadd.f32 %v2781, %v2821
        %v2823 = vpop.f32.mrf.mxu0
        %v2824 = vadd.f32 %v2783, %v2823
        %v2825 = vpop.f32.mrf.mxu0
        %v2826 = vpop.f32.mrf.mxu0
        %2827 = vdwg.mxu0
        %2828 = vmatprep.subr.bf16.mxu0 %v2181
        %2829 = vmatpush1.bf16.msra.mxu0 %v2180
        %2830 = vmatprep.subr.bf16.mxu0 %v2177
        %2831 = vmatpush1.bf16.msra.mxu0 %v2176
        %2832 = vmatprep.subr.bf16.mxu0 %v2173
        %2833 = vmatpush1.bf16.msra.mxu0 %v2172
        %2834 = vmatprep.subr.bf16.mxu0 %v2169
        %2835 = vmatpush1.bf16.msra.mxu0 %v2168
        %2836 = vmatprep.subr.bf16.mxu0 %v2165
        %2837 = vmatpush1.bf16.msra.mxu0 %v2164
        %2838 = vmatprep.subr.bf16.mxu0 %v2161
        %2839 = vmatpush1.bf16.msra.mxu0 %v2160
        %2840 = vmatprep.subr.bf16.mxu0 %v2157
        %2841 = vmatpush1.bf16.msra.mxu0 %v2156
        %2842 = vmatprep.subr.bf16.mxu0 %v2153
        %2843 = vmatpush1.bf16.msra.mxu0 %v2152
        %2844 = vmatprep.subr.bf16.mxu0 %v2213
        %2845 = vmatpush2.bf16.msra.mxu0 %v2212
        %2846 = vmatprep.subr.bf16.mxu0 %v2209
        %2847 = vmatpush2.bf16.msra.mxu0 %v2208
        %2848 = vmatprep.subr.bf16.mxu0 %v2205
        %2849 = vmatpush2.bf16.msra.mxu0 %v2204
        %2850 = vmatprep.subr.bf16.mxu0 %v2201
        %2851 = vmatpush2.bf16.msra.mxu0 %v2200
        %2852 = vmatprep.subr.bf16.mxu0 %v2197
        %2853 = vmatpush2.bf16.msra.mxu0 %v2196
        %2854 = vmatprep.subr.bf16.mxu0 %v2193
        %2855 = vmatpush2.bf16.msra.mxu0 %v2192
        %2856 = vmatprep.subr.bf16.mxu0 %v2189
        %2857 = vmatpush2.bf16.msra.mxu0 %v2188
        %2858 = vmatprep.subr.bf16.mxu0 %v2185
        %2859 = vmatpush2.bf16.msra.mxu0 %v2184
        %2860 = vmatprep.mubr.bf16.mxu0 %v729
        %2861 = vmatmul.mubr.bf16.gmra.mxu0 %v728
        %v2862 = vpop.f32.mrf.mxu0
        %v2863 = vadd.f32 %v2822, %v2862
        %v2864 = vpop.f32.mrf.mxu0
        %v2865 = vadd.f32 %v2824, %v2864
        %v2866 = vpop.f32.mrf.mxu0
        %v2867 = vpop.f32.mrf.mxu0
        %2868 = vdwg.mxu0
        %2869 = vmatprep.subr.bf16.mxu0 %v2245
        %2870 = vmatpush1.bf16.msra.mxu0 %v2244
        %2871 = vmatprep.subr.bf16.mxu0 %v2241
        %2872 = vmatpush1.bf16.msra.mxu0 %v2240
        %2873 = vmatprep.subr.bf16.mxu0 %v2237
        %2874 = vmatpush1.bf16.msra.mxu0 %v2236
        %2875 = vmatprep.subr.bf16.mxu0 %v2233
        %2876 = vmatpush1.bf16.msra.mxu0 %v2232
        %2877 = vmatprep.subr.bf16.mxu0 %v2229
        %2878 = vmatpush1.bf16.msra.mxu0 %v2228
        %2879 = vmatprep.subr.bf16.mxu0 %v2225
        %2880 = vmatpush1.bf16.msra.mxu0 %v2224
        %2881 = vmatprep.subr.bf16.mxu0 %v2221
        %2882 = vmatpush1.bf16.msra.mxu0 %v2220
        %2883 = vmatprep.subr.bf16.mxu0 %v2217
        %2884 = vmatpush1.bf16.msra.mxu0 %v2216
        %2885 = vmatprep.subr.bf16.mxu0 %v2277
        %2886 = vmatpush2.bf16.msra.mxu0 %v2276
        %2887 = vmatprep.subr.bf16.mxu0 %v2273
        %2888 = vmatpush2.bf16.msra.mxu0 %v2272
        %2889 = vmatprep.subr.bf16.mxu0 %v2269
        %2890 = vmatpush2.bf16.msra.mxu0 %v2268
        %2891 = vmatprep.subr.bf16.mxu0 %v2265
        %2892 = vmatpush2.bf16.msra.mxu0 %v2264
        %2893 = vmatprep.subr.bf16.mxu0 %v2261
        %2894 = vmatpush2.bf16.msra.mxu0 %v2260
        %2895 = vmatprep.subr.bf16.mxu0 %v2257
        %2896 = vmatpush2.bf16.msra.mxu0 %v2256
        %2897 = vmatprep.subr.bf16.mxu0 %v2253
        %2898 = vmatpush2.bf16.msra.mxu0 %v2252
        %2899 = vmatprep.subr.bf16.mxu0 %v2249
        %2900 = vmatpush2.bf16.msra.mxu0 %v2248
        %2901 = vmatprep.mubr.bf16.mxu0 %v731
        %2902 = vmatmul.mubr.bf16.gmra.mxu0 %v730
        %v2903 = vpop.f32.mrf.mxu0
        %v2904 = vadd.f32 %v2863, %v2903
        %v2905 = vpop.f32.mrf.mxu0
        %v2906 = vadd.f32 %v2865, %v2905
        %v2907 = vpop.f32.mrf.mxu0
        %v2908 = vpop.f32.mrf.mxu0
        %2909 = vdwg.mxu0
        %2910 = vmatprep.subr.bf16.mxu0 %v1927
        %2911 = vmatpush1.bf16.msra.mxu0 %v1926
        %2912 = vmatprep.subr.bf16.mxu0 %v1923
        %2913 = vmatpush1.bf16.msra.mxu0 %v1922
        %2914 = vmatprep.subr.bf16.mxu0 %v1919
        %2915 = vmatpush1.bf16.msra.mxu0 %v1918
        %2916 = vmatprep.subr.bf16.mxu0 %v1915
        %2917 = vmatpush1.bf16.msra.mxu0 %v1914
        %2918 = vmatprep.subr.bf16.mxu0 %v1911
        %2919 = vmatpush1.bf16.msra.mxu0 %v1910
        %2920 = vmatprep.subr.bf16.mxu0 %v1907
        %2921 = vmatpush1.bf16.msra.mxu0 %v1906
        %2922 = vmatprep.subr.bf16.mxu0 %v1903
        %2923 = vmatpush1.bf16.msra.mxu0 %v1902
        %2924 = vmatprep.subr.bf16.mxu0 %v1899
        %2925 = vmatpush1.bf16.msra.mxu0 %v1898
        %2926 = vmatprep.subr.bf16.mxu0 %v1959
        %2927 = vmatpush2.bf16.msra.mxu0 %v1958
        %2928 = vmatprep.subr.bf16.mxu0 %v1955
        %2929 = vmatpush2.bf16.msra.mxu0 %v1954
        %2930 = vmatprep.subr.bf16.mxu0 %v1951
        %2931 = vmatpush2.bf16.msra.mxu0 %v1950
        %2932 = vmatprep.subr.bf16.mxu0 %v1947
        %2933 = vmatpush2.bf16.msra.mxu0 %v1946
        %2934 = vmatprep.subr.bf16.mxu0 %v1943
        %2935 = vmatpush2.bf16.msra.mxu0 %v1942
        %2936 = vmatprep.subr.bf16.mxu0 %v1939
        %2937 = vmatpush2.bf16.msra.mxu0 %v1938
        %2938 = vmatprep.subr.bf16.mxu0 %v1935
        %2939 = vmatpush2.bf16.msra.mxu0 %v1934
        %2940 = vmatprep.subr.bf16.mxu0 %v1931
        %2941 = vmatpush2.bf16.msra.mxu0 %v1930
        %2942 = vmatprep.mubr.bf16.mxu0 %v721
        %2943 = vmatmul.mubr.bf16.gmra.mxu0 %v720
        %v2944 = vpop.f32.mrf.mxu0
        %v2945 = vadd.f32 0.0, %v2944
        %v2946 = vpop.f32.mrf.mxu0
        %v2947 = vadd.f32 0.0, %v2946
        %v2948 = vpop.f32.mrf.mxu0
        %v2949 = vpop.f32.mrf.mxu0
        %2950 = vdwg.mxu0
        %2951 = vmatprep.subr.bf16.mxu0 %v1991
        %2952 = vmatpush1.bf16.msra.mxu0 %v1990
        %2953 = vmatprep.subr.bf16.mxu0 %v1987
        %2954 = vmatpush1.bf16.msra.mxu0 %v1986
        %2955 = vmatprep.subr.bf16.mxu0 %v1983
        %2956 = vmatpush1.bf16.msra.mxu0 %v1982
        %2957 = vmatprep.subr.bf16.mxu0 %v1979
        %2958 = vmatpush1.bf16.msra.mxu0 %v1978
        %2959 = vmatprep.subr.bf16.mxu0 %v1975
        %2960 = vmatpush1.bf16.msra.mxu0 %v1974
        %2961 = vmatprep.subr.bf16.mxu0 %v1971
        %2962 = vmatpush1.bf16.msra.mxu0 %v1970
        %2963 = vmatprep.subr.bf16.mxu0 %v1967
        %2964 = vmatpush1.bf16.msra.mxu0 %v1966
        %2965 = vmatprep.subr.bf16.mxu0 %v1963
        %2966 = vmatpush1.bf16.msra.mxu0 %v1962
        %2967 = vmatprep.subr.bf16.mxu0 %v2023
        %2968 = vmatpush2.bf16.msra.mxu0 %v2022
        %2969 = vmatprep.subr.bf16.mxu0 %v2019
        %2970 = vmatpush2.bf16.msra.mxu0 %v2018
        %2971 = vmatprep.subr.bf16.mxu0 %v2015
        %2972 = vmatpush2.bf16.msra.mxu0 %v2014
        %2973 = vmatprep.subr.bf16.mxu0 %v2011
        %2974 = vmatpush2.bf16.msra.mxu0 %v2010
        %2975 = vmatprep.subr.bf16.mxu0 %v2007
        %2976 = vmatpush2.bf16.msra.mxu0 %v2006
        %2977 = vmatprep.subr.bf16.mxu0 %v2003
        %2978 = vmatpush2.bf16.msra.mxu0 %v2002
        %2979 = vmatprep.subr.bf16.mxu0 %v1999
        %2980 = vmatpush2.bf16.msra.mxu0 %v1998
        %2981 = vmatprep.subr.bf16.mxu0 %v1995
        %2982 = vmatpush2.bf16.msra.mxu0 %v1994
        %2983 = vmatprep.mubr.bf16.mxu0 %v723
        %2984 = vmatmul.mubr.bf16.gmra.mxu0 %v722
        %v2985 = vpop.f32.mrf.mxu0
        %v2986 = vadd.f32 %v2945, %v2985
        %v2987 = vpop.f32.mrf.mxu0
        %v2988 = vadd.f32 %v2947, %v2987
        %v2989 = vpop.f32.mrf.mxu0
        %v2990 = vpop.f32.mrf.mxu0
        %2991 = vdwg.mxu0
        %2992 = vmatprep.subr.bf16.mxu0 %v2055
        %2993 = vmatpush1.bf16.msra.mxu0 %v2054
        %2994 = vmatprep.subr.bf16.mxu0 %v2051
        %2995 = vmatpush1.bf16.msra.mxu0 %v2050
        %2996 = vmatprep.subr.bf16.mxu0 %v2047
        %2997 = vmatpush1.bf16.msra.mxu0 %v2046
        %2998 = vmatprep.subr.bf16.mxu0 %v2043
        %2999 = vmatpush1.bf16.msra.mxu0 %v2042
        %3000 = vmatprep.subr.bf16.mxu0 %v2039
        %3001 = vmatpush1.bf16.msra.mxu0 %v2038
        %3002 = vmatprep.subr.bf16.mxu0 %v2035
        %3003 = vmatpush1.bf16.msra.mxu0 %v2034
        %3004 = vmatprep.subr.bf16.mxu0 %v2031
        %3005 = vmatpush1.bf16.msra.mxu0 %v2030
        %3006 = vmatprep.subr.bf16.mxu0 %v2027
        %3007 = vmatpush1.bf16.msra.mxu0 %v2026
        %3008 = vmatprep.subr.bf16.mxu0 %v2087
        %3009 = vmatpush2.bf16.msra.mxu0 %v2086
        %3010 = vmatprep.subr.bf16.mxu0 %v2083
        %3011 = vmatpush2.bf16.msra.mxu0 %v2082
        %3012 = vmatprep.subr.bf16.mxu0 %v2079
        %3013 = vmatpush2.bf16.msra.mxu0 %v2078
        %3014 = vmatprep.subr.bf16.mxu0 %v2075
        %3015 = vmatpush2.bf16.msra.mxu0 %v2074
        %3016 = vmatprep.subr.bf16.mxu0 %v2071
        %3017 = vmatpush2.bf16.msra.mxu0 %v2070
        %3018 = vmatprep.subr.bf16.mxu0 %v2067
        %3019 = vmatpush2.bf16.msra.mxu0 %v2066
        %3020 = vmatprep.subr.bf16.mxu0 %v2063
        %3021 = vmatpush2.bf16.msra.mxu0 %v2062
        %3022 = vmatprep.subr.bf16.mxu0 %v2059
        %3023 = vmatpush2.bf16.msra.mxu0 %v2058
        %3024 = vmatprep.mubr.bf16.mxu0 %v725
        %3025 = vmatmul.mubr.bf16.gmra.mxu0 %v724
        %v3026 = vpop.f32.mrf.mxu0
        %v3027 = vadd.f32 %v2986, %v3026
        %v3028 = vpop.f32.mrf.mxu0
        %v3029 = vadd.f32 %v2988, %v3028
        %v3030 = vpop.f32.mrf.mxu0
        %v3031 = vpop.f32.mrf.mxu0
        %3032 = vdwg.mxu0
        %3033 = vmatprep.subr.bf16.mxu0 %v2119
        %3034 = vmatpush1.bf16.msra.mxu0 %v2118
        %3035 = vmatprep.subr.bf16.mxu0 %v2115
        %3036 = vmatpush1.bf16.msra.mxu0 %v2114
        %3037 = vmatprep.subr.bf16.mxu0 %v2111
        %3038 = vmatpush1.bf16.msra.mxu0 %v2110
        %3039 = vmatprep.subr.bf16.mxu0 %v2107
        %3040 = vmatpush1.bf16.msra.mxu0 %v2106
        %3041 = vmatprep.subr.bf16.mxu0 %v2103
        %3042 = vmatpush1.bf16.msra.mxu0 %v2102
        %3043 = vmatprep.subr.bf16.mxu0 %v2099
        %3044 = vmatpush1.bf16.msra.mxu0 %v2098
        %3045 = vmatprep.subr.bf16.mxu0 %v2095
        %3046 = vmatpush1.bf16.msra.mxu0 %v2094
        %3047 = vmatprep.subr.bf16.mxu0 %v2091
        %3048 = vmatpush1.bf16.msra.mxu0 %v2090
        %3049 = vmatprep.subr.bf16.mxu0 %v2151
        %3050 = vmatpush2.bf16.msra.mxu0 %v2150
        %3051 = vmatprep.subr.bf16.mxu0 %v2147
        %3052 = vmatpush2.bf16.msra.mxu0 %v2146
        %3053 = vmatprep.subr.bf16.mxu0 %v2143
        %3054 = vmatpush2.bf16.msra.mxu0 %v2142
        %3055 = vmatprep.subr.bf16.mxu0 %v2139
        %3056 = vmatpush2.bf16.msra.mxu0 %v2138
        %3057 = vmatprep.subr.bf16.mxu0 %v2135
        %3058 = vmatpush2.bf16.msra.mxu0 %v2134
        %3059 = vmatprep.subr.bf16.mxu0 %v2131
        %3060 = vmatpush2.bf16.msra.mxu0 %v2130
        %3061 = vmatprep.subr.bf16.mxu0 %v2127
        %3062 = vmatpush2.bf16.msra.mxu0 %v2126
        %3063 = vmatprep.subr.bf16.mxu0 %v2123
        %3064 = vmatpush2.bf16.msra.mxu0 %v2122
        %3065 = vmatprep.mubr.bf16.mxu0 %v727
        %3066 = vmatmul.mubr.bf16.gmra.mxu0 %v726
        %v3067 = vpop.f32.mrf.mxu0
        %v3068 = vadd.f32 %v3027, %v3067
        %v3069 = vpop.f32.mrf.mxu0
        %v3070 = vadd.f32 %v3029, %v3069
        %v3071 = vpop.f32.mrf.mxu0
        %v3072 = vpop.f32.mrf.mxu0
        %3073 = vdwg.mxu0
        %3074 = vmatprep.subr.bf16.mxu0 %v2183
        %3075 = vmatpush1.bf16.msra.mxu0 %v2182
        %3076 = vmatprep.subr.bf16.mxu0 %v2179
        %3077 = vmatpush1.bf16.msra.mxu0 %v2178
        %3078 = vmatprep.subr.bf16.mxu0 %v2175
        %3079 = vmatpush1.bf16.msra.mxu0 %v2174
        %3080 = vmatprep.subr.bf16.mxu0 %v2171
        %3081 = vmatpush1.bf16.msra.mxu0 %v2170
        %3082 = vmatprep.subr.bf16.mxu0 %v2167
        %3083 = vmatpush1.bf16.msra.mxu0 %v2166
        %3084 = vmatprep.subr.bf16.mxu0 %v2163
        %3085 = vmatpush1.bf16.msra.mxu0 %v2162
        %3086 = vmatprep.subr.bf16.mxu0 %v2159
        %3087 = vmatpush1.bf16.msra.mxu0 %v2158
        %3088 = vmatprep.subr.bf16.mxu0 %v2155
        %3089 = vmatpush1.bf16.msra.mxu0 %v2154
        %3090 = vmatprep.subr.bf16.mxu0 %v2215
        %3091 = vmatpush2.bf16.msra.mxu0 %v2214
        %3092 = vmatprep.subr.bf16.mxu0 %v2211
        %3093 = vmatpush2.bf16.msra.mxu0 %v2210
        %3094 = vmatprep.subr.bf16.mxu0 %v2207
        %3095 = vmatpush2.bf16.msra.mxu0 %v2206
        %3096 = vmatprep.subr.bf16.mxu0 %v2203
        %3097 = vmatpush2.bf16.msra.mxu0 %v2202
        %3098 = vmatprep.subr.bf16.mxu0 %v2199
        %3099 = vmatpush2.bf16.msra.mxu0 %v2198
        %3100 = vmatprep.subr.bf16.mxu0 %v2195
        %3101 = vmatpush2.bf16.msra.mxu0 %v2194
        %3102 = vmatprep.subr.bf16.mxu0 %v2191
        %3103 = vmatpush2.bf16.msra.mxu0 %v2190
        %3104 = vmatprep.subr.bf16.mxu0 %v2187
        %3105 = vmatpush2.bf16.msra.mxu0 %v2186
        %3106 = vmatprep.mubr.bf16.mxu0 %v729
        %3107 = vmatmul.mubr.bf16.gmra.mxu0 %v728
        %v3108 = vpop.f32.mrf.mxu0
        %v3109 = vadd.f32 %v3068, %v3108
        %v3110 = vpop.f32.mrf.mxu0
        %v3111 = vadd.f32 %v3070, %v3110
        %v3112 = vpop.f32.mrf.mxu0
        %v3113 = vpop.f32.mrf.mxu0
        %3114 = vdwg.mxu0
        %3115 = vmatprep.subr.bf16.mxu0 %v2247
        %3116 = vmatpush1.bf16.msra.mxu0 %v2246
        %3117 = vmatprep.subr.bf16.mxu0 %v2243
        %3118 = vmatpush1.bf16.msra.mxu0 %v2242
        %3119 = vmatprep.subr.bf16.mxu0 %v2239
        %3120 = vmatpush1.bf16.msra.mxu0 %v2238
        %3121 = vmatprep.subr.bf16.mxu0 %v2235
        %3122 = vmatpush1.bf16.msra.mxu0 %v2234
        %3123 = vmatprep.subr.bf16.mxu0 %v2231
        %3124 = vmatpush1.bf16.msra.mxu0 %v2230
        %3125 = vmatprep.subr.bf16.mxu0 %v2227
        %3126 = vmatpush1.bf16.msra.mxu0 %v2226
        %3127 = vmatprep.subr.bf16.mxu0 %v2223
        %3128 = vmatpush1.bf16.msra.mxu0 %v2222
        %3129 = vmatprep.subr.bf16.mxu0 %v2219
        %3130 = vmatpush1.bf16.msra.mxu0 %v2218
        %3131 = vmatprep.subr.bf16.mxu0 %v2279
        %3132 = vmatpush2.bf16.msra.mxu0 %v2278
        %3133 = vmatprep.subr.bf16.mxu0 %v2275
        %3134 = vmatpush2.bf16.msra.mxu0 %v2274
        %3135 = vmatprep.subr.bf16.mxu0 %v2271
        %3136 = vmatpush2.bf16.msra.mxu0 %v2270
        %3137 = vmatprep.subr.bf16.mxu0 %v2267
        %3138 = vmatpush2.bf16.msra.mxu0 %v2266
        %3139 = vmatprep.subr.bf16.mxu0 %v2263
        %3140 = vmatpush2.bf16.msra.mxu0 %v2262
        %3141 = vmatprep.subr.bf16.mxu0 %v2259
        %3142 = vmatpush2.bf16.msra.mxu0 %v2258
        %3143 = vmatprep.subr.bf16.mxu0 %v2255
        %3144 = vmatpush2.bf16.msra.mxu0 %v2254
        %3145 = vmatprep.subr.bf16.mxu0 %v2251
        %3146 = vmatpush2.bf16.msra.mxu0 %v2250
        %3147 = vmatprep.mubr.bf16.mxu0 %v731
        %3148 = vmatmul.mubr.bf16.gmra.mxu0 %v730
        %v3149 = vpop.f32.mrf.mxu0
        %v3150 = vadd.f32 %v3109, %v3149
        %v3151 = vpop.f32.mrf.mxu0
        %v3152 = vadd.f32 %v3111, %v3151
        %v3153 = vpop.f32.mrf.mxu0
        %v3154 = vpop.f32.mrf.mxu0
        %3155 = vdwg.mxu0
        %v3156 = vadd.f32 %v308, %v2904
        %v3157 = vadd.f32 %v309, %v2906
        %v3158 = vadd.f32 %v310, %v3150
        %v3159 = vadd.f32 %v311, %v3152
        %3160 = vst [vmem:[#allocation2] sm:$0xff] %v3156
        %3161 = vst [vmem:[#allocation2 + $0x8] sm:$0xff] %v3157
        %3162 = vst [vmem:[#allocation2 + $0x10] sm:$0xff] %v3158
        %3163 = vst [vmem:[#allocation2 + $0x18] sm:$0xff] %v3159
        // Predicated region
        $region45: #{autoencoder_forward.6} parent=31 // pred_check
          %p3164 = pneg %p300
        $region46: #{autoencoder_forward.6} parent=31 // pred_check_branch
          %3166 = sbr.rel (%p3164) target = $region48
        $region47: #{autoencoder_forward.6} parent=31 // pred_region
          %v3167 = vld [vmem:[#allocation2] sm:$0xff]
          %v3168 = vld [vmem:[#allocation2 + $0x8] sm:$0xff]
          %v3169 = vld [vmem:[#allocation2 + $0x10] sm:$0xff]
          %v3170 = vld [vmem:[#allocation2 + $0x18] sm:$0xff]
          %v3171 = vld [vmem:[%s238] sm:$0xf]
          %v3173 = vlaneseq
          %v3174 = vshrl.u32 %v3173, 7
          %v3175 = vsub.s32 0, %v3174
          %v3176 = vrot.slane %v3171, %v3175
          %v3177 = vlaneseq
          %v3178 = vshrl.u32 %v3177, 7
          %v3179 = vsub.s32 1, %v3178
          %v3180 = vrot.slane %v3171, %v3179
          %v3181 = vlaneseq
          %v3182 = vshrl.u32 %v3181, 7
          %v3183 = vsub.s32 2, %v3182
          %v3184 = vrot.slane %v3171, %v3183
          %v3185 = vlaneseq
          %v3186 = vshrl.u32 %v3185, 7
          %v3187 = vsub.s32 3, %v3186
          %v3188 = vrot.slane %v3171, %v3187
          %v3193 = vadd.f32 %v3167, %v3176
          %v3194 = vadd.f32 %v3168, %v3180
          %v3195 = vadd.f32 %v3169, %v3184
          %v3196 = vadd.f32 %v3170, %v3188
          %v3197 = vmax.f32 %v3193, 0.0
          %v3198 = vmax.f32 %v3194, 0.0
          %v3199 = vmax.f32 %v3195, 0.0
          %v3200 = vmax.f32 %v3196, 0.0
          %v3201 = vpack.c.bf16 %v3197, %v3197
          %v3202 = vpack.c.bf16 %v3198, %v3198
          %v3203 = vpack.c.bf16 %v3199, %v3199
          %v3204 = vpack.c.bf16 %v3200, %v3200
          %v3209 = vunpack.c.l.b16 %v3201
          %v3210 = vunpack.c.l.b16 %v3202
          %v3211 = vunpack.c.l.b16 %v3203
          %v3212 = vunpack.c.l.b16 %v3204
          %v3213 = vpack.c.b16 %v3210, %v3209
          %v3214 = vpack.c.b16 %v3212, %v3211
          %3217 = vst [vmem:[%s298] sm:$0xff] %v3213
          %3218 = vst [vmem:[%s298 + $0x8] sm:$0xff] %v3214
        $region48: #{autoencoder_forward.6} parent=31 // pred_fallthru
          _
        %s3219 = smul.u32 4, %s25
        %p3220 = scmp.lt.s32.totalorder %s26, 0
        %s3221 = scalar_select %p3220, %s26, 0
        %p3222 = scmp.lt.s32.totalorder %s3219, 7
        %s3223 = scalar_select %p3222, %s3219, 7
        %s3224 = smul.addr %s3221, 8
        %s3225 = sadd.s32 %s3223, %s3224
        %s3226 = smul.addr %s3225, 4
        %s3227 = scalar_lea.vmem %s3, %s3226
        // Predicated region
        $region49: #{autoencoder_forward.6} parent=31 // pred_check
          %p3228 = pneg %p141
        $region50: #{autoencoder_forward.6} parent=31 // pred_check_branch
          %3230 = sbr.rel (%p3228) target = $region52
        $region51: #{autoencoder_forward.6} parent=31 // pred_region
          %s3231 = smul.u32 4, %s25
        $region52: #{autoencoder_forward.6} parent=31 // pred_fallthru
          _
      $region32: #{autoencoder_forward.6} parent=5 // pred_fallthru
        _
      %p3232 = scmp.le.s32.totalorder 2, %s15
      // Predicated region
      $region53: #{autoencoder_forward.6} parent=5 // pred_check
        %p3233 = pneg %p3232
      $region54: #{autoencoder_forward.6} parent=5 // pred_check_branch
        %3235 = sbr.rel (%p3233) target = $region56
      $region55: #{autoencoder_forward.6} parent=5 // pred_region
        %s3236 = ssub.s32 %s15, 2
        // Predicated region
        $region57: #{autoencoder_forward.6} parent=55 // pred_check
          %p3237 = pneg %p147
        $region58: #{autoencoder_forward.6} parent=55 // pred_check_branch
          %3239 = sbr.rel (%p3237) target = $region60
        $region59: #{autoencoder_forward.6} parent=55 // pred_region
          %s3240 = smul.u32 4, %s28
          %p3241 = scmp.lt.s32.totalorder %s29, 0
          %s3242 = scalar_select %p3241, %s29, 0
          %p3243 = scmp.lt.s32.totalorder %s3240, 7
          %s3244 = scalar_select %p3243, %s3240, 7
          %s3245 = smul.addr %s3242, 8
          %s3246 = sadd.s32 %s3244, %s3245
          %s3247 = smul.addr %s3246, 4
          %s3248 = scalar_lea.vmem %s3, %s3247
        $region60: #{autoencoder_forward.6} parent=55 // pred_fallthru
          _
      $region56: #{autoencoder_forward.6} parent=5 // pred_fallthru
        _
    $region6: #{autoencoder_forward.6} parent=1 // loop_footer
      %s19 = sadd.s32 1, %s15
    $region7: #{autoencoder_forward.6} parent=1 // loop_footer_branch
      %14 = sbr.rel target = $region3
    $region8: #{autoencoder_forward.6} parent=1 // loop_exit
      _
    %3249 = vsyncpa [#allocation4], 1
    %s3250 = scalar_lea.sflag [#allocation4], 1
    %3251 = vsyncpa %s3250, 1
    %3252 = vsyncpa [#allocation6], 1
    %s3253 = scalar_lea.sflag [#allocation6], 1
    %3254 = vsyncpa %s3253, 1

// kernel: autoencoder_forward.11
$region0: #{autoencoder_forward.11}
  #allocation0 [shape = 'u32[]', space=smem, size = 0x4, offset = 0x4, fixed_abs, tag = 'smem constant byte address 0x4 - core index']
  #allocation1 [shape = 'u32[144,128]{1,0:T(1,128)}', space=vmem, size = 0x12000, scoped, tag = 'internal scratch']
  #allocation2 [shape = 'f32[8,768]{1,0:T(8,128)}', space=vmem, size = 0x6000, scoped, tag = 'scratch operand']
  %s0 = inlined_call_operand.vmem [shape: bf16[8,1024], index: 0, kind: input, shape index: {}]
  %s1 = inlined_call_operand.vmem [shape: bf16[2,1,1024,768], index: 1, kind: input, shape index: {}]
  %s2 = inlined_call_operand.vmem [shape: f32[1,1536], index: 2, kind: input, shape index: {}]
  %s3 = inlined_call_operand.vmem [shape: f32[8,1536], index: 3, kind: output, shape index: {}]
  %s4 = sld [smem:[#allocation0]]
  $region53: #{autoencoder_forward.11} parent=0
    _
  %s6 = ssub.s32 1, %s4
  %s7 = scalar_select 0, %s6, %s4
  loop: start=0, step=1, limit=4
  $region2: #{autoencoder_forward.11} parent=0 // loop_pre_header
    _
  $region3: #{autoencoder_forward.11} parent=0 // loop_header
    %s9 = sphi 0, %s13
    %p10 = scmp.ge.s32.totalorder %s9, 4
    %s16 = sphi 0, %s35
    %s17 = sphi 0, %s31
    %s18 = sphi 0, %s27
    %s19 = sphi 0, %s16
    %s20 = sphi 0, %s17
    %s21 = sphi 0, %s18
    %s22 = sphi 0, %s19
    %s23 = sphi 0, %s20
    %s24 = sphi 0, %s21
    %s40 = sphi 0, %s42
    %s43 = sphi 0, %s40
    %s44 = sphi 0, %s43
    %s60 = sphi 0, %s44
    %s68 = sphi 0, %s70
    %s71 = sphi 0, %s68
    %s72 = sphi 0, %s71
    %s88 = sphi 0, %s72
    %s94 = sphi 0, %s96
    %s97 = sphi 0, %s94
    %s98 = sphi 0, %s97
    %s114 = sphi 0, %s98
    %s122 = sphi 0, %s124
    %s125 = sphi 0, %s122
    %s126 = sphi 0, %s125
    %s142 = sphi 0, %s126
  $region4: #{autoencoder_forward.11} parent=0 // loop_header_branch
    %12 = sbr.rel (%p10) target = $region8
  $region5: #{autoencoder_forward.11} parent=0 // loop_body
    %s14 = ssub.s32 %s9, 1
    %s15 = ssub.s32 %s9, 2
    %s25 = sadd.s32 1, %s18
    %p26 = scmp.ge.s32.totalorder %s25, 1
    %s27 = scalar_select %p26, 0, %s25
    %s28 = sadd.s32 1, %s17
    %s29 = scalar_select %p26, %s28, %s17
    %p30 = scmp.ge.s32.totalorder %s29, 1
    %s31 = scalar_select %p30, 0, %s29
    %s32 = sadd.s32 1, %s16
    %s33 = scalar_select %p30, %s32, %s16
    %p34 = scmp.ge.s32.totalorder %s33, 2
    %s35 = scalar_select %p34, 0, %s33
    %s36 = ssub.s32 %s17, %s31
    %s37 = ssub.s32 %s18, %s27
    %s38 = sor.u32 %s36, %s37
    %p39 = scmp.eq.s32.totalorder %s38, 0
    %s41 = sadd.s32 %s40, 1
    %s42 = scalar_select %p39, %s40, %s41
    %p45 = pneg %p39
    %p46 = scmp.eq.s32.totalorder %s9, 1
    %p47 = por %p45, %p46
    %p48 = scmp.ne.s32.totalorder %s40, %s43
    %p49 = scmp.eq.s32.totalorder %s9, 0
    %p50 = por %p48, %p49
    %p51 = scmp.ne.s32.totalorder %s40, %s43
    %p52 = scmp.eq.s32.totalorder %s14, 1
    %p53 = por %p51, %p52
    %p54 = scmp.ne.s32.totalorder %s43, %s44
    %p55 = scmp.eq.s32.totalorder %s14, 0
    %p56 = por %p54, %p55
    %p57 = scmp.ne.s32.totalorder %s43, %s44
    %p58 = scmp.eq.s32.totalorder %s15, 1
    %p59 = por %p57, %p58
    %p61 = scmp.ne.s32.totalorder %s44, %s60
    %p62 = scmp.eq.s32.totalorder %s15, 0
    %p63 = por %p61, %p62
    %s64 = ssub.s32 %s16, %s35
    %s65 = ssub.s32 %s18, %s27
    %s66 = sor.u32 %s64, %s65
    %p67 = scmp.eq.s32.totalorder %s66, 0
    %s69 = sadd.s32 %s68, 1
    %s70 = scalar_select %p67, %s68, %s69
    %p73 = pneg %p67
    %p74 = scmp.eq.s32.totalorder %s9, 1
    %p75 = por %p73, %p74
    %p76 = scmp.ne.s32.totalorder %s68, %s71
    %p77 = scmp.eq.s32.totalorder %s9, 0
    %p78 = por %p76, %p77
    %p79 = scmp.ne.s32.totalorder %s68, %s71
    %p80 = scmp.eq.s32.totalorder %s14, 1
    %p81 = por %p79, %p80
    %p82 = scmp.ne.s32.totalorder %s71, %s72
    %p83 = scmp.eq.s32.totalorder %s14, 0
    %p84 = por %p82, %p83
    %p85 = scmp.ne.s32.totalorder %s71, %s72
    %p86 = scmp.eq.s32.totalorder %s15, 1
    %p87 = por %p85, %p86
    %p89 = scmp.ne.s32.totalorder %s72, %s88
    %p90 = scmp.eq.s32.totalorder %s15, 0
    %p91 = por %p89, %p90
    %s92 = ssub.s32 %s16, %s35
    %p93 = scmp.eq.s32.totalorder %s92, 0
    %s95 = sadd.s32 %s94, 1
    %s96 = scalar_select %p93, %s94, %s95
    %p99 = pneg %p93
    %p100 = scmp.eq.s32.totalorder %s9, 1
    %p101 = por %p99, %p100
    %p102 = scmp.ne.s32.totalorder %s94, %s97
    %p103 = scmp.eq.s32.totalorder %s9, 0
    %p104 = por %p102, %p103
    %p105 = scmp.ne.s32.totalorder %s94, %s97
    %p106 = scmp.eq.s32.totalorder %s14, 1
    %p107 = por %p105, %p106
    %p108 = scmp.ne.s32.totalorder %s97, %s98
    %p109 = scmp.eq.s32.totalorder %s14, 0
    %p110 = por %p108, %p109
    %p111 = scmp.ne.s32.totalorder %s97, %s98
    %p112 = scmp.eq.s32.totalorder %s15, 1
    %p113 = por %p111, %p112
    %p115 = scmp.ne.s32.totalorder %s98, %s114
    %p116 = scmp.eq.s32.totalorder %s15, 0
    %p117 = por %p115, %p116
    %s118 = ssub.s32 %s17, %s31
    %s119 = ssub.s32 %s16, %s35
    %s120 = sor.u32 %s118, %s119
    %p121 = scmp.eq.s32.totalorder %s120, 0
    %s123 = sadd.s32 %s122, 1
    %s124 = scalar_select %p121, %s122, %s123
    %p127 = pneg %p121
    %p128 = scmp.eq.s32.totalorder %s9, 1
    %p129 = por %p127, %p128
    %p130 = scmp.ne.s32.totalorder %s122, %s125
    %p131 = scmp.eq.s32.totalorder %s9, 0
    %p132 = por %p130, %p131
    %p133 = scmp.ne.s32.totalorder %s122, %s125
    %p134 = scmp.eq.s32.totalorder %s14, 1
    %p135 = por %p133, %p134
    %p136 = scmp.ne.s32.totalorder %s125, %s126
    %p137 = scmp.eq.s32.totalorder %s14, 0
    %p138 = por %p136, %p137
    %p139 = scmp.ne.s32.totalorder %s125, %s126
    %p140 = scmp.eq.s32.totalorder %s15, 1
    %p141 = por %p139, %p140
    %p143 = scmp.ne.s32.totalorder %s126, %s142
    %p144 = scmp.eq.s32.totalorder %s15, 0
    %p145 = por %p143, %p144
    %p146 = scmp.le.s32.totalorder 1, %s9
    %p147 = scmp.lt.s32.totalorder %s9, 3
    %p148 = pnand %p146, %p147
    %p149 = pneg %p148
    // Predicated region
    $region9: #{autoencoder_forward.11} parent=5 // pred_check
      _
    $region10: #{autoencoder_forward.11} parent=5 // pred_check_branch
      %151 = sbr.rel (%p148) target = $region12
    $region11: #{autoencoder_forward.11} parent=5 // pred_region
      %s152 = ssub.s32 %s9, 1
      // Predicated region
      $region13: #{autoencoder_forward.11} parent=11 // pred_check
        %p153 = pneg %p56
      $region14: #{autoencoder_forward.11} parent=11 // pred_check_branch
        %155 = sbr.rel (%p153) target = $region16
      $region15: #{autoencoder_forward.11} parent=11 // pred_region
        %s156 = smul.u32 8, %s21
        %p157 = scmp.lt.s32.totalorder %s20, 0
        %s158 = scalar_select %p157, %s20, 0
        %p159 = scmp.lt.s32.totalorder %s156, 7
        %s160 = scalar_select %p159, %s156, 7
        %s161 = smul.addr %s158, 8
        %s162 = sadd.s32 %s160, %s161
        %s163 = smul.addr %s162, 4
        %s164 = scalar_lea.vmem %s0, %s163
        %s165 = smul.u32 8, %s21
      $region16: #{autoencoder_forward.11} parent=11 // pred_fallthru
        _
    $region12: #{autoencoder_forward.11} parent=5 // pred_fallthru
      _
    %p166 = scmp.lt.s32.totalorder %s9, 2
    // Predicated region
    $region17: #{autoencoder_forward.11} parent=5 // pred_check
      %p167 = pneg %p166
    $region18: #{autoencoder_forward.11} parent=5 // pred_check_branch
      %169 = sbr.rel (%p167) target = $region20
    $region19: #{autoencoder_forward.11} parent=5 // pred_region
      // Predicated region
      $region21: #{autoencoder_forward.11} parent=19 // pred_check
        %p170 = pneg %p78
      $region22: #{autoencoder_forward.11} parent=19 // pred_check_branch
        %172 = sbr.rel (%p170) target = $region24
      $region23: #{autoencoder_forward.11} parent=19 // pred_region
        %p173 = scmp.lt.s32.totalorder %s16, 1
        %s174 = scalar_select %p173, %s16, 1
        %p175 = scmp.lt.s32.totalorder %s18, 0
        %s176 = scalar_select %p175, %s18, 0
        %s177 = smul.addr %s176, 768
        %s178 = smul.addr %s174, 768
        %s179 = sadd.s32 %s177, %s178
        %s180 = smul.addr %s179, 4
        %s181 = scalar_lea.vmem %s1, %s180
      $region24: #{autoencoder_forward.11} parent=19 // pred_fallthru
        _
      // Predicated region
      $region25: #{autoencoder_forward.11} parent=19 // pred_check
        %p182 = pneg %p104
      $region26: #{autoencoder_forward.11} parent=19 // pred_check_branch
        %184 = sbr.rel (%p182) target = $region28
      $region27: #{autoencoder_forward.11} parent=19 // pred_region
        %s185 = smul.u32 6, %s16
        %p186 = scmp.lt.s32.totalorder %s185, 11
        %s187 = scalar_select %p186, %s185, 11
        %s188 = scalar_lea.vmem %s2, %s187
        %s189 = smul.u32 6, %s16
      $region28: #{autoencoder_forward.11} parent=19 // pred_fallthru
        _
    $region20: #{autoencoder_forward.11} parent=5 // pred_fallthru
      _
    %p190 = scmp.le.s32.totalorder 1, %s9
    %p191 = scmp.lt.s32.totalorder %s9, 3
    %p192 = pnand %p190, %p191
    %p193 = pneg %p192
    // Predicated region
    $region29: #{autoencoder_forward.11} parent=5 // pred_check
      _
    $region30: #{autoencoder_forward.11} parent=5 // pred_check_branch
      %195 = sbr.rel (%p192) target = $region32
    $region31: #{autoencoder_forward.11} parent=5 // pred_region
      %s196 = ssub.s32 %s9, 1
      %s197 = smul.u32 8, %s21
      %p198 = scmp.lt.s32.totalorder %s20, 0
      %s199 = scalar_select %p198, %s20, 0
      %p200 = scmp.lt.s32.totalorder %s197, 7
      %s201 = scalar_select %p200, %s197, 7
      %s202 = smul.addr %s199, 8
      %s203 = sadd.s32 %s201, %s202
      %s204 = smul.addr %s203, 4
      %s205 = scalar_lea.vmem %s0, %s204
      %p206 = pneg %p56
      %p207 = pneg %p53
      %p208 = scmp.lt.s32.totalorder %s19, 1
      %s209 = scalar_select %p208, %s19, 1
      %p210 = scmp.lt.s32.totalorder %s21, 0
      %s211 = scalar_select %p210, %s21, 0
      %s212 = smul.addr %s211, 768
      %s213 = smul.addr %s209, 768
      %s214 = sadd.s32 %s212, %s213
      %s215 = smul.addr %s214, 4
      %s216 = scalar_lea.vmem %s1, %s215
      %p217 = pneg %p84
      %p218 = pneg %p81
      %s219 = smul.u32 6, %s19
      %p220 = scmp.lt.s32.totalorder %s219, 11
      %s221 = scalar_select %p220, %s219, 11
      %s222 = scalar_lea.vmem %s2, %s221
      %p223 = pneg %p110
      %p224 = pneg %p107
      %p225 = pneg %p138
      %p226 = pneg %p135
      %s227 = smul.u32 6, %s19
      %p228 = scmp.lt.s32.totalorder %s20, 0
      %s229 = scalar_select %p228, %s20, 0
      %p230 = scmp.lt.s32.totalorder %s227, 11
      %s231 = scalar_select %p230, %s227, 11
      %s232 = smul.addr %s229, 12
      %s233 = sadd.s32 %s231, %s232
      %s234 = smul.addr %s233, 8
      %s235 = scalar_lea.vmem %s3, %s234
      %s236 = smul.u32 8, %s21
      %p237 = scmp.lt.s32.totalorder %s20, 0
      %s238 = scalar_select %p237, %s20, 0
      %p239 = scmp.lt.s32.totalorder %s236, 7
      %s240 = scalar_select %p239, %s236, 7
      %s241 = smul.addr %s238, 8
      %s242 = sadd.s32 %s240, %s241
      %s243 = smul.addr %s242, 4
      %s244 = scalar_lea.vmem %s0, %s243
      %s245 = smul.u32 8, %s21
      %p246 = scmp.lt.s32.totalorder %s19, 1
      %s247 = scalar_select %p246, %s19, 1
      %p248 = scmp.lt.s32.totalorder %s21, 0
      %s249 = scalar_select %p248, %s21, 0
      %s250 = smul.addr %s249, 768
      %s251 = smul.addr %s247, 768
      %s252 = sadd.s32 %s250, %s251
      %s253 = smul.addr %s252, 4
      %s254 = scalar_lea.vmem %s1, %s253
      %s255 = smul.u32 6, %s19
      %p256 = scmp.lt.s32.totalorder %s255, 11
      %s257 = scalar_select %p256, %s255, 11
      %s258 = scalar_lea.vmem %s2, %s257
      %s259 = smul.u32 6, %s19
      %s260 = smul.u32 6, %s19
      %p261 = scmp.lt.s32.totalorder %s20, 0
      %s262 = scalar_select %p261, %s20, 0
      %p263 = scmp.lt.s32.totalorder %s260, 11
      %s264 = scalar_select %p263, %s260, 11
      %s265 = smul.addr %s262, 12
      %s266 = sadd.s32 %s264, %s265
      %s267 = smul.addr %s266, 8
      %s268 = scalar_lea.vmem %s3, %s267
      %s269 = smul.u32 6, %s19
      %p270 = scmp.eq.s32.totalorder %s21, 0
      // Predicated region
      $region33: #{autoencoder_forward.11} parent=31 // pred_check
        %p271 = pneg %p270
      $region34: #{autoencoder_forward.11} parent=31 // pred_check_branch
        %273 = sbr.rel (%p271) target = $region36
      $region35: #{autoencoder_forward.11} parent=31 // pred_region
        %274 = vst [vmem:[#allocation2] sm:$0xff] 0.0
        %275 = vst [vmem:[#allocation2 + $0x8] sm:$0xff] 0.0
        %276 = vst [vmem:[#allocation2 + $0x10] sm:$0xff] 0.0
        %277 = vst [vmem:[#allocation2 + $0x18] sm:$0xff] 0.0
        %278 = vst [vmem:[#allocation2 + $0x20] sm:$0xff] 0.0
        %279 = vst [vmem:[#allocation2 + $0x28] sm:$0xff] 0.0
      $region36: #{autoencoder_forward.11} parent=31 // pred_fallthru
        _
      %v280 = vld [vmem:[#allocation2] sm:$0xff]
      %v281 = vld [vmem:[#allocation2 + $0x8] sm:$0xff]
      %v282 = vld [vmem:[#allocation2 + $0x10] sm:$0xff]
      %v283 = vld [vmem:[#allocation2 + $0x18] sm:$0xff]
      %v284 = vld [vmem:[#allocation2 + $0x20] sm:$0xff]
      %v285 = vld [vmem:[#allocation2 + $0x28] sm:$0xff]
      %v286 = vld [vmem:[%s244] sm:$0xff]
      %v287 = vld [vmem:[%s244 + $0x8] sm:$0xff]
      %v288 = vld [vmem:[%s244 + $0x10] sm:$0xff]
      %v289 = vld [vmem:[%s244 + $0x18] sm:$0xff]
      %v290 = vld [vmem:[%s254] sm:$0xff]
      %v291 = vld [vmem:[%s254 + $0x8] sm:$0xff]
      %v292 = vld [vmem:[%s254 + $0x10] sm:$0xff]
      %v293 = vld [vmem:[%s254 + $0x18] sm:$0xff]
      %v294 = vld [vmem:[%s254 + $0x20] sm:$0xff]
      %v295 = vld [vmem:[%s254 + $0x28] sm:$0xff]
      %v296 = vld [vmem:[%s254 + $0x30] sm:$0xff]
      %v297 = vld [vmem:[%s254 + $0x38] sm:$0xff]
      %v298 = vld [vmem:[%s254 + $0x40] sm:$0xff]
      %v299 = vld [vmem:[%s254 + $0x48] sm:$0xff]
      %v300 = vld [vmem:[%s254 + $0x50] sm:$0xff]
      %v301 = vld [vmem:[%s254 + $0x58] sm:$0xff]
      %v302 = vld [vmem:[%s254 + $0x60] sm:$0xff]
      %v303 = vld [vmem:[%s254 + $0x68] sm:$0xff]
      %v304 = vld [vmem:[%s254 + $0x70] sm:$0xff]
      %v305 = vld [vmem:[%s254 + $0x78] sm:$0xff]
      %v306 = vld [vmem:[%s254 + $0x80] sm:$0xff]
      %v307 = vld [vmem:[%s254 + $0x88] sm:$0xff]
      %v308 = vld [vmem:[%s254 + $0x90] sm:$0xff]
      %v309 = vld [vmem:[%s254 + $0x98] sm:$0xff]
      %v310 = vld [vmem:[%s254 + $0xa0] sm:$0xff]
      %v311 = vld [vmem:[%s254 + $0xa8] sm:$0xff]
      %v312 = vld [vmem:[%s254 + $0xb0] sm:$0xff]
      %v313 = vld [vmem:[%s254 + $0xb8] sm:$0xff]
      %v314 = vld [vmem:[%s254 + $0xc0] sm:$0xff]
      %v315 = vld [vmem:[%s254 + $0xc8] sm:$0xff]
      %v316 = vld [vmem:[%s254 + $0xd0] sm:$0xff]
      %v317 = vld [vmem:[%s254 + $0xd8] sm:$0xff]
      %v318 = vld [vmem:[%s254 + $0xe0] sm:$0xff]
      %v319 = vld [vmem:[%s254 + $0xe8] sm:$0xff]
      %v320 = vld [vmem:[%s254 + $0xf0] sm:$0xff]
      %v321 = vld [vmem:[%s254 + $0xf8] sm:$0xff]
      %v322 = vld [vmem:[%s254 + $0x100] sm:$0xff]
      %v323 = vld [vmem:[%s254 + $0x108] sm:$0xff]
      %v324 = vld [vmem:[%s254 + $0x110] sm:$0xff]
      %v325 = vld [vmem:[%s254 + $0x118] sm:$0xff]
      %v326 = vld [vmem:[%s254 + $0x120] sm:$0xff]
      %v327 = vld [vmem:[%s254 + $0x128] sm:$0xff]
      %v328 = vld [vmem:[%s254 + $0x130] sm:$0xff]
      %v329 = vld [vmem:[%s254 + $0x138] sm:$0xff]
      %v330 = vld [vmem:[%s254 + $0x140] sm:$0xff]
      %v331 = vld [vmem:[%s254 + $0x148] sm:$0xff]
      %v332 = vld [vmem:[%s254 + $0x150] sm:$0xff]
      %v333 = vld [vmem:[%s254 + $0x158] sm:$0xff]
      %v334 = vld [vmem:[%s254 + $0x160] sm:$0xff]
      %v335 = vld [vmem:[%s254 + $0x168] sm:$0xff]
      %v336 = vld [vmem:[%s254 + $0x170] sm:$0xff]
      %v337 = vld [vmem:[%s254 + $0x178] sm:$0xff]
      %v338 = vld [vmem:[%s254 + $0x180] sm:$0xff]
      %v339 = vld [vmem:[%s254 + $0x188] sm:$0xff]
      %v340 = vld [vmem:[%s254 + $0x190] sm:$0xff]
      %v341 = vld [vmem:[%s254 + $0x198] sm:$0xff]
      %v342 = vld [vmem:[%s254 + $0x1a0] sm:$0xff]
      %v343 = vld [vmem:[%s254 + $0x1a8] sm:$0xff]
      %v344 = vld [vmem:[%s254 + $0x1b0] sm:$0xff]
      %v345 = vld [vmem:[%s254 + $0x1b8] sm:$0xff]
      %v346 = vld [vmem:[%s254 + $0x1c0] sm:$0xff]
      %v347 = vld [vmem:[%s254 + $0x1c8] sm:$0xff]
      %v348 = vld [vmem:[%s254 + $0x1d0] sm:$0xff]
      %v349 = vld [vmem:[%s254 + $0x1d8] sm:$0xff]
      %v350 = vld [vmem:[%s254 + $0x1e0] sm:$0xff]
      %v351 = vld [vmem:[%s254 + $0x1e8] sm:$0xff]
      %v352 = vld [vmem:[%s254 + $0x1f0] sm:$0xff]
      %v353 = vld [vmem:[%s254 + $0x1f8] sm:$0xff]
      %v354 = vld [vmem:[%s254 + $0x200] sm:$0xff]
      %v355 = vld [vmem:[%s254 + $0x208] sm:$0xff]
      %v356 = vld [vmem:[%s254 + $0x210] sm:$0xff]
      %v357 = vld [vmem:[%s254 + $0x218] sm:$0xff]
      %v358 = vld [vmem:[%s254 + $0x220] sm:$0xff]
      %v359 = vld [vmem:[%s254 + $0x228] sm:$0xff]
      %v360 = vld [vmem:[%s254 + $0x230] sm:$0xff]
      %v361 = vld [vmem:[%s254 + $0x238] sm:$0xff]
      %v362 = vld [vmem:[%s254 + $0x240] sm:$0xff]
      %v363 = vld [vmem:[%s254 + $0x248] sm:$0xff]
      %v364 = vld [vmem:[%s254 + $0x250] sm:$0xff]
      %v365 = vld [vmem:[%s254 + $0x258] sm:$0xff]
      %v366 = vld [vmem:[%s254 + $0x260] sm:$0xff]
      %v367 = vld [vmem:[%s254 + $0x268] sm:$0xff]
      %v368 = vld [vmem:[%s254 + $0x270] sm:$0xff]
      %v369 = vld [vmem:[%s254 + $0x278] sm:$0xff]
      %v370 = vld [vmem:[%s254 + $0x280] sm:$0xff]
      %v371 = vld [vmem:[%s254 + $0x288] sm:$0xff]
      %v372 = vld [vmem:[%s254 + $0x290] sm:$0xff]
      %v373 = vld [vmem:[%s254 + $0x298] sm:$0xff]
      %v374 = vld [vmem:[%s254 + $0x2a0] sm:$0xff]
      %v375 = vld [vmem:[%s254 + $0x2a8] sm:$0xff]
      %v376 = vld [vmem:[%s254 + $0x2b0] sm:$0xff]
      %v377 = vld [vmem:[%s254 + $0x2b8] sm:$0xff]
      %v378 = vld [vmem:[%s254 + $0x2c0] sm:$0xff]
      %v379 = vld [vmem:[%s254 + $0x2c8] sm:$0xff]
      %v380 = vld [vmem:[%s254 + $0x2d0] sm:$0xff]
      %v381 = vld [vmem:[%s254 + $0x2d8] sm:$0xff]
      %v382 = vld [vmem:[%s254 + $0x2e0] sm:$0xff]
      %v383 = vld [vmem:[%s254 + $0x2e8] sm:$0xff]
      %v384 = vld [vmem:[%s254 + $0x2f0] sm:$0xff]
      %v385 = vld [vmem:[%s254 + $0x2f8] sm:$0xff]
      %v386 = vld [vmem:[%s254 + $0x300] sm:$0xff]
      %v387 = vld [vmem:[%s254 + $0x308] sm:$0xff]
      %v388 = vld [vmem:[%s254 + $0x310] sm:$0xff]
      %v389 = vld [vmem:[%s254 + $0x318] sm:$0xff]
      %v390 = vld [vmem:[%s254 + $0x320] sm:$0xff]
      %v391 = vld [vmem:[%s254 + $0x328] sm:$0xff]
      %v392 = vld [vmem:[%s254 + $0x330] sm:$0xff]
      %v393 = vld [vmem:[%s254 + $0x338] sm:$0xff]
      %v394 = vld [vmem:[%s254 + $0x340] sm:$0xff]
      %v395 = vld [vmem:[%s254 + $0x348] sm:$0xff]
      %v396 = vld [vmem:[%s254 + $0x350] sm:$0xff]
      %v397 = vld [vmem:[%s254 + $0x358] sm:$0xff]
      %v398 = vld [vmem:[%s254 + $0x360] sm:$0xff]
      %v399 = vld [vmem:[%s254 + $0x368] sm:$0xff]
      %v400 = vld [vmem:[%s254 + $0x370] sm:$0xff]
      %v401 = vld [vmem:[%s254 + $0x378] sm:$0xff]
      %v402 = vld [vmem:[%s254 + $0x380] sm:$0xff]
      %v403 = vld [vmem:[%s254 + $0x388] sm:$0xff]
      %v404 = vld [vmem:[%s254 + $0x390] sm:$0xff]
      %v405 = vld [vmem:[%s254 + $0x398] sm:$0xff]
      %v406 = vld [vmem:[%s254 + $0x3a0] sm:$0xff]
      %v407 = vld [vmem:[%s254 + $0x3a8] sm:$0xff]
      %v408 = vld [vmem:[%s254 + $0x3b0] sm:$0xff]
      %v409 = vld [vmem:[%s254 + $0x3b8] sm:$0xff]
      %v410 = vld [vmem:[%s254 + $0x3c0] sm:$0xff]
      %v411 = vld [vmem:[%s254 + $0x3c8] sm:$0xff]
      %v412 = vld [vmem:[%s254 + $0x3d0] sm:$0xff]
      %v413 = vld [vmem:[%s254 + $0x3d8] sm:$0xff]
      %v414 = vld [vmem:[%s254 + $0x3e0] sm:$0xff]
      %v415 = vld [vmem:[%s254 + $0x3e8] sm:$0xff]
      %v416 = vld [vmem:[%s254 + $0x3f0] sm:$0xff]
      %v417 = vld [vmem:[%s254 + $0x3f8] sm:$0xff]
      %v418 = vld [vmem:[%s254 + $0x400] sm:$0xff]
      %v419 = vld [vmem:[%s254 + $0x408] sm:$0xff]
      %v420 = vld [vmem:[%s254 + $0x410] sm:$0xff]
      %v421 = vld [vmem:[%s254 + $0x418] sm:$0xff]
      %v422 = vld [vmem:[%s254 + $0x420] sm:$0xff]
      %v423 = vld [vmem:[%s254 + $0x428] sm:$0xff]
      %v424 = vld [vmem:[%s254 + $0x430] sm:$0xff]
      %v425 = vld [vmem:[%s254 + $0x438] sm:$0xff]
      %v426 = vld [vmem:[%s254 + $0x440] sm:$0xff]
      %v427 = vld [vmem:[%s254 + $0x448] sm:$0xff]
      %v428 = vld [vmem:[%s254 + $0x450] sm:$0xff]
      %v429 = vld [vmem:[%s254 + $0x458] sm:$0xff]
      %v430 = vld [vmem:[%s254 + $0x460] sm:$0xff]
      %v431 = vld [vmem:[%s254 + $0x468] sm:$0xff]
      %v432 = vld [vmem:[%s254 + $0x470] sm:$0xff]
      %v433 = vld [vmem:[%s254 + $0x478] sm:$0xff]
      %v434 = vld [vmem:[%s254 + $0x480] sm:$0xff]
      %v435 = vld [vmem:[%s254 + $0x488] sm:$0xff]
      %v436 = vld [vmem:[%s254 + $0x490] sm:$0xff]
      %v437 = vld [vmem:[%s254 + $0x498] sm:$0xff]
      %v438 = vld [vmem:[%s254 + $0x4a0] sm:$0xff]
      %v439 = vld [vmem:[%s254 + $0x4a8] sm:$0xff]
      %v440 = vld [vmem:[%s254 + $0x4b0] sm:$0xff]
      %v441 = vld [vmem:[%s254 + $0x4b8] sm:$0xff]
      %v442 = vld [vmem:[%s254 + $0x4c0] sm:$0xff]
      %v443 = vld [vmem:[%s254 + $0x4c8] sm:$0xff]
      %v444 = vld [vmem:[%s254 + $0x4d0] sm:$0xff]
      %v445 = vld [vmem:[%s254 + $0x4d8] sm:$0xff]
      %v446 = vld [vmem:[%s254 + $0x4e0] sm:$0xff]
      %v447 = vld [vmem:[%s254 + $0x4e8] sm:$0xff]
      %v448 = vld [vmem:[%s254 + $0x4f0] sm:$0xff]
      %v449 = vld [vmem:[%s254 + $0x4f8] sm:$0xff]
      %v450 = vld [vmem:[%s254 + $0x500] sm:$0xff]
      %v451 = vld [vmem:[%s254 + $0x508] sm:$0xff]
      %v452 = vld [vmem:[%s254 + $0x510] sm:$0xff]
      %v453 = vld [vmem:[%s254 + $0x518] sm:$0xff]
      %v454 = vld [vmem:[%s254 + $0x520] sm:$0xff]
      %v455 = vld [vmem:[%s254 + $0x528] sm:$0xff]
      %v456 = vld [vmem:[%s254 + $0x530] sm:$0xff]
      %v457 = vld [vmem:[%s254 + $0x538] sm:$0xff]
      %v458 = vld [vmem:[%s254 + $0x540] sm:$0xff]
      %v459 = vld [vmem:[%s254 + $0x548] sm:$0xff]
      %v460 = vld [vmem:[%s254 + $0x550] sm:$0xff]
      %v461 = vld [vmem:[%s254 + $0x558] sm:$0xff]
      %v462 = vld [vmem:[%s254 + $0x560] sm:$0xff]
      %v463 = vld [vmem:[%s254 + $0x568] sm:$0xff]
      %v464 = vld [vmem:[%s254 + $0x570] sm:$0xff]
      %v465 = vld [vmem:[%s254 + $0x578] sm:$0xff]
      %v466 = vld [vmem:[%s254 + $0x580] sm:$0xff]
      %v467 = vld [vmem:[%s254 + $0x588] sm:$0xff]
      %v468 = vld [vmem:[%s254 + $0x590] sm:$0xff]
      %v469 = vld [vmem:[%s254 + $0x598] sm:$0xff]
      %v470 = vld [vmem:[%s254 + $0x5a0] sm:$0xff]
      %v471 = vld [vmem:[%s254 + $0x5a8] sm:$0xff]
      %v472 = vld [vmem:[%s254 + $0x5b0] sm:$0xff]
      %v473 = vld [vmem:[%s254 + $0x5b8] sm:$0xff]
      %v474 = vld [vmem:[%s254 + $0x5c0] sm:$0xff]
      %v475 = vld [vmem:[%s254 + $0x5c8] sm:$0xff]
      %v476 = vld [vmem:[%s254 + $0x5d0] sm:$0xff]
      %v477 = vld [vmem:[%s254 + $0x5d8] sm:$0xff]
      %v478 = vld [vmem:[%s254 + $0x5e0] sm:$0xff]
      %v479 = vld [vmem:[%s254 + $0x5e8] sm:$0xff]
      %v480 = vld [vmem:[%s254 + $0x5f0] sm:$0xff]
      %v481 = vld [vmem:[%s254 + $0x5f8] sm:$0xff]
      %v482 = vld [vmem:[%s254 + $0x600] sm:$0xff]
      %v483 = vld [vmem:[%s254 + $0x608] sm:$0xff]
      %v484 = vld [vmem:[%s254 + $0x610] sm:$0xff]
      %v485 = vld [vmem:[%s254 + $0x618] sm:$0xff]
      %v486 = vld [vmem:[%s254 + $0x620] sm:$0xff]
      %v487 = vld [vmem:[%s254 + $0x628] sm:$0xff]
      %v488 = vld [vmem:[%s254 + $0x630] sm:$0xff]
      %v489 = vld [vmem:[%s254 + $0x638] sm:$0xff]
      %v490 = vld [vmem:[%s254 + $0x640] sm:$0xff]
      %v491 = vld [vmem:[%s254 + $0x648] sm:$0xff]
      %v492 = vld [vmem:[%s254 + $0x650] sm:$0xff]
      %v493 = vld [vmem:[%s254 + $0x658] sm:$0xff]
      %v494 = vld [vmem:[%s254 + $0x660] sm:$0xff]
      %v495 = vld [vmem:[%s254 + $0x668] sm:$0xff]
      %v496 = vld [vmem:[%s254 + $0x670] sm:$0xff]
      %v497 = vld [vmem:[%s254 + $0x678] sm:$0xff]
      %v498 = vld [vmem:[%s254 + $0x680] sm:$0xff]
      %v499 = vld [vmem:[%s254 + $0x688] sm:$0xff]
      %v500 = vld [vmem:[%s254 + $0x690] sm:$0xff]
      %v501 = vld [vmem:[%s254 + $0x698] sm:$0xff]
      %v502 = vld [vmem:[%s254 + $0x6a0] sm:$0xff]
      %v503 = vld [vmem:[%s254 + $0x6a8] sm:$0xff]
      %v504 = vld [vmem:[%s254 + $0x6b0] sm:$0xff]
      %v505 = vld [vmem:[%s254 + $0x6b8] sm:$0xff]
      %v506 = vld [vmem:[%s254 + $0x6c0] sm:$0xff]
      %v507 = vld [vmem:[%s254 + $0x6c8] sm:$0xff]
      %v508 = vld [vmem:[%s254 + $0x6d0] sm:$0xff]
      %v509 = vld [vmem:[%s254 + $0x6d8] sm:$0xff]
      %v510 = vld [vmem:[%s254 + $0x6e0] sm:$0xff]
      %v511 = vld [vmem:[%s254 + $0x6e8] sm:$0xff]
      %v512 = vld [vmem:[%s254 + $0x6f0] sm:$0xff]
      %v513 = vld [vmem:[%s254 + $0x6f8] sm:$0xff]
      %v514 = vld [vmem:[%s254 + $0x700] sm:$0xff]
      %v515 = vld [vmem:[%s254 + $0x708] sm:$0xff]
      %v516 = vld [vmem:[%s254 + $0x710] sm:$0xff]
      %v517 = vld [vmem:[%s254 + $0x718] sm:$0xff]
      %v518 = vld [vmem:[%s254 + $0x720] sm:$0xff]
      %v519 = vld [vmem:[%s254 + $0x728] sm:$0xff]
      %v520 = vld [vmem:[%s254 + $0x730] sm:$0xff]
      %v521 = vld [vmem:[%s254 + $0x738] sm:$0xff]
      %v522 = vld [vmem:[%s254 + $0x740] sm:$0xff]
      %v523 = vld [vmem:[%s254 + $0x748] sm:$0xff]
      %v524 = vld [vmem:[%s254 + $0x750] sm:$0xff]
      %v525 = vld [vmem:[%s254 + $0x758] sm:$0xff]
      %v526 = vld [vmem:[%s254 + $0x760] sm:$0xff]
      %v527 = vld [vmem:[%s254 + $0x768] sm:$0xff]
      %v528 = vld [vmem:[%s254 + $0x770] sm:$0xff]
      %v529 = vld [vmem:[%s254 + $0x778] sm:$0xff]
      %v530 = vld [vmem:[%s254 + $0x780] sm:$0xff]
      %v531 = vld [vmem:[%s254 + $0x788] sm:$0xff]
      %v532 = vld [vmem:[%s254 + $0x790] sm:$0xff]
      %v533 = vld [vmem:[%s254 + $0x798] sm:$0xff]
      %v534 = vld [vmem:[%s254 + $0x7a0] sm:$0xff]
      %v535 = vld [vmem:[%s254 + $0x7a8] sm:$0xff]
      %v536 = vld [vmem:[%s254 + $0x7b0] sm:$0xff]
      %v537 = vld [vmem:[%s254 + $0x7b8] sm:$0xff]
      %v538 = vld [vmem:[%s254 + $0x7c0] sm:$0xff]
      %v539 = vld [vmem:[%s254 + $0x7c8] sm:$0xff]
      %v540 = vld [vmem:[%s254 + $0x7d0] sm:$0xff]
      %v541 = vld [vmem:[%s254 + $0x7d8] sm:$0xff]
      %v542 = vld [vmem:[%s254 + $0x7e0] sm:$0xff]
      %v543 = vld [vmem:[%s254 + $0x7e8] sm:$0xff]
      %v544 = vld [vmem:[%s254 + $0x7f0] sm:$0xff]
      %v545 = vld [vmem:[%s254 + $0x7f8] sm:$0xff]
      %v546 = vld [vmem:[%s254 + $0x800] sm:$0xff]
      %v547 = vld [vmem:[%s254 + $0x808] sm:$0xff]
      %v548 = vld [vmem:[%s254 + $0x810] sm:$0xff]
      %v549 = vld [vmem:[%s254 + $0x818] sm:$0xff]
      %v550 = vld [vmem:[%s254 + $0x820] sm:$0xff]
      %v551 = vld [vmem:[%s254 + $0x828] sm:$0xff]
      %v552 = vld [vmem:[%s254 + $0x830] sm:$0xff]
      %v553 = vld [vmem:[%s254 + $0x838] sm:$0xff]
      %v554 = vld [vmem:[%s254 + $0x840] sm:$0xff]
      %v555 = vld [vmem:[%s254 + $0x848] sm:$0xff]
      %v556 = vld [vmem:[%s254 + $0x850] sm:$0xff]
      %v557 = vld [vmem:[%s254 + $0x858] sm:$0xff]
      %v558 = vld [vmem:[%s254 + $0x860] sm:$0xff]
      %v559 = vld [vmem:[%s254 + $0x868] sm:$0xff]
      %v560 = vld [vmem:[%s254 + $0x870] sm:$0xff]
      %v561 = vld [vmem:[%s254 + $0x878] sm:$0xff]
      %v562 = vld [vmem:[%s254 + $0x880] sm:$0xff]
      %v563 = vld [vmem:[%s254 + $0x888] sm:$0xff]
      %v564 = vld [vmem:[%s254 + $0x890] sm:$0xff]
      %v565 = vld [vmem:[%s254 + $0x898] sm:$0xff]
      %v566 = vld [vmem:[%s254 + $0x8a0] sm:$0xff]
      %v567 = vld [vmem:[%s254 + $0x8a8] sm:$0xff]
      %v568 = vld [vmem:[%s254 + $0x8b0] sm:$0xff]
      %v569 = vld [vmem:[%s254 + $0x8b8] sm:$0xff]
      %v570 = vld [vmem:[%s254 + $0x8c0] sm:$0xff]
      %v571 = vld [vmem:[%s254 + $0x8c8] sm:$0xff]
      %v572 = vld [vmem:[%s254 + $0x8d0] sm:$0xff]
      %v573 = vld [vmem:[%s254 + $0x8d8] sm:$0xff]
      %v574 = vld [vmem:[%s254 + $0x8e0] sm:$0xff]
      %v575 = vld [vmem:[%s254 + $0x8e8] sm:$0xff]
      %v576 = vld [vmem:[%s254 + $0x8f0] sm:$0xff]
      %v577 = vld [vmem:[%s254 + $0x8f8] sm:$0xff]
      %v578 = vld [vmem:[%s254 + $0x900] sm:$0xff]
      %v579 = vld [vmem:[%s254 + $0x908] sm:$0xff]
      %v580 = vld [vmem:[%s254 + $0x910] sm:$0xff]
      %v581 = vld [vmem:[%s254 + $0x918] sm:$0xff]
      %v582 = vld [vmem:[%s254 + $0x920] sm:$0xff]
      %v583 = vld [vmem:[%s254 + $0x928] sm:$0xff]
      %v584 = vld [vmem:[%s254 + $0x930] sm:$0xff]
      %v585 = vld [vmem:[%s254 + $0x938] sm:$0xff]
      %v586 = vld [vmem:[%s254 + $0x940] sm:$0xff]
      %v587 = vld [vmem:[%s254 + $0x948] sm:$0xff]
      %v588 = vld [vmem:[%s254 + $0x950] sm:$0xff]
      %v589 = vld [vmem:[%s254 + $0x958] sm:$0xff]
      %v590 = vld [vmem:[%s254 + $0x960] sm:$0xff]
      %v591 = vld [vmem:[%s254 + $0x968] sm:$0xff]
      %v592 = vld [vmem:[%s254 + $0x970] sm:$0xff]
      %v593 = vld [vmem:[%s254 + $0x978] sm:$0xff]
      %v594 = vld [vmem:[%s254 + $0x980] sm:$0xff]
      %v595 = vld [vmem:[%s254 + $0x988] sm:$0xff]
      %v596 = vld [vmem:[%s254 + $0x990] sm:$0xff]
      %v597 = vld [vmem:[%s254 + $0x998] sm:$0xff]
      %v598 = vld [vmem:[%s254 + $0x9a0] sm:$0xff]
      %v599 = vld [vmem:[%s254 + $0x9a8] sm:$0xff]
      %v600 = vld [vmem:[%s254 + $0x9b0] sm:$0xff]
      %v601 = vld [vmem:[%s254 + $0x9b8] sm:$0xff]
      %v602 = vld [vmem:[%s254 + $0x9c0] sm:$0xff]
      %v603 = vld [vmem:[%s254 + $0x9c8] sm:$0xff]
      %v604 = vld [vmem:[%s254 + $0x9d0] sm:$0xff]
      %v605 = vld [vmem:[%s254 + $0x9d8] sm:$0xff]
      %v606 = vld [vmem:[%s254 + $0x9e0] sm:$0xff]
      %v607 = vld [vmem:[%s254 + $0x9e8] sm:$0xff]
      %v608 = vld [vmem:[%s254 + $0x9f0] sm:$0xff]
      %v609 = vld [vmem:[%s254 + $0x9f8] sm:$0xff]
      %v610 = vld [vmem:[%s254 + $0xa00] sm:$0xff]
      %v611 = vld [vmem:[%s254 + $0xa08] sm:$0xff]
      %v612 = vld [vmem:[%s254 + $0xa10] sm:$0xff]
      %v613 = vld [vmem:[%s254 + $0xa18] sm:$0xff]
      %v614 = vld [vmem:[%s254 + $0xa20] sm:$0xff]
      %v615 = vld [vmem:[%s254 + $0xa28] sm:$0xff]
      %v616 = vld [vmem:[%s254 + $0xa30] sm:$0xff]
      %v617 = vld [vmem:[%s254 + $0xa38] sm:$0xff]
      %v618 = vld [vmem:[%s254 + $0xa40] sm:$0xff]
      %v619 = vld [vmem:[%s254 + $0xa48] sm:$0xff]
      %v620 = vld [vmem:[%s254 + $0xa50] sm:$0xff]
      %v621 = vld [vmem:[%s254 + $0xa58] sm:$0xff]
      %v622 = vld [vmem:[%s254 + $0xa60] sm:$0xff]
      %v623 = vld [vmem:[%s254 + $0xa68] sm:$0xff]
      %v624 = vld [vmem:[%s254 + $0xa70] sm:$0xff]
      %v625 = vld [vmem:[%s254 + $0xa78] sm:$0xff]
      %v626 = vld [vmem:[%s254 + $0xa80] sm:$0xff]
      %v627 = vld [vmem:[%s254 + $0xa88] sm:$0xff]
      %v628 = vld [vmem:[%s254 + $0xa90] sm:$0xff]
      %v629 = vld [vmem:[%s254 + $0xa98] sm:$0xff]
      %v630 = vld [vmem:[%s254 + $0xaa0] sm:$0xff]
      %v631 = vld [vmem:[%s254 + $0xaa8] sm:$0xff]
      %v632 = vld [vmem:[%s254 + $0xab0] sm:$0xff]
      %v633 = vld [vmem:[%s254 + $0xab8] sm:$0xff]
      %v634 = vld [vmem:[%s254 + $0xac0] sm:$0xff]
      %v635 = vld [vmem:[%s254 + $0xac8] sm:$0xff]
      %v636 = vld [vmem:[%s254 + $0xad0] sm:$0xff]
      %v637 = vld [vmem:[%s254 + $0xad8] sm:$0xff]
      %v638 = vld [vmem:[%s254 + $0xae0] sm:$0xff]
      %v639 = vld [vmem:[%s254 + $0xae8] sm:$0xff]
      %v640 = vld [vmem:[%s254 + $0xaf0] sm:$0xff]
      %v641 = vld [vmem:[%s254 + $0xaf8] sm:$0xff]
      %v642 = vld [vmem:[%s254 + $0xb00] sm:$0xff]
      %v643 = vld [vmem:[%s254 + $0xb08] sm:$0xff]
      %v644 = vld [vmem:[%s254 + $0xb10] sm:$0xff]
      %v645 = vld [vmem:[%s254 + $0xb18] sm:$0xff]
      %v646 = vld [vmem:[%s254 + $0xb20] sm:$0xff]
      %v647 = vld [vmem:[%s254 + $0xb28] sm:$0xff]
      %v648 = vld [vmem:[%s254 + $0xb30] sm:$0xff]
      %v649 = vld [vmem:[%s254 + $0xb38] sm:$0xff]
      %v650 = vld [vmem:[%s254 + $0xb40] sm:$0xff]
      %v651 = vld [vmem:[%s254 + $0xb48] sm:$0xff]
      %v652 = vld [vmem:[%s254 + $0xb50] sm:$0xff]
      %v653 = vld [vmem:[%s254 + $0xb58] sm:$0xff]
      %v654 = vld [vmem:[%s254 + $0xb60] sm:$0xff]
      %v655 = vld [vmem:[%s254 + $0xb68] sm:$0xff]
      %v656 = vld [vmem:[%s254 + $0xb70] sm:$0xff]
      %v657 = vld [vmem:[%s254 + $0xb78] sm:$0xff]
      %v658 = vld [vmem:[%s254 + $0xb80] sm:$0xff]
      %v659 = vld [vmem:[%s254 + $0xb88] sm:$0xff]
      %v660 = vld [vmem:[%s254 + $0xb90] sm:$0xff]
      %v661 = vld [vmem:[%s254 + $0xb98] sm:$0xff]
      %v662 = vld [vmem:[%s254 + $0xba0] sm:$0xff]
      %v663 = vld [vmem:[%s254 + $0xba8] sm:$0xff]
      %v664 = vld [vmem:[%s254 + $0xbb0] sm:$0xff]
      %v665 = vld [vmem:[%s254 + $0xbb8] sm:$0xff]
      %v666 = vld [vmem:[%s254 + $0xbc0] sm:$0xff]
      %v667 = vld [vmem:[%s254 + $0xbc8] sm:$0xff]
      %v668 = vld [vmem:[%s254 + $0xbd0] sm:$0xff]
      %v669 = vld [vmem:[%s254 + $0xbd8] sm:$0xff]
      %v670 = vld [vmem:[%s254 + $0xbe0] sm:$0xff]
      %v671 = vld [vmem:[%s254 + $0xbe8] sm:$0xff]
      %v672 = vld [vmem:[%s254 + $0xbf0] sm:$0xff]
      %v673 = vld [vmem:[%s254 + $0xbf8] sm:$0xff]
      %v678 = vunpack.c.l.b16 %v286
      %v679 = vunpack.c.h.b16 %v286
      %v680 = vunpack.c.l.b16 %v287
      %v681 = vunpack.c.h.b16 %v287
      %v682 = vunpack.c.l.b16 %v288
      %v683 = vunpack.c.h.b16 %v288
      %v684 = vunpack.c.l.b16 %v289
      %v685 = vunpack.c.h.b16 %v289
      %v686 = vpack.c.b16 %v678, %v678
      %v687 = vpack.c.b16 %v679, %v679
      %v688 = vpack.c.b16 %v680, %v680
      %v689 = vpack.c.b16 %v681, %v681
      %v690 = vpack.c.b16 %v682, %v682
      %v691 = vpack.c.b16 %v683, %v683
      %v692 = vpack.c.b16 %v684, %v684
      %v693 = vpack.c.b16 %v685, %v685
      %v1086 = vunpack.c.l.b16 %v290
      %v1087 = vunpack.c.h.b16 %v290
      %v1088 = vunpack.c.l.b16 %v291
      %v1089 = vunpack.c.h.b16 %v291
      %v1090 = vunpack.c.l.b16 %v292
      %v1091 = vunpack.c.h.b16 %v292
      %v1092 = vunpack.c.l.b16 %v293
      %v1093 = vunpack.c.h.b16 %v293
      %v1094 = vunpack.c.l.b16 %v294
      %v1095 = vunpack.c.h.b16 %v294
      %v1096 = vunpack.c.l.b16 %v295
      %v1097 = vunpack.c.h.b16 %v295
      %v1098 = vunpack.c.l.b16 %v296
      %v1099 = vunpack.c.h.b16 %v296
      %v1100 = vunpack.c.l.b16 %v297
      %v1101 = vunpack.c.h.b16 %v297
      %v1102 = vunpack.c.l.b16 %v298
      %v1103 = vunpack.c.h.b16 %v298
      %v1104 = vunpack.c.l.b16 %v299
      %v1105 = vunpack.c.h.b16 %v299
      %v1106 = vunpack.c.l.b16 %v300
      %v1107 = vunpack.c.h.b16 %v300
      %v1108 = vunpack.c.l.b16 %v301
      %v1109 = vunpack.c.h.b16 %v301
      %v1110 = vunpack.c.l.b16 %v302
      %v1111 = vunpack.c.h.b16 %v302
      %v1112 = vunpack.c.l.b16 %v303
      %v1113 = vunpack.c.h.b16 %v303
      %v1114 = vunpack.c.l.b16 %v304
      %v1115 = vunpack.c.h.b16 %v304
      %v1116 = vunpack.c.l.b16 %v305
      %v1117 = vunpack.c.h.b16 %v305
      %v1118 = vunpack.c.l.b16 %v306
      %v1119 = vunpack.c.h.b16 %v306
      %v1120 = vunpack.c.l.b16 %v307
      %v1121 = vunpack.c.h.b16 %v307
      %v1122 = vunpack.c.l.b16 %v308
      %v1123 = vunpack.c.h.b16 %v308
      %v1124 = vunpack.c.l.b16 %v309
      %v1125 = vunpack.c.h.b16 %v309
      %v1126 = vunpack.c.l.b16 %v310
      %v1127 = vunpack.c.h.b16 %v310
      %v1128 = vunpack.c.l.b16 %v311
      %v1129 = vunpack.c.h.b16 %v311
      %v1130 = vunpack.c.l.b16 %v312
      %v1131 = vunpack.c.h.b16 %v312
      %v1132 = vunpack.c.l.b16 %v313
      %v1133 = vunpack.c.h.b16 %v313
      %v1134 = vunpack.c.l.b16 %v314
      %v1135 = vunpack.c.h.b16 %v314
      %v1136 = vunpack.c.l.b16 %v315
      %v1137 = vunpack.c.h.b16 %v315
      %v1138 = vunpack.c.l.b16 %v316
      %v1139 = vunpack.c.h.b16 %v316
      %v1140 = vunpack.c.l.b16 %v317
      %v1141 = vunpack.c.h.b16 %v317
      %v1142 = vunpack.c.l.b16 %v318
      %v1143 = vunpack.c.h.b16 %v318
      %v1144 = vunpack.c.l.b16 %v319
      %v1145 = vunpack.c.h.b16 %v319
      %v1146 = vunpack.c.l.b16 %v320
      %v1147 = vunpack.c.h.b16 %v320
      %v1148 = vunpack.c.l.b16 %v321
      %v1149 = vunpack.c.h.b16 %v321
      %v1150 = vunpack.c.l.b16 %v322
      %v1151 = vunpack.c.h.b16 %v322
      %v1152 = vunpack.c.l.b16 %v323
      %v1153 = vunpack.c.h.b16 %v323
      %v1154 = vunpack.c.l.b16 %v324
      %v1155 = vunpack.c.h.b16 %v324
      %v1156 = vunpack.c.l.b16 %v325
      %v1157 = vunpack.c.h.b16 %v325
      %v1158 = vunpack.c.l.b16 %v326
      %v1159 = vunpack.c.h.b16 %v326
      %v1160 = vunpack.c.l.b16 %v327
      %v1161 = vunpack.c.h.b16 %v327
      %v1162 = vunpack.c.l.b16 %v328
      %v1163 = vunpack.c.h.b16 %v328
      %v1164 = vunpack.c.l.b16 %v329
      %v1165 = vunpack.c.h.b16 %v329
      %v1166 = vunpack.c.l.b16 %v330
      %v1167 = vunpack.c.h.b16 %v330
      %v1168 = vunpack.c.l.b16 %v331
      %v1169 = vunpack.c.h.b16 %v331
      %v1170 = vunpack.c.l.b16 %v332
      %v1171 = vunpack.c.h.b16 %v332
      %v1172 = vunpack.c.l.b16 %v333
      %v1173 = vunpack.c.h.b16 %v333
      %v1174 = vunpack.c.l.b16 %v334
      %v1175 = vunpack.c.h.b16 %v334
      %v1176 = vunpack.c.l.b16 %v335
      %v1177 = vunpack.c.h.b16 %v335
      %v1178 = vunpack.c.l.b16 %v336
      %v1179 = vunpack.c.h.b16 %v336
      %v1180 = vunpack.c.l.b16 %v337
      %v1181 = vunpack.c.h.b16 %v337
      %v1182 = vunpack.c.l.b16 %v338
      %v1183 = vunpack.c.h.b16 %v338
      %v1184 = vunpack.c.l.b16 %v339
      %v1185 = vunpack.c.h.b16 %v339
      %v1186 = vunpack.c.l.b16 %v340
      %v1187 = vunpack.c.h.b16 %v340
      %v1188 = vunpack.c.l.b16 %v341
      %v1189 = vunpack.c.h.b16 %v341
      %v1190 = vunpack.c.l.b16 %v342
      %v1191 = vunpack.c.h.b16 %v342
      %v1192 = vunpack.c.l.b16 %v343
      %v1193 = vunpack.c.h.b16 %v343
      %v1194 = vunpack.c.l.b16 %v344
      %v1195 = vunpack.c.h.b16 %v344
      %v1196 = vunpack.c.l.b16 %v345
      %v1197 = vunpack.c.h.b16 %v345
      %v1198 = vunpack.c.l.b16 %v346
      %v1199 = vunpack.c.h.b16 %v346
      %v1200 = vunpack.c.l.b16 %v347
      %v1201 = vunpack.c.h.b16 %v347
      %v1202 = vunpack.c.l.b16 %v348
      %v1203 = vunpack.c.h.b16 %v348
      %v1204 = vunpack.c.l.b16 %v349
      %v1205 = vunpack.c.h.b16 %v349
      %v1206 = vunpack.c.l.b16 %v350
      %v1207 = vunpack.c.h.b16 %v350
      %v1208 = vunpack.c.l.b16 %v351
      %v1209 = vunpack.c.h.b16 %v351
      %v1210 = vunpack.c.l.b16 %v352
      %v1211 = vunpack.c.h.b16 %v352
      %v1212 = vunpack.c.l.b16 %v353
      %v1213 = vunpack.c.h.b16 %v353
      %v1214 = vunpack.c.l.b16 %v354
      %v1215 = vunpack.c.h.b16 %v354
      %v1216 = vunpack.c.l.b16 %v355
      %v1217 = vunpack.c.h.b16 %v355
      %v1218 = vunpack.c.l.b16 %v356
      %v1219 = vunpack.c.h.b16 %v356
      %v1220 = vunpack.c.l.b16 %v357
      %v1221 = vunpack.c.h.b16 %v357
      %v1222 = vunpack.c.l.b16 %v358
      %v1223 = vunpack.c.h.b16 %v358
      %v1224 = vunpack.c.l.b16 %v359
      %v1225 = vunpack.c.h.b16 %v359
      %v1226 = vunpack.c.l.b16 %v360
      %v1227 = vunpack.c.h.b16 %v360
      %v1228 = vunpack.c.l.b16 %v361
      %v1229 = vunpack.c.h.b16 %v361
      %v1230 = vunpack.c.l.b16 %v362
      %v1231 = vunpack.c.h.b16 %v362
      %v1232 = vunpack.c.l.b16 %v363
      %v1233 = vunpack.c.h.b16 %v363
      %v1234 = vunpack.c.l.b16 %v364
      %v1235 = vunpack.c.h.b16 %v364
      %v1236 = vunpack.c.l.b16 %v365
      %v1237 = vunpack.c.h.b16 %v365
      %v1238 = vunpack.c.l.b16 %v366
      %v1239 = vunpack.c.h.b16 %v366
      %v1240 = vunpack.c.l.b16 %v367
      %v1241 = vunpack.c.h.b16 %v367
      %v1242 = vunpack.c.l.b16 %v368
      %v1243 = vunpack.c.h.b16 %v368
      %v1244 = vunpack.c.l.b16 %v369
      %v1245 = vunpack.c.h.b16 %v369
      %v1246 = vunpack.c.l.b16 %v370
      %v1247 = vunpack.c.h.b16 %v370
      %v1248 = vunpack.c.l.b16 %v371
      %v1249 = vunpack.c.h.b16 %v371
      %v1250 = vunpack.c.l.b16 %v372
      %v1251 = vunpack.c.h.b16 %v372
      %v1252 = vunpack.c.l.b16 %v373
      %v1253 = vunpack.c.h.b16 %v373
      %v1254 = vunpack.c.l.b16 %v374
      %v1255 = vunpack.c.h.b16 %v374
      %v1256 = vunpack.c.l.b16 %v375
      %v1257 = vunpack.c.h.b16 %v375
      %v1258 = vunpack.c.l.b16 %v376
      %v1259 = vunpack.c.h.b16 %v376
      %v1260 = vunpack.c.l.b16 %v377
      %v1261 = vunpack.c.h.b16 %v377
      %v1262 = vunpack.c.l.b16 %v378
      %v1263 = vunpack.c.h.b16 %v378
      %v1264 = vunpack.c.l.b16 %v379
      %v1265 = vunpack.c.h.b16 %v379
      %v1266 = vunpack.c.l.b16 %v380
      %v1267 = vunpack.c.h.b16 %v380
      %v1268 = vunpack.c.l.b16 %v381
      %v1269 = vunpack.c.h.b16 %v381
      %v1270 = vunpack.c.l.b16 %v382
      %v1271 = vunpack.c.h.b16 %v382
      %v1272 = vunpack.c.l.b16 %v383
      %v1273 = vunpack.c.h.b16 %v383
      %v1274 = vunpack.c.l.b16 %v384
      %v1275 = vunpack.c.h.b16 %v384
      %v1276 = vunpack.c.l.b16 %v385
      %v1277 = vunpack.c.h.b16 %v385
      %v1278 = vunpack.c.l.b16 %v386
      %v1279 = vunpack.c.h.b16 %v386
      %v1280 = vunpack.c.l.b16 %v387
      %v1281 = vunpack.c.h.b16 %v387
      %v1282 = vunpack.c.l.b16 %v388
      %v1283 = vunpack.c.h.b16 %v388
      %v1284 = vunpack.c.l.b16 %v389
      %v1285 = vunpack.c.h.b16 %v389
      %v1286 = vunpack.c.l.b16 %v390
      %v1287 = vunpack.c.h.b16 %v390
      %v1288 = vunpack.c.l.b16 %v391
      %v1289 = vunpack.c.h.b16 %v391
      %v1290 = vunpack.c.l.b16 %v392
      %v1291 = vunpack.c.h.b16 %v392
      %v1292 = vunpack.c.l.b16 %v393
      %v1293 = vunpack.c.h.b16 %v393
      %v1294 = vunpack.c.l.b16 %v394
      %v1295 = vunpack.c.h.b16 %v394
      %v1296 = vunpack.c.l.b16 %v395
      %v1297 = vunpack.c.h.b16 %v395
      %v1298 = vunpack.c.l.b16 %v396
      %v1299 = vunpack.c.h.b16 %v396
      %v1300 = vunpack.c.l.b16 %v397
      %v1301 = vunpack.c.h.b16 %v397
      %v1302 = vunpack.c.l.b16 %v398
      %v1303 = vunpack.c.h.b16 %v398
      %v1304 = vunpack.c.l.b16 %v399
      %v1305 = vunpack.c.h.b16 %v399
      %v1306 = vunpack.c.l.b16 %v400
      %v1307 = vunpack.c.h.b16 %v400
      %v1308 = vunpack.c.l.b16 %v401
      %v1309 = vunpack.c.h.b16 %v401
      %v1310 = vunpack.c.l.b16 %v402
      %v1311 = vunpack.c.h.b16 %v402
      %v1312 = vunpack.c.l.b16 %v403
      %v1313 = vunpack.c.h.b16 %v403
      %v1314 = vunpack.c.l.b16 %v404
      %v1315 = vunpack.c.h.b16 %v404
      %v1316 = vunpack.c.l.b16 %v405
      %v1317 = vunpack.c.h.b16 %v405
      %v1318 = vunpack.c.l.b16 %v406
      %v1319 = vunpack.c.h.b16 %v406
      %v1320 = vunpack.c.l.b16 %v407
      %v1321 = vunpack.c.h.b16 %v407
      %v1322 = vunpack.c.l.b16 %v408
      %v1323 = vunpack.c.h.b16 %v408
      %v1324 = vunpack.c.l.b16 %v409
      %v1325 = vunpack.c.h.b16 %v409
      %v1326 = vunpack.c.l.b16 %v410
      %v1327 = vunpack.c.h.b16 %v410
      %v1328 = vunpack.c.l.b16 %v411
      %v1329 = vunpack.c.h.b16 %v411
      %v1330 = vunpack.c.l.b16 %v412
      %v1331 = vunpack.c.h.b16 %v412
      %v1332 = vunpack.c.l.b16 %v413
      %v1333 = vunpack.c.h.b16 %v413
      %v1334 = vunpack.c.l.b16 %v414
      %v1335 = vunpack.c.h.b16 %v414
      %v1336 = vunpack.c.l.b16 %v415
      %v1337 = vunpack.c.h.b16 %v415
      %v1338 = vunpack.c.l.b16 %v416
      %v1339 = vunpack.c.h.b16 %v416
      %v1340 = vunpack.c.l.b16 %v417
      %v1341 = vunpack.c.h.b16 %v417
      %v1342 = vunpack.c.l.b16 %v418
      %v1343 = vunpack.c.h.b16 %v418
      %v1344 = vunpack.c.l.b16 %v419
      %v1345 = vunpack.c.h.b16 %v419
      %v1346 = vunpack.c.l.b16 %v420
      %v1347 = vunpack.c.h.b16 %v420
      %v1348 = vunpack.c.l.b16 %v421
      %v1349 = vunpack.c.h.b16 %v421
      %v1350 = vunpack.c.l.b16 %v422
      %v1351 = vunpack.c.h.b16 %v422
      %v1352 = vunpack.c.l.b16 %v423
      %v1353 = vunpack.c.h.b16 %v423
      %v1354 = vunpack.c.l.b16 %v424
      %v1355 = vunpack.c.h.b16 %v424
      %v1356 = vunpack.c.l.b16 %v425
      %v1357 = vunpack.c.h.b16 %v425
      %v1358 = vunpack.c.l.b16 %v426
      %v1359 = vunpack.c.h.b16 %v426
      %v1360 = vunpack.c.l.b16 %v427
      %v1361 = vunpack.c.h.b16 %v427
      %v1362 = vunpack.c.l.b16 %v428
      %v1363 = vunpack.c.h.b16 %v428
      %v1364 = vunpack.c.l.b16 %v429
      %v1365 = vunpack.c.h.b16 %v429
      %v1366 = vunpack.c.l.b16 %v430
      %v1367 = vunpack.c.h.b16 %v430
      %v1368 = vunpack.c.l.b16 %v431
      %v1369 = vunpack.c.h.b16 %v431
      %v1370 = vunpack.c.l.b16 %v432
      %v1371 = vunpack.c.h.b16 %v432
      %v1372 = vunpack.c.l.b16 %v433
      %v1373 = vunpack.c.h.b16 %v433
      %v1374 = vunpack.c.l.b16 %v434
      %v1375 = vunpack.c.h.b16 %v434
      %v1376 = vunpack.c.l.b16 %v435
      %v1377 = vunpack.c.h.b16 %v435
      %v1378 = vunpack.c.l.b16 %v436
      %v1379 = vunpack.c.h.b16 %v436
      %v1380 = vunpack.c.l.b16 %v437
      %v1381 = vunpack.c.h.b16 %v437
      %v1382 = vunpack.c.l.b16 %v438
      %v1383 = vunpack.c.h.b16 %v438
      %v1384 = vunpack.c.l.b16 %v439
      %v1385 = vunpack.c.h.b16 %v439
      %v1386 = vunpack.c.l.b16 %v440
      %v1387 = vunpack.c.h.b16 %v440
      %v1388 = vunpack.c.l.b16 %v441
      %v1389 = vunpack.c.h.b16 %v441
      %v1390 = vunpack.c.l.b16 %v442
      %v1391 = vunpack.c.h.b16 %v442
      %v1392 = vunpack.c.l.b16 %v443
      %v1393 = vunpack.c.h.b16 %v443
      %v1394 = vunpack.c.l.b16 %v444
      %v1395 = vunpack.c.h.b16 %v444
      %v1396 = vunpack.c.l.b16 %v445
      %v1397 = vunpack.c.h.b16 %v445
      %v1398 = vunpack.c.l.b16 %v446
      %v1399 = vunpack.c.h.b16 %v446
      %v1400 = vunpack.c.l.b16 %v447
      %v1401 = vunpack.c.h.b16 %v447
      %v1402 = vunpack.c.l.b16 %v448
      %v1403 = vunpack.c.h.b16 %v448
      %v1404 = vunpack.c.l.b16 %v449
      %v1405 = vunpack.c.h.b16 %v449
      %v1406 = vunpack.c.l.b16 %v450
      %v1407 = vunpack.c.h.b16 %v450
      %v1408 = vunpack.c.l.b16 %v451
      %v1409 = vunpack.c.h.b16 %v451
      %v1410 = vunpack.c.l.b16 %v452
      %v1411 = vunpack.c.h.b16 %v452
      %v1412 = vunpack.c.l.b16 %v453
      %v1413 = vunpack.c.h.b16 %v453
      %v1414 = vunpack.c.l.b16 %v454
      %v1415 = vunpack.c.h.b16 %v454
      %v1416 = vunpack.c.l.b16 %v455
      %v1417 = vunpack.c.h.b16 %v455
      %v1418 = vunpack.c.l.b16 %v456
      %v1419 = vunpack.c.h.b16 %v456
      %v1420 = vunpack.c.l.b16 %v457
      %v1421 = vunpack.c.h.b16 %v457
      %v1422 = vunpack.c.l.b16 %v458
      %v1423 = vunpack.c.h.b16 %v458
      %v1424 = vunpack.c.l.b16 %v459
      %v1425 = vunpack.c.h.b16 %v459
      %v1426 = vunpack.c.l.b16 %v460
      %v1427 = vunpack.c.h.b16 %v460
      %v1428 = vunpack.c.l.b16 %v461
      %v1429 = vunpack.c.h.b16 %v461
      %v1430 = vunpack.c.l.b16 %v462
      %v1431 = vunpack.c.h.b16 %v462
      %v1432 = vunpack.c.l.b16 %v463
      %v1433 = vunpack.c.h.b16 %v463
      %v1434 = vunpack.c.l.b16 %v464
      %v1435 = vunpack.c.h.b16 %v464
      %v1436 = vunpack.c.l.b16 %v465
      %v1437 = vunpack.c.h.b16 %v465
      %v1438 = vunpack.c.l.b16 %v466
      %v1439 = vunpack.c.h.b16 %v466
      %v1440 = vunpack.c.l.b16 %v467
      %v1441 = vunpack.c.h.b16 %v467
      %v1442 = vunpack.c.l.b16 %v468
      %v1443 = vunpack.c.h.b16 %v468
      %v1444 = vunpack.c.l.b16 %v469
      %v1445 = vunpack.c.h.b16 %v469
      %v1446 = vunpack.c.l.b16 %v470
      %v1447 = vunpack.c.h.b16 %v470
      %v1448 = vunpack.c.l.b16 %v471
      %v1449 = vunpack.c.h.b16 %v471
      %v1450 = vunpack.c.l.b16 %v472
      %v1451 = vunpack.c.h.b16 %v472
      %v1452 = vunpack.c.l.b16 %v473
      %v1453 = vunpack.c.h.b16 %v473
      %v1454 = vunpack.c.l.b16 %v474
      %v1455 = vunpack.c.h.b16 %v474
      %v1456 = vunpack.c.l.b16 %v475
      %v1457 = vunpack.c.h.b16 %v475
      %v1458 = vunpack.c.l.b16 %v476
      %v1459 = vunpack.c.h.b16 %v476
      %v1460 = vunpack.c.l.b16 %v477
      %v1461 = vunpack.c.h.b16 %v477
      %v1462 = vunpack.c.l.b16 %v478
      %v1463 = vunpack.c.h.b16 %v478
      %v1464 = vunpack.c.l.b16 %v479
      %v1465 = vunpack.c.h.b16 %v479
      %v1466 = vunpack.c.l.b16 %v480
      %v1467 = vunpack.c.h.b16 %v480
      %v1468 = vunpack.c.l.b16 %v481
      %v1469 = vunpack.c.h.b16 %v481
      %v1470 = vunpack.c.l.b16 %v482
      %v1471 = vunpack.c.h.b16 %v482
      %v1472 = vunpack.c.l.b16 %v483
      %v1473 = vunpack.c.h.b16 %v483
      %v1474 = vunpack.c.l.b16 %v484
      %v1475 = vunpack.c.h.b16 %v484
      %v1476 = vunpack.c.l.b16 %v485
      %v1477 = vunpack.c.h.b16 %v485
      %v1478 = vunpack.c.l.b16 %v486
      %v1479 = vunpack.c.h.b16 %v486
      %v1480 = vunpack.c.l.b16 %v487
      %v1481 = vunpack.c.h.b16 %v487
      %v1482 = vunpack.c.l.b16 %v488
      %v1483 = vunpack.c.h.b16 %v488
      %v1484 = vunpack.c.l.b16 %v489
      %v1485 = vunpack.c.h.b16 %v489
      %v1486 = vunpack.c.l.b16 %v490
      %v1487 = vunpack.c.h.b16 %v490
      %v1488 = vunpack.c.l.b16 %v491
      %v1489 = vunpack.c.h.b16 %v491
      %v1490 = vunpack.c.l.b16 %v492
      %v1491 = vunpack.c.h.b16 %v492
      %v1492 = vunpack.c.l.b16 %v493
      %v1493 = vunpack.c.h.b16 %v493
      %v1494 = vunpack.c.l.b16 %v494
      %v1495 = vunpack.c.h.b16 %v494
      %v1496 = vunpack.c.l.b16 %v495
      %v1497 = vunpack.c.h.b16 %v495
      %v1498 = vunpack.c.l.b16 %v496
      %v1499 = vunpack.c.h.b16 %v496
      %v1500 = vunpack.c.l.b16 %v497
      %v1501 = vunpack.c.h.b16 %v497
      %v1502 = vunpack.c.l.b16 %v498
      %v1503 = vunpack.c.h.b16 %v498
      %v1504 = vunpack.c.l.b16 %v499
      %v1505 = vunpack.c.h.b16 %v499
      %v1506 = vunpack.c.l.b16 %v500
      %v1507 = vunpack.c.h.b16 %v500
      %v1508 = vunpack.c.l.b16 %v501
      %v1509 = vunpack.c.h.b16 %v501
      %v1510 = vunpack.c.l.b16 %v502
      %v1511 = vunpack.c.h.b16 %v502
      %v1512 = vunpack.c.l.b16 %v503
      %v1513 = vunpack.c.h.b16 %v503
      %v1514 = vunpack.c.l.b16 %v504
      %v1515 = vunpack.c.h.b16 %v504
      %v1516 = vunpack.c.l.b16 %v505
      %v1517 = vunpack.c.h.b16 %v505
      %v1518 = vunpack.c.l.b16 %v506
      %v1519 = vunpack.c.h.b16 %v506
      %v1520 = vunpack.c.l.b16 %v507
      %v1521 = vunpack.c.h.b16 %v507
      %v1522 = vunpack.c.l.b16 %v508
      %v1523 = vunpack.c.h.b16 %v508
      %v1524 = vunpack.c.l.b16 %v509
      %v1525 = vunpack.c.h.b16 %v509
      %v1526 = vunpack.c.l.b16 %v510
      %v1527 = vunpack.c.h.b16 %v510
      %v1528 = vunpack.c.l.b16 %v511
      %v1529 = vunpack.c.h.b16 %v511
      %v1530 = vunpack.c.l.b16 %v512
      %v1531 = vunpack.c.h.b16 %v512
      %v1532 = vunpack.c.l.b16 %v513
      %v1533 = vunpack.c.h.b16 %v513
      %v1534 = vunpack.c.l.b16 %v514
      %v1535 = vunpack.c.h.b16 %v514
      %v1536 = vunpack.c.l.b16 %v515
      %v1537 = vunpack.c.h.b16 %v515
      %v1538 = vunpack.c.l.b16 %v516
      %v1539 = vunpack.c.h.b16 %v516
      %v1540 = vunpack.c.l.b16 %v517
      %v1541 = vunpack.c.h.b16 %v517
      %v1542 = vunpack.c.l.b16 %v518
      %v1543 = vunpack.c.h.b16 %v518
      %v1544 = vunpack.c.l.b16 %v519
      %v1545 = vunpack.c.h.b16 %v519
      %v1546 = vunpack.c.l.b16 %v520
      %v1547 = vunpack.c.h.b16 %v520
      %v1548 = vunpack.c.l.b16 %v521
      %v1549 = vunpack.c.h.b16 %v521
      %v1550 = vunpack.c.l.b16 %v522
      %v1551 = vunpack.c.h.b16 %v522
      %v1552 = vunpack.c.l.b16 %v523
      %v1553 = vunpack.c.h.b16 %v523
      %v1554 = vunpack.c.l.b16 %v524
      %v1555 = vunpack.c.h.b16 %v524
      %v1556 = vunpack.c.l.b16 %v525
      %v1557 = vunpack.c.h.b16 %v525
      %v1558 = vunpack.c.l.b16 %v526
      %v1559 = vunpack.c.h.b16 %v526
      %v1560 = vunpack.c.l.b16 %v527
      %v1561 = vunpack.c.h.b16 %v527
      %v1562 = vunpack.c.l.b16 %v528
      %v1563 = vunpack.c.h.b16 %v528
      %v1564 = vunpack.c.l.b16 %v529
      %v1565 = vunpack.c.h.b16 %v529
      %v1566 = vunpack.c.l.b16 %v530
      %v1567 = vunpack.c.h.b16 %v530
      %v1568 = vunpack.c.l.b16 %v531
      %v1569 = vunpack.c.h.b16 %v531
      %v1570 = vunpack.c.l.b16 %v532
      %v1571 = vunpack.c.h.b16 %v532
      %v1572 = vunpack.c.l.b16 %v533
      %v1573 = vunpack.c.h.b16 %v533
      %v1574 = vunpack.c.l.b16 %v534
      %v1575 = vunpack.c.h.b16 %v534
      %v1576 = vunpack.c.l.b16 %v535
      %v1577 = vunpack.c.h.b16 %v535
      %v1578 = vunpack.c.l.b16 %v536
      %v1579 = vunpack.c.h.b16 %v536
      %v1580 = vunpack.c.l.b16 %v537
      %v1581 = vunpack.c.h.b16 %v537
      %v1582 = vunpack.c.l.b16 %v538
      %v1583 = vunpack.c.h.b16 %v538
      %v1584 = vunpack.c.l.b16 %v539
      %v1585 = vunpack.c.h.b16 %v539
      %v1586 = vunpack.c.l.b16 %v540
      %v1587 = vunpack.c.h.b16 %v540
      %v1588 = vunpack.c.l.b16 %v541
      %v1589 = vunpack.c.h.b16 %v541
      %v1590 = vunpack.c.l.b16 %v542
      %v1591 = vunpack.c.h.b16 %v542
      %v1592 = vunpack.c.l.b16 %v543
      %v1593 = vunpack.c.h.b16 %v543
      %v1594 = vunpack.c.l.b16 %v544
      %v1595 = vunpack.c.h.b16 %v544
      %v1596 = vunpack.c.l.b16 %v545
      %v1597 = vunpack.c.h.b16 %v545
      %v1598 = vunpack.c.l.b16 %v546
      %v1599 = vunpack.c.h.b16 %v546
      %v1600 = vunpack.c.l.b16 %v547
      %v1601 = vunpack.c.h.b16 %v547
      %v1602 = vunpack.c.l.b16 %v548
      %v1603 = vunpack.c.h.b16 %v548
      %v1604 = vunpack.c.l.b16 %v549
      %v1605 = vunpack.c.h.b16 %v549
      %v1606 = vunpack.c.l.b16 %v550
      %v1607 = vunpack.c.h.b16 %v550
      %v1608 = vunpack.c.l.b16 %v551
      %v1609 = vunpack.c.h.b16 %v551
      %v1610 = vunpack.c.l.b16 %v552
      %v1611 = vunpack.c.h.b16 %v552
      %v1612 = vunpack.c.l.b16 %v553
      %v1613 = vunpack.c.h.b16 %v553
      %v1614 = vunpack.c.l.b16 %v554
      %v1615 = vunpack.c.h.b16 %v554
      %v1616 = vunpack.c.l.b16 %v555
      %v1617 = vunpack.c.h.b16 %v555
      %v1618 = vunpack.c.l.b16 %v556
      %v1619 = vunpack.c.h.b16 %v556
      %v1620 = vunpack.c.l.b16 %v557
      %v1621 = vunpack.c.h.b16 %v557
      %v1622 = vunpack.c.l.b16 %v558
      %v1623 = vunpack.c.h.b16 %v558
      %v1624 = vunpack.c.l.b16 %v559
      %v1625 = vunpack.c.h.b16 %v559
      %v1626 = vunpack.c.l.b16 %v560
      %v1627 = vunpack.c.h.b16 %v560
      %v1628 = vunpack.c.l.b16 %v561
      %v1629 = vunpack.c.h.b16 %v561
      %v1630 = vunpack.c.l.b16 %v562
      %v1631 = vunpack.c.h.b16 %v562
      %v1632 = vunpack.c.l.b16 %v563
      %v1633 = vunpack.c.h.b16 %v563
      %v1634 = vunpack.c.l.b16 %v564
      %v1635 = vunpack.c.h.b16 %v564
      %v1636 = vunpack.c.l.b16 %v565
      %v1637 = vunpack.c.h.b16 %v565
      %v1638 = vunpack.c.l.b16 %v566
      %v1639 = vunpack.c.h.b16 %v566
      %v1640 = vunpack.c.l.b16 %v567
      %v1641 = vunpack.c.h.b16 %v567
      %v1642 = vunpack.c.l.b16 %v568
      %v1643 = vunpack.c.h.b16 %v568
      %v1644 = vunpack.c.l.b16 %v569
      %v1645 = vunpack.c.h.b16 %v569
      %v1646 = vunpack.c.l.b16 %v570
      %v1647 = vunpack.c.h.b16 %v570
      %v1648 = vunpack.c.l.b16 %v571
      %v1649 = vunpack.c.h.b16 %v571
      %v1650 = vunpack.c.l.b16 %v572
      %v1651 = vunpack.c.h.b16 %v572
      %v1652 = vunpack.c.l.b16 %v573
      %v1653 = vunpack.c.h.b16 %v573
      %v1654 = vunpack.c.l.b16 %v574
      %v1655 = vunpack.c.h.b16 %v574
      %v1656 = vunpack.c.l.b16 %v575
      %v1657 = vunpack.c.h.b16 %v575
      %v1658 = vunpack.c.l.b16 %v576
      %v1659 = vunpack.c.h.b16 %v576
      %v1660 = vunpack.c.l.b16 %v577
      %v1661 = vunpack.c.h.b16 %v577
      %v1662 = vunpack.c.l.b16 %v578
      %v1663 = vunpack.c.h.b16 %v578
      %v1664 = vunpack.c.l.b16 %v579
      %v1665 = vunpack.c.h.b16 %v579
      %v1666 = vunpack.c.l.b16 %v580
      %v1667 = vunpack.c.h.b16 %v580
      %v1668 = vunpack.c.l.b16 %v581
      %v1669 = vunpack.c.h.b16 %v581
      %v1670 = vunpack.c.l.b16 %v582
      %v1671 = vunpack.c.h.b16 %v582
      %v1672 = vunpack.c.l.b16 %v583
      %v1673 = vunpack.c.h.b16 %v583
      %v1674 = vunpack.c.l.b16 %v584
      %v1675 = vunpack.c.h.b16 %v584
      %v1676 = vunpack.c.l.b16 %v585
      %v1677 = vunpack.c.h.b16 %v585
      %v1678 = vunpack.c.l.b16 %v586
      %v1679 = vunpack.c.h.b16 %v586
      %v1680 = vunpack.c.l.b16 %v587
      %v1681 = vunpack.c.h.b16 %v587
      %v1682 = vunpack.c.l.b16 %v588
      %v1683 = vunpack.c.h.b16 %v588
      %v1684 = vunpack.c.l.b16 %v589
      %v1685 = vunpack.c.h.b16 %v589
      %v1686 = vunpack.c.l.b16 %v590
      %v1687 = vunpack.c.h.b16 %v590
      %v1688 = vunpack.c.l.b16 %v591
      %v1689 = vunpack.c.h.b16 %v591
      %v1690 = vunpack.c.l.b16 %v592
      %v1691 = vunpack.c.h.b16 %v592
      %v1692 = vunpack.c.l.b16 %v593
      %v1693 = vunpack.c.h.b16 %v593
      %v1694 = vunpack.c.l.b16 %v594
      %v1695 = vunpack.c.h.b16 %v594
      %v1696 = vunpack.c.l.b16 %v595
      %v1697 = vunpack.c.h.b16 %v595
      %v1698 = vunpack.c.l.b16 %v596
      %v1699 = vunpack.c.h.b16 %v596
      %v1700 = vunpack.c.l.b16 %v597
      %v1701 = vunpack.c.h.b16 %v597
      %v1702 = vunpack.c.l.b16 %v598
      %v1703 = vunpack.c.h.b16 %v598
      %v1704 = vunpack.c.l.b16 %v599
      %v1705 = vunpack.c.h.b16 %v599
      %v1706 = vunpack.c.l.b16 %v600
      %v1707 = vunpack.c.h.b16 %v600
      %v1708 = vunpack.c.l.b16 %v601
      %v1709 = vunpack.c.h.b16 %v601
      %v1710 = vunpack.c.l.b16 %v602
      %v1711 = vunpack.c.h.b16 %v602
      %v1712 = vunpack.c.l.b16 %v603
      %v1713 = vunpack.c.h.b16 %v603
      %v1714 = vunpack.c.l.b16 %v604
      %v1715 = vunpack.c.h.b16 %v604
      %v1716 = vunpack.c.l.b16 %v605
      %v1717 = vunpack.c.h.b16 %v605
      %v1718 = vunpack.c.l.b16 %v606
      %v1719 = vunpack.c.h.b16 %v606
      %v1720 = vunpack.c.l.b16 %v607
      %v1721 = vunpack.c.h.b16 %v607
      %v1722 = vunpack.c.l.b16 %v608
      %v1723 = vunpack.c.h.b16 %v608
      %v1724 = vunpack.c.l.b16 %v609
      %v1725 = vunpack.c.h.b16 %v609
      %v1726 = vunpack.c.l.b16 %v610
      %v1727 = vunpack.c.h.b16 %v610
      %v1728 = vunpack.c.l.b16 %v611
      %v1729 = vunpack.c.h.b16 %v611
      %v1730 = vunpack.c.l.b16 %v612
      %v1731 = vunpack.c.h.b16 %v612
      %v1732 = vunpack.c.l.b16 %v613
      %v1733 = vunpack.c.h.b16 %v613
      %v1734 = vunpack.c.l.b16 %v614
      %v1735 = vunpack.c.h.b16 %v614
      %v1736 = vunpack.c.l.b16 %v615
      %v1737 = vunpack.c.h.b16 %v615
      %v1738 = vunpack.c.l.b16 %v616
      %v1739 = vunpack.c.h.b16 %v616
      %v1740 = vunpack.c.l.b16 %v617
      %v1741 = vunpack.c.h.b16 %v617
      %v1742 = vunpack.c.l.b16 %v618
      %v1743 = vunpack.c.h.b16 %v618
      %v1744 = vunpack.c.l.b16 %v619
      %v1745 = vunpack.c.h.b16 %v619
      %v1746 = vunpack.c.l.b16 %v620
      %v1747 = vunpack.c.h.b16 %v620
      %v1748 = vunpack.c.l.b16 %v621
      %v1749 = vunpack.c.h.b16 %v621
      %v1750 = vunpack.c.l.b16 %v622
      %v1751 = vunpack.c.h.b16 %v622
      %v1752 = vunpack.c.l.b16 %v623
      %v1753 = vunpack.c.h.b16 %v623
      %v1754 = vunpack.c.l.b16 %v624
      %v1755 = vunpack.c.h.b16 %v624
      %v1756 = vunpack.c.l.b16 %v625
      %v1757 = vunpack.c.h.b16 %v625
      %v1758 = vunpack.c.l.b16 %v626
      %v1759 = vunpack.c.h.b16 %v626
      %v1760 = vunpack.c.l.b16 %v627
      %v1761 = vunpack.c.h.b16 %v627
      %v1762 = vunpack.c.l.b16 %v628
      %v1763 = vunpack.c.h.b16 %v628
      %v1764 = vunpack.c.l.b16 %v629
      %v1765 = vunpack.c.h.b16 %v629
      %v1766 = vunpack.c.l.b16 %v630
      %v1767 = vunpack.c.h.b16 %v630
      %v1768 = vunpack.c.l.b16 %v631
      %v1769 = vunpack.c.h.b16 %v631
      %v1770 = vunpack.c.l.b16 %v632
      %v1771 = vunpack.c.h.b16 %v632
      %v1772 = vunpack.c.l.b16 %v633
      %v1773 = vunpack.c.h.b16 %v633
      %v1774 = vunpack.c.l.b16 %v634
      %v1775 = vunpack.c.h.b16 %v634
      %v1776 = vunpack.c.l.b16 %v635
      %v1777 = vunpack.c.h.b16 %v635
      %v1778 = vunpack.c.l.b16 %v636
      %v1779 = vunpack.c.h.b16 %v636
      %v1780 = vunpack.c.l.b16 %v637
      %v1781 = vunpack.c.h.b16 %v637
      %v1782 = vunpack.c.l.b16 %v638
      %v1783 = vunpack.c.h.b16 %v638
      %v1784 = vunpack.c.l.b16 %v639
      %v1785 = vunpack.c.h.b16 %v639
      %v1786 = vunpack.c.l.b16 %v640
      %v1787 = vunpack.c.h.b16 %v640
      %v1788 = vunpack.c.l.b16 %v641
      %v1789 = vunpack.c.h.b16 %v641
      %v1790 = vunpack.c.l.b16 %v642
      %v1791 = vunpack.c.h.b16 %v642
      %v1792 = vunpack.c.l.b16 %v643
      %v1793 = vunpack.c.h.b16 %v643
      %v1794 = vunpack.c.l.b16 %v644
      %v1795 = vunpack.c.h.b16 %v644
      %v1796 = vunpack.c.l.b16 %v645
      %v1797 = vunpack.c.h.b16 %v645
      %v1798 = vunpack.c.l.b16 %v646
      %v1799 = vunpack.c.h.b16 %v646
      %v1800 = vunpack.c.l.b16 %v647
      %v1801 = vunpack.c.h.b16 %v647
      %v1802 = vunpack.c.l.b16 %v648
      %v1803 = vunpack.c.h.b16 %v648
      %v1804 = vunpack.c.l.b16 %v649
      %v1805 = vunpack.c.h.b16 %v649
      %v1806 = vunpack.c.l.b16 %v650
      %v1807 = vunpack.c.h.b16 %v650
      %v1808 = vunpack.c.l.b16 %v651
      %v1809 = vunpack.c.h.b16 %v651
      %v1810 = vunpack.c.l.b16 %v652
      %v1811 = vunpack.c.h.b16 %v652
      %v1812 = vunpack.c.l.b16 %v653
      %v1813 = vunpack.c.h.b16 %v653
      %v1814 = vunpack.c.l.b16 %v654
      %v1815 = vunpack.c.h.b16 %v654
      %v1816 = vunpack.c.l.b16 %v655
      %v1817 = vunpack.c.h.b16 %v655
      %v1818 = vunpack.c.l.b16 %v656
      %v1819 = vunpack.c.h.b16 %v656
      %v1820 = vunpack.c.l.b16 %v657
      %v1821 = vunpack.c.h.b16 %v657
      %v1822 = vunpack.c.l.b16 %v658
      %v1823 = vunpack.c.h.b16 %v658
      %v1824 = vunpack.c.l.b16 %v659
      %v1825 = vunpack.c.h.b16 %v659
      %v1826 = vunpack.c.l.b16 %v660
      %v1827 = vunpack.c.h.b16 %v660
      %v1828 = vunpack.c.l.b16 %v661
      %v1829 = vunpack.c.h.b16 %v661
      %v1830 = vunpack.c.l.b16 %v662
      %v1831 = vunpack.c.h.b16 %v662
      %v1832 = vunpack.c.l.b16 %v663
      %v1833 = vunpack.c.h.b16 %v663
      %v1834 = vunpack.c.l.b16 %v664
      %v1835 = vunpack.c.h.b16 %v664
      %v1836 = vunpack.c.l.b16 %v665
      %v1837 = vunpack.c.h.b16 %v665
      %v1838 = vunpack.c.l.b16 %v666
      %v1839 = vunpack.c.h.b16 %v666
      %v1840 = vunpack.c.l.b16 %v667
      %v1841 = vunpack.c.h.b16 %v667
      %v1842 = vunpack.c.l.b16 %v668
      %v1843 = vunpack.c.h.b16 %v668
      %v1844 = vunpack.c.l.b16 %v669
      %v1845 = vunpack.c.h.b16 %v669
      %v1846 = vunpack.c.l.b16 %v670
      %v1847 = vunpack.c.h.b16 %v670
      %v1848 = vunpack.c.l.b16 %v671
      %v1849 = vunpack.c.h.b16 %v671
      %v1850 = vunpack.c.l.b16 %v672
      %v1851 = vunpack.c.h.b16 %v672
      %v1852 = vunpack.c.l.b16 %v673
      %v1853 = vunpack.c.h.b16 %v673
      %v1854 = vpack.c.b16 %v1092, %v1086
      %v1855 = vpack.c.b16 %v1093, %v1087
      %v1856 = vpack.c.b16 %v1094, %v1088
      %v1857 = vpack.c.b16 %v1095, %v1089
      %v1858 = vpack.c.b16 %v1096, %v1090
      %v1859 = vpack.c.b16 %v1097, %v1091
      %v1860 = vpack.c.b16 %v1104, %v1098
      %v1861 = vpack.c.b16 %v1105, %v1099
      %v1862 = vpack.c.b16 %v1106, %v1100
      %v1863 = vpack.c.b16 %v1107, %v1101
      %v1864 = vpack.c.b16 %v1108, %v1102
      %v1865 = vpack.c.b16 %v1109, %v1103
      %v1866 = vpack.c.b16 %v1116, %v1110
      %v1867 = vpack.c.b16 %v1117, %v1111
      %v1868 = vpack.c.b16 %v1118, %v1112
      %v1869 = vpack.c.b16 %v1119, %v1113
      %v1870 = vpack.c.b16 %v1120, %v1114
      %v1871 = vpack.c.b16 %v1121, %v1115
      %v1872 = vpack.c.b16 %v1128, %v1122
      %v1873 = vpack.c.b16 %v1129, %v1123
      %v1874 = vpack.c.b16 %v1130, %v1124
      %v1875 = vpack.c.b16 %v1131, %v1125
      %v1876 = vpack.c.b16 %v1132, %v1126
      %v1877 = vpack.c.b16 %v1133, %v1127
      %v1878 = vpack.c.b16 %v1140, %v1134
      %v1879 = vpack.c.b16 %v1141, %v1135
      %v1880 = vpack.c.b16 %v1142, %v1136
      %v1881 = vpack.c.b16 %v1143, %v1137
      %v1882 = vpack.c.b16 %v1144, %v1138
      %v1883 = vpack.c.b16 %v1145, %v1139
      %v1884 = vpack.c.b16 %v1152, %v1146
      %v1885 = vpack.c.b16 %v1153, %v1147
      %v1886 = vpack.c.b16 %v1154, %v1148
      %v1887 = vpack.c.b16 %v1155, %v1149
      %v1888 = vpack.c.b16 %v1156, %v1150
      %v1889 = vpack.c.b16 %v1157, %v1151
      %v1890 = vpack.c.b16 %v1164, %v1158
      %v1891 = vpack.c.b16 %v1165, %v1159
      %v1892 = vpack.c.b16 %v1166, %v1160
      %v1893 = vpack.c.b16 %v1167, %v1161
      %v1894 = vpack.c.b16 %v1168, %v1162
      %v1895 = vpack.c.b16 %v1169, %v1163
      %v1896 = vpack.c.b16 %v1176, %v1170
      %v1897 = vpack.c.b16 %v1177, %v1171
      %v1898 = vpack.c.b16 %v1178, %v1172
      %v1899 = vpack.c.b16 %v1179, %v1173
      %v1900 = vpack.c.b16 %v1180, %v1174
      %v1901 = vpack.c.b16 %v1181, %v1175
      %v1902 = vpack.c.b16 %v1188, %v1182
      %v1903 = vpack.c.b16 %v1189, %v1183
      %v1904 = vpack.c.b16 %v1190, %v1184
      %v1905 = vpack.c.b16 %v1191, %v1185
      %v1906 = vpack.c.b16 %v1192, %v1186
      %v1907 = vpack.c.b16 %v1193, %v1187
      %v1908 = vpack.c.b16 %v1200, %v1194
      %v1909 = vpack.c.b16 %v1201, %v1195
      %v1910 = vpack.c.b16 %v1202, %v1196
      %v1911 = vpack.c.b16 %v1203, %v1197
      %v1912 = vpack.c.b16 %v1204, %v1198
      %v1913 = vpack.c.b16 %v1205, %v1199
      %v1914 = vpack.c.b16 %v1212, %v1206
      %v1915 = vpack.c.b16 %v1213, %v1207
      %v1916 = vpack.c.b16 %v1214, %v1208
      %v1917 = vpack.c.b16 %v1215, %v1209
      %v1918 = vpack.c.b16 %v1216, %v1210
      %v1919 = vpack.c.b16 %v1217, %v1211
      %v1920 = vpack.c.b16 %v1224, %v1218
      %v1921 = vpack.c.b16 %v1225, %v1219
      %v1922 = vpack.c.b16 %v1226, %v1220
      %v1923 = vpack.c.b16 %v1227, %v1221
      %v1924 = vpack.c.b16 %v1228, %v1222
      %v1925 = vpack.c.b16 %v1229, %v1223
      %v1926 = vpack.c.b16 %v1236, %v1230
      %v1927 = vpack.c.b16 %v1237, %v1231
      %v1928 = vpack.c.b16 %v1238, %v1232
      %v1929 = vpack.c.b16 %v1239, %v1233
      %v1930 = vpack.c.b16 %v1240, %v1234
      %v1931 = vpack.c.b16 %v1241, %v1235
      %v1932 = vpack.c.b16 %v1248, %v1242
      %v1933 = vpack.c.b16 %v1249, %v1243
      %v1934 = vpack.c.b16 %v1250, %v1244
      %v1935 = vpack.c.b16 %v1251, %v1245
      %v1936 = vpack.c.b16 %v1252, %v1246
      %v1937 = vpack.c.b16 %v1253, %v1247
      %v1938 = vpack.c.b16 %v1260, %v1254
      %v1939 = vpack.c.b16 %v1261, %v1255
      %v1940 = vpack.c.b16 %v1262, %v1256
      %v1941 = vpack.c.b16 %v1263, %v1257
      %v1942 = vpack.c.b16 %v1264, %v1258
      %v1943 = vpack.c.b16 %v1265, %v1259
      %v1944 = vpack.c.b16 %v1272, %v1266
      %v1945 = vpack.c.b16 %v1273, %v1267
      %v1946 = vpack.c.b16 %v1274, %v1268
      %v1947 = vpack.c.b16 %v1275, %v1269
      %v1948 = vpack.c.b16 %v1276, %v1270
      %v1949 = vpack.c.b16 %v1277, %v1271
      %v1950 = vpack.c.b16 %v1284, %v1278
      %v1951 = vpack.c.b16 %v1285, %v1279
      %v1952 = vpack.c.b16 %v1286, %v1280
      %v1953 = vpack.c.b16 %v1287, %v1281
      %v1954 = vpack.c.b16 %v1288, %v1282
      %v1955 = vpack.c.b16 %v1289, %v1283
      %v1956 = vpack.c.b16 %v1296, %v1290
      %v1957 = vpack.c.b16 %v1297, %v1291
      %v1958 = vpack.c.b16 %v1298, %v1292
      %v1959 = vpack.c.b16 %v1299, %v1293
      %v1960 = vpack.c.b16 %v1300, %v1294
      %v1961 = vpack.c.b16 %v1301, %v1295
      %v1962 = vpack.c.b16 %v1308, %v1302
      %v1963 = vpack.c.b16 %v1309, %v1303
      %v1964 = vpack.c.b16 %v1310, %v1304
      %v1965 = vpack.c.b16 %v1311, %v1305
      %v1966 = vpack.c.b16 %v1312, %v1306
      %v1967 = vpack.c.b16 %v1313, %v1307
      %v1968 = vpack.c.b16 %v1320, %v1314
      %v1969 = vpack.c.b16 %v1321, %v1315
      %v1970 = vpack.c.b16 %v1322, %v1316
      %v1971 = vpack.c.b16 %v1323, %v1317
      %v1972 = vpack.c.b16 %v1324, %v1318
      %v1973 = vpack.c.b16 %v1325, %v1319
      %v1974 = vpack.c.b16 %v1332, %v1326
      %v1975 = vpack.c.b16 %v1333, %v1327
      %v1976 = vpack.c.b16 %v1334, %v1328
      %v1977 = vpack.c.b16 %v1335, %v1329
      %v1978 = vpack.c.b16 %v1336, %v1330
      %v1979 = vpack.c.b16 %v1337, %v1331
      %v1980 = vpack.c.b16 %v1344, %v1338
      %v1981 = vpack.c.b16 %v1345, %v1339
      %v1982 = vpack.c.b16 %v1346, %v1340
      %v1983 = vpack.c.b16 %v1347, %v1341
      %v1984 = vpack.c.b16 %v1348, %v1342
      %v1985 = vpack.c.b16 %v1349, %v1343
      %v1986 = vpack.c.b16 %v1356, %v1350
      %v1987 = vpack.c.b16 %v1357, %v1351
      %v1988 = vpack.c.b16 %v1358, %v1352
      %v1989 = vpack.c.b16 %v1359, %v1353
      %v1990 = vpack.c.b16 %v1360, %v1354
      %v1991 = vpack.c.b16 %v1361, %v1355
      %v1992 = vpack.c.b16 %v1368, %v1362
      %v1993 = vpack.c.b16 %v1369, %v1363
      %v1994 = vpack.c.b16 %v1370, %v1364
      %v1995 = vpack.c.b16 %v1371, %v1365
      %v1996 = vpack.c.b16 %v1372, %v1366
      %v1997 = vpack.c.b16 %v1373, %v1367
      %v1998 = vpack.c.b16 %v1380, %v1374
      %v1999 = vpack.c.b16 %v1381, %v1375
      %v2000 = vpack.c.b16 %v1382, %v1376
      %v2001 = vpack.c.b16 %v1383, %v1377
      %v2002 = vpack.c.b16 %v1384, %v1378
      %v2003 = vpack.c.b16 %v1385, %v1379
      %v2004 = vpack.c.b16 %v1392, %v1386
      %v2005 = vpack.c.b16 %v1393, %v1387
      %v2006 = vpack.c.b16 %v1394, %v1388
      %v2007 = vpack.c.b16 %v1395, %v1389
      %v2008 = vpack.c.b16 %v1396, %v1390
      %v2009 = vpack.c.b16 %v1397, %v1391
      %v2010 = vpack.c.b16 %v1404, %v1398
      %v2011 = vpack.c.b16 %v1405, %v1399
      %v2012 = vpack.c.b16 %v1406, %v1400
      %v2013 = vpack.c.b16 %v1407, %v1401
      %v2014 = vpack.c.b16 %v1408, %v1402
      %v2015 = vpack.c.b16 %v1409, %v1403
      %v2016 = vpack.c.b16 %v1416, %v1410
      %v2017 = vpack.c.b16 %v1417, %v1411
      %v2018 = vpack.c.b16 %v1418, %v1412
      %v2019 = vpack.c.b16 %v1419, %v1413
      %v2020 = vpack.c.b16 %v1420, %v1414
      %v2021 = vpack.c.b16 %v1421, %v1415
      %v2022 = vpack.c.b16 %v1428, %v1422
      %v2023 = vpack.c.b16 %v1429, %v1423
      %v2024 = vpack.c.b16 %v1430, %v1424
      %v2025 = vpack.c.b16 %v1431, %v1425
      %v2026 = vpack.c.b16 %v1432, %v1426
      %v2027 = vpack.c.b16 %v1433, %v1427
      %v2028 = vpack.c.b16 %v1440, %v1434
      %v2029 = vpack.c.b16 %v1441, %v1435
      %v2030 = vpack.c.b16 %v1442, %v1436
      %v2031 = vpack.c.b16 %v1443, %v1437
      %v2032 = vpack.c.b16 %v1444, %v1438
      %v2033 = vpack.c.b16 %v1445, %v1439
      %v2034 = vpack.c.b16 %v1452, %v1446
      %v2035 = vpack.c.b16 %v1453, %v1447
      %v2036 = vpack.c.b16 %v1454, %v1448
      %v2037 = vpack.c.b16 %v1455, %v1449
      %v2038 = vpack.c.b16 %v1456, %v1450
      %v2039 = vpack.c.b16 %v1457, %v1451
      %v2040 = vpack.c.b16 %v1464, %v1458
      %v2041 = vpack.c.b16 %v1465, %v1459
      %v2042 = vpack.c.b16 %v1466, %v1460
      %v2043 = vpack.c.b16 %v1467, %v1461
      %v2044 = vpack.c.b16 %v1468, %v1462
      %v2045 = vpack.c.b16 %v1469, %v1463
      %v2046 = vpack.c.b16 %v1476, %v1470
      %v2047 = vpack.c.b16 %v1477, %v1471
      %v2048 = vpack.c.b16 %v1478, %v1472
      %v2049 = vpack.c.b16 %v1479, %v1473
      %v2050 = vpack.c.b16 %v1480, %v1474
      %v2051 = vpack.c.b16 %v1481, %v1475
      %v2052 = vpack.c.b16 %v1488, %v1482
      %v2053 = vpack.c.b16 %v1489, %v1483
      %v2054 = vpack.c.b16 %v1490, %v1484
      %v2055 = vpack.c.b16 %v1491, %v1485
      %v2056 = vpack.c.b16 %v1492, %v1486
      %v2057 = vpack.c.b16 %v1493, %v1487
      %v2058 = vpack.c.b16 %v1500, %v1494
      %v2059 = vpack.c.b16 %v1501, %v1495
      %v2060 = vpack.c.b16 %v1502, %v1496
      %v2061 = vpack.c.b16 %v1503, %v1497
      %v2062 = vpack.c.b16 %v1504, %v1498
      %v2063 = vpack.c.b16 %v1505, %v1499
      %v2064 = vpack.c.b16 %v1512, %v1506
      %v2065 = vpack.c.b16 %v1513, %v1507
      %v2066 = vpack.c.b16 %v1514, %v1508
      %v2067 = vpack.c.b16 %v1515, %v1509
      %v2068 = vpack.c.b16 %v1516, %v1510
      %v2069 = vpack.c.b16 %v1517, %v1511
      %v2070 = vpack.c.b16 %v1524, %v1518
      %v2071 = vpack.c.b16 %v1525, %v1519
      %v2072 = vpack.c.b16 %v1526, %v1520
      %v2073 = vpack.c.b16 %v1527, %v1521
      %v2074 = vpack.c.b16 %v1528, %v1522
      %v2075 = vpack.c.b16 %v1529, %v1523
      %v2076 = vpack.c.b16 %v1536, %v1530
      %v2077 = vpack.c.b16 %v1537, %v1531
      %v2078 = vpack.c.b16 %v1538, %v1532
      %v2079 = vpack.c.b16 %v1539, %v1533
      %v2080 = vpack.c.b16 %v1540, %v1534
      %v2081 = vpack.c.b16 %v1541, %v1535
      %v2082 = vpack.c.b16 %v1548, %v1542
      %v2083 = vpack.c.b16 %v1549, %v1543
      %v2084 = vpack.c.b16 %v1550, %v1544
      %v2085 = vpack.c.b16 %v1551, %v1545
      %v2086 = vpack.c.b16 %v1552, %v1546
      %v2087 = vpack.c.b16 %v1553, %v1547
      %v2088 = vpack.c.b16 %v1560, %v1554
      %v2089 = vpack.c.b16 %v1561, %v1555
      %v2090 = vpack.c.b16 %v1562, %v1556
      %v2091 = vpack.c.b16 %v1563, %v1557
      %v2092 = vpack.c.b16 %v1564, %v1558
      %v2093 = vpack.c.b16 %v1565, %v1559
      %v2094 = vpack.c.b16 %v1572, %v1566
      %v2095 = vpack.c.b16 %v1573, %v1567
      %v2096 = vpack.c.b16 %v1574, %v1568
      %v2097 = vpack.c.b16 %v1575, %v1569
      %v2098 = vpack.c.b16 %v1576, %v1570
      %v2099 = vpack.c.b16 %v1577, %v1571
      %v2100 = vpack.c.b16 %v1584, %v1578
      %v2101 = vpack.c.b16 %v1585, %v1579
      %v2102 = vpack.c.b16 %v1586, %v1580
      %v2103 = vpack.c.b16 %v1587, %v1581
      %v2104 = vpack.c.b16 %v1588, %v1582
      %v2105 = vpack.c.b16 %v1589, %v1583
      %v2106 = vpack.c.b16 %v1596, %v1590
      %v2107 = vpack.c.b16 %v1597, %v1591
      %v2108 = vpack.c.b16 %v1598, %v1592
      %v2109 = vpack.c.b16 %v1599, %v1593
      %v2110 = vpack.c.b16 %v1600, %v1594
      %v2111 = vpack.c.b16 %v1601, %v1595
      %v2112 = vpack.c.b16 %v1608, %v1602
      %v2113 = vpack.c.b16 %v1609, %v1603
      %v2114 = vpack.c.b16 %v1610, %v1604
      %v2115 = vpack.c.b16 %v1611, %v1605
      %v2116 = vpack.c.b16 %v1612, %v1606
      %v2117 = vpack.c.b16 %v1613, %v1607
      %v2118 = vpack.c.b16 %v1620, %v1614
      %v2119 = vpack.c.b16 %v1621, %v1615
      %v2120 = vpack.c.b16 %v1622, %v1616
      %v2121 = vpack.c.b16 %v1623, %v1617
      %v2122 = vpack.c.b16 %v1624, %v1618
      %v2123 = vpack.c.b16 %v1625, %v1619
      %v2124 = vpack.c.b16 %v1632, %v1626
      %v2125 = vpack.c.b16 %v1633, %v1627
      %v2126 = vpack.c.b16 %v1634, %v1628
      %v2127 = vpack.c.b16 %v1635, %v1629
      %v2128 = vpack.c.b16 %v1636, %v1630
      %v2129 = vpack.c.b16 %v1637, %v1631
      %v2130 = vpack.c.b16 %v1644, %v1638
      %v2131 = vpack.c.b16 %v1645, %v1639
      %v2132 = vpack.c.b16 %v1646, %v1640
      %v2133 = vpack.c.b16 %v1647, %v1641
      %v2134 = vpack.c.b16 %v1648, %v1642
      %v2135 = vpack.c.b16 %v1649, %v1643
      %v2136 = vpack.c.b16 %v1656, %v1650
      %v2137 = vpack.c.b16 %v1657, %v1651
      %v2138 = vpack.c.b16 %v1658, %v1652
      %v2139 = vpack.c.b16 %v1659, %v1653
      %v2140 = vpack.c.b16 %v1660, %v1654
      %v2141 = vpack.c.b16 %v1661, %v1655
      %v2142 = vpack.c.b16 %v1668, %v1662
      %v2143 = vpack.c.b16 %v1669, %v1663
      %v2144 = vpack.c.b16 %v1670, %v1664
      %v2145 = vpack.c.b16 %v1671, %v1665
      %v2146 = vpack.c.b16 %v1672, %v1666
      %v2147 = vpack.c.b16 %v1673, %v1667
      %v2148 = vpack.c.b16 %v1680, %v1674
      %v2149 = vpack.c.b16 %v1681, %v1675
      %v2150 = vpack.c.b16 %v1682, %v1676
      %v2151 = vpack.c.b16 %v1683, %v1677
      %v2152 = vpack.c.b16 %v1684, %v1678
      %v2153 = vpack.c.b16 %v1685, %v1679
      %v2154 = vpack.c.b16 %v1692, %v1686
      %v2155 = vpack.c.b16 %v1693, %v1687
      %v2156 = vpack.c.b16 %v1694, %v1688
      %v2157 = vpack.c.b16 %v1695, %v1689
      %v2158 = vpack.c.b16 %v1696, %v1690
      %v2159 = vpack.c.b16 %v1697, %v1691
      %v2160 = vpack.c.b16 %v1704, %v1698
      %v2161 = vpack.c.b16 %v1705, %v1699
      %v2162 = vpack.c.b16 %v1706, %v1700
      %v2163 = vpack.c.b16 %v1707, %v1701
      %v2164 = vpack.c.b16 %v1708, %v1702
      %v2165 = vpack.c.b16 %v1709, %v1703
      %v2166 = vpack.c.b16 %v1716, %v1710
      %v2167 = vpack.c.b16 %v1717, %v1711
      %v2168 = vpack.c.b16 %v1718, %v1712
      %v2169 = vpack.c.b16 %v1719, %v1713
      %v2170 = vpack.c.b16 %v1720, %v1714
      %v2171 = vpack.c.b16 %v1721, %v1715
      %v2172 = vpack.c.b16 %v1728, %v1722
      %v2173 = vpack.c.b16 %v1729, %v1723
      %v2174 = vpack.c.b16 %v1730, %v1724
      %v2175 = vpack.c.b16 %v1731, %v1725
      %v2176 = vpack.c.b16 %v1732, %v1726
      %v2177 = vpack.c.b16 %v1733, %v1727
      %v2178 = vpack.c.b16 %v1740, %v1734
      %v2179 = vpack.c.b16 %v1741, %v1735
      %v2180 = vpack.c.b16 %v1742, %v1736
      %v2181 = vpack.c.b16 %v1743, %v1737
      %v2182 = vpack.c.b16 %v1744, %v1738
      %v2183 = vpack.c.b16 %v1745, %v1739
      %v2184 = vpack.c.b16 %v1752, %v1746
      %v2185 = vpack.c.b16 %v1753, %v1747
      %v2186 = vpack.c.b16 %v1754, %v1748
      %v2187 = vpack.c.b16 %v1755, %v1749
      %v2188 = vpack.c.b16 %v1756, %v1750
      %v2189 = vpack.c.b16 %v1757, %v1751
      %v2190 = vpack.c.b16 %v1764, %v1758
      %v2191 = vpack.c.b16 %v1765, %v1759
      %v2192 = vpack.c.b16 %v1766, %v1760
      %v2193 = vpack.c.b16 %v1767, %v1761
      %v2194 = vpack.c.b16 %v1768, %v1762
      %v2195 = vpack.c.b16 %v1769, %v1763
      %v2196 = vpack.c.b16 %v1776, %v1770
      %v2197 = vpack.c.b16 %v1777, %v1771
      %v2198 = vpack.c.b16 %v1778, %v1772
      %v2199 = vpack.c.b16 %v1779, %v1773
      %v2200 = vpack.c.b16 %v1780, %v1774
      %v2201 = vpack.c.b16 %v1781, %v1775
      %v2202 = vpack.c.b16 %v1788, %v1782
      %v2203 = vpack.c.b16 %v1789, %v1783
      %v2204 = vpack.c.b16 %v1790, %v1784
      %v2205 = vpack.c.b16 %v1791, %v1785
      %v2206 = vpack.c.b16 %v1792, %v1786
      %v2207 = vpack.c.b16 %v1793, %v1787
      %v2208 = vpack.c.b16 %v1800, %v1794
      %v2209 = vpack.c.b16 %v1801, %v1795
      %v2210 = vpack.c.b16 %v1802, %v1796
      %v2211 = vpack.c.b16 %v1803, %v1797
      %v2212 = vpack.c.b16 %v1804, %v1798
      %v2213 = vpack.c.b16 %v1805, %v1799
      %v2214 = vpack.c.b16 %v1812, %v1806
      %v2215 = vpack.c.b16 %v1813, %v1807
      %v2216 = vpack.c.b16 %v1814, %v1808
      %v2217 = vpack.c.b16 %v1815, %v1809
      %v2218 = vpack.c.b16 %v1816, %v1810
      %v2219 = vpack.c.b16 %v1817, %v1811
      %v2220 = vpack.c.b16 %v1824, %v1818
      %v2221 = vpack.c.b16 %v1825, %v1819
      %v2222 = vpack.c.b16 %v1826, %v1820
      %v2223 = vpack.c.b16 %v1827, %v1821
      %v2224 = vpack.c.b16 %v1828, %v1822
      %v2225 = vpack.c.b16 %v1829, %v1823
      %v2226 = vpack.c.b16 %v1836, %v1830
      %v2227 = vpack.c.b16 %v1837, %v1831
      %v2228 = vpack.c.b16 %v1838, %v1832
      %v2229 = vpack.c.b16 %v1839, %v1833
      %v2230 = vpack.c.b16 %v1840, %v1834
      %v2231 = vpack.c.b16 %v1841, %v1835
      %v2232 = vpack.c.b16 %v1848, %v1842
      %v2233 = vpack.c.b16 %v1849, %v1843
      %v2234 = vpack.c.b16 %v1850, %v1844
      %v2235 = vpack.c.b16 %v1851, %v1845
      %v2236 = vpack.c.b16 %v1852, %v1846
      %v2237 = vpack.c.b16 %v1853, %v1847
      %2622 = vmatprep.subr.bf16.mxu0 %v1897
      %2623 = vmatpush1.bf16.msra.mxu0 %v1896
      %2624 = vmatprep.subr.bf16.mxu0 %v1891
      %2625 = vmatpush1.bf16.msra.mxu0 %v1890
      %2626 = vmatprep.subr.bf16.mxu0 %v1885
      %2627 = vmatpush1.bf16.msra.mxu0 %v1884
      %2628 = vmatprep.subr.bf16.mxu0 %v1879
      %2629 = vmatpush1.bf16.msra.mxu0 %v1878
      %2630 = vmatprep.subr.bf16.mxu0 %v1873
      %2631 = vmatpush1.bf16.msra.mxu0 %v1872
      %2632 = vmatprep.subr.bf16.mxu0 %v1867
      %2633 = vmatpush1.bf16.msra.mxu0 %v1866
      %2634 = vmatprep.subr.bf16.mxu0 %v1861
      %2635 = vmatpush1.bf16.msra.mxu0 %v1860
      %2636 = vmatprep.subr.bf16.mxu0 %v1855
      %2637 = vmatpush1.bf16.msra.mxu0 %v1854
      %2638 = vmatprep.subr.bf16.mxu0 %v1945
      %2639 = vmatpush2.bf16.msra.mxu0 %v1944
      %2640 = vmatprep.subr.bf16.mxu0 %v1939
      %2641 = vmatpush2.bf16.msra.mxu0 %v1938
      %2642 = vmatprep.subr.bf16.mxu0 %v1933
      %2643 = vmatpush2.bf16.msra.mxu0 %v1932
      %2644 = vmatprep.subr.bf16.mxu0 %v1927
      %2645 = vmatpush2.bf16.msra.mxu0 %v1926
      %2646 = vmatprep.subr.bf16.mxu0 %v1921
      %2647 = vmatpush2.bf16.msra.mxu0 %v1920
      %2648 = vmatprep.subr.bf16.mxu0 %v1915
      %2649 = vmatpush2.bf16.msra.mxu0 %v1914
      %2650 = vmatprep.subr.bf16.mxu0 %v1909
      %2651 = vmatpush2.bf16.msra.mxu0 %v1908
      %2652 = vmatprep.subr.bf16.mxu0 %v1903
      %2653 = vmatpush2.bf16.msra.mxu0 %v1902
      %2654 = vmatprep.mubr.bf16.mxu0 %v687
      %2655 = vmatmul.mubr.bf16.gmra.mxu0 %v686
      %v2656 = vpop.f32.mrf.mxu0
      %v2657 = vadd.f32 0.0, %v2656
      %v2658 = vpop.f32.mrf.mxu0
      %v2659 = vadd.f32 0.0, %v2658
      %v2660 = vpop.f32.mrf.mxu0
      %v2661 = vpop.f32.mrf.mxu0
      %2662 = vdwg.mxu0
      %2663 = vmatprep.subr.bf16.mxu0 %v1993
      %2664 = vmatpush1.bf16.msra.mxu0 %v1992
      %2665 = vmatprep.subr.bf16.mxu0 %v1987
      %2666 = vmatpush1.bf16.msra.mxu0 %v1986
      %2667 = vmatprep.subr.bf16.mxu0 %v1981
      %2668 = vmatpush1.bf16.msra.mxu0 %v1980
      %2669 = vmatprep.subr.bf16.mxu0 %v1975
      %2670 = vmatpush1.bf16.msra.mxu0 %v1974
      %2671 = vmatprep.subr.bf16.mxu0 %v1969
      %2672 = vmatpush1.bf16.msra.mxu0 %v1968
      %2673 = vmatprep.subr.bf16.mxu0 %v1963
      %2674 = vmatpush1.bf16.msra.mxu0 %v1962
      %2675 = vmatprep.subr.bf16.mxu0 %v1957
      %2676 = vmatpush1.bf16.msra.mxu0 %v1956
      %2677 = vmatprep.subr.bf16.mxu0 %v1951
      %2678 = vmatpush1.bf16.msra.mxu0 %v1950
      %2679 = vmatprep.subr.bf16.mxu0 %v2041
      %2680 = vmatpush2.bf16.msra.mxu0 %v2040
      %2681 = vmatprep.subr.bf16.mxu0 %v2035
      %2682 = vmatpush2.bf16.msra.mxu0 %v2034
      %2683 = vmatprep.subr.bf16.mxu0 %v2029
      %2684 = vmatpush2.bf16.msra.mxu0 %v2028
      %2685 = vmatprep.subr.bf16.mxu0 %v2023
      %2686 = vmatpush2.bf16.msra.mxu0 %v2022
      %2687 = vmatprep.subr.bf16.mxu0 %v2017
      %2688 = vmatpush2.bf16.msra.mxu0 %v2016
      %2689 = vmatprep.subr.bf16.mxu0 %v2011
      %2690 = vmatpush2.bf16.msra.mxu0 %v2010
      %2691 = vmatprep.subr.bf16.mxu0 %v2005
      %2692 = vmatpush2.bf16.msra.mxu0 %v2004
      %2693 = vmatprep.subr.bf16.mxu0 %v1999
      %2694 = vmatpush2.bf16.msra.mxu0 %v1998
      %2695 = vmatprep.mubr.bf16.mxu0 %v689
      %2696 = vmatmul.mubr.bf16.gmra.mxu0 %v688
      %v2697 = vpop.f32.mrf.mxu0
      %v2698 = vadd.f32 %v2657, %v2697
      %v2699 = vpop.f32.mrf.mxu0
      %v2700 = vadd.f32 %v2659, %v2699
      %v2701 = vpop.f32.mrf.mxu0
      %v2702 = vpop.f32.mrf.mxu0
      %2703 = vdwg.mxu0
      %2704 = vmatprep.subr.bf16.mxu0 %v2089
      %2705 = vmatpush1.bf16.msra.mxu0 %v2088
      %2706 = vmatprep.subr.bf16.mxu0 %v2083
      %2707 = vmatpush1.bf16.msra.mxu0 %v2082
      %2708 = vmatprep.subr.bf16.mxu0 %v2077
      %2709 = vmatpush1.bf16.msra.mxu0 %v2076
      %2710 = vmatprep.subr.bf16.mxu0 %v2071
      %2711 = vmatpush1.bf16.msra.mxu0 %v2070
      %2712 = vmatprep.subr.bf16.mxu0 %v2065
      %2713 = vmatpush1.bf16.msra.mxu0 %v2064
      %2714 = vmatprep.subr.bf16.mxu0 %v2059
      %2715 = vmatpush1.bf16.msra.mxu0 %v2058
      %2716 = vmatprep.subr.bf16.mxu0 %v2053
      %2717 = vmatpush1.bf16.msra.mxu0 %v2052
      %2718 = vmatprep.subr.bf16.mxu0 %v2047
      %2719 = vmatpush1.bf16.msra.mxu0 %v2046
      %2720 = vmatprep.subr.bf16.mxu0 %v2137
      %2721 = vmatpush2.bf16.msra.mxu0 %v2136
      %2722 = vmatprep.subr.bf16.mxu0 %v2131
      %2723 = vmatpush2.bf16.msra.mxu0 %v2130
      %2724 = vmatprep.subr.bf16.mxu0 %v2125
      %2725 = vmatpush2.bf16.msra.mxu0 %v2124
      %2726 = vmatprep.subr.bf16.mxu0 %v2119
      %2727 = vmatpush2.bf16.msra.mxu0 %v2118
      %2728 = vmatprep.subr.bf16.mxu0 %v2113
      %2729 = vmatpush2.bf16.msra.mxu0 %v2112
      %2730 = vmatprep.subr.bf16.mxu0 %v2107
      %2731 = vmatpush2.bf16.msra.mxu0 %v2106
      %2732 = vmatprep.subr.bf16.mxu0 %v2101
      %2733 = vmatpush2.bf16.msra.mxu0 %v2100
      %2734 = vmatprep.subr.bf16.mxu0 %v2095
      %2735 = vmatpush2.bf16.msra.mxu0 %v2094
      %2736 = vmatprep.mubr.bf16.mxu0 %v691
      %2737 = vmatmul.mubr.bf16.gmra.mxu0 %v690
      %v2738 = vpop.f32.mrf.mxu0
      %v2739 = vadd.f32 %v2698, %v2738
      %v2740 = vpop.f32.mrf.mxu0
      %v2741 = vadd.f32 %v2700, %v2740
      %v2742 = vpop.f32.mrf.mxu0
      %v2743 = vpop.f32.mrf.mxu0
      %2744 = vdwg.mxu0
      %2745 = vmatprep.subr.bf16.mxu0 %v2185
      %2746 = vmatpush1.bf16.msra.mxu0 %v2184
      %2747 = vmatprep.subr.bf16.mxu0 %v2179
      %2748 = vmatpush1.bf16.msra.mxu0 %v2178
      %2749 = vmatprep.subr.bf16.mxu0 %v2173
      %2750 = vmatpush1.bf16.msra.mxu0 %v2172
      %2751 = vmatprep.subr.bf16.mxu0 %v2167
      %2752 = vmatpush1.bf16.msra.mxu0 %v2166
      %2753 = vmatprep.subr.bf16.mxu0 %v2161
      %2754 = vmatpush1.bf16.msra.mxu0 %v2160
      %2755 = vmatprep.subr.bf16.mxu0 %v2155
      %2756 = vmatpush1.bf16.msra.mxu0 %v2154
      %2757 = vmatprep.subr.bf16.mxu0 %v2149
      %2758 = vmatpush1.bf16.msra.mxu0 %v2148
      %2759 = vmatprep.subr.bf16.mxu0 %v2143
      %2760 = vmatpush1.bf16.msra.mxu0 %v2142
      %2761 = vmatprep.subr.bf16.mxu0 %v2233
      %2762 = vmatpush2.bf16.msra.mxu0 %v2232
      %2763 = vmatprep.subr.bf16.mxu0 %v2227
      %2764 = vmatpush2.bf16.msra.mxu0 %v2226
      %2765 = vmatprep.subr.bf16.mxu0 %v2221
      %2766 = vmatpush2.bf16.msra.mxu0 %v2220
      %2767 = vmatprep.subr.bf16.mxu0 %v2215
      %2768 = vmatpush2.bf16.msra.mxu0 %v2214
      %2769 = vmatprep.subr.bf16.mxu0 %v2209
      %2770 = vmatpush2.bf16.msra.mxu0 %v2208
      %2771 = vmatprep.subr.bf16.mxu0 %v2203
      %2772 = vmatpush2.bf16.msra.mxu0 %v2202
      %2773 = vmatprep.subr.bf16.mxu0 %v2197
      %2774 = vmatpush2.bf16.msra.mxu0 %v2196
      %2775 = vmatprep.subr.bf16.mxu0 %v2191
      %2776 = vmatpush2.bf16.msra.mxu0 %v2190
      %2777 = vmatprep.mubr.bf16.mxu0 %v693
      %2778 = vmatmul.mubr.bf16.gmra.mxu0 %v692
      %v2779 = vpop.f32.mrf.mxu0
      %v2780 = vadd.f32 %v2739, %v2779
      %v2781 = vpop.f32.mrf.mxu0
      %v2782 = vadd.f32 %v2741, %v2781
      %v2783 = vpop.f32.mrf.mxu0
      %v2784 = vpop.f32.mrf.mxu0
      %2785 = vdwg.mxu0
      %2786 = vmatprep.subr.bf16.mxu0 %v1899
      %2787 = vmatpush1.bf16.msra.mxu0 %v1898
      %2788 = vmatprep.subr.bf16.mxu0 %v1893
      %2789 = vmatpush1.bf16.msra.mxu0 %v1892
      %2790 = vmatprep.subr.bf16.mxu0 %v1887
      %2791 = vmatpush1.bf16.msra.mxu0 %v1886
      %2792 = vmatprep.subr.bf16.mxu0 %v1881
      %2793 = vmatpush1.bf16.msra.mxu0 %v1880
      %2794 = vmatprep.subr.bf16.mxu0 %v1875
      %2795 = vmatpush1.bf16.msra.mxu0 %v1874
      %2796 = vmatprep.subr.bf16.mxu0 %v1869
      %2797 = vmatpush1.bf16.msra.mxu0 %v1868
      %2798 = vmatprep.subr.bf16.mxu0 %v1863
      %2799 = vmatpush1.bf16.msra.mxu0 %v1862
      %2800 = vmatprep.subr.bf16.mxu0 %v1857
      %2801 = vmatpush1.bf16.msra.mxu0 %v1856
      %2802 = vmatprep.subr.bf16.mxu0 %v1947
      %2803 = vmatpush2.bf16.msra.mxu0 %v1946
      %2804 = vmatprep.subr.bf16.mxu0 %v1941
      %2805 = vmatpush2.bf16.msra.mxu0 %v1940
      %2806 = vmatprep.subr.bf16.mxu0 %v1935
      %2807 = vmatpush2.bf16.msra.mxu0 %v1934
      %2808 = vmatprep.subr.bf16.mxu0 %v1929
      %2809 = vmatpush2.bf16.msra.mxu0 %v1928
      %2810 = vmatprep.subr.bf16.mxu0 %v1923
      %2811 = vmatpush2.bf16.msra.mxu0 %v1922
      %2812 = vmatprep.subr.bf16.mxu0 %v1917
      %2813 = vmatpush2.bf16.msra.mxu0 %v1916
      %2814 = vmatprep.subr.bf16.mxu0 %v1911
      %2815 = vmatpush2.bf16.msra.mxu0 %v1910
      %2816 = vmatprep.subr.bf16.mxu0 %v1905
      %2817 = vmatpush2.bf16.msra.mxu0 %v1904
      %2818 = vmatprep.mubr.bf16.mxu0 %v687
      %2819 = vmatmul.mubr.bf16.gmra.mxu0 %v686
      %v2820 = vpop.f32.mrf.mxu0
      %v2821 = vadd.f32 0.0, %v2820
      %v2822 = vpop.f32.mrf.mxu0
      %v2823 = vadd.f32 0.0, %v2822
      %v2824 = vpop.f32.mrf.mxu0
      %v2825 = vpop.f32.mrf.mxu0
      %2826 = vdwg.mxu0
      %2827 = vmatprep.subr.bf16.mxu0 %v1995
      %2828 = vmatpush1.bf16.msra.mxu0 %v1994
      %2829 = vmatprep.subr.bf16.mxu0 %v1989
      %2830 = vmatpush1.bf16.msra.mxu0 %v1988
      %2831 = vmatprep.subr.bf16.mxu0 %v1983
      %2832 = vmatpush1.bf16.msra.mxu0 %v1982
      %2833 = vmatprep.subr.bf16.mxu0 %v1977
      %2834 = vmatpush1.bf16.msra.mxu0 %v1976
      %2835 = vmatprep.subr.bf16.mxu0 %v1971
      %2836 = vmatpush1.bf16.msra.mxu0 %v1970
      %2837 = vmatprep.subr.bf16.mxu0 %v1965
      %2838 = vmatpush1.bf16.msra.mxu0 %v1964
      %2839 = vmatprep.subr.bf16.mxu0 %v1959
      %2840 = vmatpush1.bf16.msra.mxu0 %v1958
      %2841 = vmatprep.subr.bf16.mxu0 %v1953
      %2842 = vmatpush1.bf16.msra.mxu0 %v1952
      %2843 = vmatprep.subr.bf16.mxu0 %v2043
      %2844 = vmatpush2.bf16.msra.mxu0 %v2042
      %2845 = vmatprep.subr.bf16.mxu0 %v2037
      %2846 = vmatpush2.bf16.msra.mxu0 %v2036
      %2847 = vmatprep.subr.bf16.mxu0 %v2031
      %2848 = vmatpush2.bf16.msra.mxu0 %v2030
      %2849 = vmatprep.subr.bf16.mxu0 %v2025
      %2850 = vmatpush2.bf16.msra.mxu0 %v2024
      %2851 = vmatprep.subr.bf16.mxu0 %v2019
      %2852 = vmatpush2.bf16.msra.mxu0 %v2018
      %2853 = vmatprep.subr.bf16.mxu0 %v2013
      %2854 = vmatpush2.bf16.msra.mxu0 %v2012
      %2855 = vmatprep.subr.bf16.mxu0 %v2007
      %2856 = vmatpush2.bf16.msra.mxu0 %v2006
      %2857 = vmatprep.subr.bf16.mxu0 %v2001
      %2858 = vmatpush2.bf16.msra.mxu0 %v2000
      %2859 = vmatprep.mubr.bf16.mxu0 %v689
      %2860 = vmatmul.mubr.bf16.gmra.mxu0 %v688
      %v2861 = vpop.f32.mrf.mxu0
      %v2862 = vadd.f32 %v2821, %v2861
      %v2863 = vpop.f32.mrf.mxu0
      %v2864 = vadd.f32 %v2823, %v2863
      %v2865 = vpop.f32.mrf.mxu0
      %v2866 = vpop.f32.mrf.mxu0
      %2867 = vdwg.mxu0
      %2868 = vmatprep.subr.bf16.mxu0 %v2091
      %2869 = vmatpush1.bf16.msra.mxu0 %v2090
      %2870 = vmatprep.subr.bf16.mxu0 %v2085
      %2871 = vmatpush1.bf16.msra.mxu0 %v2084
      %2872 = vmatprep.subr.bf16.mxu0 %v2079
      %2873 = vmatpush1.bf16.msra.mxu0 %v2078
      %2874 = vmatprep.subr.bf16.mxu0 %v2073
      %2875 = vmatpush1.bf16.msra.mxu0 %v2072
      %2876 = vmatprep.subr.bf16.mxu0 %v2067
      %2877 = vmatpush1.bf16.msra.mxu0 %v2066
      %2878 = vmatprep.subr.bf16.mxu0 %v2061
      %2879 = vmatpush1.bf16.msra.mxu0 %v2060
      %2880 = vmatprep.subr.bf16.mxu0 %v2055
      %2881 = vmatpush1.bf16.msra.mxu0 %v2054
      %2882 = vmatprep.subr.bf16.mxu0 %v2049
      %2883 = vmatpush1.bf16.msra.mxu0 %v2048
      %2884 = vmatprep.subr.bf16.mxu0 %v2139
      %2885 = vmatpush2.bf16.msra.mxu0 %v2138
      %2886 = vmatprep.subr.bf16.mxu0 %v2133
      %2887 = vmatpush2.bf16.msra.mxu0 %v2132
      %2888 = vmatprep.subr.bf16.mxu0 %v2127
      %2889 = vmatpush2.bf16.msra.mxu0 %v2126
      %2890 = vmatprep.subr.bf16.mxu0 %v2121
      %2891 = vmatpush2.bf16.msra.mxu0 %v2120
      %2892 = vmatprep.subr.bf16.mxu0 %v2115
      %2893 = vmatpush2.bf16.msra.mxu0 %v2114
      %2894 = vmatprep.subr.bf16.mxu0 %v2109
      %2895 = vmatpush2.bf16.msra.mxu0 %v2108
      %2896 = vmatprep.subr.bf16.mxu0 %v2103
      %2897 = vmatpush2.bf16.msra.mxu0 %v2102
      %2898 = vmatprep.subr.bf16.mxu0 %v2097
      %2899 = vmatpush2.bf16.msra.mxu0 %v2096
      %2900 = vmatprep.mubr.bf16.mxu0 %v691
      %2901 = vmatmul.mubr.bf16.gmra.mxu0 %v690
      %v2902 = vpop.f32.mrf.mxu0
      %v2903 = vadd.f32 %v2862, %v2902
      %v2904 = vpop.f32.mrf.mxu0
      %v2905 = vadd.f32 %v2864, %v2904
      %v2906 = vpop.f32.mrf.mxu0
      %v2907 = vpop.f32.mrf.mxu0
      %2908 = vdwg.mxu0
      %2909 = vmatprep.subr.bf16.mxu0 %v2187
      %2910 = vmatpush1.bf16.msra.mxu0 %v2186
      %2911 = vmatprep.subr.bf16.mxu0 %v2181
      %2912 = vmatpush1.bf16.msra.mxu0 %v2180
      %2913 = vmatprep.subr.bf16.mxu0 %v2175
      %2914 = vmatpush1.bf16.msra.mxu0 %v2174
      %2915 = vmatprep.subr.bf16.mxu0 %v2169
      %2916 = vmatpush1.bf16.msra.mxu0 %v2168
      %2917 = vmatprep.subr.bf16.mxu0 %v2163
      %2918 = vmatpush1.bf16.msra.mxu0 %v2162
      %2919 = vmatprep.subr.bf16.mxu0 %v2157
      %2920 = vmatpush1.bf16.msra.mxu0 %v2156
      %2921 = vmatprep.subr.bf16.mxu0 %v2151
      %2922 = vmatpush1.bf16.msra.mxu0 %v2150
      %2923 = vmatprep.subr.bf16.mxu0 %v2145
      %2924 = vmatpush1.bf16.msra.mxu0 %v2144
      %2925 = vmatprep.subr.bf16.mxu0 %v2235
      %2926 = vmatpush2.bf16.msra.mxu0 %v2234
      %2927 = vmatprep.subr.bf16.mxu0 %v2229
      %2928 = vmatpush2.bf16.msra.mxu0 %v2228
      %2929 = vmatprep.subr.bf16.mxu0 %v2223
      %2930 = vmatpush2.bf16.msra.mxu0 %v2222
      %2931 = vmatprep.subr.bf16.mxu0 %v2217
      %2932 = vmatpush2.bf16.msra.mxu0 %v2216
      %2933 = vmatprep.subr.bf16.mxu0 %v2211
      %2934 = vmatpush2.bf16.msra.mxu0 %v2210
      %2935 = vmatprep.subr.bf16.mxu0 %v2205
      %2936 = vmatpush2.bf16.msra.mxu0 %v2204
      %2937 = vmatprep.subr.bf16.mxu0 %v2199
      %2938 = vmatpush2.bf16.msra.mxu0 %v2198
      %2939 = vmatprep.subr.bf16.mxu0 %v2193
      %2940 = vmatpush2.bf16.msra.mxu0 %v2192
      %2941 = vmatprep.mubr.bf16.mxu0 %v693
      %2942 = vmatmul.mubr.bf16.gmra.mxu0 %v692
      %v2943 = vpop.f32.mrf.mxu0
      %v2944 = vadd.f32 %v2903, %v2943
      %v2945 = vpop.f32.mrf.mxu0
      %v2946 = vadd.f32 %v2905, %v2945
      %v2947 = vpop.f32.mrf.mxu0
      %v2948 = vpop.f32.mrf.mxu0
      %2949 = vdwg.mxu0
      %2950 = vmatprep.subr.bf16.mxu0 %v1901
      %2951 = vmatpush1.bf16.msra.mxu0 %v1900
      %2952 = vmatprep.subr.bf16.mxu0 %v1895
      %2953 = vmatpush1.bf16.msra.mxu0 %v1894
      %2954 = vmatprep.subr.bf16.mxu0 %v1889
      %2955 = vmatpush1.bf16.msra.mxu0 %v1888
      %2956 = vmatprep.subr.bf16.mxu0 %v1883
      %2957 = vmatpush1.bf16.msra.mxu0 %v1882
      %2958 = vmatprep.subr.bf16.mxu0 %v1877
      %2959 = vmatpush1.bf16.msra.mxu0 %v1876
      %2960 = vmatprep.subr.bf16.mxu0 %v1871
      %2961 = vmatpush1.bf16.msra.mxu0 %v1870
      %2962 = vmatprep.subr.bf16.mxu0 %v1865
      %2963 = vmatpush1.bf16.msra.mxu0 %v1864
      %2964 = vmatprep.subr.bf16.mxu0 %v1859
      %2965 = vmatpush1.bf16.msra.mxu0 %v1858
      %2966 = vmatprep.subr.bf16.mxu0 %v1949
      %2967 = vmatpush2.bf16.msra.mxu0 %v1948
      %2968 = vmatprep.subr.bf16.mxu0 %v1943
      %2969 = vmatpush2.bf16.msra.mxu0 %v1942
      %2970 = vmatprep.subr.bf16.mxu0 %v1937
      %2971 = vmatpush2.bf16.msra.mxu0 %v1936
      %2972 = vmatprep.subr.bf16.mxu0 %v1931
      %2973 = vmatpush2.bf16.msra.mxu0 %v1930
      %2974 = vmatprep.subr.bf16.mxu0 %v1925
      %2975 = vmatpush2.bf16.msra.mxu0 %v1924
      %2976 = vmatprep.subr.bf16.mxu0 %v1919
      %2977 = vmatpush2.bf16.msra.mxu0 %v1918
      %2978 = vmatprep.subr.bf16.mxu0 %v1913
      %2979 = vmatpush2.bf16.msra.mxu0 %v1912
      %2980 = vmatprep.subr.bf16.mxu0 %v1907
      %2981 = vmatpush2.bf16.msra.mxu0 %v1906
      %2982 = vmatprep.mubr.bf16.mxu0 %v687
      %2983 = vmatmul.mubr.bf16.gmra.mxu0 %v686
      %v2984 = vpop.f32.mrf.mxu0
      %v2985 = vadd.f32 0.0, %v2984
      %v2986 = vpop.f32.mrf.mxu0
      %v2987 = vadd.f32 0.0, %v2986
      %v2988 = vpop.f32.mrf.mxu0
      %v2989 = vpop.f32.mrf.mxu0
      %2990 = vdwg.mxu0
      %2991 = vmatprep.subr.bf16.mxu0 %v1997
      %2992 = vmatpush1.bf16.msra.mxu0 %v1996
      %2993 = vmatprep.subr.bf16.mxu0 %v1991
      %2994 = vmatpush1.bf16.msra.mxu0 %v1990
      %2995 = vmatprep.subr.bf16.mxu0 %v1985
      %2996 = vmatpush1.bf16.msra.mxu0 %v1984
      %2997 = vmatprep.subr.bf16.mxu0 %v1979
      %2998 = vmatpush1.bf16.msra.mxu0 %v1978
      %2999 = vmatprep.subr.bf16.mxu0 %v1973
      %3000 = vmatpush1.bf16.msra.mxu0 %v1972
      %3001 = vmatprep.subr.bf16.mxu0 %v1967
      %3002 = vmatpush1.bf16.msra.mxu0 %v1966
      %3003 = vmatprep.subr.bf16.mxu0 %v1961
      %3004 = vmatpush1.bf16.msra.mxu0 %v1960
      %3005 = vmatprep.subr.bf16.mxu0 %v1955
      %3006 = vmatpush1.bf16.msra.mxu0 %v1954
      %3007 = vmatprep.subr.bf16.mxu0 %v2045
      %3008 = vmatpush2.bf16.msra.mxu0 %v2044
      %3009 = vmatprep.subr.bf16.mxu0 %v2039
      %3010 = vmatpush2.bf16.msra.mxu0 %v2038
      %3011 = vmatprep.subr.bf16.mxu0 %v2033
      %3012 = vmatpush2.bf16.msra.mxu0 %v2032
      %3013 = vmatprep.subr.bf16.mxu0 %v2027
      %3014 = vmatpush2.bf16.msra.mxu0 %v2026
      %3015 = vmatprep.subr.bf16.mxu0 %v2021
      %3016 = vmatpush2.bf16.msra.mxu0 %v2020
      %3017 = vmatprep.subr.bf16.mxu0 %v2015
      %3018 = vmatpush2.bf16.msra.mxu0 %v2014
      %3019 = vmatprep.subr.bf16.mxu0 %v2009
      %3020 = vmatpush2.bf16.msra.mxu0 %v2008
      %3021 = vmatprep.subr.bf16.mxu0 %v2003
      %3022 = vmatpush2.bf16.msra.mxu0 %v2002
      %3023 = vmatprep.mubr.bf16.mxu0 %v689
      %3024 = vmatmul.mubr.bf16.gmra.mxu0 %v688
      %v3025 = vpop.f32.mrf.mxu0
      %v3026 = vadd.f32 %v2985, %v3025
      %v3027 = vpop.f32.mrf.mxu0
      %v3028 = vadd.f32 %v2987, %v3027
      %v3029 = vpop.f32.mrf.mxu0
      %v3030 = vpop.f32.mrf.mxu0
      %3031 = vdwg.mxu0
      %3032 = vmatprep.subr.bf16.mxu0 %v2093
      %3033 = vmatpush1.bf16.msra.mxu0 %v2092
      %3034 = vmatprep.subr.bf16.mxu0 %v2087
      %3035 = vmatpush1.bf16.msra.mxu0 %v2086
      %3036 = vmatprep.subr.bf16.mxu0 %v2081
      %3037 = vmatpush1.bf16.msra.mxu0 %v2080
      %3038 = vmatprep.subr.bf16.mxu0 %v2075
      %3039 = vmatpush1.bf16.msra.mxu0 %v2074
      %3040 = vmatprep.subr.bf16.mxu0 %v2069
      %3041 = vmatpush1.bf16.msra.mxu0 %v2068
      %3042 = vmatprep.subr.bf16.mxu0 %v2063
      %3043 = vmatpush1.bf16.msra.mxu0 %v2062
      %3044 = vmatprep.subr.bf16.mxu0 %v2057
      %3045 = vmatpush1.bf16.msra.mxu0 %v2056
      %3046 = vmatprep.subr.bf16.mxu0 %v2051
      %3047 = vmatpush1.bf16.msra.mxu0 %v2050
      %3048 = vmatprep.subr.bf16.mxu0 %v2141
      %3049 = vmatpush2.bf16.msra.mxu0 %v2140
      %3050 = vmatprep.subr.bf16.mxu0 %v2135
      %3051 = vmatpush2.bf16.msra.mxu0 %v2134
      %3052 = vmatprep.subr.bf16.mxu0 %v2129
      %3053 = vmatpush2.bf16.msra.mxu0 %v2128
      %3054 = vmatprep.subr.bf16.mxu0 %v2123
      %3055 = vmatpush2.bf16.msra.mxu0 %v2122
      %3056 = vmatprep.subr.bf16.mxu0 %v2117
      %3057 = vmatpush2.bf16.msra.mxu0 %v2116
      %3058 = vmatprep.subr.bf16.mxu0 %v2111
      %3059 = vmatpush2.bf16.msra.mxu0 %v2110
      %3060 = vmatprep.subr.bf16.mxu0 %v2105
      %3061 = vmatpush2.bf16.msra.mxu0 %v2104
      %3062 = vmatprep.subr.bf16.mxu0 %v2099
      %3063 = vmatpush2.bf16.msra.mxu0 %v2098
      %3064 = vmatprep.mubr.bf16.mxu0 %v691
      %3065 = vmatmul.mubr.bf16.gmra.mxu0 %v690
      %v3066 = vpop.f32.mrf.mxu0
      %v3067 = vadd.f32 %v3026, %v3066
      %v3068 = vpop.f32.mrf.mxu0
      %v3069 = vadd.f32 %v3028, %v3068
      %v3070 = vpop.f32.mrf.mxu0
      %v3071 = vpop.f32.mrf.mxu0
      %3072 = vdwg.mxu0
      %3073 = vmatprep.subr.bf16.mxu0 %v2189
      %3074 = vmatpush1.bf16.msra.mxu0 %v2188
      %3075 = vmatprep.subr.bf16.mxu0 %v2183
      %3076 = vmatpush1.bf16.msra.mxu0 %v2182
      %3077 = vmatprep.subr.bf16.mxu0 %v2177
      %3078 = vmatpush1.bf16.msra.mxu0 %v2176
      %3079 = vmatprep.subr.bf16.mxu0 %v2171
      %3080 = vmatpush1.bf16.msra.mxu0 %v2170
      %3081 = vmatprep.subr.bf16.mxu0 %v2165
      %3082 = vmatpush1.bf16.msra.mxu0 %v2164
      %3083 = vmatprep.subr.bf16.mxu0 %v2159
      %3084 = vmatpush1.bf16.msra.mxu0 %v2158
      %3085 = vmatprep.subr.bf16.mxu0 %v2153
      %3086 = vmatpush1.bf16.msra.mxu0 %v2152
      %3087 = vmatprep.subr.bf16.mxu0 %v2147
      %3088 = vmatpush1.bf16.msra.mxu0 %v2146
      %3089 = vmatprep.subr.bf16.mxu0 %v2237
      %3090 = vmatpush2.bf16.msra.mxu0 %v2236
      %3091 = vmatprep.subr.bf16.mxu0 %v2231
      %3092 = vmatpush2.bf16.msra.mxu0 %v2230
      %3093 = vmatprep.subr.bf16.mxu0 %v2225
      %3094 = vmatpush2.bf16.msra.mxu0 %v2224
      %3095 = vmatprep.subr.bf16.mxu0 %v2219
      %3096 = vmatpush2.bf16.msra.mxu0 %v2218
      %3097 = vmatprep.subr.bf16.mxu0 %v2213
      %3098 = vmatpush2.bf16.msra.mxu0 %v2212
      %3099 = vmatprep.subr.bf16.mxu0 %v2207
      %3100 = vmatpush2.bf16.msra.mxu0 %v2206
      %3101 = vmatprep.subr.bf16.mxu0 %v2201
      %3102 = vmatpush2.bf16.msra.mxu0 %v2200
      %3103 = vmatprep.subr.bf16.mxu0 %v2195
      %3104 = vmatpush2.bf16.msra.mxu0 %v2194
      %3105 = vmatprep.mubr.bf16.mxu0 %v693
      %3106 = vmatmul.mubr.bf16.gmra.mxu0 %v692
      %v3107 = vpop.f32.mrf.mxu0
      %v3108 = vadd.f32 %v3067, %v3107
      %v3109 = vpop.f32.mrf.mxu0
      %v3110 = vadd.f32 %v3069, %v3109
      %v3111 = vpop.f32.mrf.mxu0
      %v3112 = vpop.f32.mrf.mxu0
      %3113 = vdwg.mxu0
      %v3114 = vadd.f32 %v280, %v2780
      %v3115 = vadd.f32 %v281, %v2782
      %v3116 = vadd.f32 %v282, %v2944
      %v3117 = vadd.f32 %v283, %v2946
      %v3118 = vadd.f32 %v284, %v3108
      %v3119 = vadd.f32 %v285, %v3110
      %3120 = vst [vmem:[#allocation2] sm:$0xff] %v3114
      %3121 = vst [vmem:[#allocation2 + $0x8] sm:$0xff] %v3115
      %3122 = vst [vmem:[#allocation2 + $0x10] sm:$0xff] %v3116
      %3123 = vst [vmem:[#allocation2 + $0x18] sm:$0xff] %v3117
      %3124 = vst [vmem:[#allocation2 + $0x20] sm:$0xff] %v3118
      %3125 = vst [vmem:[#allocation2 + $0x28] sm:$0xff] %v3119
      // Predicated region
      $region37: #{autoencoder_forward.11} parent=31 // pred_check
        %p3126 = pneg %p270
      $region38: #{autoencoder_forward.11} parent=31 // pred_check_branch
        %3128 = sbr.rel (%p3126) target = $region40
      $region39: #{autoencoder_forward.11} parent=31 // pred_region
        %v3129 = vld [vmem:[#allocation2] sm:$0xff]
        %v3130 = vld [vmem:[#allocation2 + $0x8] sm:$0xff]
        %v3131 = vld [vmem:[#allocation2 + $0x10] sm:$0xff]
        %v3132 = vld [vmem:[#allocation2 + $0x18] sm:$0xff]
        %v3133 = vld [vmem:[#allocation2 + $0x20] sm:$0xff]
        %v3134 = vld [vmem:[#allocation2 + $0x28] sm:$0xff]
        %v3135 = vld [vmem:[%s258] sm:$0x3f]
        %v3137 = vlaneseq
        %v3138 = vshrl.u32 %v3137, 7
        %v3139 = vsub.s32 0, %v3138
        %v3140 = vrot.slane %v3135, %v3139
        %v3141 = vlaneseq
        %v3142 = vshrl.u32 %v3141, 7
        %v3143 = vsub.s32 1, %v3142
        %v3144 = vrot.slane %v3135, %v3143
        %v3145 = vlaneseq
        %v3146 = vshrl.u32 %v3145, 7
        %v3147 = vsub.s32 2, %v3146
        %v3148 = vrot.slane %v3135, %v3147
        %v3149 = vlaneseq
        %v3150 = vshrl.u32 %v3149, 7
        %v3151 = vsub.s32 3, %v3150
        %v3152 = vrot.slane %v3135, %v3151
        %v3153 = vlaneseq
        %v3154 = vshrl.u32 %v3153, 7
        %v3155 = vsub.s32 4, %v3154
        %v3156 = vrot.slane %v3135, %v3155
        %v3157 = vlaneseq
        %v3158 = vshrl.u32 %v3157, 7
        %v3159 = vsub.s32 5, %v3158
        %v3160 = vrot.slane %v3135, %v3159
        %v3167 = vadd.f32 %v3129, %v3140
        %v3168 = vadd.f32 %v3130, %v3144
        %v3169 = vadd.f32 %v3131, %v3148
        %v3170 = vadd.f32 %v3132, %v3152
        %v3171 = vadd.f32 %v3133, %v3156
        %v3172 = vadd.f32 %v3134, %v3160
        %v3173 = vtanh.pop %v3167
        %v3174 = vtanh.pop %v3168
        %v3175 = vtanh.pop %v3169
        %v3176 = vtanh.pop %v3170
        %v3177 = vtanh.pop %v3171
        %v3178 = vtanh.pop %v3172
        %3179 = vst [vmem:[%s268] sm:$0xff] %v3173
        %3180 = vst [vmem:[%s268 + $0x8] sm:$0xff] %v3174
        %3181 = vst [vmem:[%s268 + $0x10] sm:$0xff] %v3175
        %3182 = vst [vmem:[%s268 + $0x18] sm:$0xff] %v3176
        %3183 = vst [vmem:[%s268 + $0x20] sm:$0xff] %v3177
        %3184 = vst [vmem:[%s268 + $0x28] sm:$0xff] %v3178
      $region40: #{autoencoder_forward.11} parent=31 // pred_fallthru
        _
      %s3185 = smul.u32 6, %s19
      %p3186 = scmp.lt.s32.totalorder %s20, 0
      %s3187 = scalar_select %p3186, %s20, 0
      %p3188 = scmp.lt.s32.totalorder %s3185, 11
      %s3189 = scalar_select %p3188, %s3185, 11
      %s3190 = smul.addr %s3187, 12
      %s3191 = sadd.s32 %s3189, %s3190
      %s3192 = smul.addr %s3191, 8
      %s3193 = scalar_lea.vmem %s3, %s3192
      // Predicated region
      $region41: #{autoencoder_forward.11} parent=31 // pred_check
        %p3194 = pneg %p135
      $region42: #{autoencoder_forward.11} parent=31 // pred_check_branch
        %3196 = sbr.rel (%p3194) target = $region44
      $region43: #{autoencoder_forward.11} parent=31 // pred_region
        %s3197 = smul.u32 6, %s19
      $region44: #{autoencoder_forward.11} parent=31 // pred_fallthru
        _
    $region32: #{autoencoder_forward.11} parent=5 // pred_fallthru
      _
    %p3198 = scmp.le.s32.totalorder 2, %s9
    // Predicated region
    $region45: #{autoencoder_forward.11} parent=5 // pred_check
      %p3199 = pneg %p3198
    $region46: #{autoencoder_forward.11} parent=5 // pred_check_branch
      %3201 = sbr.rel (%p3199) target = $region48
    $region47: #{autoencoder_forward.11} parent=5 // pred_region
      %s3202 = ssub.s32 %s9, 2
      // Predicated region
      $region49: #{autoencoder_forward.11} parent=47 // pred_check
        %p3203 = pneg %p141
      $region50: #{autoencoder_forward.11} parent=47 // pred_check_branch
        %3205 = sbr.rel (%p3203) target = $region52
      $region51: #{autoencoder_forward.11} parent=47 // pred_region
        %s3206 = smul.u32 6, %s22
        %p3207 = scmp.lt.s32.totalorder %s23, 0
        %s3208 = scalar_select %p3207, %s23, 0
        %p3209 = scmp.lt.s32.totalorder %s3206, 11
        %s3210 = scalar_select %p3209, %s3206, 11
        %s3211 = smul.addr %s3208, 12
        %s3212 = sadd.s32 %s3210, %s3211
        %s3213 = smul.addr %s3212, 8
        %s3214 = scalar_lea.vmem %s3, %s3213
      $region52: #{autoencoder_forward.11} parent=47 // pred_fallthru
        _
    $region48: #{autoencoder_forward.11} parent=5 // pred_fallthru
      _
  $region6: #{autoencoder_forward.11} parent=0 // loop_footer
    %s13 = sadd.s32 1, %s9
  $region7: #{autoencoder_forward.11} parent=0 // loop_footer_branch
    %8 = sbr.rel target = $region3
  $region8: #{autoencoder_forward.11} parent=0 // loop_exit
    _

</llo_original>
